<compile_context>
chip_gen: v5e
topology: v5e:2x2
jax: 0.10.0
libtpu: 0.0.40
codegen_flags: <defaults>
</compile_context>

<pallas_src>
from functools import partial

import numpy as np
import jax
import jax.numpy as jnp
from jax import lax
from jax.experimental import pallas as pl
from jax.experimental.pallas import tpu as pltpu


# bf16 MXU operands (native on v5e/v6e/v7x); accumulation stays f32.
MATMUL_DTYPE = jnp.bfloat16


# ----------------------------------------------------------------------------
# Generation-aware tiling / VMEM budget
# ----------------------------------------------------------------------------
def _vmem_capacity_bytes():
    try:
        info = pltpu.get_tpu_info()
        cap = getattr(info, "vmem_capacity_bytes", None)
        if cap:
            return int(cap)
    except Exception:
        pass
    return 64 << 20                       # conservative fallback (v7x per-TC VMEM)


_VMEM_CAP = _vmem_capacity_bytes()
_BIG_VMEM = _VMEM_CAP >= (100 << 20)      # 128 MiB (v5e/v6e) vs 64 MiB (v7x)
_ROW_TILE_TARGET = 1024 if _BIG_VMEM else 256     # token rows per grid step
_VMEM_LIMIT = int(_VMEM_CAP * 3 // 4)             # explicit scoped-VMEM budget


def _cparams(naxes=1):
    return pltpu.CompilerParams(
        dimension_semantics=("parallel",) * naxes,
        vmem_limit_bytes=_VMEM_LIMIT)


def _round_up(x, m):
    return ((x + m - 1) // m) * m


def _window_block(nW, N):
    """Largest divisor of nW with WB * N <= _ROW_TILE_TARGET (>= 1)."""
    cap = max(1, _ROW_TILE_TARGET // max(N, 1))
    wb = 1
    for d in range(1, nW + 1):
        if nW % d == 0 and d <= cap:
            wb = d
    return wb


def _row_band(H, W):
    """Largest divisor of H with band * W <= _ROW_TILE_TARGET (>= 1)."""
    cap = max(1, _ROW_TILE_TARGET // max(W, 1))
    th = 1
    for d in range(1, H + 1):
        if H % d == 0 and d <= cap:
            th = d
    return th


# ----------------------------------------------------------------------------
# In-kernel math helpers
# ----------------------------------------------------------------------------
def _mm(x, w):
    """x @ w on the MXU: bf16 operands, f32 accumulation.  x: (..., K), w: (K, N)."""
    return lax.dot_general(
        x.astype(MATMUL_DTYPE), w.astype(MATMUL_DTYPE),
        (((x.ndim - 1,), (0,)), ((), ())),
        preferred_element_type=jnp.float32)


def _gelu(x):
    # tanh-approximation GELU (~1e-3 vs exact erf); tanh runs on the EUP slot,
    # freeing the VALU on the widest (rows, 4C) activation.
    c = 0.7978845608028654  # sqrt(2/pi)
    return 0.5 * x * (1.0 + jnp.tanh(c * (x + 0.044715 * x * x * x)))


def _ln(x, g, b, eps=1e-5):
    x = x.astype(jnp.float32)
    mu = jnp.mean(x, axis=-1, keepdims=True)
    xc = x - mu
    var = jnp.mean(xc * xc, axis=-1, keepdims=True)
    return xc * lax.rsqrt(var + eps) * g + b


# ----------------------------------------------------------------------------
# Fused Swin transformer block kernel:
#   LN1 + QKV -> window attention (bias/mask in-kernel) -> proj + residual
#   -> LN2 + fc1 + GELU + fc2 + residual, all per window-block, gridded over
#   window blocks.  qkv / attn intermediates live in VMEM scratch.
# ----------------------------------------------------------------------------
def _swin_block_kernel(x_ref, g1_ref, b1_ref, wqkv_ref, bqkv_ref, rpb_ref, *rest,
                       num_heads, masked):
    if masked:
        (mask_ref, wproj_ref, bproj_ref, g2_ref, b2_ref,
         wfc1_ref, bfc1_ref, wfc2_ref, bfc2_ref,
         o_ref, qkv_scr, attn_scr) = rest
    else:
        (wproj_ref, bproj_ref, g2_ref, b2_ref,
         wfc1_ref, bfc1_ref, wfc2_ref, bfc2_ref,
         o_ref, qkv_scr, attn_scr) = rest

    x = x_ref[...].astype(jnp.float32)                  # (WB, N, C)
    C = x.shape[-1]
    Dh = C // num_heads

    # --- LN1 + fused QKV projection (scale pre-folded into q columns) ------
    y = _ln(x, g1_ref[...], b1_ref[...])
    qkv_scr[...] = (_mm(y, wqkv_ref[...]) + bqkv_ref[...]).astype(qkv_scr.dtype)

    rpb = rpb_ref[...]                                   # (nH, N, N) f32
    maskv = mask_ref[...] if masked else None            # (WB, N, N) or None

    # --- per-head attention; q/k/v sliced from the bf16 scratch Ref --------
    for h in range(num_heads):                           # static, small
        q = qkv_scr[:, :, h * Dh:(h + 1) * Dh]
        k = qkv_scr[:, :, C + h * Dh:C + (h + 1) * Dh]
        v = qkv_scr[:, :, 2 * C + h * Dh:2 * C + (h + 1) * Dh]
        s = jnp.einsum("wqd,wkd->wqk", q, k, preferred_element_type=jnp.float32)
        s = s + rpb[h][None, :, :]
        if masked:
            s = s + maskv
        s = s - jnp.max(s, axis=-1, keepdims=True)
        e = jnp.exp(s)
        p = e * pl.reciprocal(jnp.sum(e, axis=-1, keepdims=True), approx=True)
        attn_scr[:, :, h * Dh:(h + 1) * Dh] = jnp.einsum(
            "wqk,wkd->wqd", p.astype(MATMUL_DTYPE), v,
            preferred_element_type=jnp.float32)

    # --- proj + residual, LN2 + MLP + residual ------------------------------
    a = attn_scr[...]                                    # (WB, N, C) f32
    x1 = _mm(a, wproj_ref[...]) + bproj_ref[...] + x
    y2 = _ln(x1, g2_ref[...], b2_ref[...])
    hdn = _gelu(_mm(y2, wfc1_ref[...]) + bfc1_ref[...])
    out = x1 + _mm(hdn, wfc2_ref[...]) + bfc2_ref[...]
    o_ref[...] = out.astype(o_ref.dtype)


def swin_block_fused(xw, qkv_w, qkv_b, rpb, mask, p, *, num_heads, nW):
    """xw: (BW, N, C) windowed tokens; rpb: (nH, N, N); mask: (nW, N, N)|None."""
    BW, N, C = xw.shape
    Hd = p["fc1_w"].shape[1]
    WB = _window_block(nW, N)
    nblk = nW // WB
    masked = mask is not None

    row3 = lambda i: (i, 0, 0)
    c2 = lambda i: (0, 0)
    c3 = lambda i: (0, 0, 0)

    in_specs = [
        pl.BlockSpec((WB, N, C), row3),
        pl.BlockSpec((1, C), c2), pl.BlockSpec((1, C), c2),          # norm1
        pl.BlockSpec((C, 3 * C), c2), pl.BlockSpec((1, 3 * C), c2),  # qkv
        pl.BlockSpec((num_heads, N, N), c3),                         # rel-pos bias
    ]
    args = [xw, p["norm1_g"].reshape(1, C), p["norm1_b"].reshape(1, C),
            qkv_w, qkv_b.reshape(1, 3 * C), rpb]
    if masked:
        in_specs.append(pl.BlockSpec((WB, N, N), lambda i: (i % nblk, 0, 0)))
        args.append(mask)
    in_specs += [
        pl.BlockSpec((C, C), c2), pl.BlockSpec((1, C), c2),          # proj
        pl.BlockSpec((1, C), c2), pl.BlockSpec((1, C), c2),          # norm2
        pl.BlockSpec((C, Hd), c2), pl.BlockSpec((1, Hd), c2),        # fc1
        pl.BlockSpec((Hd, C), c2), pl.BlockSpec((1, C), c2),         # fc2
    ]
    args += [p["proj_w"], p["proj_b"].reshape(1, C),
             p["norm2_g"].reshape(1, C), p["norm2_b"].reshape(1, C),
             p["fc1_w"], p["fc1_b"].reshape(1, Hd),
             p["fc2_w"], p["fc2_b"].reshape(1, C)]

    return pl.pallas_call(
        partial(_swin_block_kernel, num_heads=num_heads, masked=masked),
        out_shape=jax.ShapeDtypeStruct((BW, N, C), xw.dtype),
        grid=(BW // WB,),
        in_specs=in_specs,
        out_specs=pl.BlockSpec((WB, N, C), row3),
        scratch_shapes=[pltpu.VMEM((WB, N, 3 * C), MATMUL_DTYPE),
                        pltpu.VMEM((WB, N, C), jnp.float32)],
        compiler_params=_cparams(1),
    )(*args)


# ----------------------------------------------------------------------------
# 3x3 conv + RSTB residual: grid over (batch, row bands); 9 taps accumulated
# in (band, W, Cout) via dot_general contracting Cin (no im2col, no per-tap
# token reshapes).  Row halos handled by three row-shifted padded views so
# band blocks never overlap.
# ----------------------------------------------------------------------------
def _conv3x3_kernel(x0_ref, x1_ref, x2_ref, res_ref, w_ref, b_ref, o_ref):
    TH, W, Cout = o_ref.shape[1], o_ref.shape[2], o_ref.shape[3]
    xs = (x0_ref, x1_ref, x2_ref)
    acc = jnp.zeros((TH, W, Cout), jnp.float32)
    for kh in range(3):
        for kw in range(3):
            patch = xs[kh][0, :, kw:kw + W, :]           # (TH, W, Cin) ref slice
            acc = acc + _mm(patch, w_ref[kh, kw])
    acc = acc + b_ref[...]
    o_ref[0] = (acc + res_ref[0].astype(jnp.float32)).astype(o_ref.dtype)


def conv3x3_residual(y_img, res_img, w_oihw, bias):
    """conv3x3(y_img) + res_img.  Both (B, H, W, C); output (B, H, W, Cout)."""
    B, H, W, Cin = y_img.shape
    Cout = w_oihw.shape[0]
    xp = jnp.pad(y_img, ((0, 0), (1, 1), (1, 1), (0, 0)))     # (B, H+2, W+2, Cin)
    x0, x1, x2 = (xp[:, kh:kh + H] for kh in range(3))        # row-shifted views
    wm = jnp.transpose(w_oihw, (2, 3, 1, 0))                  # (3, 3, Cin, Cout)
    TH = _row_band(H, W)

    band_x = lambda b, r: (b, r, 0, 0)
    const4 = lambda b, r: (0, 0, 0, 0)
    return pl.pallas_call(
        _conv3x3_kernel,
        out_shape=jax.ShapeDtypeStruct((B, H, W, Cout), res_img.dtype),
        grid=(B, H // TH),
        in_specs=[
            pl.BlockSpec((1, TH, W + 2, Cin), band_x),
            pl.BlockSpec((1, TH, W + 2, Cin), band_x),
            pl.BlockSpec((1, TH, W + 2, Cin), band_x),
            pl.BlockSpec((1, TH, W, Cout), band_x),
            pl.BlockSpec((3, 3, Cin, Cout), const4),          # resident weights
            pl.BlockSpec((1, Cout), lambda b, r: (0, 0)),
        ],
        out_specs=pl.BlockSpec((1, TH, W, Cout), band_x),
        compiler_params=_cparams(2),
    )(x0, x1, x2, res_img, wm, bias.reshape(1, Cout))


# ----------------------------------------------------------------------------
# Fused 1x1-conv gate + channel-softmax + weighted z/zq combination
# ----------------------------------------------------------------------------
def _gate_kernel(y_ref, z_ref, zq_ref, w_ref, b_ref, o_ref):
    y = y_ref[...].astype(jnp.float32)                   # (TM, 2C)
    w = w_ref[...]                                       # (2, 2C)
    b = b_ref[...]                                       # (1, 2)
    # 2-wide logits via VPU mul + lane reduction (avoids an N=2 MXU matmul).
    l0 = jnp.sum(y * w[0:1, :], axis=-1, keepdims=True) + b[:, 0:1]
    l1 = jnp.sum(y * w[1:2, :], axis=-1, keepdims=True) + b[:, 1:2]
    m = jnp.maximum(l0, l1)
    e0 = jnp.exp(l0 - m)
    e1 = jnp.exp(l1 - m)
    inv = pl.reciprocal(e0 + e1, approx=True)
    o = (e0 * inv) * z_ref[...].astype(jnp.float32) + (e1 * inv) * zq_ref[...].astype(jnp.float32)
    o_ref[...] = o.astype(o_ref.dtype)


def gated_combine(y, z_t, zq_t, w, b):
    """y: (M, 2C), z_t/zq_t: (M, dim), w: (2, 2C), b: (2,) -> (M, dim)."""
    M, C2 = y.shape
    dim = z_t.shape[1]
    TM = min(_ROW_TILE_TARGET, _round_up(M, 8))
    Mp = _round_up(M, TM)
    if Mp != M:                       # padded tail tile (no giant full-M fallback)
        pad = ((0, Mp - M), (0, 0))
        y, z_t, zq_t = jnp.pad(y, pad), jnp.pad(z_t, pad), jnp.pad(zq_t, pad)
    row = lambda i: (i, 0)
    const = lambda i: (0, 0)
    out = pl.pallas_call(
        _gate_kernel,
        out_shape=jax.ShapeDtypeStruct((Mp, dim), z_t.dtype),
        grid=(Mp // TM,),
        in_specs=[
            pl.BlockSpec((TM, C2), row),
            pl.BlockSpec((TM, dim), row),
            pl.BlockSpec((TM, dim), row),
            pl.BlockSpec((2, C2), const),
            pl.BlockSpec((1, 2), const),
        ],
        out_specs=pl.BlockSpec((TM, dim), row),
        compiler_params=_cparams(1),
    )(y, z_t, zq_t, w, b.reshape(1, 2))
    return out[:M]


# ----------------------------------------------------------------------------
# Pure-JAX / numpy glue (window bookkeeping)
# ----------------------------------------------------------------------------
def compute_relative_position_index(ws):
    coords = np.stack(np.meshgrid(np.arange(ws), np.arange(ws), indexing="ij"))
    cf = coords.reshape(2, -1)
    rel = cf[:, :, None] - cf[:, None, :]
    rel = rel.transpose(1, 2, 0).astype(np.int64)
    rel[:, :, 0] += ws - 1
    rel[:, :, 1] += ws - 1
    rel[:, :, 0] *= 2 * ws - 1
    return rel.sum(-1)                                   # (N, N)


def compute_attn_mask(H, W, ws, shift):
    img_mask = np.zeros((1, H, W, 1), np.float32)
    slices = (slice(0, -ws), slice(-ws, -shift), slice(-shift, None))
    cnt = 0
    for h in slices:
        for w in slices:
            img_mask[:, h, w, :] = cnt
            cnt += 1
    mw = img_mask.reshape(1, H // ws, ws, W // ws, ws, 1).transpose(0, 1, 3, 2, 4, 5)
    mw = mw.reshape(-1, ws * ws)                         # (nW, N)
    m = mw[:, None, :] - mw[:, :, None]                  # (nW, N, N)
    return np.where(m != 0, -100.0, 0.0).astype(np.float32)


def window_partition_jax(x, ws):
    B, H, W, C = x.shape
    x = x.reshape(B, H // ws, ws, W // ws, ws, C).transpose(0, 1, 3, 2, 4, 5)
    return x.reshape(-1, ws * ws, C)


def window_reverse_jax(windows, ws, H, W, B, C):
    x = windows.reshape(B, H // ws, W // ws, ws, ws, C).transpose(0, 1, 3, 2, 4, 5)
    return x.reshape(B, H, W, C)


# ----------------------------------------------------------------------------
# Swin blocks (forward-only; drop / drop_path = 0 -> identity)
# ----------------------------------------------------------------------------
def swin_block_forward(x, p, H, W, ws, shift, num_heads, rel_idx, attn_mask):
    B, L, C = x.shape
    N = ws * ws
    nW = (H // ws) * (W // ws)
    Dh = C // num_heads
    scale = Dh ** -0.5

    # Permute tokens into (shifted) window order; LN/linear/MLP are row-wise
    # so the whole fused block commutes with this permutation.
    xi = x.reshape(B, H, W, C)
    if shift > 0:
        xi = jnp.roll(xi, shift=(-shift, -shift), axis=(1, 2))
    xw = window_partition_jax(xi, ws)                    # (BW, N, C)

    # Fold the attention scale into the q columns of the QKV projection.
    scale_row = jnp.concatenate([jnp.full((C,), scale, jnp.float32),
                                 jnp.ones((2 * C,), jnp.float32)])
    qkv_w = p["qkv_w"] * scale_row[None, :]
    qkv_b = p["qkv_b"] * scale_row

    # Relative-position bias (nH, N, N); tiny gather, once per block.
    rpb = p["rpb_table"][rel_idx.reshape(-1)].reshape(N, N, num_heads)
    rpb = jnp.transpose(rpb, (2, 0, 1)).astype(jnp.float32)
    mask = attn_mask if shift > 0 else None              # (nW, N, N) or None

    yw = swin_block_fused(xw, qkv_w, qkv_b, rpb, mask, p,
                          num_heads=num_heads, nW=nW)    # (BW, N, C)

    y = window_reverse_jax(yw, ws, H, W, B, C)
    if shift > 0:
        y = jnp.roll(y, shift=(shift, shift), axis=(1, 2))
    return y.reshape(B, L, C)


def rstb_forward(x, p, H, W, ws, shift_val, num_heads, rel_idx, attn_mask):
    B, L, C = x.shape
    y = x
    for i, blk in enumerate(p["blocks"]):
        shift = 0 if i % 2 == 0 else shift_val
        y = swin_block_forward(y, blk, H, W, ws, shift, num_heads, rel_idx, attn_mask)
    out_img = conv3x3_residual(y.reshape(B, H, W, C), x.reshape(B, H, W, C),
                               p["conv_w"], p["conv_b"])
    return out_img.reshape(B, L, C)


def rac_forward(z, zq, params, *, window_size, num_heads):
    B, dim, H, W = z.shape
    C = 2 * dim
    L = H * W
    # SwinTransformerBlock.__init__ rule: shrink window / disable shift for tiny inputs.
    if min(H, W) <= window_size:
        ws, shift_val = min(H, W), 0
    else:
        ws, shift_val = window_size, window_size // 2
    rel_idx = compute_relative_position_index(ws)                      # numpy const
    attn_mask = (jnp.asarray(compute_attn_mask(H, W, ws, shift_val))
                 if shift_val > 0 else None)                           # (nW, N, N)

    cat = jnp.concatenate([z, zq], axis=1)               # (B, 2*dim, H, W)
    x = cat.reshape(B, C, L).transpose(0, 2, 1)          # (B, L, C) tokens

    for rstb in params["swin_blocks"]:
        x = rstb_forward(x, rstb, H, W, ws, shift_val, num_heads, rel_idx, attn_mask)

    z_t = z.reshape(B, dim, L).transpose(0, 2, 1).reshape(B * L, dim)
    zq_t = zq.reshape(B, dim, L).transpose(0, 2, 1).reshape(B * L, dim)
    out_t = gated_combine(x.reshape(B * L, C), z_t, zq_t,
                          params["conv1x1_w"], params["conv1x1_b"])
    return out_t.reshape(B, L, dim).transpose(0, 2, 1).reshape(B, dim, H, W)


# ----------------------------------------------------------------------------
# Deterministic parameter initialization (shapes from RACMoudle2.__init__)
# ----------------------------------------------------------------------------
def init_params(key, dim, input_resolution, depth, num_heads, window_size, mlp_ratio=4.0):
    C = dim * 2
    hidden = int(C * mlp_ratio)
    ws_eff = min(min(input_resolution), window_size)
    n_rel = (2 * ws_eff - 1) ** 2
    keys = iter(jax.random.split(key, 256))

    def nrm(shape, std=0.02):
        return std * jax.random.normal(next(keys), shape, dtype=jnp.float32)

    params = {"swin_blocks": []}
    for _ in range(2):  # two ResidualSwinTransformerBlocks
        blocks = []
        for _ in range(depth):
            blocks.append({
                "norm1_g": jnp.ones((C,), jnp.float32),
                "norm1_b": jnp.zeros((C,), jnp.float32),
                "qkv_w": nrm((C, 3 * C)),
                "qkv_b": nrm((3 * C,)),
                "proj_w": nrm((C, C)),
                "proj_b": nrm((C,)),
                "rpb_table": nrm((n_rel, num_heads)),
                "norm2_g": jnp.ones((C,), jnp.float32),
                "norm2_b": jnp.zeros((C,), jnp.float32),
                "fc1_w": nrm((C, hidden)),
                "fc1_b": nrm((hidden,)),
                "fc2_w": nrm((hidden, C)),
                "fc2_b": nrm((C,)),
            })
        params["swin_blocks"].append({
            "blocks": blocks,
            "conv_w": nrm((C, C, 3, 3)),     # PyTorch Conv2d (Cout, Cin, kh, kw)
            "conv_b": nrm((C,)),
        })
    params["conv1x1_w"] = nrm((2, C))        # (2, C, 1, 1) conv stored as (2, C)
    params["conv1x1_b"] = nrm((2,))
    return params


# ----------------------------------------------------------------------------
if __name__ == "__main__":
    # RACMoudle2(dim=4, input_resolution=(8,8), depth=2, num_heads=2, window_size=4)
    dim, H, W, B = 4, 8, 8, 2
    depth, num_heads, window_size = 2, 2, 4

    key = jax.random.PRNGKey(0)
    kz, kzq, kp = jax.random.split(key, 3)
    z = jax.random.normal(kz, (B, dim, H, W), dtype=jnp.float32)
    zq = jax.random.normal(kzq, (B, dim, H, W), dtype=jnp.float32)
    params = init_params(kp, dim, (H, W), depth, num_heads, window_size)

    fwd = jax.jit(partial(rac_forward, window_size=window_size, num_heads=num_heads))
    out = jax.block_until_ready(fwd(z, zq, params))

    assert out.shape == (B, dim, H, W), out.shape
    assert bool(jnp.all(jnp.isfinite(out)))
    print("KERNEL_OK")
</pallas_src>

<mosaic_0001>
module attributes {stable_mosaic.version = 11 : i64} {
  func.func @_swin_block_kernel(%arg0: i32, %arg1: memref<4x16x8xf32, #tpu.memory_space<vmem>>, %arg2: memref<1x8xf32, #tpu.memory_space<vmem>>, %arg3: memref<1x8xf32, #tpu.memory_space<vmem>>, %arg4: memref<8x24xf32, #tpu.memory_space<vmem>>, %arg5: memref<1x24xf32, #tpu.memory_space<vmem>>, %arg6: memref<2x16x16xf32, #tpu.memory_space<vmem>>, %arg7: memref<8x8xf32, #tpu.memory_space<vmem>>, %arg8: memref<1x8xf32, #tpu.memory_space<vmem>>, %arg9: memref<1x8xf32, #tpu.memory_space<vmem>>, %arg10: memref<1x8xf32, #tpu.memory_space<vmem>>, %arg11: memref<8x32xf32, #tpu.memory_space<vmem>>, %arg12: memref<1x32xf32, #tpu.memory_space<vmem>>, %arg13: memref<32x8xf32, #tpu.memory_space<vmem>>, %arg14: memref<1x8xf32, #tpu.memory_space<vmem>>, %arg15: memref<4x16x8xf32, #tpu.memory_space<vmem>>, %arg16: memref<4x16x24xbf16, #tpu.memory_space<vmem>>, %arg17: memref<4x16x8xf32, #tpu.memory_space<vmem>>) attributes {dimension_semantics = [#tpu.dimension_semantics<parallel>], iteration_bounds = array<i64: 2>, scalar_prefetch = 0 : i64, scratch_operands = 2 : i64, tpu.core_type = #tpu.core_type<tc>, window_params = [{transform_indices = @transform_0, window_bounds = array<i64: 4, 16, 8>}, {pipeline_mode = #tpu.pipeline_mode<synchronous>, transform_indices = @transform_1, window_bounds = array<i64: 1, 8>}, {pipeline_mode = #tpu.pipeline_mode<synchronous>, transform_indices = @transform_2, window_bounds = array<i64: 1, 8>}, {pipeline_mode = #tpu.pipeline_mode<synchronous>, transform_indices = @transform_3, window_bounds = array<i64: 8, 24>}, {pipeline_mode = #tpu.pipeline_mode<synchronous>, transform_indices = @transform_4, window_bounds = array<i64: 1, 24>}, {pipeline_mode = #tpu.pipeline_mode<synchronous>, transform_indices = @transform_5, window_bounds = array<i64: 2, 16, 16>}, {pipeline_mode = #tpu.pipeline_mode<synchronous>, transform_indices = @transform_6, window_bounds = array<i64: 8, 8>}, {pipeline_mode = #tpu.pipeline_mode<synchronous>, transform_indices = @transform_7, window_bounds = array<i64: 1, 8>}, {pipeline_mode = #tpu.pipeline_mode<synchronous>, transform_indices = @transform_8, window_bounds = array<i64: 1, 8>}, {pipeline_mode = #tpu.pipeline_mode<synchronous>, transform_indices = @transform_9, window_bounds = array<i64: 1, 8>}, {pipeline_mode = #tpu.pipeline_mode<synchronous>, transform_indices = @transform_10, window_bounds = array<i64: 8, 32>}, {pipeline_mode = #tpu.pipeline_mode<synchronous>, transform_indices = @transform_11, window_bounds = array<i64: 1, 32>}, {pipeline_mode = #tpu.pipeline_mode<synchronous>, transform_indices = @transform_12, window_bounds = array<i64: 32, 8>}, {pipeline_mode = #tpu.pipeline_mode<synchronous>, transform_indices = @transform_13, window_bounds = array<i64: 1, 8>}, {transform_indices = @transform_14, window_bounds = array<i64: 4, 16, 8>}]} {
    %c0 = arith.constant 0 : index
    %c0_0 = arith.constant 0 : index
    %c0_1 = arith.constant 0 : index
    %0 = vector.load %arg1[%c0, %c0_0, %c0_1] : memref<4x16x8xf32, #tpu.memory_space<vmem>>, vector<4x16x8xf32>
    %c0_2 = arith.constant 0 : index
    %c0_3 = arith.constant 0 : index
    %1 = vector.load %arg2[%c0_2, %c0_3] : memref<1x8xf32, #tpu.memory_space<vmem>>, vector<1x8xf32>
    %c0_4 = arith.constant 0 : index
    %c0_5 = arith.constant 0 : index
    %2 = vector.load %arg3[%c0_4, %c0_5] : memref<1x8xf32, #tpu.memory_space<vmem>>, vector<1x8xf32>
    %cst = arith.constant dense<0.000000e+00> : vector<4x16xf32>
    %3 = vector.multi_reduction <add>, %0, %cst [2] : vector<4x16x8xf32> to vector<4x16xf32>
    %4 = vector.shape_cast %3 : vector<4x16xf32> to vector<4x16x1xf32>
    %cst_6 = arith.constant 8.000000e+00 : f32
    %5 = vector.broadcast %cst_6 : f32 to vector<4x16x1xf32>
    %6 = arith.divf %4, %5 : vector<4x16x1xf32>
    %7 = vector.broadcast %6 : vector<4x16x1xf32> to vector<4x16x8xf32>
    %8 = arith.subf %0, %7 : vector<4x16x8xf32>
    %9 = arith.mulf %8, %8 : vector<4x16x8xf32>
    %cst_7 = arith.constant dense<0.000000e+00> : vector<4x16xf32>
    %10 = vector.multi_reduction <add>, %9, %cst_7 [2] : vector<4x16x8xf32> to vector<4x16xf32>
    %11 = vector.shape_cast %10 : vector<4x16xf32> to vector<4x16x1xf32>
    %cst_8 = arith.constant 8.000000e+00 : f32
    %12 = vector.broadcast %cst_8 : f32 to vector<4x16x1xf32>
    %13 = arith.divf %11, %12 : vector<4x16x1xf32>
    %cst_9 = arith.constant 9.99999974E-6 : f32
    %14 = vector.broadcast %cst_9 : f32 to vector<4x16x1xf32>
    %15 = arith.addf %13, %14 : vector<4x16x1xf32>
    %16 = math.rsqrt %15 : vector<4x16x1xf32>
    %17 = vector.broadcast %16 : vector<4x16x1xf32> to vector<4x16x8xf32>
    %18 = arith.mulf %8, %17 : vector<4x16x8xf32>
    %19 = vector.shape_cast %1 : vector<1x8xf32> to vector<1x1x8xf32>
    %20 = vector.broadcast %19 : vector<1x1x8xf32> to vector<4x16x8xf32>
    %21 = arith.mulf %18, %20 : vector<4x16x8xf32>
    %22 = vector.shape_cast %2 : vector<1x8xf32> to vector<1x1x8xf32>
    %23 = vector.broadcast %22 : vector<1x1x8xf32> to vector<4x16x8xf32>
    %24 = arith.addf %21, %23 : vector<4x16x8xf32>
    %c0_10 = arith.constant 0 : index
    %c0_11 = arith.constant 0 : index
    %25 = vector.load %arg4[%c0_10, %c0_11] : memref<8x24xf32, #tpu.memory_space<vmem>>, vector<8x24xf32>
    %26 = arith.truncf %24 : vector<4x16x8xf32> to vector<4x16x8xbf16>
    %27 = arith.truncf %25 : vector<8x24xf32> to vector<8x24xbf16>
    %cst_12 = arith.constant dense<0.000000e+00> : vector<4x16x24xf32>
    %28 = tpu.matmul %26, %27, %cst_12 {dimension_numbers = #tpu.dot_dimension_numbers<[2], [0], [0, 1], [1], [0, 0, 0, 1, 1, 1], [], []>} : vector<4x16x8xbf16>, vector<8x24xbf16>, vector<4x16x24xf32> -> vector<4x16x24xf32>
    %c0_13 = arith.constant 0 : index
    %c0_14 = arith.constant 0 : index
    %29 = vector.load %arg5[%c0_13, %c0_14] : memref<1x24xf32, #tpu.memory_space<vmem>>, vector<1x24xf32>
    %30 = vector.shape_cast %29 : vector<1x24xf32> to vector<1x1x24xf32>
    %31 = vector.broadcast %30 : vector<1x1x24xf32> to vector<4x16x24xf32>
    %32 = arith.addf %28, %31 : vector<4x16x24xf32>
    %33 = arith.truncf %32 : vector<4x16x24xf32> to vector<4x16x24xbf16>
    %c0_15 = arith.constant 0 : index
    %c0_16 = arith.constant 0 : index
    %c0_17 = arith.constant 0 : index
    %34 = vector.load %arg16[%c0_15, %c0_16, %c0_17] : memref<4x16x24xbf16, #tpu.memory_space<vmem>>, vector<4x16x24xbf16>
    tpu.vector_store %arg16[%c0_15, %c0_16, %c0_17], %33 {strides = array<i32>} : memref<4x16x24xbf16, #tpu.memory_space<vmem>>, vector<4x16x24xbf16>,
    %c0_18 = arith.constant 0 : index
    %c0_19 = arith.constant 0 : index
    %c0_20 = arith.constant 0 : index
    %35 = vector.load %arg6[%c0_18, %c0_19, %c0_20] : memref<2x16x16xf32, #tpu.memory_space<vmem>>, vector<2x16x16xf32>
    %c0_21 = arith.constant 0 : index
    %c0_22 = arith.constant 0 : index
    %c0_23 = arith.constant 0 : index
    %36 = vector.load %arg16[%c0_21, %c0_22, %c0_23] : memref<4x16x24xbf16, #tpu.memory_space<vmem>>, vector<4x16x4xbf16>
    %c0_24 = arith.constant 0 : index
    %c0_25 = arith.constant 0 : index
    %c8 = arith.constant 8 : index
    %37 = vector.load %arg16[%c0_24, %c0_25, %c8] : memref<4x16x24xbf16, #tpu.memory_space<vmem>>, vector<4x16x4xbf16>
    %c0_26 = arith.constant 0 : index
    %c0_27 = arith.constant 0 : index
    %c16 = arith.constant 16 : index
    %38 = vector.load %arg16[%c0_26, %c0_27, %c16] : memref<4x16x24xbf16, #tpu.memory_space<vmem>>, vector<4x16x4xbf16>
    "tpu.trace_start"() <{level = 10 : i32, message = "wqd,wkd->wqk"}> : () -> ()
    %cst_28 = arith.constant dense<0.000000e+00> : vector<4x16x16xf32>
    %39 = tpu.matmul %36, %37, %cst_28 {dimension_numbers = #tpu.dot_dimension_numbers<[2], [2], [1], [1], [0, 0, 0, 1, 1, 1], [0], [0]>} : vector<4x16x4xbf16>, vector<4x16x4xbf16>, vector<4x16x16xf32> -> vector<4x16x16xf32>
    "tpu.trace_stop"() : () -> ()
    %40 = vector.extract_strided_slice %35 {offsets = [0, 0, 0], sizes = [1, 16, 16], strides = [1, 1, 1]} : vector<2x16x16xf32> to vector<1x16x16xf32>
    %41 = vector.shape_cast %40 : vector<1x16x16xf32> to vector<16x16xf32>
    %42 = vector.shape_cast %41 : vector<16x16xf32> to vector<1x16x16xf32>
    %43 = vector.broadcast %42 : vector<1x16x16xf32> to vector<4x16x16xf32>
    %44 = arith.addf %39, %43 : vector<4x16x16xf32>
    %cst_29 = arith.constant dense<0xFF800000> : vector<4x16xf32>
    %45 = vector.multi_reduction <maximumf>, %44, %cst_29 [2] : vector<4x16x16xf32> to vector<4x16xf32>
    %46 = vector.shape_cast %45 : vector<4x16xf32> to vector<4x16x1xf32>
    %47 = vector.broadcast %46 : vector<4x16x1xf32> to vector<4x16x16xf32>
    %48 = arith.subf %44, %47 : vector<4x16x16xf32>
    %49 = math.exp %48 : vector<4x16x16xf32>
    %cst_30 = arith.constant dense<0.000000e+00> : vector<4x16xf32>
    %50 = vector.multi_reduction <add>, %49, %cst_30 [2] : vector<4x16x16xf32> to vector<4x16xf32>
    %51 = vector.shape_cast %50 : vector<4x16xf32> to vector<4x16x1xf32>
    %52 = tpu.reciprocal %51 {approx = true} : vector<4x16x1xf32> -> vector<4x16x1xf32>
    %53 = vector.broadcast %52 : vector<4x16x1xf32> to vector<4x16x16xf32>
    %54 = arith.mulf %49, %53 : vector<4x16x16xf32>
    %55 = arith.truncf %54 : vector<4x16x16xf32> to vector<4x16x16xbf16>
    "tpu.trace_start"() <{level = 10 : i32, message = "wqk,wkd->wqd"}> : () -> ()
    %cst_31 = arith.constant dense<0.000000e+00> : vector<4x16x4xf32>
    %56 = tpu.matmul %55, %38, %cst_31 {dimension_numbers = #tpu.dot_dimension_numbers<[2], [1], [1], [2], [0, 0, 0, 1, 1, 2], [0], [0]>} : vector<4x16x16xbf16>, vector<4x16x4xbf16>, vector<4x16x4xf32> -> vector<4x16x4xf32>
    "tpu.trace_stop"() : () -> ()
    %c0_32 = arith.constant 0 : index
    %c0_33 = arith.constant 0 : index
    %c0_34 = arith.constant 0 : index
    %57 = vector.load %arg17[%c0_32, %c0_33, %c0_34] : memref<4x16x8xf32, #tpu.memory_space<vmem>>, vector<4x16x4xf32>
    tpu.vector_store %arg17[%c0_32, %c0_33, %c0_34], %56 {strides = array<i32>} : memref<4x16x8xf32, #tpu.memory_space<vmem>>, vector<4x16x4xf32>,
    %c0_35 = arith.constant 0 : index
    %c0_36 = arith.constant 0 : index
    %c4 = arith.constant 4 : index
    %58 = vector.load %arg16[%c0_35, %c0_36, %c4] : memref<4x16x24xbf16, #tpu.memory_space<vmem>>, vector<4x16x4xbf16>
    %c0_37 = arith.constant 0 : index
    %c0_38 = arith.constant 0 : index
    %c12 = arith.constant 12 : index
    %59 = vector.load %arg16[%c0_37, %c0_38, %c12] : memref<4x16x24xbf16, #tpu.memory_space<vmem>>, vector<4x16x4xbf16>
    %c0_39 = arith.constant 0 : index
    %c0_40 = arith.constant 0 : index
    %c20 = arith.constant 20 : index
    %60 = vector.load %arg16[%c0_39, %c0_40, %c20] : memref<4x16x24xbf16, #tpu.memory_space<vmem>>, vector<4x16x4xbf16>
    "tpu.trace_start"() <{level = 10 : i32, message = "wqd,wkd->wqk"}> : () -> ()
    %cst_41 = arith.constant dense<0.000000e+00> : vector<4x16x16xf32>
    %61 = tpu.matmul %58, %59, %cst_41 {dimension_numbers = #tpu.dot_dimension_numbers<[2], [2], [1], [1], [0, 0, 0, 1, 1, 1], [0], [0]>} : vector<4x16x4xbf16>, vector<4x16x4xbf16>, vector<4x16x16xf32> -> vector<4x16x16xf32>
    "tpu.trace_stop"() : () -> ()
    %62 = vector.extract_strided_slice %35 {offsets = [1, 0, 0], sizes = [1, 16, 16], strides = [1, 1, 1]} : vector<2x16x16xf32> to vector<1x16x16xf32>
    %63 = vector.shape_cast %62 : vector<1x16x16xf32> to vector<16x16xf32>
    %64 = vector.shape_cast %63 : vector<16x16xf32> to vector<1x16x16xf32>
    %65 = vector.broadcast %64 : vector<1x16x16xf32> to vector<4x16x16xf32>
    %66 = arith.addf %61, %65 : vector<4x16x16xf32>
    %cst_42 = arith.constant dense<0xFF800000> : vector<4x16xf32>
    %67 = vector.multi_reduction <maximumf>, %66, %cst_42 [2] : vector<4x16x16xf32> to vector<4x16xf32>
    %68 = vector.shape_cast %67 : vector<4x16xf32> to vector<4x16x1xf32>
    %69 = vector.broadcast %68 : vector<4x16x1xf32> to vector<4x16x16xf32>
    %70 = arith.subf %66, %69 : vector<4x16x16xf32>
    %71 = math.exp %70 : vector<4x16x16xf32>
    %cst_43 = arith.constant dense<0.000000e+00> : vector<4x16xf32>
    %72 = vector.multi_reduction <add>, %71, %cst_43 [2] : vector<4x16x16xf32> to vector<4x16xf32>
    %73 = vector.shape_cast %72 : vector<4x16xf32> to vector<4x16x1xf32>
    %74 = tpu.reciprocal %73 {approx = true} : vector<4x16x1xf32> -> vector<4x16x1xf32>
    %75 = vector.broadcast %74 : vector<4x16x1xf32> to vector<4x16x16xf32>
    %76 = arith.mulf %71, %75 : vector<4x16x16xf32>
    %77 = arith.truncf %76 : vector<4x16x16xf32> to vector<4x16x16xbf16>
    "tpu.trace_start"() <{level = 10 : i32, message = "wqk,wkd->wqd"}> : () -> ()
    %cst_44 = arith.constant dense<0.000000e+00> : vector<4x16x4xf32>
    %78 = tpu.matmul %77, %60, %cst_44 {dimension_numbers = #tpu.dot_dimension_numbers<[2], [1], [1], [2], [0, 0, 0, 1, 1, 2], [0], [0]>} : vector<4x16x16xbf16>, vector<4x16x4xbf16>, vector<4x16x4xf32> -> vector<4x16x4xf32>
    "tpu.trace_stop"() : () -> ()
    %c0_45 = arith.constant 0 : index
    %c0_46 = arith.constant 0 : index
    %c4_47 = arith.constant 4 : index
    %79 = vector.load %arg17[%c0_45, %c0_46, %c4_47] : memref<4x16x8xf32, #tpu.memory_space<vmem>>, vector<4x16x4xf32>
    tpu.vector_store %arg17[%c0_45, %c0_46, %c4_47], %78 {strides = array<i32>} : memref<4x16x8xf32, #tpu.memory_space<vmem>>, vector<4x16x4xf32>,
    %c0_48 = arith.constant 0 : index
    %c0_49 = arith.constant 0 : index
    %c0_50 = arith.constant 0 : index
    %80 = vector.load %arg17[%c0_48, %c0_49, %c0_50] : memref<4x16x8xf32, #tpu.memory_space<vmem>>, vector<4x16x8xf32>
    %c0_51 = arith.constant 0 : index
    %c0_52 = arith.constant 0 : index
    %81 = vector.load %arg7[%c0_51, %c0_52] : memref<8x8xf32, #tpu.memory_space<vmem>>, vector<8x8xf32>
    %82 = arith.truncf %80 : vector<4x16x8xf32> to vector<4x16x8xbf16>
    %83 = arith.truncf %81 : vector<8x8xf32> to vector<8x8xbf16>
    %cst_53 = arith.constant dense<0.000000e+00> : vector<4x16x8xf32>
    %84 = tpu.matmul %82, %83, %cst_53 {dimension_numbers = #tpu.dot_dimension_numbers<[2], [0], [0, 1], [1], [0, 0, 0, 1, 1, 1], [], []>} : vector<4x16x8xbf16>, vector<8x8xbf16>, vector<4x16x8xf32> -> vector<4x16x8xf32>
    %c0_54 = arith.constant 0 : index
    %c0_55 = arith.constant 0 : index
    %85 = vector.load %arg8[%c0_54, %c0_55] : memref<1x8xf32, #tpu.memory_space<vmem>>, vector<1x8xf32>
    %86 = vector.shape_cast %85 : vector<1x8xf32> to vector<1x1x8xf32>
    %87 = vector.broadcast %86 : vector<1x1x8xf32> to vector<4x16x8xf32>
    %88 = arith.addf %84, %87 : vector<4x16x8xf32>
    %89 = arith.addf %88, %0 : vector<4x16x8xf32>
    %c0_56 = arith.constant 0 : index
    %c0_57 = arith.constant 0 : index
    %90 = vector.load %arg9[%c0_56, %c0_57] : memref<1x8xf32, #tpu.memory_space<vmem>>, vector<1x8xf32>
    %c0_58 = arith.constant 0 : index
    %c0_59 = arith.constant 0 : index
    %91 = vector.load %arg10[%c0_58, %c0_59] : memref<1x8xf32, #tpu.memory_space<vmem>>, vector<1x8xf32>
    %cst_60 = arith.constant dense<0.000000e+00> : vector<4x16xf32>
    %92 = vector.multi_reduction <add>, %89, %cst_60 [2] : vector<4x16x8xf32> to vector<4x16xf32>
    %93 = vector.shape_cast %92 : vector<4x16xf32> to vector<4x16x1xf32>
    %cst_61 = arith.constant 8.000000e+00 : f32
    %94 = vector.broadcast %cst_61 : f32 to vector<4x16x1xf32>
    %95 = arith.divf %93, %94 : vector<4x16x1xf32>
    %96 = vector.broadcast %95 : vector<4x16x1xf32> to vector<4x16x8xf32>
    %97 = arith.subf %89, %96 : vector<4x16x8xf32>
    %98 = arith.mulf %97, %97 : vector<4x16x8xf32>
    %cst_62 = arith.constant dense<0.000000e+00> : vector<4x16xf32>
    %99 = vector.multi_reduction <add>, %98, %cst_62 [2] : vector<4x16x8xf32> to vector<4x16xf32>
    %100 = vector.shape_cast %99 : vector<4x16xf32> to vector<4x16x1xf32>
    %cst_63 = arith.constant 8.000000e+00 : f32
    %101 = vector.broadcast %cst_63 : f32 to vector<4x16x1xf32>
    %102 = arith.divf %100, %101 : vector<4x16x1xf32>
    %cst_64 = arith.constant 9.99999974E-6 : f32
    %103 = vector.broadcast %cst_64 : f32 to vector<4x16x1xf32>
    %104 = arith.addf %102, %103 : vector<4x16x1xf32>
    %105 = math.rsqrt %104 : vector<4x16x1xf32>
    %106 = vector.broadcast %105 : vector<4x16x1xf32> to vector<4x16x8xf32>
    %107 = arith.mulf %97, %106 : vector<4x16x8xf32>
    %108 = vector.shape_cast %90 : vector<1x8xf32> to vector<1x1x8xf32>
    %109 = vector.broadcast %108 : vector<1x1x8xf32> to vector<4x16x8xf32>
    %110 = arith.mulf %107, %109 : vector<4x16x8xf32>
    %111 = vector.shape_cast %91 : vector<1x8xf32> to vector<1x1x8xf32>
    %112 = vector.broadcast %111 : vector<1x1x8xf32> to vector<4x16x8xf32>
    %113 = arith.addf %110, %112 : vector<4x16x8xf32>
    %c0_65 = arith.constant 0 : index
    %c0_66 = arith.constant 0 : index
    %114 = vector.load %arg11[%c0_65, %c0_66] : memref<8x32xf32, #tpu.memory_space<vmem>>, vector<8x32xf32>
    %115 = arith.truncf %113 : vector<4x16x8xf32> to vector<4x16x8xbf16>
    %116 = arith.truncf %114 : vector<8x32xf32> to vector<8x32xbf16>
    %cst_67 = arith.constant dense<0.000000e+00> : vector<4x16x32xf32>
    %117 = tpu.matmul %115, %116, %cst_67 {dimension_numbers = #tpu.dot_dimension_numbers<[2], [0], [0, 1], [1], [0, 0, 0, 1, 1, 1], [], []>} : vector<4x16x8xbf16>, vector<8x32xbf16>, vector<4x16x32xf32> -> vector<4x16x32xf32>
    %c0_68 = arith.constant 0 : index
    %c0_69 = arith.constant 0 : index
    %118 = vector.load %arg12[%c0_68, %c0_69] : memref<1x32xf32, #tpu.memory_space<vmem>>, vector<1x32xf32>
    %119 = vector.shape_cast %118 : vector<1x32xf32> to vector<1x1x32xf32>
    %120 = vector.broadcast %119 : vector<1x1x32xf32> to vector<4x16x32xf32>
    %121 = arith.addf %117, %120 : vector<4x16x32xf32>
    %cst_70 = arith.constant 5.000000e-01 : f32
    %122 = vector.broadcast %cst_70 : f32 to vector<4x16x32xf32>
    %123 = arith.mulf %122, %121 : vector<4x16x32xf32>
    %cst_71 = arith.constant 4.471500e-02 : f32
    %124 = vector.broadcast %cst_71 : f32 to vector<4x16x32xf32>
    %125 = arith.mulf %124, %121 : vector<4x16x32xf32>
    %126 = arith.mulf %125, %121 : vector<4x16x32xf32>
    %127 = arith.mulf %126, %121 : vector<4x16x32xf32>
    %128 = arith.addf %121, %127 : vector<4x16x32xf32>
    %cst_72 = arith.constant 0.797884583 : f32
    %129 = vector.broadcast %cst_72 : f32 to vector<4x16x32xf32>
    %130 = arith.mulf %129, %128 : vector<4x16x32xf32>
    %131 = math.tanh %130 : vector<4x16x32xf32>
    %cst_73 = arith.constant 1.000000e+00 : f32
    %132 = vector.broadcast %cst_73 : f32 to vector<4x16x32xf32>
    %133 = arith.addf %132, %131 : vector<4x16x32xf32>
    %134 = arith.mulf %123, %133 : vector<4x16x32xf32>
    %c0_74 = arith.constant 0 : index
    %c0_75 = arith.constant 0 : index
    %135 = vector.load %arg13[%c0_74, %c0_75] : memref<32x8xf32, #tpu.memory_space<vmem>>, vector<32x8xf32>
    %136 = arith.truncf %134 : vector<4x16x32xf32> to vector<4x16x32xbf16>
    %137 = arith.truncf %135 : vector<32x8xf32> to vector<32x8xbf16>
    %cst_76 = arith.constant dense<0.000000e+00> : vector<4x16x8xf32>
    %138 = tpu.matmul %136, %137, %cst_76 {dimension_numbers = #tpu.dot_dimension_numbers<[2], [0], [0, 1], [1], [0, 0, 0, 1, 1, 1], [], []>} : vector<4x16x32xbf16>, vector<32x8xbf16>, vector<4x16x8xf32> -> vector<4x16x8xf32>
    %139 = arith.addf %89, %138 : vector<4x16x8xf32>
    %c0_77 = arith.constant 0 : index
    %c0_78 = arith.constant 0 : index
    %140 = vector.load %arg14[%c0_77, %c0_78] : memref<1x8xf32, #tpu.memory_space<vmem>>, vector<1x8xf32>
    %141 = vector.shape_cast %140 : vector<1x8xf32> to vector<1x1x8xf32>
    %142 = vector.broadcast %141 : vector<1x1x8xf32> to vector<4x16x8xf32>
    %143 = arith.addf %139, %142 : vector<4x16x8xf32>
    %c0_79 = arith.constant 0 : index
    %c0_80 = arith.constant 0 : index
    %c0_81 = arith.constant 0 : index
    %144 = vector.load %arg15[%c0_79, %c0_80, %c0_81] : memref<4x16x8xf32, #tpu.memory_space<vmem>>, vector<4x16x8xf32>
    tpu.vector_store %arg15[%c0_79, %c0_80, %c0_81], %143 {strides = array<i32>} : memref<4x16x8xf32, #tpu.memory_space<vmem>>, vector<4x16x8xf32>,
    return
  }
  func.func @transform_0(%arg0: i32) -> (i32, i32, i32) {
    %c0_i32 = arith.constant 0 : i32
    %c0_i32_0 = arith.constant 0 : i32
    %c0_i32_1 = arith.constant 0 : i32
    return %arg0, %c0_i32, %c0_i32_0 : i32, i32, i32
  }
  func.func @transform_1(%arg0: i32) -> (i32, i32) {
    %c0_i32 = arith.constant 0 : i32
    %c0_i32_0 = arith.constant 0 : i32
    %c0_i32_1 = arith.constant 0 : i32
    return %c0_i32, %c0_i32_0 : i32, i32
  }
  func.func @transform_2(%arg0: i32) -> (i32, i32) {
    %c0_i32 = arith.constant 0 : i32
    %c0_i32_0 = arith.constant 0 : i32
    %c0_i32_1 = arith.constant 0 : i32
    return %c0_i32, %c0_i32_0 : i32, i32
  }
  func.func @transform_3(%arg0: i32) -> (i32, i32) {
    %c0_i32 = arith.constant 0 : i32
    %c0_i32_0 = arith.constant 0 : i32
    %c0_i32_1 = arith.constant 0 : i32
    return %c0_i32, %c0_i32_0 : i32, i32
  }
  func.func @transform_4(%arg0: i32) -> (i32, i32) {
    %c0_i32 = arith.constant 0 : i32
    %c0_i32_0 = arith.constant 0 : i32
    %c0_i32_1 = arith.constant 0 : i32
    return %c0_i32, %c0_i32_0 : i32, i32
  }
  func.func @transform_5(%arg0: i32) -> (i32, i32, i32) {
    %c0_i32 = arith.constant 0 : i32
    %c0_i32_0 = arith.constant 0 : i32
    %c0_i32_1 = arith.constant 0 : i32
    %c0_i32_2 = arith.constant 0 : i32
    return %c0_i32, %c0_i32_0, %c0_i32_1 : i32, i32, i32
  }
  func.func @transform_6(%arg0: i32) -> (i32, i32) {
    %c0_i32 = arith.constant 0 : i32
    %c0_i32_0 = arith.constant 0 : i32
    %c0_i32_1 = arith.constant 0 : i32
    return %c0_i32, %c0_i32_0 : i32, i32
  }
  func.func @transform_7(%arg0: i32) -> (i32, i32) {
    %c0_i32 = arith.constant 0 : i32
    %c0_i32_0 = arith.constant 0 : i32
    %c0_i32_1 = arith.constant 0 : i32
    return %c0_i32, %c0_i32_0 : i32, i32
  }
  func.func @transform_8(%arg0: i32) -> (i32, i32) {
    %c0_i32 = arith.constant 0 : i32
    %c0_i32_0 = arith.constant 0 : i32
    %c0_i32_1 = arith.constant 0 : i32
    return %c0_i32, %c0_i32_0 : i32, i32
  }
  func.func @transform_9(%arg0: i32) -> (i32, i32) {
    %c0_i32 = arith.constant 0 : i32
    %c0_i32_0 = arith.constant 0 : i32
    %c0_i32_1 = arith.constant 0 : i32
    return %c0_i32, %c0_i32_0 : i32, i32
  }
  func.func @transform_10(%arg0: i32) -> (i32, i32) {
    %c0_i32 = arith.constant 0 : i32
    %c0_i32_0 = arith.constant 0 : i32
    %c0_i32_1 = arith.constant 0 : i32
    return %c0_i32, %c0_i32_0 : i32, i32
  }
  func.func @transform_11(%arg0: i32) -> (i32, i32) {
    %c0_i32 = arith.constant 0 : i32
    %c0_i32_0 = arith.constant 0 : i32
    %c0_i32_1 = arith.constant 0 : i32
    return %c0_i32, %c0_i32_0 : i32, i32
  }
  func.func @transform_12(%arg0: i32) -> (i32, i32) {
    %c0_i32 = arith.constant 0 : i32
    %c0_i32_0 = arith.constant 0 : i32
    %c0_i32_1 = arith.constant 0 : i32
    return %c0_i32, %c0_i32_0 : i32, i32
  }
  func.func @transform_13(%arg0: i32) -> (i32, i32) {
    %c0_i32 = arith.constant 0 : i32
    %c0_i32_0 = arith.constant 0 : i32
    %c0_i32_1 = arith.constant 0 : i32
    return %c0_i32, %c0_i32_0 : i32, i32
  }
  func.func @transform_14(%arg0: i32) -> (i32, i32, i32) {
    %c0_i32 = arith.constant 0 : i32
    %c0_i32_0 = arith.constant 0 : i32
    %c0_i32_1 = arith.constant 0 : i32
    return %arg0, %c0_i32, %c0_i32_0 : i32, i32, i32
  }
}

module attributes {stable_mosaic.version = 11 : i64} {
  func.func @_swin_block_kernel(%arg0: i32, %arg1: memref<4x16x8xf32, #tpu.memory_space<vmem>>, %arg2: memref<1x8xf32, #tpu.memory_space<vmem>>, %arg3: memref<1x8xf32, #tpu.memory_space<vmem>>, %arg4: memref<8x24xf32, #tpu.memory_space<vmem>>, %arg5: memref<1x24xf32, #tpu.memory_space<vmem>>, %arg6: memref<2x16x16xf32, #tpu.memory_space<vmem>>, %arg7: memref<4x16x16xf32, #tpu.memory_space<vmem>>, %arg8: memref<8x8xf32, #tpu.memory_space<vmem>>, %arg9: memref<1x8xf32, #tpu.memory_space<vmem>>, %arg10: memref<1x8xf32, #tpu.memory_space<vmem>>, %arg11: memref<1x8xf32, #tpu.memory_space<vmem>>, %arg12: memref<8x32xf32, #tpu.memory_space<vmem>>, %arg13: memref<1x32xf32, #tpu.memory_space<vmem>>, %arg14: memref<32x8xf32, #tpu.memory_space<vmem>>, %arg15: memref<1x8xf32, #tpu.memory_space<vmem>>, %arg16: memref<4x16x8xf32, #tpu.memory_space<vmem>>, %arg17: memref<4x16x24xbf16, #tpu.memory_space<vmem>>, %arg18: memref<4x16x8xf32, #tpu.memory_space<vmem>>) attributes {dimension_semantics = [#tpu.dimension_semantics<parallel>], iteration_bounds = array<i64: 2>, scalar_prefetch = 0 : i64, scratch_operands = 2 : i64, tpu.core_type = #tpu.core_type<tc>, window_params = [{transform_indices = @transform_0, window_bounds = array<i64: 4, 16, 8>}, {pipeline_mode = #tpu.pipeline_mode<synchronous>, transform_indices = @transform_1, window_bounds = array<i64: 1, 8>}, {pipeline_mode = #tpu.pipeline_mode<synchronous>, transform_indices = @transform_2, window_bounds = array<i64: 1, 8>}, {pipeline_mode = #tpu.pipeline_mode<synchronous>, transform_indices = @transform_3, window_bounds = array<i64: 8, 24>}, {pipeline_mode = #tpu.pipeline_mode<synchronous>, transform_indices = @transform_4, window_bounds = array<i64: 1, 24>}, {pipeline_mode = #tpu.pipeline_mode<synchronous>, transform_indices = @transform_5, window_bounds = array<i64: 2, 16, 16>}, {transform_indices = @transform_6, window_bounds = array<i64: 4, 16, 16>}, {pipeline_mode = #tpu.pipeline_mode<synchronous>, transform_indices = @transform_7, window_bounds = array<i64: 8, 8>}, {pipeline_mode = #tpu.pipeline_mode<synchronous>, transform_indices = @transform_8, window_bounds = array<i64: 1, 8>}, {pipeline_mode = #tpu.pipeline_mode<synchronous>, transform_indices = @transform_9, window_bounds = array<i64: 1, 8>}, {pipeline_mode = #tpu.pipeline_mode<synchronous>, transform_indices = @transform_10, window_bounds = array<i64: 1, 8>}, {pipeline_mode = #tpu.pipeline_mode<synchronous>, transform_indices = @transform_11, window_bounds = array<i64: 8, 32>}, {pipeline_mode = #tpu.pipeline_mode<synchronous>, transform_indices = @transform_12, window_bounds = array<i64: 1, 32>}, {pipeline_mode = #tpu.pipeline_mode<synchronous>, transform_indices = @transform_13, window_bounds = array<i64: 32, 8>}, {pipeline_mode = #tpu.pipeline_mode<synchronous>, transform_indices = @transform_14, window_bounds = array<i64: 1, 8>}, {transform_indices = @transform_15, window_bounds = array<i64: 4, 16, 8>}]} {
    %c0 = arith.constant 0 : index
    %c0_0 = arith.constant 0 : index
    %c0_1 = arith.constant 0 : index
    %0 = vector.load %arg1[%c0, %c0_0, %c0_1] : memref<4x16x8xf32, #tpu.memory_space<vmem>>, vector<4x16x8xf32>
    %c0_2 = arith.constant 0 : index
    %c0_3 = arith.constant 0 : index
    %1 = vector.load %arg2[%c0_2, %c0_3] : memref<1x8xf32, #tpu.memory_space<vmem>>, vector<1x8xf32>
    %c0_4 = arith.constant 0 : index
    %c0_5 = arith.constant 0 : index
    %2 = vector.load %arg3[%c0_4, %c0_5] : memref<1x8xf32, #tpu.memory_space<vmem>>, vector<1x8xf32>
    %cst = arith.constant dense<0.000000e+00> : vector<4x16xf32>
    %3 = vector.multi_reduction <add>, %0, %cst [2] : vector<4x16x8xf32> to vector<4x16xf32>
    %4 = vector.shape_cast %3 : vector<4x16xf32> to vector<4x16x1xf32>
    %cst_6 = arith.constant 8.000000e+00 : f32
    %5 = vector.broadcast %cst_6 : f32 to vector<4x16x1xf32>
    %6 = arith.divf %4, %5 : vector<4x16x1xf32>
    %7 = vector.broadcast %6 : vector<4x16x1xf32> to vector<4x16x8xf32>
    %8 = arith.subf %0, %7 : vector<4x16x8xf32>
    %9 = arith.mulf %8, %8 : vector<4x16x8xf32>
    %cst_7 = arith.constant dense<0.000000e+00> : vector<4x16xf32>
    %10 = vector.multi_reduction <add>, %9, %cst_7 [2] : vector<4x16x8xf32> to vector<4x16xf32>
    %11 = vector.shape_cast %10 : vector<4x16xf32> to vector<4x16x1xf32>
    %cst_8 = arith.constant 8.000000e+00 : f32
    %12 = vector.broadcast %cst_8 : f32 to vector<4x16x1xf32>
    %13 = arith.divf %11, %12 : vector<4x16x1xf32>
    %cst_9 = arith.constant 9.99999974E-6 : f32
    %14 = vector.broadcast %cst_9 : f32 to vector<4x16x1xf32>
    %15 = arith.addf %13, %14 : vector<4x16x1xf32>
    %16 = math.rsqrt %15 : vector<4x16x1xf32>
    %17 = vector.broadcast %16 : vector<4x16x1xf32> to vector<4x16x8xf32>
    %18 = arith.mulf %8, %17 : vector<4x16x8xf32>
    %19 = vector.shape_cast %1 : vector<1x8xf32> to vector<1x1x8xf32>
    %20 = vector.broadcast %19 : vector<1x1x8xf32> to vector<4x16x8xf32>
    %21 = arith.mulf %18, %20 : vector<4x16x8xf32>
    %22 = vector.shape_cast %2 : vector<1x8xf32> to vector<1x1x8xf32>
    %23 = vector.broadcast %22 : vector<1x1x8xf32> to vector<4x16x8xf32>
    %24 = arith.addf %21, %23 : vector<4x16x8xf32>
    %c0_10 = arith.constant 0 : index
    %c0_11 = arith.constant 0 : index
    %25 = vector.load %arg4[%c0_10, %c0_11] : memref<8x24xf32, #tpu.memory_space<vmem>>, vector<8x24xf32>
    %26 = arith.truncf %24 : vector<4x16x8xf32> to vector<4x16x8xbf16>
    %27 = arith.truncf %25 : vector<8x24xf32> to vector<8x24xbf16>
    %cst_12 = arith.constant dense<0.000000e+00> : vector<4x16x24xf32>
    %28 = tpu.matmul %26, %27, %cst_12 {dimension_numbers = #tpu.dot_dimension_numbers<[2], [0], [0, 1], [1], [0, 0, 0, 1, 1, 1], [], []>} : vector<4x16x8xbf16>, vector<8x24xbf16>, vector<4x16x24xf32> -> vector<4x16x24xf32>
    %c0_13 = arith.constant 0 : index
    %c0_14 = arith.constant 0 : index
    %29 = vector.load %arg5[%c0_13, %c0_14] : memref<1x24xf32, #tpu.memory_space<vmem>>, vector<1x24xf32>
    %30 = vector.shape_cast %29 : vector<1x24xf32> to vector<1x1x24xf32>
    %31 = vector.broadcast %30 : vector<1x1x24xf32> to vector<4x16x24xf32>
    %32 = arith.addf %28, %31 : vector<4x16x24xf32>
    %33 = arith.truncf %32 : vector<4x16x24xf32> to vector<4x16x24xbf16>
    %c0_15 = arith.constant 0 : index
    %c0_16 = arith.constant 0 : index
    %c0_17 = arith.constant 0 : index
    %34 = vector.load %arg17[%c0_15, %c0_16, %c0_17] : memref<4x16x24xbf16, #tpu.memory_space<vmem>>, vector<4x16x24xbf16>
    tpu.vector_store %arg17[%c0_15, %c0_16, %c0_17], %33 {strides = array<i32>} : memref<4x16x24xbf16, #tpu.memory_space<vmem>>, vector<4x16x24xbf16>,
    %c0_18 = arith.constant 0 : index
    %c0_19 = arith.constant 0 : index
    %c0_20 = arith.constant 0 : index
    %35 = vector.load %arg6[%c0_18, %c0_19, %c0_20] : memref<2x16x16xf32, #tpu.memory_space<vmem>>, vector<2x16x16xf32>
    %c0_21 = arith.constant 0 : index
    %c0_22 = arith.constant 0 : index
    %c0_23 = arith.constant 0 : index
    %36 = vector.load %arg7[%c0_21, %c0_22, %c0_23] : memref<4x16x16xf32, #tpu.memory_space<vmem>>, vector<4x16x16xf32>
    %c0_24 = arith.constant 0 : index
    %c0_25 = arith.constant 0 : index
    %c0_26 = arith.constant 0 : index
    %37 = vector.load %arg17[%c0_24, %c0_25, %c0_26] : memref<4x16x24xbf16, #tpu.memory_space<vmem>>, vector<4x16x4xbf16>
    %c0_27 = arith.constant 0 : index
    %c0_28 = arith.constant 0 : index
    %c8 = arith.constant 8 : index
    %38 = vector.load %arg17[%c0_27, %c0_28, %c8] : memref<4x16x24xbf16, #tpu.memory_space<vmem>>, vector<4x16x4xbf16>
    %c0_29 = arith.constant 0 : index
    %c0_30 = arith.constant 0 : index
    %c16 = arith.constant 16 : index
    %39 = vector.load %arg17[%c0_29, %c0_30, %c16] : memref<4x16x24xbf16, #tpu.memory_space<vmem>>, vector<4x16x4xbf16>
    "tpu.trace_start"() <{level = 10 : i32, message = "wqd,wkd->wqk"}> : () -> ()
    %cst_31 = arith.constant dense<0.000000e+00> : vector<4x16x16xf32>
    %40 = tpu.matmul %37, %38, %cst_31 {dimension_numbers = #tpu.dot_dimension_numbers<[2], [2], [1], [1], [0, 0, 0, 1, 1, 1], [0], [0]>} : vector<4x16x4xbf16>, vector<4x16x4xbf16>, vector<4x16x16xf32> -> vector<4x16x16xf32>
    "tpu.trace_stop"() : () -> ()
    %41 = vector.extract_strided_slice %35 {offsets = [0, 0, 0], sizes = [1, 16, 16], strides = [1, 1, 1]} : vector<2x16x16xf32> to vector<1x16x16xf32>
    %42 = vector.shape_cast %41 : vector<1x16x16xf32> to vector<16x16xf32>
    %43 = vector.shape_cast %42 : vector<16x16xf32> to vector<1x16x16xf32>
    %44 = vector.broadcast %43 : vector<1x16x16xf32> to vector<4x16x16xf32>
    %45 = arith.addf %40, %44 : vector<4x16x16xf32>
    %46 = arith.addf %45, %36 : vector<4x16x16xf32>
    %cst_32 = arith.constant dense<0xFF800000> : vector<4x16xf32>
    %47 = vector.multi_reduction <maximumf>, %46, %cst_32 [2] : vector<4x16x16xf32> to vector<4x16xf32>
    %48 = vector.shape_cast %47 : vector<4x16xf32> to vector<4x16x1xf32>
    %49 = vector.broadcast %48 : vector<4x16x1xf32> to vector<4x16x16xf32>
    %50 = arith.subf %46, %49 : vector<4x16x16xf32>
    %51 = math.exp %50 : vector<4x16x16xf32>
    %cst_33 = arith.constant dense<0.000000e+00> : vector<4x16xf32>
    %52 = vector.multi_reduction <add>, %51, %cst_33 [2] : vector<4x16x16xf32> to vector<4x16xf32>
    %53 = vector.shape_cast %52 : vector<4x16xf32> to vector<4x16x1xf32>
    %54 = tpu.reciprocal %53 {approx = true} : vector<4x16x1xf32> -> vector<4x16x1xf32>
    %55 = vector.broadcast %54 : vector<4x16x1xf32> to vector<4x16x16xf32>
    %56 = arith.mulf %51, %55 : vector<4x16x16xf32>
    %57 = arith.truncf %56 : vector<4x16x16xf32> to vector<4x16x16xbf16>
    "tpu.trace_start"() <{level = 10 : i32, message = "wqk,wkd->wqd"}> : () -> ()
    %cst_34 = arith.constant dense<0.000000e+00> : vector<4x16x4xf32>
    %58 = tpu.matmul %57, %39, %cst_34 {dimension_numbers = #tpu.dot_dimension_numbers<[2], [1], [1], [2], [0, 0, 0, 1, 1, 2], [0], [0]>} : vector<4x16x16xbf16>, vector<4x16x4xbf16>, vector<4x16x4xf32> -> vector<4x16x4xf32>
    "tpu.trace_stop"() : () -> ()
    %c0_35 = arith.constant 0 : index
    %c0_36 = arith.constant 0 : index
    %c0_37 = arith.constant 0 : index
    %59 = vector.load %arg18[%c0_35, %c0_36, %c0_37] : memref<4x16x8xf32, #tpu.memory_space<vmem>>, vector<4x16x4xf32>
    tpu.vector_store %arg18[%c0_35, %c0_36, %c0_37], %58 {strides = array<i32>} : memref<4x16x8xf32, #tpu.memory_space<vmem>>, vector<4x16x4xf32>,
    %c0_38 = arith.constant 0 : index
    %c0_39 = arith.constant 0 : index
    %c4 = arith.constant 4 : index
    %60 = vector.load %arg17[%c0_38, %c0_39, %c4] : memref<4x16x24xbf16, #tpu.memory_space<vmem>>, vector<4x16x4xbf16>
    %c0_40 = arith.constant 0 : index
    %c0_41 = arith.constant 0 : index
    %c12 = arith.constant 12 : index
    %61 = vector.load %arg17[%c0_40, %c0_41, %c12] : memref<4x16x24xbf16, #tpu.memory_space<vmem>>, vector<4x16x4xbf16>
    %c0_42 = arith.constant 0 : index
    %c0_43 = arith.constant 0 : index
    %c20 = arith.constant 20 : index
    %62 = vector.load %arg17[%c0_42, %c0_43, %c20] : memref<4x16x24xbf16, #tpu.memory_space<vmem>>, vector<4x16x4xbf16>
    "tpu.trace_start"() <{level = 10 : i32, message = "wqd,wkd->wqk"}> : () -> ()
    %cst_44 = arith.constant dense<0.000000e+00> : vector<4x16x16xf32>
    %63 = tpu.matmul %60, %61, %cst_44 {dimension_numbers = #tpu.dot_dimension_numbers<[2], [2], [1], [1], [0, 0, 0, 1, 1, 1], [0], [0]>} : vector<4x16x4xbf16>, vector<4x16x4xbf16>, vector<4x16x16xf32> -> vector<4x16x16xf32>
    "tpu.trace_stop"() : () -> ()
    %64 = vector.extract_strided_slice %35 {offsets = [1, 0, 0], sizes = [1, 16, 16], strides = [1, 1, 1]} : vector<2x16x16xf32> to vector<1x16x16xf32>
    %65 = vector.shape_cast %64 : vector<1x16x16xf32> to vector<16x16xf32>
    %66 = vector.shape_cast %65 : vector<16x16xf32> to vector<1x16x16xf32>
    %67 = vector.broadcast %66 : vector<1x16x16xf32> to vector<4x16x16xf32>
    %68 = arith.addf %63, %67 : vector<4x16x16xf32>
    %69 = arith.addf %68, %36 : vector<4x16x16xf32>
    %cst_45 = arith.constant dense<0xFF800000> : vector<4x16xf32>
    %70 = vector.multi_reduction <maximumf>, %69, %cst_45 [2] : vector<4x16x16xf32> to vector<4x16xf32>
    %71 = vector.shape_cast %70 : vector<4x16xf32> to vector<4x16x1xf32>
    %72 = vector.broadcast %71 : vector<4x16x1xf32> to vector<4x16x16xf32>
    %73 = arith.subf %69, %72 : vector<4x16x16xf32>
    %74 = math.exp %73 : vector<4x16x16xf32>
    %cst_46 = arith.constant dense<0.000000e+00> : vector<4x16xf32>
    %75 = vector.multi_reduction <add>, %74, %cst_46 [2] : vector<4x16x16xf32> to vector<4x16xf32>
    %76 = vector.shape_cast %75 : vector<4x16xf32> to vector<4x16x1xf32>
    %77 = tpu.reciprocal %76 {approx = true} : vector<4x16x1xf32> -> vector<4x16x1xf32>
    %78 = vector.broadcast %77 : vector<4x16x1xf32> to vector<4x16x16xf32>
    %79 = arith.mulf %74, %78 : vector<4x16x16xf32>
    %80 = arith.truncf %79 : vector<4x16x16xf32> to vector<4x16x16xbf16>
    "tpu.trace_start"() <{level = 10 : i32, message = "wqk,wkd->wqd"}> : () -> ()
    %cst_47 = arith.constant dense<0.000000e+00> : vector<4x16x4xf32>
    %81 = tpu.matmul %80, %62, %cst_47 {dimension_numbers = #tpu.dot_dimension_numbers<[2], [1], [1], [2], [0, 0, 0, 1, 1, 2], [0], [0]>} : vector<4x16x16xbf16>, vector<4x16x4xbf16>, vector<4x16x4xf32> -> vector<4x16x4xf32>
    "tpu.trace_stop"() : () -> ()
    %c0_48 = arith.constant 0 : index
    %c0_49 = arith.constant 0 : index
    %c4_50 = arith.constant 4 : index
    %82 = vector.load %arg18[%c0_48, %c0_49, %c4_50] : memref<4x16x8xf32, #tpu.memory_space<vmem>>, vector<4x16x4xf32>
    tpu.vector_store %arg18[%c0_48, %c0_49, %c4_50], %81 {strides = array<i32>} : memref<4x16x8xf32, #tpu.memory_space<vmem>>, vector<4x16x4xf32>,
    %c0_51 = arith.constant 0 : index
    %c0_52 = arith.constant 0 : index
    %c0_53 = arith.constant 0 : index
    %83 = vector.load %arg18[%c0_51, %c0_52, %c0_53] : memref<4x16x8xf32, #tpu.memory_space<vmem>>, vector<4x16x8xf32>
    %c0_54 = arith.constant 0 : index
    %c0_55 = arith.constant 0 : index
    %84 = vector.load %arg8[%c0_54, %c0_55] : memref<8x8xf32, #tpu.memory_space<vmem>>, vector<8x8xf32>
    %85 = arith.truncf %83 : vector<4x16x8xf32> to vector<4x16x8xbf16>
    %86 = arith.truncf %84 : vector<8x8xf32> to vector<8x8xbf16>
    %cst_56 = arith.constant dense<0.000000e+00> : vector<4x16x8xf32>
    %87 = tpu.matmul %85, %86, %cst_56 {dimension_numbers = #tpu.dot_dimension_numbers<[2], [0], [0, 1], [1], [0, 0, 0, 1, 1, 1], [], []>} : vector<4x16x8xbf16>, vector<8x8xbf16>, vector<4x16x8xf32> -> vector<4x16x8xf32>
    %c0_57 = arith.constant 0 : index
    %c0_58 = arith.constant 0 : index
    %88 = vector.load %arg9[%c0_57, %c0_58] : memref<1x8xf32, #tpu.memory_space<vmem>>, vector<1x8xf32>
    %89 = vector.shape_cast %88 : vector<1x8xf32> to vector<1x1x8xf32>
    %90 = vector.broadcast %89 : vector<1x1x8xf32> to vector<4x16x8xf32>
    %91 = arith.addf %87, %90 : vector<4x16x8xf32>
    %92 = arith.addf %91, %0 : vector<4x16x8xf32>
    %c0_59 = arith.constant 0 : index
    %c0_60 = arith.constant 0 : index
    %93 = vector.load %arg10[%c0_59, %c0_60] : memref<1x8xf32, #tpu.memory_space<vmem>>, vector<1x8xf32>
    %c0_61 = arith.constant 0 : index
    %c0_62 = arith.constant 0 : index
    %94 = vector.load %arg11[%c0_61, %c0_62] : memref<1x8xf32, #tpu.memory_space<vmem>>, vector<1x8xf32>
    %cst_63 = arith.constant dense<0.000000e+00> : vector<4x16xf32>
    %95 = vector.multi_reduction <add>, %92, %cst_63 [2] : vector<4x16x8xf32> to vector<4x16xf32>
    %96 = vector.shape_cast %95 : vector<4x16xf32> to vector<4x16x1xf32>
    %cst_64 = arith.constant 8.000000e+00 : f32
    %97 = vector.broadcast %cst_64 : f32 to vector<4x16x1xf32>
    %98 = arith.divf %96, %97 : vector<4x16x1xf32>
    %99 = vector.broadcast %98 : vector<4x16x1xf32> to vector<4x16x8xf32>
    %100 = arith.subf %92, %99 : vector<4x16x8xf32>
    %101 = arith.mulf %100, %100 : vector<4x16x8xf32>
    %cst_65 = arith.constant dense<0.000000e+00> : vector<4x16xf32>
    %102 = vector.multi_reduction <add>, %101, %cst_65 [2] : vector<4x16x8xf32> to vector<4x16xf32>
    %103 = vector.shape_cast %102 : vector<4x16xf32> to vector<4x16x1xf32>
    %cst_66 = arith.constant 8.000000e+00 : f32
    %104 = vector.broadcast %cst_66 : f32 to vector<4x16x1xf32>
    %105 = arith.divf %103, %104 : vector<4x16x1xf32>
    %cst_67 = arith.constant 9.99999974E-6 : f32
    %106 = vector.broadcast %cst_67 : f32 to vector<4x16x1xf32>
    %107 = arith.addf %105, %106 : vector<4x16x1xf32>
    %108 = math.rsqrt %107 : vector<4x16x1xf32>
    %109 = vector.broadcast %108 : vector<4x16x1xf32> to vector<4x16x8xf32>
    %110 = arith.mulf %100, %109 : vector<4x16x8xf32>
    %111 = vector.shape_cast %93 : vector<1x8xf32> to vector<1x1x8xf32>
    %112 = vector.broadcast %111 : vector<1x1x8xf32> to vector<4x16x8xf32>
    %113 = arith.mulf %110, %112 : vector<4x16x8xf32>
    %114 = vector.shape_cast %94 : vector<1x8xf32> to vector<1x1x8xf32>
    %115 = vector.broadcast %114 : vector<1x1x8xf32> to vector<4x16x8xf32>
    %116 = arith.addf %113, %115 : vector<4x16x8xf32>
    %c0_68 = arith.constant 0 : index
    %c0_69 = arith.constant 0 : index
    %117 = vector.load %arg12[%c0_68, %c0_69] : memref<8x32xf32, #tpu.memory_space<vmem>>, vector<8x32xf32>
    %118 = arith.truncf %116 : vector<4x16x8xf32> to vector<4x16x8xbf16>
    %119 = arith.truncf %117 : vector<8x32xf32> to vector<8x32xbf16>
    %cst_70 = arith.constant dense<0.000000e+00> : vector<4x16x32xf32>
    %120 = tpu.matmul %118, %119, %cst_70 {dimension_numbers = #tpu.dot_dimension_numbers<[2], [0], [0, 1], [1], [0, 0, 0, 1, 1, 1], [], []>} : vector<4x16x8xbf16>, vector<8x32xbf16>, vector<4x16x32xf32> -> vector<4x16x32xf32>
    %c0_71 = arith.constant 0 : index
    %c0_72 = arith.constant 0 : index
    %121 = vector.load %arg13[%c0_71, %c0_72] : memref<1x32xf32, #tpu.memory_space<vmem>>, vector<1x32xf32>
    %122 = vector.shape_cast %121 : vector<1x32xf32> to vector<1x1x32xf32>
    %123 = vector.broadcast %122 : vector<1x1x32xf32> to vector<4x16x32xf32>
    %124 = arith.addf %120, %123 : vector<4x16x32xf32>
    %cst_73 = arith.constant 5.000000e-01 : f32
    %125 = vector.broadcast %cst_73 : f32 to vector<4x16x32xf32>
    %126 = arith.mulf %125, %124 : vector<4x16x32xf32>
    %cst_74 = arith.constant 4.471500e-02 : f32
    %127 = vector.broadcast %cst_74 : f32 to vector<4x16x32xf32>
    %128 = arith.mulf %127, %124 : vector<4x16x32xf32>
    %129 = arith.mulf %128, %124 : vector<4x16x32xf32>
    %130 = arith.mulf %129, %124 : vector<4x16x32xf32>
    %131 = arith.addf %124, %130 : vector<4x16x32xf32>
    %cst_75 = arith.constant 0.797884583 : f32
    %132 = vector.broadcast %cst_75 : f32 to vector<4x16x32xf32>
    %133 = arith.mulf %132, %131 : vector<4x16x32xf32>
    %134 = math.tanh %133 : vector<4x16x32xf32>
    %cst_76 = arith.constant 1.000000e+00 : f32
    %135 = vector.broadcast %cst_76 : f32 to vector<4x16x32xf32>
    %136 = arith.addf %135, %134 : vector<4x16x32xf32>
    %137 = arith.mulf %126, %136 : vector<4x16x32xf32>
    %c0_77 = arith.constant 0 : index
    %c0_78 = arith.constant 0 : index
    %138 = vector.load %arg14[%c0_77, %c0_78] : memref<32x8xf32, #tpu.memory_space<vmem>>, vector<32x8xf32>
    %139 = arith.truncf %137 : vector<4x16x32xf32> to vector<4x16x32xbf16>
    %140 = arith.truncf %138 : vector<32x8xf32> to vector<32x8xbf16>
    %cst_79 = arith.constant dense<0.000000e+00> : vector<4x16x8xf32>
    %141 = tpu.matmul %139, %140, %cst_79 {dimension_numbers = #tpu.dot_dimension_numbers<[2], [0], [0, 1], [1], [0, 0, 0, 1, 1, 1], [], []>} : vector<4x16x32xbf16>, vector<32x8xbf16>, vector<4x16x8xf32> -> vector<4x16x8xf32>
    %142 = arith.addf %92, %141 : vector<4x16x8xf32>
    %c0_80 = arith.constant 0 : index
    %c0_81 = arith.constant 0 : index
    %143 = vector.load %arg15[%c0_80, %c0_81] : memref<1x8xf32, #tpu.memory_space<vmem>>, vector<1x8xf32>
    %144 = vector.shape_cast %143 : vector<1x8xf32> to vector<1x1x8xf32>
    %145 = vector.broadcast %144 : vector<1x1x8xf32> to vector<4x16x8xf32>
    %146 = arith.addf %142, %145 : vector<4x16x8xf32>
    %c0_82 = arith.constant 0 : index
    %c0_83 = arith.constant 0 : index
    %c0_84 = arith.constant 0 : index
    %147 = vector.load %arg16[%c0_82, %c0_83, %c0_84] : memref<4x16x8xf32, #tpu.memory_space<vmem>>, vector<4x16x8xf32>
    tpu.vector_store %arg16[%c0_82, %c0_83, %c0_84], %146 {strides = array<i32>} : memref<4x16x8xf32, #tpu.memory_space<vmem>>, vector<4x16x8xf32>,
    return
  }
  func.func @transform_0(%arg0: i32) -> (i32, i32, i32) {
    %c0_i32 = arith.constant 0 : i32
    %c0_i32_0 = arith.constant 0 : i32
    %c0_i32_1 = arith.constant 0 : i32
    return %arg0, %c0_i32, %c0_i32_0 : i32, i32, i32
  }
  func.func @transform_1(%arg0: i32) -> (i32, i32) {
    %c0_i32 = arith.constant 0 : i32
    %c0_i32_0 = arith.constant 0 : i32
    %c0_i32_1 = arith.constant 0 : i32
    return %c0_i32, %c0_i32_0 : i32, i32
  }
  func.func @transform_2(%arg0: i32) -> (i32, i32) {
    %c0_i32 = arith.constant 0 : i32
    %c0_i32_0 = arith.constant 0 : i32
    %c0_i32_1 = arith.constant 0 : i32
    return %c0_i32, %c0_i32_0 : i32, i32
  }
  func.func @transform_3(%arg0: i32) -> (i32, i32) {
    %c0_i32 = arith.constant 0 : i32
    %c0_i32_0 = arith.constant 0 : i32
    %c0_i32_1 = arith.constant 0 : i32
    return %c0_i32, %c0_i32_0 : i32, i32
  }
  func.func @transform_4(%arg0: i32) -> (i32, i32) {
    %c0_i32 = arith.constant 0 : i32
    %c0_i32_0 = arith.constant 0 : i32
    %c0_i32_1 = arith.constant 0 : i32
    return %c0_i32, %c0_i32_0 : i32, i32
  }
  func.func @transform_5(%arg0: i32) -> (i32, i32, i32) {
    %c0_i32 = arith.constant 0 : i32
    %c0_i32_0 = arith.constant 0 : i32
    %c0_i32_1 = arith.constant 0 : i32
    %c0_i32_2 = arith.constant 0 : i32
    return %c0_i32, %c0_i32_0, %c0_i32_1 : i32, i32, i32
  }
  func.func @transform_6(%arg0: i32) -> (i32, i32, i32) {
    %c1_i32 = arith.constant 1 : i32
    %c0_i32 = arith.constant 0 : i32
    %0 = arith.cmpi eq, %c1_i32, %c0_i32 : i32
    %c1_i32_0 = arith.constant 1 : i32
    %1 = arith.select %0, %c1_i32_0, %c1_i32 : i32
    %2 = arith.remsi %arg0, %1 : i32
    %c0_i32_1 = arith.constant 0 : i32
    %3 = arith.cmpi ne, %2, %c0_i32_1 : i32
    %c0_i32_2 = arith.constant 0 : i32
    %4 = arith.cmpi slt, %2, %c0_i32_2 : i32
    %c0_i32_3 = arith.constant 0 : i32
    %5 = arith.cmpi slt, %1, %c0_i32_3 : i32
    %6 = arith.xori %4, %5 : i1
    %7 = arith.andi %6, %3 : i1
    %8 = arith.addi %2, %1 : i32
    %9 = arith.select %7, %8, %2 : i32
    %c0_i32_4 = arith.constant 0 : i32
    %c0_i32_5 = arith.constant 0 : i32
    %c0_i32_6 = arith.constant 0 : i32
    return %9, %c0_i32_4, %c0_i32_5 : i32, i32, i32
  }
  func.func @transform_7(%arg0: i32) -> (i32, i32) {
    %c0_i32 = arith.constant 0 : i32
    %c0_i32_0 = arith.constant 0 : i32
    %c0_i32_1 = arith.constant 0 : i32
    return %c0_i32, %c0_i32_0 : i32, i32
  }
  func.func @transform_8(%arg0: i32) -> (i32, i32) {
    %c0_i32 = arith.constant 0 : i32
    %c0_i32_0 = arith.constant 0 : i32
    %c0_i32_1 = arith.constant 0 : i32
    return %c0_i32, %c0_i32_0 : i32, i32
  }
  func.func @transform_9(%arg0: i32) -> (i32, i32) {
    %c0_i32 = arith.constant 0 : i32
    %c0_i32_0 = arith.constant 0 : i32
    %c0_i32_1 = arith.constant 0 : i32
    return %c0_i32, %c0_i32_0 : i32, i32
  }
  func.func @transform_10(%arg0: i32) -> (i32, i32) {
    %c0_i32 = arith.constant 0 : i32
    %c0_i32_0 = arith.constant 0 : i32
    %c0_i32_1 = arith.constant 0 : i32
    return %c0_i32, %c0_i32_0 : i32, i32
  }
  func.func @transform_11(%arg0: i32) -> (i32, i32) {
    %c0_i32 = arith.constant 0 : i32
    %c0_i32_0 = arith.constant 0 : i32
    %c0_i32_1 = arith.constant 0 : i32
    return %c0_i32, %c0_i32_0 : i32, i32
  }
  func.func @transform_12(%arg0: i32) -> (i32, i32) {
    %c0_i32 = arith.constant 0 : i32
    %c0_i32_0 = arith.constant 0 : i32
    %c0_i32_1 = arith.constant 0 : i32
    return %c0_i32, %c0_i32_0 : i32, i32
  }
  func.func @transform_13(%arg0: i32) -> (i32, i32) {
    %c0_i32 = arith.constant 0 : i32
    %c0_i32_0 = arith.constant 0 : i32
    %c0_i32_1 = arith.constant 0 : i32
    return %c0_i32, %c0_i32_0 : i32, i32
  }
  func.func @transform_14(%arg0: i32) -> (i32, i32) {
    %c0_i32 = arith.constant 0 : i32
    %c0_i32_0 = arith.constant 0 : i32
    %c0_i32_1 = arith.constant 0 : i32
    return %c0_i32, %c0_i32_0 : i32, i32
  }
  func.func @transform_15(%arg0: i32) -> (i32, i32, i32) {
    %c0_i32 = arith.constant 0 : i32
    %c0_i32_0 = arith.constant 0 : i32
    %c0_i32_1 = arith.constant 0 : i32
    return %arg0, %c0_i32, %c0_i32_0 : i32, i32, i32
  }
}

module attributes {stable_mosaic.version = 11 : i64} {
  func.func @_conv3x3_kernel(%arg0: i32, %arg1: i32, %arg2: memref<1x8x10x8xf32, #tpu.memory_space<vmem>>, %arg3: memref<1x8x10x8xf32, #tpu.memory_space<vmem>>, %arg4: memref<1x8x10x8xf32, #tpu.memory_space<vmem>>, %arg5: memref<1x8x8x8xf32, #tpu.memory_space<vmem>>, %arg6: memref<3x3x8x8xf32, #tpu.memory_space<vmem>>, %arg7: memref<1x8xf32, #tpu.memory_space<vmem>>, %arg8: memref<1x8x8x8xf32, #tpu.memory_space<vmem>>) attributes {dimension_semantics = [#tpu.dimension_semantics<parallel>, #tpu.dimension_semantics<parallel>], iteration_bounds = array<i64: 2, 1>, scalar_prefetch = 0 : i64, scratch_operands = 0 : i64, tpu.core_type = #tpu.core_type<tc>, window_params = [{transform_indices = @transform_0, window_bounds = array<i64: 1, 8, 10, 8>}, {transform_indices = @transform_1, window_bounds = array<i64: 1, 8, 10, 8>}, {transform_indices = @transform_2, window_bounds = array<i64: 1, 8, 10, 8>}, {transform_indices = @transform_3, window_bounds = array<i64: 1, 8, 8, 8>}, {pipeline_mode = #tpu.pipeline_mode<synchronous>, transform_indices = @transform_4, window_bounds = array<i64: 3, 3, 8, 8>}, {pipeline_mode = #tpu.pipeline_mode<synchronous>, transform_indices = @transform_5, window_bounds = array<i64: 1, 8>}, {transform_indices = @transform_6, window_bounds = array<i64: 1, 8, 8, 8>}]} {
    %cst = arith.constant 0.000000e+00 : f32
    %0 = vector.broadcast %cst : f32 to vector<8x8x8xf32>
    %c0 = arith.constant 0 : index
    %c0_0 = arith.constant 0 : index
    %c0_1 = arith.constant 0 : index
    %c0_2 = arith.constant 0 : index
    %1 = vector.load %arg2[%c0, %c0_0, %c0_1, %c0_2] : memref<1x8x10x8xf32, #tpu.memory_space<vmem>>, vector<1x8x8x8xf32>
    %2 = vector.shape_cast %1 : vector<1x8x8x8xf32> to vector<8x8x8xf32>
    %c0_3 = arith.constant 0 : index
    %c0_4 = arith.constant 0 : index
    %c0_5 = arith.constant 0 : index
    %c0_6 = arith.constant 0 : index
    %3 = vector.load %arg6[%c0_3, %c0_4, %c0_5, %c0_6] : memref<3x3x8x8xf32, #tpu.memory_space<vmem>>, vector<1x1x8x8xf32>
    %4 = vector.shape_cast %3 : vector<1x1x8x8xf32> to vector<8x8xf32>
    %5 = arith.truncf %2 : vector<8x8x8xf32> to vector<8x8x8xbf16>
    %6 = arith.truncf %4 : vector<8x8xf32> to vector<8x8xbf16>
    %cst_7 = arith.constant dense<0.000000e+00> : vector<8x8x8xf32>
    %7 = tpu.matmul %5, %6, %cst_7 {dimension_numbers = #tpu.dot_dimension_numbers<[2], [0], [0, 1], [1], [0, 0, 0, 1, 1, 1], [], []>} : vector<8x8x8xbf16>, vector<8x8xbf16>, vector<8x8x8xf32> -> vector<8x8x8xf32>
    %8 = arith.addf %0, %7 : vector<8x8x8xf32>
    %c0_8 = arith.constant 0 : index
    %c0_9 = arith.constant 0 : index
    %c1 = arith.constant 1 : index
    %c0_10 = arith.constant 0 : index
    %9 = vector.load %arg2[%c0_8, %c0_9, %c1, %c0_10] : memref<1x8x10x8xf32, #tpu.memory_space<vmem>>, vector<1x8x8x8xf32>
    %10 = vector.shape_cast %9 : vector<1x8x8x8xf32> to vector<8x8x8xf32>
    %c0_11 = arith.constant 0 : index
    %c1_12 = arith.constant 1 : index
    %c0_13 = arith.constant 0 : index
    %c0_14 = arith.constant 0 : index
    %11 = vector.load %arg6[%c0_11, %c1_12, %c0_13, %c0_14] : memref<3x3x8x8xf32, #tpu.memory_space<vmem>>, vector<1x1x8x8xf32>
    %12 = vector.shape_cast %11 : vector<1x1x8x8xf32> to vector<8x8xf32>
    %13 = arith.truncf %10 : vector<8x8x8xf32> to vector<8x8x8xbf16>
    %14 = arith.truncf %12 : vector<8x8xf32> to vector<8x8xbf16>
    %cst_15 = arith.constant dense<0.000000e+00> : vector<8x8x8xf32>
    %15 = tpu.matmul %13, %14, %cst_15 {dimension_numbers = #tpu.dot_dimension_numbers<[2], [0], [0, 1], [1], [0, 0, 0, 1, 1, 1], [], []>} : vector<8x8x8xbf16>, vector<8x8xbf16>, vector<8x8x8xf32> -> vector<8x8x8xf32>
    %16 = arith.addf %8, %15 : vector<8x8x8xf32>
    %c0_16 = arith.constant 0 : index
    %c0_17 = arith.constant 0 : index
    %c2 = arith.constant 2 : index
    %c0_18 = arith.constant 0 : index
    %17 = vector.load %arg2[%c0_16, %c0_17, %c2, %c0_18] : memref<1x8x10x8xf32, #tpu.memory_space<vmem>>, vector<1x8x8x8xf32>
    %18 = vector.shape_cast %17 : vector<1x8x8x8xf32> to vector<8x8x8xf32>
    %c0_19 = arith.constant 0 : index
    %c2_20 = arith.constant 2 : index
    %c0_21 = arith.constant 0 : index
    %c0_22 = arith.constant 0 : index
    %19 = vector.load %arg6[%c0_19, %c2_20, %c0_21, %c0_22] : memref<3x3x8x8xf32, #tpu.memory_space<vmem>>, vector<1x1x8x8xf32>
    %20 = vector.shape_cast %19 : vector<1x1x8x8xf32> to vector<8x8xf32>
    %21 = arith.truncf %18 : vector<8x8x8xf32> to vector<8x8x8xbf16>
    %22 = arith.truncf %20 : vector<8x8xf32> to vector<8x8xbf16>
    %cst_23 = arith.constant dense<0.000000e+00> : vector<8x8x8xf32>
    %23 = tpu.matmul %21, %22, %cst_23 {dimension_numbers = #tpu.dot_dimension_numbers<[2], [0], [0, 1], [1], [0, 0, 0, 1, 1, 1], [], []>} : vector<8x8x8xbf16>, vector<8x8xbf16>, vector<8x8x8xf32> -> vector<8x8x8xf32>
    %24 = arith.addf %16, %23 : vector<8x8x8xf32>
    %c0_24 = arith.constant 0 : index
    %c0_25 = arith.constant 0 : index
    %c0_26 = arith.constant 0 : index
    %c0_27 = arith.constant 0 : index
    %25 = vector.load %arg3[%c0_24, %c0_25, %c0_26, %c0_27] : memref<1x8x10x8xf32, #tpu.memory_space<vmem>>, vector<1x8x8x8xf32>
    %26 = vector.shape_cast %25 : vector<1x8x8x8xf32> to vector<8x8x8xf32>
    %c1_28 = arith.constant 1 : index
    %c0_29 = arith.constant 0 : index
    %c0_30 = arith.constant 0 : index
    %c0_31 = arith.constant 0 : index
    %27 = vector.load %arg6[%c1_28, %c0_29, %c0_30, %c0_31] : memref<3x3x8x8xf32, #tpu.memory_space<vmem>>, vector<1x1x8x8xf32>
    %28 = vector.shape_cast %27 : vector<1x1x8x8xf32> to vector<8x8xf32>
    %29 = arith.truncf %26 : vector<8x8x8xf32> to vector<8x8x8xbf16>
    %30 = arith.truncf %28 : vector<8x8xf32> to vector<8x8xbf16>
    %cst_32 = arith.constant dense<0.000000e+00> : vector<8x8x8xf32>
    %31 = tpu.matmul %29, %30, %cst_32 {dimension_numbers = #tpu.dot_dimension_numbers<[2], [0], [0, 1], [1], [0, 0, 0, 1, 1, 1], [], []>} : vector<8x8x8xbf16>, vector<8x8xbf16>, vector<8x8x8xf32> -> vector<8x8x8xf32>
    %32 = arith.addf %24, %31 : vector<8x8x8xf32>
    %c0_33 = arith.constant 0 : index
    %c0_34 = arith.constant 0 : index
    %c1_35 = arith.constant 1 : index
    %c0_36 = arith.constant 0 : index
    %33 = vector.load %arg3[%c0_33, %c0_34, %c1_35, %c0_36] : memref<1x8x10x8xf32, #tpu.memory_space<vmem>>, vector<1x8x8x8xf32>
    %34 = vector.shape_cast %33 : vector<1x8x8x8xf32> to vector<8x8x8xf32>
    %c1_37 = arith.constant 1 : index
    %c1_38 = arith.constant 1 : index
    %c0_39 = arith.constant 0 : index
    %c0_40 = arith.constant 0 : index
    %35 = vector.load %arg6[%c1_37, %c1_38, %c0_39, %c0_40] : memref<3x3x8x8xf32, #tpu.memory_space<vmem>>, vector<1x1x8x8xf32>
    %36 = vector.shape_cast %35 : vector<1x1x8x8xf32> to vector<8x8xf32>
    %37 = arith.truncf %34 : vector<8x8x8xf32> to vector<8x8x8xbf16>
    %38 = arith.truncf %36 : vector<8x8xf32> to vector<8x8xbf16>
    %cst_41 = arith.constant dense<0.000000e+00> : vector<8x8x8xf32>
    %39 = tpu.matmul %37, %38, %cst_41 {dimension_numbers = #tpu.dot_dimension_numbers<[2], [0], [0, 1], [1], [0, 0, 0, 1, 1, 1], [], []>} : vector<8x8x8xbf16>, vector<8x8xbf16>, vector<8x8x8xf32> -> vector<8x8x8xf32>
    %40 = arith.addf %32, %39 : vector<8x8x8xf32>
    %c0_42 = arith.constant 0 : index
    %c0_43 = arith.constant 0 : index
    %c2_44 = arith.constant 2 : index
    %c0_45 = arith.constant 0 : index
    %41 = vector.load %arg3[%c0_42, %c0_43, %c2_44, %c0_45] : memref<1x8x10x8xf32, #tpu.memory_space<vmem>>, vector<1x8x8x8xf32>
    %42 = vector.shape_cast %41 : vector<1x8x8x8xf32> to vector<8x8x8xf32>
    %c1_46 = arith.constant 1 : index
    %c2_47 = arith.constant 2 : index
    %c0_48 = arith.constant 0 : index
    %c0_49 = arith.constant 0 : index
    %43 = vector.load %arg6[%c1_46, %c2_47, %c0_48, %c0_49] : memref<3x3x8x8xf32, #tpu.memory_space<vmem>>, vector<1x1x8x8xf32>
    %44 = vector.shape_cast %43 : vector<1x1x8x8xf32> to vector<8x8xf32>
    %45 = arith.truncf %42 : vector<8x8x8xf32> to vector<8x8x8xbf16>
    %46 = arith.truncf %44 : vector<8x8xf32> to vector<8x8xbf16>
    %cst_50 = arith.constant dense<0.000000e+00> : vector<8x8x8xf32>
    %47 = tpu.matmul %45, %46, %cst_50 {dimension_numbers = #tpu.dot_dimension_numbers<[2], [0], [0, 1], [1], [0, 0, 0, 1, 1, 1], [], []>} : vector<8x8x8xbf16>, vector<8x8xbf16>, vector<8x8x8xf32> -> vector<8x8x8xf32>
    %48 = arith.addf %40, %47 : vector<8x8x8xf32>
    %c0_51 = arith.constant 0 : index
    %c0_52 = arith.constant 0 : index
    %c0_53 = arith.constant 0 : index
    %c0_54 = arith.constant 0 : index
    %49 = vector.load %arg4[%c0_51, %c0_52, %c0_53, %c0_54] : memref<1x8x10x8xf32, #tpu.memory_space<vmem>>, vector<1x8x8x8xf32>
    %50 = vector.shape_cast %49 : vector<1x8x8x8xf32> to vector<8x8x8xf32>
    %c2_55 = arith.constant 2 : index
    %c0_56 = arith.constant 0 : index
    %c0_57 = arith.constant 0 : index
    %c0_58 = arith.constant 0 : index
    %51 = vector.load %arg6[%c2_55, %c0_56, %c0_57, %c0_58] : memref<3x3x8x8xf32, #tpu.memory_space<vmem>>, vector<1x1x8x8xf32>
    %52 = vector.shape_cast %51 : vector<1x1x8x8xf32> to vector<8x8xf32>
    %53 = arith.truncf %50 : vector<8x8x8xf32> to vector<8x8x8xbf16>
    %54 = arith.truncf %52 : vector<8x8xf32> to vector<8x8xbf16>
    %cst_59 = arith.constant dense<0.000000e+00> : vector<8x8x8xf32>
    %55 = tpu.matmul %53, %54, %cst_59 {dimension_numbers = #tpu.dot_dimension_numbers<[2], [0], [0, 1], [1], [0, 0, 0, 1, 1, 1], [], []>} : vector<8x8x8xbf16>, vector<8x8xbf16>, vector<8x8x8xf32> -> vector<8x8x8xf32>
    %56 = arith.addf %48, %55 : vector<8x8x8xf32>
    %c0_60 = arith.constant 0 : index
    %c0_61 = arith.constant 0 : index
    %c1_62 = arith.constant 1 : index
    %c0_63 = arith.constant 0 : index
    %57 = vector.load %arg4[%c0_60, %c0_61, %c1_62, %c0_63] : memref<1x8x10x8xf32, #tpu.memory_space<vmem>>, vector<1x8x8x8xf32>
    %58 = vector.shape_cast %57 : vector<1x8x8x8xf32> to vector<8x8x8xf32>
    %c2_64 = arith.constant 2 : index
    %c1_65 = arith.constant 1 : index
    %c0_66 = arith.constant 0 : index
    %c0_67 = arith.constant 0 : index
    %59 = vector.load %arg6[%c2_64, %c1_65, %c0_66, %c0_67] : memref<3x3x8x8xf32, #tpu.memory_space<vmem>>, vector<1x1x8x8xf32>
    %60 = vector.shape_cast %59 : vector<1x1x8x8xf32> to vector<8x8xf32>
    %61 = arith.truncf %58 : vector<8x8x8xf32> to vector<8x8x8xbf16>
    %62 = arith.truncf %60 : vector<8x8xf32> to vector<8x8xbf16>
    %cst_68 = arith.constant dense<0.000000e+00> : vector<8x8x8xf32>
    %63 = tpu.matmul %61, %62, %cst_68 {dimension_numbers = #tpu.dot_dimension_numbers<[2], [0], [0, 1], [1], [0, 0, 0, 1, 1, 1], [], []>} : vector<8x8x8xbf16>, vector<8x8xbf16>, vector<8x8x8xf32> -> vector<8x8x8xf32>
    %64 = arith.addf %56, %63 : vector<8x8x8xf32>
    %c0_69 = arith.constant 0 : index
    %c0_70 = arith.constant 0 : index
    %c2_71 = arith.constant 2 : index
    %c0_72 = arith.constant 0 : index
    %65 = vector.load %arg4[%c0_69, %c0_70, %c2_71, %c0_72] : memref<1x8x10x8xf32, #tpu.memory_space<vmem>>, vector<1x8x8x8xf32>
    %66 = vector.shape_cast %65 : vector<1x8x8x8xf32> to vector<8x8x8xf32>
    %c2_73 = arith.constant 2 : index
    %c2_74 = arith.constant 2 : index
    %c0_75 = arith.constant 0 : index
    %c0_76 = arith.constant 0 : index
    %67 = vector.load %arg6[%c2_73, %c2_74, %c0_75, %c0_76] : memref<3x3x8x8xf32, #tpu.memory_space<vmem>>, vector<1x1x8x8xf32>
    %68 = vector.shape_cast %67 : vector<1x1x8x8xf32> to vector<8x8xf32>
    %69 = arith.truncf %66 : vector<8x8x8xf32> to vector<8x8x8xbf16>
    %70 = arith.truncf %68 : vector<8x8xf32> to vector<8x8xbf16>
    %cst_77 = arith.constant dense<0.000000e+00> : vector<8x8x8xf32>
    %71 = tpu.matmul %69, %70, %cst_77 {dimension_numbers = #tpu.dot_dimension_numbers<[2], [0], [0, 1], [1], [0, 0, 0, 1, 1, 1], [], []>} : vector<8x8x8xbf16>, vector<8x8xbf16>, vector<8x8x8xf32> -> vector<8x8x8xf32>
    %72 = arith.addf %64, %71 : vector<8x8x8xf32>
    %c0_78 = arith.constant 0 : index
    %c0_79 = arith.constant 0 : index
    %73 = vector.load %arg7[%c0_78, %c0_79] : memref<1x8xf32, #tpu.memory_space<vmem>>, vector<1x8xf32>
    %74 = vector.shape_cast %73 : vector<1x8xf32> to vector<1x1x8xf32>
    %75 = vector.broadcast %74 : vector<1x1x8xf32> to vector<8x8x8xf32>
    %76 = arith.addf %72, %75 : vector<8x8x8xf32>
    %c0_80 = arith.constant 0 : index
    %c0_81 = arith.constant 0 : index
    %c0_82 = arith.constant 0 : index
    %c0_83 = arith.constant 0 : index
    %77 = vector.load %arg5[%c0_80, %c0_81, %c0_82, %c0_83] : memref<1x8x8x8xf32, #tpu.memory_space<vmem>>, vector<1x8x8x8xf32>
    %78 = vector.shape_cast %77 : vector<1x8x8x8xf32> to vector<8x8x8xf32>
    %79 = arith.addf %76, %78 : vector<8x8x8xf32>
    %c0_84 = arith.constant 0 : index
    %c0_85 = arith.constant 0 : index
    %c0_86 = arith.constant 0 : index
    %c0_87 = arith.constant 0 : index
    %80 = vector.load %arg8[%c0_84, %c0_85, %c0_86, %c0_87] : memref<1x8x8x8xf32, #tpu.memory_space<vmem>>, vector<1x8x8x8xf32>
    %81 = vector.shape_cast %80 : vector<1x8x8x8xf32> to vector<8x8x8xf32>
    %82 = vector.shape_cast %79 : vector<8x8x8xf32> to vector<1x8x8x8xf32>
    tpu.vector_store %arg8[%c0_84, %c0_85, %c0_86, %c0_87], %82 {strides = array<i32>} : memref<1x8x8x8xf32, #tpu.memory_space<vmem>>, vector<1x8x8x8xf32>,
    return
  }
  func.func @transform_0(%arg0: i32, %arg1: i32) -> (i32, i32, i32, i32) {
    %c0_i32 = arith.constant 0 : i32
    %c0_i32_0 = arith.constant 0 : i32
    %c0_i32_1 = arith.constant 0 : i32
    return %arg0, %arg1, %c0_i32, %c0_i32_0 : i32, i32, i32, i32
  }
  func.func @transform_1(%arg0: i32, %arg1: i32) -> (i32, i32, i32, i32) {
    %c0_i32 = arith.constant 0 : i32
    %c0_i32_0 = arith.constant 0 : i32
    %c0_i32_1 = arith.constant 0 : i32
    return %arg0, %arg1, %c0_i32, %c0_i32_0 : i32, i32, i32, i32
  }
  func.func @transform_2(%arg0: i32, %arg1: i32) -> (i32, i32, i32, i32) {
    %c0_i32 = arith.constant 0 : i32
    %c0_i32_0 = arith.constant 0 : i32
    %c0_i32_1 = arith.constant 0 : i32
    return %arg0, %arg1, %c0_i32, %c0_i32_0 : i32, i32, i32, i32
  }
  func.func @transform_3(%arg0: i32, %arg1: i32) -> (i32, i32, i32, i32) {
    %c0_i32 = arith.constant 0 : i32
    %c0_i32_0 = arith.constant 0 : i32
    %c0_i32_1 = arith.constant 0 : i32
    return %arg0, %arg1, %c0_i32, %c0_i32_0 : i32, i32, i32, i32
  }
  func.func @transform_4(%arg0: i32, %arg1: i32) -> (i32, i32, i32, i32) {
    %c0_i32 = arith.constant 0 : i32
    %c0_i32_0 = arith.constant 0 : i32
    %c0_i32_1 = arith.constant 0 : i32
    %c0_i32_2 = arith.constant 0 : i32
    %c0_i32_3 = arith.constant 0 : i32
    return %c0_i32, %c0_i32_0, %c0_i32_1, %c0_i32_2 : i32, i32, i32, i32
  }
  func.func @transform_5(%arg0: i32, %arg1: i32) -> (i32, i32) {
    %c0_i32 = arith.constant 0 : i32
    %c0_i32_0 = arith.constant 0 : i32
    %c0_i32_1 = arith.constant 0 : i32
    return %c0_i32, %c0_i32_0 : i32, i32
  }
  func.func @transform_6(%arg0: i32, %arg1: i32) -> (i32, i32, i32, i32) {
    %c0_i32 = arith.constant 0 : i32
    %c0_i32_0 = arith.constant 0 : i32
    %c0_i32_1 = arith.constant 0 : i32
    return %arg0, %arg1, %c0_i32, %c0_i32_0 : i32, i32, i32, i32
  }
}

module attributes {stable_mosaic.version = 11 : i64} {
  func.func @_gate_kernel(%arg0: i32, %arg1: memref<128x8xf32, #tpu.memory_space<vmem>>, %arg2: memref<128x4xf32, #tpu.memory_space<vmem>>, %arg3: memref<128x4xf32, #tpu.memory_space<vmem>>, %arg4: memref<2x8xf32, #tpu.memory_space<vmem>>, %arg5: memref<1x2xf32, #tpu.memory_space<vmem>>, %arg6: memref<128x4xf32, #tpu.memory_space<vmem>>) attributes {dimension_semantics = [#tpu.dimension_semantics<parallel>], iteration_bounds = array<i64: 1>, scalar_prefetch = 0 : i64, scratch_operands = 0 : i64, tpu.core_type = #tpu.core_type<tc>, window_params = [{transform_indices = @transform_0, window_bounds = array<i64: 128, 8>}, {transform_indices = @transform_1, window_bounds = array<i64: 128, 4>}, {transform_indices = @transform_2, window_bounds = array<i64: 128, 4>}, {pipeline_mode = #tpu.pipeline_mode<synchronous>, transform_indices = @transform_3, window_bounds = array<i64: 2, 8>}, {pipeline_mode = #tpu.pipeline_mode<synchronous>, transform_indices = @transform_4, window_bounds = array<i64: 1, 2>}, {transform_indices = @transform_5, window_bounds = array<i64: 128, 4>}]} {
    %c0 = arith.constant 0 : index
    %c0_0 = arith.constant 0 : index
    %0 = vector.load %arg1[%c0, %c0_0] : memref<128x8xf32, #tpu.memory_space<vmem>>, vector<128x8xf32>
    %c0_1 = arith.constant 0 : index
    %c0_2 = arith.constant 0 : index
    %1 = vector.load %arg4[%c0_1, %c0_2] : memref<2x8xf32, #tpu.memory_space<vmem>>, vector<2x8xf32>
    %c0_3 = arith.constant 0 : index
    %c0_4 = arith.constant 0 : index
    %2 = vector.load %arg5[%c0_3, %c0_4] : memref<1x2xf32, #tpu.memory_space<vmem>>, vector<1x2xf32>
    %3 = vector.extract_strided_slice %1 {offsets = [0, 0], sizes = [1, 8], strides = [1, 1]} : vector<2x8xf32> to vector<1x8xf32>
    %4 = vector.broadcast %3 : vector<1x8xf32> to vector<128x8xf32>
    %5 = arith.mulf %0, %4 : vector<128x8xf32>
    %cst = arith.constant dense<0.000000e+00> : vector<128xf32>
    %6 = vector.multi_reduction <add>, %5, %cst [1] : vector<128x8xf32> to vector<128xf32>
    %7 = vector.shape_cast %6 : vector<128xf32> to vector<128x1xf32>
    %8 = vector.extract_strided_slice %2 {offsets = [0, 0], sizes = [1, 1], strides = [1, 1]} : vector<1x2xf32> to vector<1x1xf32>
    %9 = vector.broadcast %8 : vector<1x1xf32> to vector<128x1xf32>
    %10 = arith.addf %7, %9 : vector<128x1xf32>
    %11 = vector.extract_strided_slice %1 {offsets = [1, 0], sizes = [1, 8], strides = [1, 1]} : vector<2x8xf32> to vector<1x8xf32>
    %12 = vector.broadcast %11 : vector<1x8xf32> to vector<128x8xf32>
    %13 = arith.mulf %0, %12 : vector<128x8xf32>
    %cst_5 = arith.constant dense<0.000000e+00> : vector<128xf32>
    %14 = vector.multi_reduction <add>, %13, %cst_5 [1] : vector<128x8xf32> to vector<128xf32>
    %15 = vector.shape_cast %14 : vector<128xf32> to vector<128x1xf32>
    %16 = vector.extract_strided_slice %2 {offsets = [0, 1], sizes = [1, 1], strides = [1, 1]} : vector<1x2xf32> to vector<1x1xf32>
    %17 = vector.broadcast %16 : vector<1x1xf32> to vector<128x1xf32>
    %18 = arith.addf %15, %17 : vector<128x1xf32>
    %19 = arith.maximumf %10, %18 : vector<128x1xf32>
    %20 = arith.subf %10, %19 : vector<128x1xf32>
    %21 = math.exp %20 : vector<128x1xf32>
    %22 = arith.subf %18, %19 : vector<128x1xf32>
    %23 = math.exp %22 : vector<128x1xf32>
    %24 = arith.addf %21, %23 : vector<128x1xf32>
    %25 = tpu.reciprocal %24 {approx = true} : vector<128x1xf32> -> vector<128x1xf32>
    %26 = arith.mulf %21, %25 : vector<128x1xf32>
    %c0_6 = arith.constant 0 : index
    %c0_7 = arith.constant 0 : index
    %27 = vector.load %arg2[%c0_6, %c0_7] : memref<128x4xf32, #tpu.memory_space<vmem>>, vector<128x4xf32>
    %28 = vector.broadcast %26 : vector<128x1xf32> to vector<128x4xf32>
    %29 = arith.mulf %28, %27 : vector<128x4xf32>
    %30 = arith.mulf %23, %25 : vector<128x1xf32>
    %c0_8 = arith.constant 0 : index
    %c0_9 = arith.constant 0 : index
    %31 = vector.load %arg3[%c0_8, %c0_9] : memref<128x4xf32, #tpu.memory_space<vmem>>, vector<128x4xf32>
    %32 = vector.broadcast %30 : vector<128x1xf32> to vector<128x4xf32>
    %33 = arith.mulf %32, %31 : vector<128x4xf32>
    %34 = arith.addf %29, %33 : vector<128x4xf32>
    %c0_10 = arith.constant 0 : index
    %c0_11 = arith.constant 0 : index
    %35 = vector.load %arg6[%c0_10, %c0_11] : memref<128x4xf32, #tpu.memory_space<vmem>>, vector<128x4xf32>
    tpu.vector_store %arg6[%c0_10, %c0_11], %34 {strides = array<i32>} : memref<128x4xf32, #tpu.memory_space<vmem>>, vector<128x4xf32>,
    return
  }
  func.func @transform_0(%arg0: i32) -> (i32, i32) {
    %c0_i32 = arith.constant 0 : i32
    %c0_i32_0 = arith.constant 0 : i32
    return %arg0, %c0_i32 : i32, i32
  }
  func.func @transform_1(%arg0: i32) -> (i32, i32) {
    %c0_i32 = arith.constant 0 : i32
    %c0_i32_0 = arith.constant 0 : i32
    return %arg0, %c0_i32 : i32, i32
  }
  func.func @transform_2(%arg0: i32) -> (i32, i32) {
    %c0_i32 = arith.constant 0 : i32
    %c0_i32_0 = arith.constant 0 : i32
    return %arg0, %c0_i32 : i32, i32
  }
  func.func @transform_3(%arg0: i32) -> (i32, i32) {
    %c0_i32 = arith.constant 0 : i32
    %c0_i32_0 = arith.constant 0 : i32
    %c0_i32_1 = arith.constant 0 : i32
    return %c0_i32, %c0_i32_0 : i32, i32
  }
  func.func @transform_4(%arg0: i32) -> (i32, i32) {
    %c0_i32 = arith.constant 0 : i32
    %c0_i32_0 = arith.constant 0 : i32
    %c0_i32_1 = arith.constant 0 : i32
    return %c0_i32, %c0_i32_0 : i32, i32
  }
  func.func @transform_5(%arg0: i32) -> (i32, i32) {
    %c0_i32 = arith.constant 0 : i32
    %c0_i32_0 = arith.constant 0 : i32
    return %arg0, %c0_i32 : i32, i32
  }
}

</mosaic_0001>

<llo_original>
// kernel: rac_forward.9
$region0: #{rac_forward.9}
  #allocation0 [shape = 'u32[]', space=smem, size = 0x4, offset = 0x4, fixed_abs, tag = 'smem constant byte address 0x4 - core index']
  #allocation1 [shape = 'u32[72,128]{1,0:T(1,128)}', space=vmem, size = 0x9000, scoped, tag = 'internal scratch']
  %s0 = inlined_call_operand.vmem [shape: f32[2,8,10,8], index: 0, kind: input, shape index: {}]
  %s1 = inlined_call_operand.vmem [shape: f32[2,8,10,8], index: 1, kind: input, shape index: {}]
  %s2 = inlined_call_operand.vmem [shape: f32[2,8,10,8], index: 2, kind: input, shape index: {}]
  %s3 = inlined_call_operand.vmem [shape: f32[2,8,8,8], index: 3, kind: input, shape index: {}]
  %s4 = inlined_call_operand.vmem [shape: f32[3,3,8,8], index: 4, kind: input, shape index: {}]
  %s5 = inlined_call_operand.vmem [shape: f32[1,8], index: 5, kind: input, shape index: {}]
  %s6 = inlined_call_operand.vmem [shape: f32[2,8,8,8], index: 6, kind: output, shape index: {}]
  %s7 = sld [smem:[#allocation0]]
  $region57: #{rac_forward.9} parent=0
    _
  %s9 = ssub.s32 1, %s7
  %s10 = scalar_select 0, %s9, %s7
  loop: start=0, step=1, limit=4
  $region2: #{rac_forward.9} parent=0 // loop_pre_header
    _
  $region3: #{rac_forward.9} parent=0 // loop_header
    %s12 = sphi 0, %s16
    %p13 = scmp.ge.s32.totalorder %s12, 4
    %s19 = sphi 0, %s31
    %s20 = sphi 0, %s27
    %s21 = sphi 0, %s19
    %s22 = sphi 0, %s20
    %s23 = sphi 0, %s21
    %s24 = sphi 0, %s22
    %s36 = sphi 0, %s38
    %s39 = sphi 0, %s36
    %s40 = sphi 0, %s39
    %s56 = sphi 0, %s40
    %s64 = sphi 0, %s66
    %s67 = sphi 0, %s64
    %s68 = sphi 0, %s67
    %s84 = sphi 0, %s68
    %s92 = sphi 0, %s94
    %s95 = sphi 0, %s92
    %s96 = sphi 0, %s95
    %s112 = sphi 0, %s96
    %s120 = sphi 0, %s122
    %s123 = sphi 0, %s120
    %s124 = sphi 0, %s123
    %s140 = sphi 0, %s124
    %s144 = sphi 0, %s144
    %s146 = sphi 0, %s144
    %s147 = sphi 0, %s146
    %s161 = sphi 0, %s147
    %s165 = sphi 0, %s165
    %s167 = sphi 0, %s165
    %s168 = sphi 0, %s167
    %s182 = sphi 0, %s168
    %s190 = sphi 0, %s192
    %s193 = sphi 0, %s190
    %s194 = sphi 0, %s193
    %s210 = sphi 0, %s194
  $region4: #{rac_forward.9} parent=0 // loop_header_branch
    %15 = sbr.rel (%p13) target = $region8
  $region5: #{rac_forward.9} parent=0 // loop_body
    %s17 = ssub.s32 %s12, 1
    %s18 = ssub.s32 %s12, 2
    %s25 = sadd.s32 1, %s20
    %p26 = scmp.ge.s32.totalorder %s25, 1
    %s27 = scalar_select %p26, 0, %s25
    %s28 = sadd.s32 1, %s19
    %s29 = scalar_select %p26, %s28, %s19
    %p30 = scmp.ge.s32.totalorder %s29, 2
    %s31 = scalar_select %p30, 0, %s29
    %s32 = ssub.s32 %s19, %s31
    %s33 = ssub.s32 %s20, %s27
    %s34 = sor.u32 %s32, %s33
    %p35 = scmp.eq.s32.totalorder %s34, 0
    %s37 = sadd.s32 %s36, 1
    %s38 = scalar_select %p35, %s36, %s37
    %p41 = pneg %p35
    %p42 = scmp.eq.s32.totalorder %s12, 1
    %p43 = por %p41, %p42
    %p44 = scmp.ne.s32.totalorder %s36, %s39
    %p45 = scmp.eq.s32.totalorder %s12, 0
    %p46 = por %p44, %p45
    %p47 = scmp.ne.s32.totalorder %s36, %s39
    %p48 = scmp.eq.s32.totalorder %s17, 1
    %p49 = por %p47, %p48
    %p50 = scmp.ne.s32.totalorder %s39, %s40
    %p51 = scmp.eq.s32.totalorder %s17, 0
    %p52 = por %p50, %p51
    %p53 = scmp.ne.s32.totalorder %s39, %s40
    %p54 = scmp.eq.s32.totalorder %s18, 1
    %p55 = por %p53, %p54
    %p57 = scmp.ne.s32.totalorder %s40, %s56
    %p58 = scmp.eq.s32.totalorder %s18, 0
    %p59 = por %p57, %p58
    %s60 = ssub.s32 %s19, %s31
    %s61 = ssub.s32 %s20, %s27
    %s62 = sor.u32 %s60, %s61
    %p63 = scmp.eq.s32.totalorder %s62, 0
    %s65 = sadd.s32 %s64, 1
    %s66 = scalar_select %p63, %s64, %s65
    %p69 = pneg %p63
    %p70 = scmp.eq.s32.totalorder %s12, 1
    %p71 = por %p69, %p70
    %p72 = scmp.ne.s32.totalorder %s64, %s67
    %p73 = scmp.eq.s32.totalorder %s12, 0
    %p74 = por %p72, %p73
    %p75 = scmp.ne.s32.totalorder %s64, %s67
    %p76 = scmp.eq.s32.totalorder %s17, 1
    %p77 = por %p75, %p76
    %p78 = scmp.ne.s32.totalorder %s67, %s68
    %p79 = scmp.eq.s32.totalorder %s17, 0
    %p80 = por %p78, %p79
    %p81 = scmp.ne.s32.totalorder %s67, %s68
    %p82 = scmp.eq.s32.totalorder %s18, 1
    %p83 = por %p81, %p82
    %p85 = scmp.ne.s32.totalorder %s68, %s84
    %p86 = scmp.eq.s32.totalorder %s18, 0
    %p87 = por %p85, %p86
    %s88 = ssub.s32 %s19, %s31
    %s89 = ssub.s32 %s20, %s27
    %s90 = sor.u32 %s88, %s89
    %p91 = scmp.eq.s32.totalorder %s90, 0
    %s93 = sadd.s32 %s92, 1
    %s94 = scalar_select %p91, %s92, %s93
    %p97 = pneg %p91
    %p98 = scmp.eq.s32.totalorder %s12, 1
    %p99 = por %p97, %p98
    %p100 = scmp.ne.s32.totalorder %s92, %s95
    %p101 = scmp.eq.s32.totalorder %s12, 0
    %p102 = por %p100, %p101
    %p103 = scmp.ne.s32.totalorder %s92, %s95
    %p104 = scmp.eq.s32.totalorder %s17, 1
    %p105 = por %p103, %p104
    %p106 = scmp.ne.s32.totalorder %s95, %s96
    %p107 = scmp.eq.s32.totalorder %s17, 0
    %p108 = por %p106, %p107
    %p109 = scmp.ne.s32.totalorder %s95, %s96
    %p110 = scmp.eq.s32.totalorder %s18, 1
    %p111 = por %p109, %p110
    %p113 = scmp.ne.s32.totalorder %s96, %s112
    %p114 = scmp.eq.s32.totalorder %s18, 0
    %p115 = por %p113, %p114
    %s116 = ssub.s32 %s19, %s31
    %s117 = ssub.s32 %s20, %s27
    %s118 = sor.u32 %s116, %s117
    %p119 = scmp.eq.s32.totalorder %s118, 0
    %s121 = sadd.s32 %s120, 1
    %s122 = scalar_select %p119, %s120, %s121
    %p125 = pneg %p119
    %p126 = scmp.eq.s32.totalorder %s12, 1
    %p127 = por %p125, %p126
    %p128 = scmp.ne.s32.totalorder %s120, %s123
    %p129 = scmp.eq.s32.totalorder %s12, 0
    %p130 = por %p128, %p129
    %p131 = scmp.ne.s32.totalorder %s120, %s123
    %p132 = scmp.eq.s32.totalorder %s17, 1
    %p133 = por %p131, %p132
    %p134 = scmp.ne.s32.totalorder %s123, %s124
    %p135 = scmp.eq.s32.totalorder %s17, 0
    %p136 = por %p134, %p135
    %p137 = scmp.ne.s32.totalorder %s123, %s124
    %p138 = scmp.eq.s32.totalorder %s18, 1
    %p139 = por %p137, %p138
    %p141 = scmp.ne.s32.totalorder %s124, %s140
    %p142 = scmp.eq.s32.totalorder %s18, 0
    %p143 = por %p141, %p142
    %s145 = sadd.s32 %s144, 1
    %p148 = scmp.eq.s32.totalorder %s12, 1
    %p149 = scmp.ne.s32.totalorder %s144, %s146
    %p150 = scmp.eq.s32.totalorder %s12, 0
    %p151 = por %p149, %p150
    %p152 = scmp.ne.s32.totalorder %s144, %s146
    %p153 = scmp.eq.s32.totalorder %s17, 1
    %p154 = por %p152, %p153
    %p155 = scmp.ne.s32.totalorder %s146, %s147
    %p156 = scmp.eq.s32.totalorder %s17, 0
    %p157 = por %p155, %p156
    %p158 = scmp.ne.s32.totalorder %s146, %s147
    %p159 = scmp.eq.s32.totalorder %s18, 1
    %p160 = por %p158, %p159
    %p162 = scmp.ne.s32.totalorder %s147, %s161
    %p163 = scmp.eq.s32.totalorder %s18, 0
    %p164 = por %p162, %p163
    %s166 = sadd.s32 %s165, 1
    %p169 = scmp.eq.s32.totalorder %s12, 1
    %p170 = scmp.ne.s32.totalorder %s165, %s167
    %p171 = scmp.eq.s32.totalorder %s12, 0
    %p172 = por %p170, %p171
    %p173 = scmp.ne.s32.totalorder %s165, %s167
    %p174 = scmp.eq.s32.totalorder %s17, 1
    %p175 = por %p173, %p174
    %p176 = scmp.ne.s32.totalorder %s167, %s168
    %p177 = scmp.eq.s32.totalorder %s17, 0
    %p178 = por %p176, %p177
    %p179 = scmp.ne.s32.totalorder %s167, %s168
    %p180 = scmp.eq.s32.totalorder %s18, 1
    %p181 = por %p179, %p180
    %p183 = scmp.ne.s32.totalorder %s168, %s182
    %p184 = scmp.eq.s32.totalorder %s18, 0
    %p185 = por %p183, %p184
    %s186 = ssub.s32 %s19, %s31
    %s187 = ssub.s32 %s20, %s27
    %s188 = sor.u32 %s186, %s187
    %p189 = scmp.eq.s32.totalorder %s188, 0
    %s191 = sadd.s32 %s190, 1
    %s192 = scalar_select %p189, %s190, %s191
    %p195 = pneg %p189
    %p196 = scmp.eq.s32.totalorder %s12, 1
    %p197 = por %p195, %p196
    %p198 = scmp.ne.s32.totalorder %s190, %s193
    %p199 = scmp.eq.s32.totalorder %s12, 0
    %p200 = por %p198, %p199
    %p201 = scmp.ne.s32.totalorder %s190, %s193
    %p202 = scmp.eq.s32.totalorder %s17, 1
    %p203 = por %p201, %p202
    %p204 = scmp.ne.s32.totalorder %s193, %s194
    %p205 = scmp.eq.s32.totalorder %s17, 0
    %p206 = por %p204, %p205
    %p207 = scmp.ne.s32.totalorder %s193, %s194
    %p208 = scmp.eq.s32.totalorder %s18, 1
    %p209 = por %p207, %p208
    %p211 = scmp.ne.s32.totalorder %s194, %s210
    %p212 = scmp.eq.s32.totalorder %s18, 0
    %p213 = por %p211, %p212
    %p214 = scmp.le.s32.totalorder 1, %s12
    %p215 = scmp.lt.s32.totalorder %s12, 3
    %p216 = pnand %p214, %p215
    %p217 = pneg %p216
    // Predicated region
    $region9: #{rac_forward.9} parent=5 // pred_check
      _
    $region10: #{rac_forward.9} parent=5 // pred_check_branch
      %219 = sbr.rel (%p216) target = $region12
    $region11: #{rac_forward.9} parent=5 // pred_region
      %s220 = ssub.s32 %s12, 1
      // Predicated region
      $region13: #{rac_forward.9} parent=11 // pred_check
        %p221 = pneg %p157
      $region14: #{rac_forward.9} parent=11 // pred_check_branch
        %223 = sbr.rel (%p221) target = $region16
      $region15: #{rac_forward.9} parent=11 // pred_region
        _
      $region16: #{rac_forward.9} parent=11 // pred_fallthru
        _
      // Predicated region
      $region17: #{rac_forward.9} parent=11 // pred_check
        %p224 = pneg %p178
      $region18: #{rac_forward.9} parent=11 // pred_check_branch
        %226 = sbr.rel (%p224) target = $region20
      $region19: #{rac_forward.9} parent=11 // pred_region
        _
      $region20: #{rac_forward.9} parent=11 // pred_fallthru
        _
    $region12: #{rac_forward.9} parent=5 // pred_fallthru
      _
    %p227 = scmp.lt.s32.totalorder %s12, 2
    // Predicated region
    $region21: #{rac_forward.9} parent=5 // pred_check
      %p228 = pneg %p227
    $region22: #{rac_forward.9} parent=5 // pred_check_branch
      %230 = sbr.rel (%p228) target = $region24
    $region23: #{rac_forward.9} parent=5 // pred_region
      // Predicated region
      $region25: #{rac_forward.9} parent=23 // pred_check
        %p231 = pneg %p46
      $region26: #{rac_forward.9} parent=23 // pred_check_branch
        %233 = sbr.rel (%p231) target = $region28
      $region27: #{rac_forward.9} parent=23 // pred_region
        %s234 = smul.u32 8, %s20
        %p235 = scmp.lt.s32.totalorder %s19, 1
        %s236 = scalar_select %p235, %s19, 1
        %p237 = scmp.lt.s32.totalorder %s234, 7
        %s238 = scalar_select %p237, %s234, 7
        %s239 = smul.addr %s238, 2
        %s240 = smul.addr %s236, 16
        %s241 = sadd.s32 %s239, %s240
        %s242 = smul.addr %s241, 8
        %s243 = scalar_lea.vmem %s0, %s242
        %s244 = smul.u32 8, %s20
      $region28: #{rac_forward.9} parent=23 // pred_fallthru
        _
      // Predicated region
      $region29: #{rac_forward.9} parent=23 // pred_check
        %p245 = pneg %p74
      $region30: #{rac_forward.9} parent=23 // pred_check_branch
        %247 = sbr.rel (%p245) target = $region32
      $region31: #{rac_forward.9} parent=23 // pred_region
        %s248 = smul.u32 8, %s20
        %p249 = scmp.lt.s32.totalorder %s19, 1
        %s250 = scalar_select %p249, %s19, 1
        %p251 = scmp.lt.s32.totalorder %s248, 7
        %s252 = scalar_select %p251, %s248, 7
        %s253 = smul.addr %s252, 2
        %s254 = smul.addr %s250, 16
        %s255 = sadd.s32 %s253, %s254
        %s256 = smul.addr %s255, 8
        %s257 = scalar_lea.vmem %s1, %s256
        %s258 = smul.u32 8, %s20
      $region32: #{rac_forward.9} parent=23 // pred_fallthru
        _
      // Predicated region
      $region33: #{rac_forward.9} parent=23 // pred_check
        %p259 = pneg %p102
      $region34: #{rac_forward.9} parent=23 // pred_check_branch
        %261 = sbr.rel (%p259) target = $region36
      $region35: #{rac_forward.9} parent=23 // pred_region
        %s262 = smul.u32 8, %s20
        %p263 = scmp.lt.s32.totalorder %s19, 1
        %s264 = scalar_select %p263, %s19, 1
        %p265 = scmp.lt.s32.totalorder %s262, 7
        %s266 = scalar_select %p265, %s262, 7
        %s267 = smul.addr %s266, 2
        %s268 = smul.addr %s264, 16
        %s269 = sadd.s32 %s267, %s268
        %s270 = smul.addr %s269, 8
        %s271 = scalar_lea.vmem %s2, %s270
        %s272 = smul.u32 8, %s20
      $region36: #{rac_forward.9} parent=23 // pred_fallthru
        _
      // Predicated region
      $region37: #{rac_forward.9} parent=23 // pred_check
        %p273 = pneg %p130
      $region38: #{rac_forward.9} parent=23 // pred_check_branch
        %275 = sbr.rel (%p273) target = $region40
      $region39: #{rac_forward.9} parent=23 // pred_region
        %s276 = smul.u32 8, %s20
        %p277 = scmp.lt.s32.totalorder %s19, 1
        %s278 = scalar_select %p277, %s19, 1
        %p279 = scmp.lt.s32.totalorder %s276, 7
        %s280 = scalar_select %p279, %s276, 7
        %s281 = smul.addr %s278, 8
        %s282 = sadd.s32 %s280, %s281
        %s283 = smul.addr %s282, 8
        %s284 = scalar_lea.vmem %s3, %s283
        %s285 = smul.u32 8, %s20
      $region40: #{rac_forward.9} parent=23 // pred_fallthru
        _
    $region24: #{rac_forward.9} parent=5 // pred_fallthru
      _
    %p286 = scmp.le.s32.totalorder 1, %s12
    %p287 = scmp.lt.s32.totalorder %s12, 3
    %p288 = pnand %p286, %p287
    %p289 = pneg %p288
    // Predicated region
    $region41: #{rac_forward.9} parent=5 // pred_check
      _
    $region42: #{rac_forward.9} parent=5 // pred_check_branch
      %291 = sbr.rel (%p288) target = $region44
    $region43: #{rac_forward.9} parent=5 // pred_region
      %s292 = ssub.s32 %s12, 1
      %s293 = smul.u32 8, %s22
      %p294 = scmp.lt.s32.totalorder %s21, 1
      %s295 = scalar_select %p294, %s21, 1
      %p296 = scmp.lt.s32.totalorder %s293, 7
      %s297 = scalar_select %p296, %s293, 7
      %s298 = smul.addr %s297, 2
      %s299 = smul.addr %s295, 16
      %s300 = sadd.s32 %s298, %s299
      %s301 = smul.addr %s300, 8
      %s302 = scalar_lea.vmem %s0, %s301
      %p303 = pneg %p52
      %p304 = pneg %p49
      %s305 = smul.u32 8, %s22
      %p306 = scmp.lt.s32.totalorder %s21, 1
      %s307 = scalar_select %p306, %s21, 1
      %p308 = scmp.lt.s32.totalorder %s305, 7
      %s309 = scalar_select %p308, %s305, 7
      %s310 = smul.addr %s309, 2
      %s311 = smul.addr %s307, 16
      %s312 = sadd.s32 %s310, %s311
      %s313 = smul.addr %s312, 8
      %s314 = scalar_lea.vmem %s1, %s313
      %p315 = pneg %p80
      %p316 = pneg %p77
      %s317 = smul.u32 8, %s22
      %p318 = scmp.lt.s32.totalorder %s21, 1
      %s319 = scalar_select %p318, %s21, 1
      %p320 = scmp.lt.s32.totalorder %s317, 7
      %s321 = scalar_select %p320, %s317, 7
      %s322 = smul.addr %s321, 2
      %s323 = smul.addr %s319, 16
      %s324 = sadd.s32 %s322, %s323
      %s325 = smul.addr %s324, 8
      %s326 = scalar_lea.vmem %s2, %s325
      %p327 = pneg %p108
      %p328 = pneg %p105
      %s329 = smul.u32 8, %s22
      %p330 = scmp.lt.s32.totalorder %s21, 1
      %s331 = scalar_select %p330, %s21, 1
      %p332 = scmp.lt.s32.totalorder %s329, 7
      %s333 = scalar_select %p332, %s329, 7
      %s334 = smul.addr %s331, 8
      %s335 = sadd.s32 %s333, %s334
      %s336 = smul.addr %s335, 8
      %s337 = scalar_lea.vmem %s3, %s336
      %p338 = pneg %p136
      %p339 = pneg %p133
      %p340 = pneg %p157
      %p341 = pneg %p154
      %p342 = pneg %p178
      %p343 = pneg %p175
      %p344 = pneg %p206
      %p345 = pneg %p203
      %s346 = smul.u32 8, %s22
      %p347 = scmp.lt.s32.totalorder %s21, 1
      %s348 = scalar_select %p347, %s21, 1
      %p349 = scmp.lt.s32.totalorder %s346, 7
      %s350 = scalar_select %p349, %s346, 7
      %s351 = smul.addr %s348, 8
      %s352 = sadd.s32 %s350, %s351
      %s353 = smul.addr %s352, 8
      %s354 = scalar_lea.vmem %s6, %s353
      %s355 = smul.u32 8, %s22
      %p356 = scmp.lt.s32.totalorder %s21, 1
      %s357 = scalar_select %p356, %s21, 1
      %p358 = scmp.lt.s32.totalorder %s355, 7
      %s359 = scalar_select %p358, %s355, 7
      %s360 = smul.addr %s359, 2
      %s361 = smul.addr %s357, 16
      %s362 = sadd.s32 %s360, %s361
      %s363 = smul.addr %s362, 8
      %s364 = scalar_lea.vmem %s0, %s363
      %s365 = smul.u32 8, %s22
      %s366 = smul.u32 8, %s22
      %p367 = scmp.lt.s32.totalorder %s21, 1
      %s368 = scalar_select %p367, %s21, 1
      %p369 = scmp.lt.s32.totalorder %s366, 7
      %s370 = scalar_select %p369, %s366, 7
      %s371 = smul.addr %s370, 2
      %s372 = smul.addr %s368, 16
      %s373 = sadd.s32 %s371, %s372
      %s374 = smul.addr %s373, 8
      %s375 = scalar_lea.vmem %s1, %s374
      %s376 = smul.u32 8, %s22
      %s377 = smul.u32 8, %s22
      %p378 = scmp.lt.s32.totalorder %s21, 1
      %s379 = scalar_select %p378, %s21, 1
      %p380 = scmp.lt.s32.totalorder %s377, 7
      %s381 = scalar_select %p380, %s377, 7
      %s382 = smul.addr %s381, 2
      %s383 = smul.addr %s379, 16
      %s384 = sadd.s32 %s382, %s383
      %s385 = smul.addr %s384, 8
      %s386 = scalar_lea.vmem %s2, %s385
      %s387 = smul.u32 8, %s22
      %s388 = smul.u32 8, %s22
      %p389 = scmp.lt.s32.totalorder %s21, 1
      %s390 = scalar_select %p389, %s21, 1
      %p391 = scmp.lt.s32.totalorder %s388, 7
      %s392 = scalar_select %p391, %s388, 7
      %s393 = smul.addr %s390, 8
      %s394 = sadd.s32 %s392, %s393
      %s395 = smul.addr %s394, 8
      %s396 = scalar_lea.vmem %s3, %s395
      %s397 = smul.u32 8, %s22
      %s398 = smul.u32 8, %s22
      %p399 = scmp.lt.s32.totalorder %s21, 1
      %s400 = scalar_select %p399, %s21, 1
      %p401 = scmp.lt.s32.totalorder %s398, 7
      %s402 = scalar_select %p401, %s398, 7
      %s403 = smul.addr %s400, 8
      %s404 = sadd.s32 %s402, %s403
      %s405 = smul.addr %s404, 8
      %s406 = scalar_lea.vmem %s6, %s405
      %s407 = smul.u32 8, %s22
      %v409 = vld [vmem:[%s364] sm:$0xff]
      %v410 = vld [vmem:[%s364 + $0x10] sm:$0xff]
      %v411 = vld [vmem:[%s364 + $0x20] sm:$0xff]
      %v412 = vld [vmem:[%s364 + $0x30] sm:$0xff]
      %v413 = vld [vmem:[%s364 + $0x40] sm:$0xff]
      %v414 = vld [vmem:[%s364 + $0x50] sm:$0xff]
      %v415 = vld [vmem:[%s364 + $0x60] sm:$0xff]
      %v416 = vld [vmem:[%s364 + $0x70] sm:$0xff]
      %v417 = vld [vmem:[%s4] sm:$0xff]
      %v418 = vpack.c.bf16 %v409, %v409
      %v419 = vpack.c.bf16 %v410, %v410
      %v420 = vpack.c.bf16 %v411, %v411
      %v421 = vpack.c.bf16 %v412, %v412
      %v422 = vpack.c.bf16 %v413, %v413
      %v423 = vpack.c.bf16 %v414, %v414
      %v424 = vpack.c.bf16 %v415, %v415
      %v425 = vpack.c.bf16 %v416, %v416
      %v426 = vpack.c.bf16 %v417, %v417
      %v427 = vld [vmem:[%s364 + $0x1] sm:$0xff]
      %v428 = vld [vmem:[%s364 + $0x11] sm:$0xff]
      %v429 = vld [vmem:[%s364 + $0x21] sm:$0xff]
      %v430 = vld [vmem:[%s364 + $0x31] sm:$0xff]
      %v431 = vld [vmem:[%s364 + $0x41] sm:$0xff]
      %v432 = vld [vmem:[%s364 + $0x51] sm:$0xff]
      %v433 = vld [vmem:[%s364 + $0x61] sm:$0xff]
      %v434 = vld [vmem:[%s364 + $0x71] sm:$0xff]
      %s435 = scalar_lea.vmem %s4, 8
      %v436 = vld [vmem:[%s435] sm:$0xff]
      %v437 = vpack.c.bf16 %v427, %v427
      %v438 = vpack.c.bf16 %v428, %v428
      %v439 = vpack.c.bf16 %v429, %v429
      %v440 = vpack.c.bf16 %v430, %v430
      %v441 = vpack.c.bf16 %v431, %v431
      %v442 = vpack.c.bf16 %v432, %v432
      %v443 = vpack.c.bf16 %v433, %v433
      %v444 = vpack.c.bf16 %v434, %v434
      %v445 = vpack.c.bf16 %v436, %v436
      %v454 = vunpack.c.l.b16 %v437
      %v455 = vunpack.c.l.b16 %v438
      %v456 = vunpack.c.l.b16 %v439
      %v457 = vunpack.c.l.b16 %v440
      %v458 = vunpack.c.l.b16 %v441
      %v459 = vunpack.c.l.b16 %v442
      %v460 = vunpack.c.l.b16 %v443
      %v461 = vunpack.c.l.b16 %v444
      %v462 = vpack.c.b16 %v455, %v454
      %v463 = vpack.c.b16 %v457, %v456
      %v464 = vpack.c.b16 %v459, %v458
      %v465 = vpack.c.b16 %v461, %v460
      %vm466 = vcmask 64512
      %v468 = vsel %vm466, %v462, 0
      %v471 = vsel %vm466, %v463, 0
      %v474 = vsel %vm466, %v464, 0
      %v477 = vsel %vm466, %v465, 0
      %vm479 = vcmask 1043456
      %v481 = vsel %vm479, %v445, 0
      %483 = vmatpush.bf16.msra.mxu0 0
      %484 = vmatpush.bf16.msra.mxu0 0
      %485 = vmatpush.bf16.msra.mxu0 0
      %486 = vmatpush.bf16.msra.mxu0 0
      %487 = vmatpush.bf16.msra.mxu0 0
      %488 = vmatpush.bf16.msra.mxu0 0
      %489 = vmatpush.bf16.msra.mxu0 0
      %490 = vmatpush.bf16.msra.mxu0 %v481
      %491 = vmatmul.bf16.gmra.mxu0 %v468
      %v492 = vpop.f32.mrf.mxu0
      %v493 = vadd.f32 0.0, %v492
      %v494 = vpop.f32.mrf.mxu0
      %v495 = vadd.f32 0.0, %v494
      %496 = vmatmul.bf16.gmra.mxu0 %v471
      %v497 = vpop.f32.mrf.mxu0
      %v498 = vadd.f32 0.0, %v497
      %v499 = vpop.f32.mrf.mxu0
      %v500 = vadd.f32 0.0, %v499
      %501 = vmatmul.bf16.gmra.mxu0 %v474
      %v502 = vpop.f32.mrf.mxu0
      %v503 = vadd.f32 0.0, %v502
      %v504 = vpop.f32.mrf.mxu0
      %v505 = vadd.f32 0.0, %v504
      %506 = vmatmul.bf16.gmra.mxu0 %v477
      %v507 = vpop.f32.mrf.mxu0
      %v508 = vadd.f32 0.0, %v507
      %v509 = vpop.f32.mrf.mxu0
      %v510 = vadd.f32 0.0, %v509
      %511 = vdwg.mxu0
      %v520 = vunpack.c.l.b16 %v418
      %v521 = vunpack.c.l.b16 %v419
      %v522 = vunpack.c.l.b16 %v420
      %v523 = vunpack.c.l.b16 %v421
      %v524 = vunpack.c.l.b16 %v422
      %v525 = vunpack.c.l.b16 %v423
      %v526 = vunpack.c.l.b16 %v424
      %v527 = vunpack.c.l.b16 %v425
      %v528 = vpack.c.b16 %v521, %v520
      %v529 = vpack.c.b16 %v523, %v522
      %v530 = vpack.c.b16 %v525, %v524
      %v531 = vpack.c.b16 %v527, %v526
      %v533 = vsel %vm466, %v528, 0
      %v536 = vsel %vm466, %v529, 0
      %v539 = vsel %vm466, %v530, 0
      %v542 = vsel %vm466, %v531, 0
      %v545 = vsel %vm479, %v426, 0
      %547 = vmatpush.bf16.msra.mxu0 0
      %548 = vmatpush.bf16.msra.mxu0 0
      %549 = vmatpush.bf16.msra.mxu0 0
      %550 = vmatpush.bf16.msra.mxu0 0
      %551 = vmatpush.bf16.msra.mxu0 0
      %552 = vmatpush.bf16.msra.mxu0 0
      %553 = vmatpush.bf16.msra.mxu0 0
      %554 = vmatpush.bf16.msra.mxu0 %v545
      %555 = vmatmul.bf16.gmra.mxu0 %v533
      %v556 = vpop.f32.mrf.mxu0
      %v557 = vadd.f32 %v493, %v556
      %v558 = vpop.f32.mrf.mxu0
      %v559 = vadd.f32 %v495, %v558
      %560 = vmatmul.bf16.gmra.mxu0 %v536
      %v561 = vpop.f32.mrf.mxu0
      %v562 = vadd.f32 %v498, %v561
      %v563 = vpop.f32.mrf.mxu0
      %v564 = vadd.f32 %v500, %v563
      %565 = vmatmul.bf16.gmra.mxu0 %v539
      %v566 = vpop.f32.mrf.mxu0
      %v567 = vadd.f32 %v503, %v566
      %v568 = vpop.f32.mrf.mxu0
      %v569 = vadd.f32 %v505, %v568
      %570 = vmatmul.bf16.gmra.mxu0 %v542
      %v571 = vpop.f32.mrf.mxu0
      %v572 = vadd.f32 %v508, %v571
      %v573 = vpop.f32.mrf.mxu0
      %v574 = vadd.f32 %v510, %v573
      %575 = vdwg.mxu0
      %v576 = vld [vmem:[%s364 + $0x2] sm:$0xff]
      %v577 = vld [vmem:[%s364 + $0x12] sm:$0xff]
      %v578 = vld [vmem:[%s364 + $0x22] sm:$0xff]
      %v579 = vld [vmem:[%s364 + $0x32] sm:$0xff]
      %v580 = vld [vmem:[%s364 + $0x42] sm:$0xff]
      %v581 = vld [vmem:[%s364 + $0x52] sm:$0xff]
      %v582 = vld [vmem:[%s364 + $0x62] sm:$0xff]
      %v583 = vld [vmem:[%s364 + $0x72] sm:$0xff]
      %s584 = scalar_lea.vmem %s4, 16
      %v585 = vld [vmem:[%s584] sm:$0xff]
      %v586 = vpack.c.bf16 %v576, %v576
      %v587 = vpack.c.bf16 %v577, %v577
      %v588 = vpack.c.bf16 %v578, %v578
      %v589 = vpack.c.bf16 %v579, %v579
      %v590 = vpack.c.bf16 %v580, %v580
      %v591 = vpack.c.bf16 %v581, %v581
      %v592 = vpack.c.bf16 %v582, %v582
      %v593 = vpack.c.bf16 %v583, %v583
      %v594 = vpack.c.bf16 %v585, %v585
      %v603 = vunpack.c.l.b16 %v586
      %v604 = vunpack.c.l.b16 %v587
      %v605 = vunpack.c.l.b16 %v588
      %v606 = vunpack.c.l.b16 %v589
      %v607 = vunpack.c.l.b16 %v590
      %v608 = vunpack.c.l.b16 %v591
      %v609 = vunpack.c.l.b16 %v592
      %v610 = vunpack.c.l.b16 %v593
      %v611 = vpack.c.b16 %v604, %v603
      %v612 = vpack.c.b16 %v606, %v605
      %v613 = vpack.c.b16 %v608, %v607
      %v614 = vpack.c.b16 %v610, %v609
      %v616 = vsel %vm466, %v611, 0
      %v619 = vsel %vm466, %v612, 0
      %v622 = vsel %vm466, %v613, 0
      %v625 = vsel %vm466, %v614, 0
      %v628 = vsel %vm479, %v594, 0
      %630 = vmatpush.bf16.msra.mxu0 0
      %631 = vmatpush.bf16.msra.mxu0 0
      %632 = vmatpush.bf16.msra.mxu0 0
      %633 = vmatpush.bf16.msra.mxu0 0
      %634 = vmatpush.bf16.msra.mxu0 0
      %635 = vmatpush.bf16.msra.mxu0 0
      %636 = vmatpush.bf16.msra.mxu0 0
      %637 = vmatpush.bf16.msra.mxu0 %v628
      %638 = vmatmul.bf16.gmra.mxu0 %v616
      %v639 = vpop.f32.mrf.mxu0
      %v640 = vadd.f32 0.0, %v639
      %v641 = vpop.f32.mrf.mxu0
      %v642 = vadd.f32 0.0, %v641
      %643 = vmatmul.bf16.gmra.mxu0 %v619
      %v644 = vpop.f32.mrf.mxu0
      %v645 = vadd.f32 0.0, %v644
      %v646 = vpop.f32.mrf.mxu0
      %v647 = vadd.f32 0.0, %v646
      %648 = vmatmul.bf16.gmra.mxu0 %v622
      %v649 = vpop.f32.mrf.mxu0
      %v650 = vadd.f32 0.0, %v649
      %v651 = vpop.f32.mrf.mxu0
      %v652 = vadd.f32 0.0, %v651
      %653 = vmatmul.bf16.gmra.mxu0 %v625
      %v654 = vpop.f32.mrf.mxu0
      %v655 = vadd.f32 0.0, %v654
      %v656 = vpop.f32.mrf.mxu0
      %v657 = vadd.f32 0.0, %v656
      %658 = vdwg.mxu0
      %v659 = vadd.f32 %v557, %v640
      %v660 = vadd.f32 %v559, %v642
      %v661 = vadd.f32 %v562, %v645
      %v662 = vadd.f32 %v564, %v647
      %v663 = vadd.f32 %v567, %v650
      %v664 = vadd.f32 %v569, %v652
      %v665 = vadd.f32 %v572, %v655
      %v666 = vadd.f32 %v574, %v657
      %v667 = vld [vmem:[%s375] sm:$0xff]
      %v668 = vld [vmem:[%s375 + $0x10] sm:$0xff]
      %v669 = vld [vmem:[%s375 + $0x20] sm:$0xff]
      %v670 = vld [vmem:[%s375 + $0x30] sm:$0xff]
      %v671 = vld [vmem:[%s375 + $0x40] sm:$0xff]
      %v672 = vld [vmem:[%s375 + $0x50] sm:$0xff]
      %v673 = vld [vmem:[%s375 + $0x60] sm:$0xff]
      %v674 = vld [vmem:[%s375 + $0x70] sm:$0xff]
      %s675 = scalar_lea.vmem %s4, 24
      %v676 = vld [vmem:[%s675] sm:$0xff]
      %v677 = vpack.c.bf16 %v667, %v667
      %v678 = vpack.c.bf16 %v668, %v668
      %v679 = vpack.c.bf16 %v669, %v669
      %v680 = vpack.c.bf16 %v670, %v670
      %v681 = vpack.c.bf16 %v671, %v671
      %v682 = vpack.c.bf16 %v672, %v672
      %v683 = vpack.c.bf16 %v673, %v673
      %v684 = vpack.c.bf16 %v674, %v674
      %v685 = vpack.c.bf16 %v676, %v676
      %v694 = vunpack.c.l.b16 %v677
      %v695 = vunpack.c.l.b16 %v678
      %v696 = vunpack.c.l.b16 %v679
      %v697 = vunpack.c.l.b16 %v680
      %v698 = vunpack.c.l.b16 %v681
      %v699 = vunpack.c.l.b16 %v682
      %v700 = vunpack.c.l.b16 %v683
      %v701 = vunpack.c.l.b16 %v684
      %v702 = vpack.c.b16 %v695, %v694
      %v703 = vpack.c.b16 %v697, %v696
      %v704 = vpack.c.b16 %v699, %v698
      %v705 = vpack.c.b16 %v701, %v700
      %v707 = vsel %vm466, %v702, 0
      %v710 = vsel %vm466, %v703, 0
      %v713 = vsel %vm466, %v704, 0
      %v716 = vsel %vm466, %v705, 0
      %v719 = vsel %vm479, %v685, 0
      %721 = vmatpush.bf16.msra.mxu0 0
      %722 = vmatpush.bf16.msra.mxu0 0
      %723 = vmatpush.bf16.msra.mxu0 0
      %724 = vmatpush.bf16.msra.mxu0 0
      %725 = vmatpush.bf16.msra.mxu0 0
      %726 = vmatpush.bf16.msra.mxu0 0
      %727 = vmatpush.bf16.msra.mxu0 0
      %728 = vmatpush.bf16.msra.mxu0 %v719
      %729 = vmatmul.bf16.gmra.mxu0 %v707
      %v730 = vpop.f32.mrf.mxu0
      %v731 = vadd.f32 0.0, %v730
      %v732 = vpop.f32.mrf.mxu0
      %v733 = vadd.f32 0.0, %v732
      %734 = vmatmul.bf16.gmra.mxu0 %v710
      %v735 = vpop.f32.mrf.mxu0
      %v736 = vadd.f32 0.0, %v735
      %v737 = vpop.f32.mrf.mxu0
      %v738 = vadd.f32 0.0, %v737
      %739 = vmatmul.bf16.gmra.mxu0 %v713
      %v740 = vpop.f32.mrf.mxu0
      %v741 = vadd.f32 0.0, %v740
      %v742 = vpop.f32.mrf.mxu0
      %v743 = vadd.f32 0.0, %v742
      %744 = vmatmul.bf16.gmra.mxu0 %v716
      %v745 = vpop.f32.mrf.mxu0
      %v746 = vadd.f32 0.0, %v745
      %v747 = vpop.f32.mrf.mxu0
      %v748 = vadd.f32 0.0, %v747
      %749 = vdwg.mxu0
      %v750 = vadd.f32 %v659, %v731
      %v751 = vadd.f32 %v660, %v733
      %v752 = vadd.f32 %v661, %v736
      %v753 = vadd.f32 %v662, %v738
      %v754 = vadd.f32 %v663, %v741
      %v755 = vadd.f32 %v664, %v743
      %v756 = vadd.f32 %v665, %v746
      %v757 = vadd.f32 %v666, %v748
      %v758 = vld [vmem:[%s375 + $0x1] sm:$0xff]
      %v759 = vld [vmem:[%s375 + $0x11] sm:$0xff]
      %v760 = vld [vmem:[%s375 + $0x21] sm:$0xff]
      %v761 = vld [vmem:[%s375 + $0x31] sm:$0xff]
      %v762 = vld [vmem:[%s375 + $0x41] sm:$0xff]
      %v763 = vld [vmem:[%s375 + $0x51] sm:$0xff]
      %v764 = vld [vmem:[%s375 + $0x61] sm:$0xff]
      %v765 = vld [vmem:[%s375 + $0x71] sm:$0xff]
      %s766 = scalar_lea.vmem %s4, 32
      %v767 = vld [vmem:[%s766] sm:$0xff]
      %v768 = vpack.c.bf16 %v758, %v758
      %v769 = vpack.c.bf16 %v759, %v759
      %v770 = vpack.c.bf16 %v760, %v760
      %v771 = vpack.c.bf16 %v761, %v761
      %v772 = vpack.c.bf16 %v762, %v762
      %v773 = vpack.c.bf16 %v763, %v763
      %v774 = vpack.c.bf16 %v764, %v764
      %v775 = vpack.c.bf16 %v765, %v765
      %v776 = vpack.c.bf16 %v767, %v767
      %v785 = vunpack.c.l.b16 %v768
      %v786 = vunpack.c.l.b16 %v769
      %v787 = vunpack.c.l.b16 %v770
      %v788 = vunpack.c.l.b16 %v771
      %v789 = vunpack.c.l.b16 %v772
      %v790 = vunpack.c.l.b16 %v773
      %v791 = vunpack.c.l.b16 %v774
      %v792 = vunpack.c.l.b16 %v775
      %v793 = vpack.c.b16 %v786, %v785
      %v794 = vpack.c.b16 %v788, %v787
      %v795 = vpack.c.b16 %v790, %v789
      %v796 = vpack.c.b16 %v792, %v791
      %v798 = vsel %vm466, %v793, 0
      %v801 = vsel %vm466, %v794, 0
      %v804 = vsel %vm466, %v795, 0
      %v807 = vsel %vm466, %v796, 0
      %v810 = vsel %vm479, %v776, 0
      %812 = vmatpush.bf16.msra.mxu0 0
      %813 = vmatpush.bf16.msra.mxu0 0
      %814 = vmatpush.bf16.msra.mxu0 0
      %815 = vmatpush.bf16.msra.mxu0 0
      %816 = vmatpush.bf16.msra.mxu0 0
      %817 = vmatpush.bf16.msra.mxu0 0
      %818 = vmatpush.bf16.msra.mxu0 0
      %819 = vmatpush.bf16.msra.mxu0 %v810
      %820 = vmatmul.bf16.gmra.mxu0 %v798
      %v821 = vpop.f32.mrf.mxu0
      %v822 = vadd.f32 0.0, %v821
      %v823 = vpop.f32.mrf.mxu0
      %v824 = vadd.f32 0.0, %v823
      %825 = vmatmul.bf16.gmra.mxu0 %v801
      %v826 = vpop.f32.mrf.mxu0
      %v827 = vadd.f32 0.0, %v826
      %v828 = vpop.f32.mrf.mxu0
      %v829 = vadd.f32 0.0, %v828
      %830 = vmatmul.bf16.gmra.mxu0 %v804
      %v831 = vpop.f32.mrf.mxu0
      %v832 = vadd.f32 0.0, %v831
      %v833 = vpop.f32.mrf.mxu0
      %v834 = vadd.f32 0.0, %v833
      %835 = vmatmul.bf16.gmra.mxu0 %v807
      %v836 = vpop.f32.mrf.mxu0
      %v837 = vadd.f32 0.0, %v836
      %v838 = vpop.f32.mrf.mxu0
      %v839 = vadd.f32 0.0, %v838
      %840 = vdwg.mxu0
      %v841 = vadd.f32 %v750, %v822
      %v842 = vadd.f32 %v751, %v824
      %v843 = vadd.f32 %v752, %v827
      %v844 = vadd.f32 %v753, %v829
      %v845 = vadd.f32 %v754, %v832
      %v846 = vadd.f32 %v755, %v834
      %v847 = vadd.f32 %v756, %v837
      %v848 = vadd.f32 %v757, %v839
      %v849 = vld [vmem:[%s375 + $0x2] sm:$0xff]
      %v850 = vld [vmem:[%s375 + $0x12] sm:$0xff]
      %v851 = vld [vmem:[%s375 + $0x22] sm:$0xff]
      %v852 = vld [vmem:[%s375 + $0x32] sm:$0xff]
      %v853 = vld [vmem:[%s375 + $0x42] sm:$0xff]
      %v854 = vld [vmem:[%s375 + $0x52] sm:$0xff]
      %v855 = vld [vmem:[%s375 + $0x62] sm:$0xff]
      %v856 = vld [vmem:[%s375 + $0x72] sm:$0xff]
      %s857 = scalar_lea.vmem %s4, 40
      %v858 = vld [vmem:[%s857] sm:$0xff]
      %v859 = vpack.c.bf16 %v849, %v849
      %v860 = vpack.c.bf16 %v850, %v850
      %v861 = vpack.c.bf16 %v851, %v851
      %v862 = vpack.c.bf16 %v852, %v852
      %v863 = vpack.c.bf16 %v853, %v853
      %v864 = vpack.c.bf16 %v854, %v854
      %v865 = vpack.c.bf16 %v855, %v855
      %v866 = vpack.c.bf16 %v856, %v856
      %v867 = vpack.c.bf16 %v858, %v858
      %v876 = vunpack.c.l.b16 %v859
      %v877 = vunpack.c.l.b16 %v860
      %v878 = vunpack.c.l.b16 %v861
      %v879 = vunpack.c.l.b16 %v862
      %v880 = vunpack.c.l.b16 %v863
      %v881 = vunpack.c.l.b16 %v864
      %v882 = vunpack.c.l.b16 %v865
      %v883 = vunpack.c.l.b16 %v866
      %v884 = vpack.c.b16 %v877, %v876
      %v885 = vpack.c.b16 %v879, %v878
      %v886 = vpack.c.b16 %v881, %v880
      %v887 = vpack.c.b16 %v883, %v882
      %v889 = vsel %vm466, %v884, 0
      %v892 = vsel %vm466, %v885, 0
      %v895 = vsel %vm466, %v886, 0
      %v898 = vsel %vm466, %v887, 0
      %v901 = vsel %vm479, %v867, 0
      %903 = vmatpush.bf16.msra.mxu0 0
      %904 = vmatpush.bf16.msra.mxu0 0
      %905 = vmatpush.bf16.msra.mxu0 0
      %906 = vmatpush.bf16.msra.mxu0 0
      %907 = vmatpush.bf16.msra.mxu0 0
      %908 = vmatpush.bf16.msra.mxu0 0
      %909 = vmatpush.bf16.msra.mxu0 0
      %910 = vmatpush.bf16.msra.mxu0 %v901
      %911 = vmatmul.bf16.gmra.mxu0 %v889
      %v912 = vpop.f32.mrf.mxu0
      %v913 = vadd.f32 0.0, %v912
      %v914 = vpop.f32.mrf.mxu0
      %v915 = vadd.f32 0.0, %v914
      %916 = vmatmul.bf16.gmra.mxu0 %v892
      %v917 = vpop.f32.mrf.mxu0
      %v918 = vadd.f32 0.0, %v917
      %v919 = vpop.f32.mrf.mxu0
      %v920 = vadd.f32 0.0, %v919
      %921 = vmatmul.bf16.gmra.mxu0 %v895
      %v922 = vpop.f32.mrf.mxu0
      %v923 = vadd.f32 0.0, %v922
      %v924 = vpop.f32.mrf.mxu0
      %v925 = vadd.f32 0.0, %v924
      %926 = vmatmul.bf16.gmra.mxu0 %v898
      %v927 = vpop.f32.mrf.mxu0
      %v928 = vadd.f32 0.0, %v927
      %v929 = vpop.f32.mrf.mxu0
      %v930 = vadd.f32 0.0, %v929
      %931 = vdwg.mxu0
      %v932 = vadd.f32 %v841, %v913
      %v933 = vadd.f32 %v842, %v915
      %v934 = vadd.f32 %v843, %v918
      %v935 = vadd.f32 %v844, %v920
      %v936 = vadd.f32 %v845, %v923
      %v937 = vadd.f32 %v846, %v925
      %v938 = vadd.f32 %v847, %v928
      %v939 = vadd.f32 %v848, %v930
      %v940 = vld [vmem:[%s386] sm:$0xff]
      %v941 = vld [vmem:[%s386 + $0x10] sm:$0xff]
      %v942 = vld [vmem:[%s386 + $0x20] sm:$0xff]
      %v943 = vld [vmem:[%s386 + $0x30] sm:$0xff]
      %v944 = vld [vmem:[%s386 + $0x40] sm:$0xff]
      %v945 = vld [vmem:[%s386 + $0x50] sm:$0xff]
      %v946 = vld [vmem:[%s386 + $0x60] sm:$0xff]
      %v947 = vld [vmem:[%s386 + $0x70] sm:$0xff]
      %s948 = scalar_lea.vmem %s4, 48
      %v949 = vld [vmem:[%s948] sm:$0xff]
      %v950 = vpack.c.bf16 %v940, %v940
      %v951 = vpack.c.bf16 %v941, %v941
      %v952 = vpack.c.bf16 %v942, %v942
      %v953 = vpack.c.bf16 %v943, %v943
      %v954 = vpack.c.bf16 %v944, %v944
      %v955 = vpack.c.bf16 %v945, %v945
      %v956 = vpack.c.bf16 %v946, %v946
      %v957 = vpack.c.bf16 %v947, %v947
      %v958 = vpack.c.bf16 %v949, %v949
      %v967 = vunpack.c.l.b16 %v950
      %v968 = vunpack.c.l.b16 %v951
      %v969 = vunpack.c.l.b16 %v952
      %v970 = vunpack.c.l.b16 %v953
      %v971 = vunpack.c.l.b16 %v954
      %v972 = vunpack.c.l.b16 %v955
      %v973 = vunpack.c.l.b16 %v956
      %v974 = vunpack.c.l.b16 %v957
      %v975 = vpack.c.b16 %v968, %v967
      %v976 = vpack.c.b16 %v970, %v969
      %v977 = vpack.c.b16 %v972, %v971
      %v978 = vpack.c.b16 %v974, %v973
      %v980 = vsel %vm466, %v975, 0
      %v983 = vsel %vm466, %v976, 0
      %v986 = vsel %vm466, %v977, 0
      %v989 = vsel %vm466, %v978, 0
      %v992 = vsel %vm479, %v958, 0
      %994 = vmatpush.bf16.msra.mxu0 0
      %995 = vmatpush.bf16.msra.mxu0 0
      %996 = vmatpush.bf16.msra.mxu0 0
      %997 = vmatpush.bf16.msra.mxu0 0
      %998 = vmatpush.bf16.msra.mxu0 0
      %999 = vmatpush.bf16.msra.mxu0 0
      %1000 = vmatpush.bf16.msra.mxu0 0
      %1001 = vmatpush.bf16.msra.mxu0 %v992
      %1002 = vmatmul.bf16.gmra.mxu0 %v980
      %v1003 = vpop.f32.mrf.mxu0
      %v1004 = vadd.f32 0.0, %v1003
      %v1005 = vpop.f32.mrf.mxu0
      %v1006 = vadd.f32 0.0, %v1005
      %1007 = vmatmul.bf16.gmra.mxu0 %v983
      %v1008 = vpop.f32.mrf.mxu0
      %v1009 = vadd.f32 0.0, %v1008
      %v1010 = vpop.f32.mrf.mxu0
      %v1011 = vadd.f32 0.0, %v1010
      %1012 = vmatmul.bf16.gmra.mxu0 %v986
      %v1013 = vpop.f32.mrf.mxu0
      %v1014 = vadd.f32 0.0, %v1013
      %v1015 = vpop.f32.mrf.mxu0
      %v1016 = vadd.f32 0.0, %v1015
      %1017 = vmatmul.bf16.gmra.mxu0 %v989
      %v1018 = vpop.f32.mrf.mxu0
      %v1019 = vadd.f32 0.0, %v1018
      %v1020 = vpop.f32.mrf.mxu0
      %v1021 = vadd.f32 0.0, %v1020
      %1022 = vdwg.mxu0
      %v1023 = vadd.f32 %v932, %v1004
      %v1024 = vadd.f32 %v933, %v1006
      %v1025 = vadd.f32 %v934, %v1009
      %v1026 = vadd.f32 %v935, %v1011
      %v1027 = vadd.f32 %v936, %v1014
      %v1028 = vadd.f32 %v937, %v1016
      %v1029 = vadd.f32 %v938, %v1019
      %v1030 = vadd.f32 %v939, %v1021
      %v1031 = vld [vmem:[%s386 + $0x1] sm:$0xff]
      %v1032 = vld [vmem:[%s386 + $0x11] sm:$0xff]
      %v1033 = vld [vmem:[%s386 + $0x21] sm:$0xff]
      %v1034 = vld [vmem:[%s386 + $0x31] sm:$0xff]
      %v1035 = vld [vmem:[%s386 + $0x41] sm:$0xff]
      %v1036 = vld [vmem:[%s386 + $0x51] sm:$0xff]
      %v1037 = vld [vmem:[%s386 + $0x61] sm:$0xff]
      %v1038 = vld [vmem:[%s386 + $0x71] sm:$0xff]
      %s1039 = scalar_lea.vmem %s4, 56
      %v1040 = vld [vmem:[%s1039] sm:$0xff]
      %v1041 = vpack.c.bf16 %v1031, %v1031
      %v1042 = vpack.c.bf16 %v1032, %v1032
      %v1043 = vpack.c.bf16 %v1033, %v1033
      %v1044 = vpack.c.bf16 %v1034, %v1034
      %v1045 = vpack.c.bf16 %v1035, %v1035
      %v1046 = vpack.c.bf16 %v1036, %v1036
      %v1047 = vpack.c.bf16 %v1037, %v1037
      %v1048 = vpack.c.bf16 %v1038, %v1038
      %v1049 = vpack.c.bf16 %v1040, %v1040
      %v1058 = vunpack.c.l.b16 %v1041
      %v1059 = vunpack.c.l.b16 %v1042
      %v1060 = vunpack.c.l.b16 %v1043
      %v1061 = vunpack.c.l.b16 %v1044
      %v1062 = vunpack.c.l.b16 %v1045
      %v1063 = vunpack.c.l.b16 %v1046
      %v1064 = vunpack.c.l.b16 %v1047
      %v1065 = vunpack.c.l.b16 %v1048
      %v1066 = vpack.c.b16 %v1059, %v1058
      %v1067 = vpack.c.b16 %v1061, %v1060
      %v1068 = vpack.c.b16 %v1063, %v1062
      %v1069 = vpack.c.b16 %v1065, %v1064
      %v1071 = vsel %vm466, %v1066, 0
      %v1074 = vsel %vm466, %v1067, 0
      %v1077 = vsel %vm466, %v1068, 0
      %v1080 = vsel %vm466, %v1069, 0
      %v1083 = vsel %vm479, %v1049, 0
      %1085 = vmatpush.bf16.msra.mxu0 0
      %1086 = vmatpush.bf16.msra.mxu0 0
      %1087 = vmatpush.bf16.msra.mxu0 0
      %1088 = vmatpush.bf16.msra.mxu0 0
      %1089 = vmatpush.bf16.msra.mxu0 0
      %1090 = vmatpush.bf16.msra.mxu0 0
      %1091 = vmatpush.bf16.msra.mxu0 0
      %1092 = vmatpush.bf16.msra.mxu0 %v1083
      %1093 = vmatmul.bf16.gmra.mxu0 %v1071
      %v1094 = vpop.f32.mrf.mxu0
      %v1095 = vadd.f32 0.0, %v1094
      %v1096 = vpop.f32.mrf.mxu0
      %v1097 = vadd.f32 0.0, %v1096
      %1098 = vmatmul.bf16.gmra.mxu0 %v1074
      %v1099 = vpop.f32.mrf.mxu0
      %v1100 = vadd.f32 0.0, %v1099
      %v1101 = vpop.f32.mrf.mxu0
      %v1102 = vadd.f32 0.0, %v1101
      %1103 = vmatmul.bf16.gmra.mxu0 %v1077
      %v1104 = vpop.f32.mrf.mxu0
      %v1105 = vadd.f32 0.0, %v1104
      %v1106 = vpop.f32.mrf.mxu0
      %v1107 = vadd.f32 0.0, %v1106
      %1108 = vmatmul.bf16.gmra.mxu0 %v1080
      %v1109 = vpop.f32.mrf.mxu0
      %v1110 = vadd.f32 0.0, %v1109
      %v1111 = vpop.f32.mrf.mxu0
      %v1112 = vadd.f32 0.0, %v1111
      %1113 = vdwg.mxu0
      %v1114 = vadd.f32 %v1023, %v1095
      %v1115 = vadd.f32 %v1024, %v1097
      %v1116 = vadd.f32 %v1025, %v1100
      %v1117 = vadd.f32 %v1026, %v1102
      %v1118 = vadd.f32 %v1027, %v1105
      %v1119 = vadd.f32 %v1028, %v1107
      %v1120 = vadd.f32 %v1029, %v1110
      %v1121 = vadd.f32 %v1030, %v1112
      %v1122 = vld [vmem:[%s386 + $0x2] sm:$0xff]
      %v1123 = vld [vmem:[%s386 + $0x12] sm:$0xff]
      %v1124 = vld [vmem:[%s386 + $0x22] sm:$0xff]
      %v1125 = vld [vmem:[%s386 + $0x32] sm:$0xff]
      %v1126 = vld [vmem:[%s386 + $0x42] sm:$0xff]
      %v1127 = vld [vmem:[%s386 + $0x52] sm:$0xff]
      %v1128 = vld [vmem:[%s386 + $0x62] sm:$0xff]
      %v1129 = vld [vmem:[%s386 + $0x72] sm:$0xff]
      %s1130 = scalar_lea.vmem %s4, 64
      %v1131 = vld [vmem:[%s1130] sm:$0xff]
      %v1132 = vpack.c.bf16 %v1122, %v1122
      %v1133 = vpack.c.bf16 %v1123, %v1123
      %v1134 = vpack.c.bf16 %v1124, %v1124
      %v1135 = vpack.c.bf16 %v1125, %v1125
      %v1136 = vpack.c.bf16 %v1126, %v1126
      %v1137 = vpack.c.bf16 %v1127, %v1127
      %v1138 = vpack.c.bf16 %v1128, %v1128
      %v1139 = vpack.c.bf16 %v1129, %v1129
      %v1140 = vpack.c.bf16 %v1131, %v1131
      %v1149 = vunpack.c.l.b16 %v1132
      %v1150 = vunpack.c.l.b16 %v1133
      %v1151 = vunpack.c.l.b16 %v1134
      %v1152 = vunpack.c.l.b16 %v1135
      %v1153 = vunpack.c.l.b16 %v1136
      %v1154 = vunpack.c.l.b16 %v1137
      %v1155 = vunpack.c.l.b16 %v1138
      %v1156 = vunpack.c.l.b16 %v1139
      %v1157 = vpack.c.b16 %v1150, %v1149
      %v1158 = vpack.c.b16 %v1152, %v1151
      %v1159 = vpack.c.b16 %v1154, %v1153
      %v1160 = vpack.c.b16 %v1156, %v1155
      %v1162 = vsel %vm466, %v1157, 0
      %v1165 = vsel %vm466, %v1158, 0
      %v1168 = vsel %vm466, %v1159, 0
      %v1171 = vsel %vm466, %v1160, 0
      %v1174 = vsel %vm479, %v1140, 0
      %1176 = vmatpush.bf16.msra.mxu0 0
      %1177 = vmatpush.bf16.msra.mxu0 0
      %1178 = vmatpush.bf16.msra.mxu0 0
      %1179 = vmatpush.bf16.msra.mxu0 0
      %1180 = vmatpush.bf16.msra.mxu0 0
      %1181 = vmatpush.bf16.msra.mxu0 0
      %1182 = vmatpush.bf16.msra.mxu0 0
      %1183 = vmatpush.bf16.msra.mxu0 %v1174
      %1184 = vmatmul.bf16.gmra.mxu0 %v1162
      %v1185 = vpop.f32.mrf.mxu0
      %v1186 = vadd.f32 0.0, %v1185
      %v1187 = vpop.f32.mrf.mxu0
      %v1188 = vadd.f32 0.0, %v1187
      %1189 = vmatmul.bf16.gmra.mxu0 %v1165
      %v1190 = vpop.f32.mrf.mxu0
      %v1191 = vadd.f32 0.0, %v1190
      %v1192 = vpop.f32.mrf.mxu0
      %v1193 = vadd.f32 0.0, %v1192
      %1194 = vmatmul.bf16.gmra.mxu0 %v1168
      %v1195 = vpop.f32.mrf.mxu0
      %v1196 = vadd.f32 0.0, %v1195
      %v1197 = vpop.f32.mrf.mxu0
      %v1198 = vadd.f32 0.0, %v1197
      %1199 = vmatmul.bf16.gmra.mxu0 %v1171
      %v1200 = vpop.f32.mrf.mxu0
      %v1201 = vadd.f32 0.0, %v1200
      %v1202 = vpop.f32.mrf.mxu0
      %v1203 = vadd.f32 0.0, %v1202
      %1204 = vdwg.mxu0
      %v1205 = vadd.f32 %v1114, %v1186
      %v1206 = vadd.f32 %v1115, %v1188
      %v1207 = vadd.f32 %v1116, %v1191
      %v1208 = vadd.f32 %v1117, %v1193
      %v1209 = vadd.f32 %v1118, %v1196
      %v1210 = vadd.f32 %v1119, %v1198
      %v1211 = vadd.f32 %v1120, %v1201
      %v1212 = vadd.f32 %v1121, %v1203
      %v1213 = vld [vmem:[%s5] sm:$0x1]
      %v1215 = vperm.slane %v1213, 0
      %v1217 = vadd.f32 %v1205, %v1215
      %v1218 = vadd.f32 %v1206, %v1215
      %v1219 = vadd.f32 %v1207, %v1215
      %v1220 = vadd.f32 %v1208, %v1215
      %v1221 = vadd.f32 %v1209, %v1215
      %v1222 = vadd.f32 %v1210, %v1215
      %v1223 = vadd.f32 %v1211, %v1215
      %v1224 = vadd.f32 %v1212, %v1215
      %v1225 = vld [vmem:[%s396] sm:$0xff]
      %v1226 = vld [vmem:[%s396 + $0x8] sm:$0xff]
      %v1227 = vld [vmem:[%s396 + $0x10] sm:$0xff]
      %v1228 = vld [vmem:[%s396 + $0x18] sm:$0xff]
      %v1229 = vld [vmem:[%s396 + $0x20] sm:$0xff]
      %v1230 = vld [vmem:[%s396 + $0x28] sm:$0xff]
      %v1231 = vld [vmem:[%s396 + $0x30] sm:$0xff]
      %v1232 = vld [vmem:[%s396 + $0x38] sm:$0xff]
      %v1233 = vadd.f32 %v1217, %v1225
      %v1234 = vadd.f32 %v1218, %v1226
      %v1235 = vadd.f32 %v1219, %v1227
      %v1236 = vadd.f32 %v1220, %v1228
      %v1237 = vadd.f32 %v1221, %v1229
      %v1238 = vadd.f32 %v1222, %v1230
      %v1239 = vadd.f32 %v1223, %v1231
      %v1240 = vadd.f32 %v1224, %v1232
      %1241 = vst.msk [vmem:[%s406] sm:$0xff] %vm466, %v1233
      %1242 = vst.msk [vmem:[%s406 + $0x8] sm:$0xff] %vm466, %v1234
      %1243 = vst.msk [vmem:[%s406 + $0x10] sm:$0xff] %vm466, %v1235
      %1244 = vst.msk [vmem:[%s406 + $0x18] sm:$0xff] %vm466, %v1236
      %1245 = vst.msk [vmem:[%s406 + $0x20] sm:$0xff] %vm466, %v1237
      %1246 = vst.msk [vmem:[%s406 + $0x28] sm:$0xff] %vm466, %v1238
      %1247 = vst.msk [vmem:[%s406 + $0x30] sm:$0xff] %vm466, %v1239
      %1248 = vst.msk [vmem:[%s406 + $0x38] sm:$0xff] %vm466, %v1240
      %s1249 = smul.u32 8, %s22
      %p1250 = scmp.lt.s32.totalorder %s21, 1
      %s1251 = scalar_select %p1250, %s21, 1
      %p1252 = scmp.lt.s32.totalorder %s1249, 7
      %s1253 = scalar_select %p1252, %s1249, 7
      %s1254 = smul.addr %s1251, 8
      %s1255 = sadd.s32 %s1253, %s1254
      %s1256 = smul.addr %s1255, 8
      %s1257 = scalar_lea.vmem %s6, %s1256
      // Predicated region
      $region45: #{rac_forward.9} parent=43 // pred_check
        %p1258 = pneg %p203
      $region46: #{rac_forward.9} parent=43 // pred_check_branch
        %1260 = sbr.rel (%p1258) target = $region48
      $region47: #{rac_forward.9} parent=43 // pred_region
        %s1261 = smul.u32 8, %s22
      $region48: #{rac_forward.9} parent=43 // pred_fallthru
        _
    $region44: #{rac_forward.9} parent=5 // pred_fallthru
      _
    %p1262 = scmp.le.s32.totalorder 2, %s12
    // Predicated region
    $region49: #{rac_forward.9} parent=5 // pred_check
      %p1263 = pneg %p1262
    $region50: #{rac_forward.9} parent=5 // pred_check_branch
      %1265 = sbr.rel (%p1263) target = $region52
    $region51: #{rac_forward.9} parent=5 // pred_region
      %s1266 = ssub.s32 %s12, 2
      // Predicated region
      $region53: #{rac_forward.9} parent=51 // pred_check
        %p1267 = pneg %p209
      $region54: #{rac_forward.9} parent=51 // pred_check_branch
        %1269 = sbr.rel (%p1267) target = $region56
      $region55: #{rac_forward.9} parent=51 // pred_region
        %s1270 = smul.u32 8, %s24
        %p1271 = scmp.lt.s32.totalorder %s23, 1
        %s1272 = scalar_select %p1271, %s23, 1
        %p1273 = scmp.lt.s32.totalorder %s1270, 7
        %s1274 = scalar_select %p1273, %s1270, 7
        %s1275 = smul.addr %s1272, 8
        %s1276 = sadd.s32 %s1274, %s1275
        %s1277 = smul.addr %s1276, 8
        %s1278 = scalar_lea.vmem %s6, %s1277
      $region56: #{rac_forward.9} parent=51 // pred_fallthru
        _
    $region52: #{rac_forward.9} parent=5 // pred_fallthru
      _
  $region6: #{rac_forward.9} parent=0 // loop_footer
    %s16 = sadd.s32 1, %s12
  $region7: #{rac_forward.9} parent=0 // loop_footer_branch
    %11 = sbr.rel target = $region3
  $region8: #{rac_forward.9} parent=0 // loop_exit
    _

// kernel: rac_forward.7
$region0: #{rac_forward.7}
  #allocation0 [shape = 'u32[]', space=smem, size = 0x4, offset = 0x4, fixed_abs, tag = 'smem constant byte address 0x4 - core index']
  #allocation1 [shape = 'u32[72,128]{1,0:T(1,128)}', space=vmem, size = 0x9000, scoped, tag = 'internal scratch']
  #allocation2 [shape = 'bf16[4,16,24]{2,1,0:T(8,128)(2,1)}', space=vmem, size = 0x4000, scoped, tag = 'scratch operand']
  #allocation3 [shape = 'f32[4,16,8]{2,1,0:T(8,128)}', space=vmem, size = 0x8000, scoped, tag = 'scratch operand']
  %s0 = inlined_call_operand.vmem [shape: f32[8,16,8], index: 0, kind: input, shape index: {}]
  %s1 = inlined_call_operand.vmem [shape: f32[1,8], index: 1, kind: input, shape index: {}]
  %s2 = inlined_call_operand.vmem [shape: f32[1,8], index: 2, kind: input, shape index: {}]
  %s3 = inlined_call_operand.vmem [shape: f32[8,24], index: 3, kind: input, shape index: {}]
  %s4 = inlined_call_operand.vmem [shape: f32[1,24], index: 4, kind: input, shape index: {}]
  %s5 = inlined_call_operand.vmem [shape: f32[2,16,16], index: 5, kind: input, shape index: {}]
  %s6 = inlined_call_operand.vmem [shape: f32[8,8], index: 6, kind: input, shape index: {}]
  %s7 = inlined_call_operand.vmem [shape: f32[1,8], index: 7, kind: input, shape index: {}]
  %s8 = inlined_call_operand.vmem [shape: f32[1,8], index: 8, kind: input, shape index: {}]
  %s9 = inlined_call_operand.vmem [shape: f32[1,8], index: 9, kind: input, shape index: {}]
  %s10 = inlined_call_operand.vmem [shape: f32[8,32], index: 10, kind: input, shape index: {}]
  %s11 = inlined_call_operand.vmem [shape: f32[1,32], index: 11, kind: input, shape index: {}]
  %s12 = inlined_call_operand.vmem [shape: f32[32,8], index: 12, kind: input, shape index: {}]
  %s13 = inlined_call_operand.vmem [shape: f32[1,8], index: 13, kind: input, shape index: {}]
  %s14 = inlined_call_operand.vmem [shape: f32[8,16,8], index: 14, kind: output, shape index: {}]
  %s15 = sld [smem:[#allocation0]]
  $region89: #{rac_forward.7} parent=0
    _
  %s17 = ssub.s32 1, %s15
  %s18 = scalar_select 0, %s17, %s15
  loop: start=0, step=1, limit=4
  $region2: #{rac_forward.7} parent=0 // loop_pre_header
    _
  $region3: #{rac_forward.7} parent=0 // loop_header
    %s20 = sphi 0, %s24
    %p21 = scmp.ge.s32.totalorder %s20, 4
    %s30 = sphi 0, %s32
    %s33 = sphi 0, %s30
    %s34 = sphi 0, %s33
    %s50 = sphi 0, %s34
    %s54 = sphi 0, %s54
    %s56 = sphi 0, %s54
    %s57 = sphi 0, %s56
    %s71 = sphi 0, %s57
    %s75 = sphi 0, %s75
    %s77 = sphi 0, %s75
    %s78 = sphi 0, %s77
    %s92 = sphi 0, %s78
    %s96 = sphi 0, %s96
    %s98 = sphi 0, %s96
    %s99 = sphi 0, %s98
    %s113 = sphi 0, %s99
    %s117 = sphi 0, %s117
    %s119 = sphi 0, %s117
    %s120 = sphi 0, %s119
    %s134 = sphi 0, %s120
    %s138 = sphi 0, %s138
    %s140 = sphi 0, %s138
    %s141 = sphi 0, %s140
    %s155 = sphi 0, %s141
    %s159 = sphi 0, %s159
    %s161 = sphi 0, %s159
    %s162 = sphi 0, %s161
    %s176 = sphi 0, %s162
    %s180 = sphi 0, %s180
    %s182 = sphi 0, %s180
    %s183 = sphi 0, %s182
    %s197 = sphi 0, %s183
    %s201 = sphi 0, %s201
    %s203 = sphi 0, %s201
    %s204 = sphi 0, %s203
    %s218 = sphi 0, %s204
    %s222 = sphi 0, %s222
    %s224 = sphi 0, %s222
    %s225 = sphi 0, %s224
    %s239 = sphi 0, %s225
    %s243 = sphi 0, %s243
    %s245 = sphi 0, %s243
    %s246 = sphi 0, %s245
    %s260 = sphi 0, %s246
    %s264 = sphi 0, %s264
    %s266 = sphi 0, %s264
    %s267 = sphi 0, %s266
    %s281 = sphi 0, %s267
    %s285 = sphi 0, %s285
    %s287 = sphi 0, %s285
    %s288 = sphi 0, %s287
    %s302 = sphi 0, %s288
    %s306 = sphi 0, %s306
    %s308 = sphi 0, %s306
    %s309 = sphi 0, %s308
    %s323 = sphi 0, %s309
    %s329 = sphi 0, %s331
    %s332 = sphi 0, %s329
    %s333 = sphi 0, %s332
    %s349 = sphi 0, %s333
  $region4: #{rac_forward.7} parent=0 // loop_header_branch
    %23 = sbr.rel (%p21) target = $region8
  $region5: #{rac_forward.7} parent=0 // loop_body
    %s25 = ssub.s32 %s20, 1
    %s26 = ssub.s32 %s20, 2
    %s27 = sadd.s32 %s20, 1
    %s28 = ssub.s32 %s20, %s27
    %p29 = scmp.eq.s32.totalorder %s28, 0
    %s31 = sadd.s32 %s30, 1
    %s32 = scalar_select %p29, %s30, %s31
    %p35 = pneg %p29
    %p36 = scmp.eq.s32.totalorder %s20, 1
    %p37 = por %p35, %p36
    %p38 = scmp.ne.s32.totalorder %s30, %s33
    %p39 = scmp.eq.s32.totalorder %s20, 0
    %p40 = por %p38, %p39
    %p41 = scmp.ne.s32.totalorder %s30, %s33
    %p42 = scmp.eq.s32.totalorder %s25, 1
    %p43 = por %p41, %p42
    %p44 = scmp.ne.s32.totalorder %s33, %s34
    %p45 = scmp.eq.s32.totalorder %s25, 0
    %p46 = por %p44, %p45
    %p47 = scmp.ne.s32.totalorder %s33, %s34
    %p48 = scmp.eq.s32.totalorder %s26, 1
    %p49 = por %p47, %p48
    %p51 = scmp.ne.s32.totalorder %s34, %s50
    %p52 = scmp.eq.s32.totalorder %s26, 0
    %p53 = por %p51, %p52
    %s55 = sadd.s32 %s54, 1
    %p58 = scmp.eq.s32.totalorder %s20, 1
    %p59 = scmp.ne.s32.totalorder %s54, %s56
    %p60 = scmp.eq.s32.totalorder %s20, 0
    %p61 = por %p59, %p60
    %p62 = scmp.ne.s32.totalorder %s54, %s56
    %p63 = scmp.eq.s32.totalorder %s25, 1
    %p64 = por %p62, %p63
    %p65 = scmp.ne.s32.totalorder %s56, %s57
    %p66 = scmp.eq.s32.totalorder %s25, 0
    %p67 = por %p65, %p66
    %p68 = scmp.ne.s32.totalorder %s56, %s57
    %p69 = scmp.eq.s32.totalorder %s26, 1
    %p70 = por %p68, %p69
    %p72 = scmp.ne.s32.totalorder %s57, %s71
    %p73 = scmp.eq.s32.totalorder %s26, 0
    %p74 = por %p72, %p73
    %s76 = sadd.s32 %s75, 1
    %p79 = scmp.eq.s32.totalorder %s20, 1
    %p80 = scmp.ne.s32.totalorder %s75, %s77
    %p81 = scmp.eq.s32.totalorder %s20, 0
    %p82 = por %p80, %p81
    %p83 = scmp.ne.s32.totalorder %s75, %s77
    %p84 = scmp.eq.s32.totalorder %s25, 1
    %p85 = por %p83, %p84
    %p86 = scmp.ne.s32.totalorder %s77, %s78
    %p87 = scmp.eq.s32.totalorder %s25, 0
    %p88 = por %p86, %p87
    %p89 = scmp.ne.s32.totalorder %s77, %s78
    %p90 = scmp.eq.s32.totalorder %s26, 1
    %p91 = por %p89, %p90
    %p93 = scmp.ne.s32.totalorder %s78, %s92
    %p94 = scmp.eq.s32.totalorder %s26, 0
    %p95 = por %p93, %p94
    %s97 = sadd.s32 %s96, 1
    %p100 = scmp.eq.s32.totalorder %s20, 1
    %p101 = scmp.ne.s32.totalorder %s96, %s98
    %p102 = scmp.eq.s32.totalorder %s20, 0
    %p103 = por %p101, %p102
    %p104 = scmp.ne.s32.totalorder %s96, %s98
    %p105 = scmp.eq.s32.totalorder %s25, 1
    %p106 = por %p104, %p105
    %p107 = scmp.ne.s32.totalorder %s98, %s99
    %p108 = scmp.eq.s32.totalorder %s25, 0
    %p109 = por %p107, %p108
    %p110 = scmp.ne.s32.totalorder %s98, %s99
    %p111 = scmp.eq.s32.totalorder %s26, 1
    %p112 = por %p110, %p111
    %p114 = scmp.ne.s32.totalorder %s99, %s113
    %p115 = scmp.eq.s32.totalorder %s26, 0
    %p116 = por %p114, %p115
    %s118 = sadd.s32 %s117, 1
    %p121 = scmp.eq.s32.totalorder %s20, 1
    %p122 = scmp.ne.s32.totalorder %s117, %s119
    %p123 = scmp.eq.s32.totalorder %s20, 0
    %p124 = por %p122, %p123
    %p125 = scmp.ne.s32.totalorder %s117, %s119
    %p126 = scmp.eq.s32.totalorder %s25, 1
    %p127 = por %p125, %p126
    %p128 = scmp.ne.s32.totalorder %s119, %s120
    %p129 = scmp.eq.s32.totalorder %s25, 0
    %p130 = por %p128, %p129
    %p131 = scmp.ne.s32.totalorder %s119, %s120
    %p132 = scmp.eq.s32.totalorder %s26, 1
    %p133 = por %p131, %p132
    %p135 = scmp.ne.s32.totalorder %s120, %s134
    %p136 = scmp.eq.s32.totalorder %s26, 0
    %p137 = por %p135, %p136
    %s139 = sadd.s32 %s138, 1
    %p142 = scmp.eq.s32.totalorder %s20, 1
    %p143 = scmp.ne.s32.totalorder %s138, %s140
    %p144 = scmp.eq.s32.totalorder %s20, 0
    %p145 = por %p143, %p144
    %p146 = scmp.ne.s32.totalorder %s138, %s140
    %p147 = scmp.eq.s32.totalorder %s25, 1
    %p148 = por %p146, %p147
    %p149 = scmp.ne.s32.totalorder %s140, %s141
    %p150 = scmp.eq.s32.totalorder %s25, 0
    %p151 = por %p149, %p150
    %p152 = scmp.ne.s32.totalorder %s140, %s141
    %p153 = scmp.eq.s32.totalorder %s26, 1
    %p154 = por %p152, %p153
    %p156 = scmp.ne.s32.totalorder %s141, %s155
    %p157 = scmp.eq.s32.totalorder %s26, 0
    %p158 = por %p156, %p157
    %s160 = sadd.s32 %s159, 1
    %p163 = scmp.eq.s32.totalorder %s20, 1
    %p164 = scmp.ne.s32.totalorder %s159, %s161
    %p165 = scmp.eq.s32.totalorder %s20, 0
    %p166 = por %p164, %p165
    %p167 = scmp.ne.s32.totalorder %s159, %s161
    %p168 = scmp.eq.s32.totalorder %s25, 1
    %p169 = por %p167, %p168
    %p170 = scmp.ne.s32.totalorder %s161, %s162
    %p171 = scmp.eq.s32.totalorder %s25, 0
    %p172 = por %p170, %p171
    %p173 = scmp.ne.s32.totalorder %s161, %s162
    %p174 = scmp.eq.s32.totalorder %s26, 1
    %p175 = por %p173, %p174
    %p177 = scmp.ne.s32.totalorder %s162, %s176
    %p178 = scmp.eq.s32.totalorder %s26, 0
    %p179 = por %p177, %p178
    %s181 = sadd.s32 %s180, 1
    %p184 = scmp.eq.s32.totalorder %s20, 1
    %p185 = scmp.ne.s32.totalorder %s180, %s182
    %p186 = scmp.eq.s32.totalorder %s20, 0
    %p187 = por %p185, %p186
    %p188 = scmp.ne.s32.totalorder %s180, %s182
    %p189 = scmp.eq.s32.totalorder %s25, 1
    %p190 = por %p188, %p189
    %p191 = scmp.ne.s32.totalorder %s182, %s183
    %p192 = scmp.eq.s32.totalorder %s25, 0
    %p193 = por %p191, %p192
    %p194 = scmp.ne.s32.totalorder %s182, %s183
    %p195 = scmp.eq.s32.totalorder %s26, 1
    %p196 = por %p194, %p195
    %p198 = scmp.ne.s32.totalorder %s183, %s197
    %p199 = scmp.eq.s32.totalorder %s26, 0
    %p200 = por %p198, %p199
    %s202 = sadd.s32 %s201, 1
    %p205 = scmp.eq.s32.totalorder %s20, 1
    %p206 = scmp.ne.s32.totalorder %s201, %s203
    %p207 = scmp.eq.s32.totalorder %s20, 0
    %p208 = por %p206, %p207
    %p209 = scmp.ne.s32.totalorder %s201, %s203
    %p210 = scmp.eq.s32.totalorder %s25, 1
    %p211 = por %p209, %p210
    %p212 = scmp.ne.s32.totalorder %s203, %s204
    %p213 = scmp.eq.s32.totalorder %s25, 0
    %p214 = por %p212, %p213
    %p215 = scmp.ne.s32.totalorder %s203, %s204
    %p216 = scmp.eq.s32.totalorder %s26, 1
    %p217 = por %p215, %p216
    %p219 = scmp.ne.s32.totalorder %s204, %s218
    %p220 = scmp.eq.s32.totalorder %s26, 0
    %p221 = por %p219, %p220
    %s223 = sadd.s32 %s222, 1
    %p226 = scmp.eq.s32.totalorder %s20, 1
    %p227 = scmp.ne.s32.totalorder %s222, %s224
    %p228 = scmp.eq.s32.totalorder %s20, 0
    %p229 = por %p227, %p228
    %p230 = scmp.ne.s32.totalorder %s222, %s224
    %p231 = scmp.eq.s32.totalorder %s25, 1
    %p232 = por %p230, %p231
    %p233 = scmp.ne.s32.totalorder %s224, %s225
    %p234 = scmp.eq.s32.totalorder %s25, 0
    %p235 = por %p233, %p234
    %p236 = scmp.ne.s32.totalorder %s224, %s225
    %p237 = scmp.eq.s32.totalorder %s26, 1
    %p238 = por %p236, %p237
    %p240 = scmp.ne.s32.totalorder %s225, %s239
    %p241 = scmp.eq.s32.totalorder %s26, 0
    %p242 = por %p240, %p241
    %s244 = sadd.s32 %s243, 1
    %p247 = scmp.eq.s32.totalorder %s20, 1
    %p248 = scmp.ne.s32.totalorder %s243, %s245
    %p249 = scmp.eq.s32.totalorder %s20, 0
    %p250 = por %p248, %p249
    %p251 = scmp.ne.s32.totalorder %s243, %s245
    %p252 = scmp.eq.s32.totalorder %s25, 1
    %p253 = por %p251, %p252
    %p254 = scmp.ne.s32.totalorder %s245, %s246
    %p255 = scmp.eq.s32.totalorder %s25, 0
    %p256 = por %p254, %p255
    %p257 = scmp.ne.s32.totalorder %s245, %s246
    %p258 = scmp.eq.s32.totalorder %s26, 1
    %p259 = por %p257, %p258
    %p261 = scmp.ne.s32.totalorder %s246, %s260
    %p262 = scmp.eq.s32.totalorder %s26, 0
    %p263 = por %p261, %p262
    %s265 = sadd.s32 %s264, 1
    %p268 = scmp.eq.s32.totalorder %s20, 1
    %p269 = scmp.ne.s32.totalorder %s264, %s266
    %p270 = scmp.eq.s32.totalorder %s20, 0
    %p271 = por %p269, %p270
    %p272 = scmp.ne.s32.totalorder %s264, %s266
    %p273 = scmp.eq.s32.totalorder %s25, 1
    %p274 = por %p272, %p273
    %p275 = scmp.ne.s32.totalorder %s266, %s267
    %p276 = scmp.eq.s32.totalorder %s25, 0
    %p277 = por %p275, %p276
    %p278 = scmp.ne.s32.totalorder %s266, %s267
    %p279 = scmp.eq.s32.totalorder %s26, 1
    %p280 = por %p278, %p279
    %p282 = scmp.ne.s32.totalorder %s267, %s281
    %p283 = scmp.eq.s32.totalorder %s26, 0
    %p284 = por %p282, %p283
    %s286 = sadd.s32 %s285, 1
    %p289 = scmp.eq.s32.totalorder %s20, 1
    %p290 = scmp.ne.s32.totalorder %s285, %s287
    %p291 = scmp.eq.s32.totalorder %s20, 0
    %p292 = por %p290, %p291
    %p293 = scmp.ne.s32.totalorder %s285, %s287
    %p294 = scmp.eq.s32.totalorder %s25, 1
    %p295 = por %p293, %p294
    %p296 = scmp.ne.s32.totalorder %s287, %s288
    %p297 = scmp.eq.s32.totalorder %s25, 0
    %p298 = por %p296, %p297
    %p299 = scmp.ne.s32.totalorder %s287, %s288
    %p300 = scmp.eq.s32.totalorder %s26, 1
    %p301 = por %p299, %p300
    %p303 = scmp.ne.s32.totalorder %s288, %s302
    %p304 = scmp.eq.s32.totalorder %s26, 0
    %p305 = por %p303, %p304
    %s307 = sadd.s32 %s306, 1
    %p310 = scmp.eq.s32.totalorder %s20, 1
    %p311 = scmp.ne.s32.totalorder %s306, %s308
    %p312 = scmp.eq.s32.totalorder %s20, 0
    %p313 = por %p311, %p312
    %p314 = scmp.ne.s32.totalorder %s306, %s308
    %p315 = scmp.eq.s32.totalorder %s25, 1
    %p316 = por %p314, %p315
    %p317 = scmp.ne.s32.totalorder %s308, %s309
    %p318 = scmp.eq.s32.totalorder %s25, 0
    %p319 = por %p317, %p318
    %p320 = scmp.ne.s32.totalorder %s308, %s309
    %p321 = scmp.eq.s32.totalorder %s26, 1
    %p322 = por %p320, %p321
    %p324 = scmp.ne.s32.totalorder %s309, %s323
    %p325 = scmp.eq.s32.totalorder %s26, 0
    %p326 = por %p324, %p325
    %s327 = ssub.s32 %s20, %s27
    %p328 = scmp.eq.s32.totalorder %s327, 0
    %s330 = sadd.s32 %s329, 1
    %s331 = scalar_select %p328, %s329, %s330
    %p334 = pneg %p328
    %p335 = scmp.eq.s32.totalorder %s20, 1
    %p336 = por %p334, %p335
    %p337 = scmp.ne.s32.totalorder %s329, %s332
    %p338 = scmp.eq.s32.totalorder %s20, 0
    %p339 = por %p337, %p338
    %p340 = scmp.ne.s32.totalorder %s329, %s332
    %p341 = scmp.eq.s32.totalorder %s25, 1
    %p342 = por %p340, %p341
    %p343 = scmp.ne.s32.totalorder %s332, %s333
    %p344 = scmp.eq.s32.totalorder %s25, 0
    %p345 = por %p343, %p344
    %p346 = scmp.ne.s32.totalorder %s332, %s333
    %p347 = scmp.eq.s32.totalorder %s26, 1
    %p348 = por %p346, %p347
    %p350 = scmp.ne.s32.totalorder %s333, %s349
    %p351 = scmp.eq.s32.totalorder %s26, 0
    %p352 = por %p350, %p351
    %p353 = scmp.le.s32.totalorder 1, %s20
    %p354 = scmp.lt.s32.totalorder %s20, 3
    %p355 = pnand %p353, %p354
    %p356 = pneg %p355
    // Predicated region
    $region9: #{rac_forward.7} parent=5 // pred_check
      _
    $region10: #{rac_forward.7} parent=5 // pred_check_branch
      %358 = sbr.rel (%p355) target = $region12
    $region11: #{rac_forward.7} parent=5 // pred_region
      %s359 = ssub.s32 %s20, 1
      // Predicated region
      $region13: #{rac_forward.7} parent=11 // pred_check
        %p360 = pneg %p67
      $region14: #{rac_forward.7} parent=11 // pred_check_branch
        %362 = sbr.rel (%p360) target = $region16
      $region15: #{rac_forward.7} parent=11 // pred_region
        _
      $region16: #{rac_forward.7} parent=11 // pred_fallthru
        _
      // Predicated region
      $region17: #{rac_forward.7} parent=11 // pred_check
        %p363 = pneg %p88
      $region18: #{rac_forward.7} parent=11 // pred_check_branch
        %365 = sbr.rel (%p363) target = $region20
      $region19: #{rac_forward.7} parent=11 // pred_region
        _
      $region20: #{rac_forward.7} parent=11 // pred_fallthru
        _
      // Predicated region
      $region21: #{rac_forward.7} parent=11 // pred_check
        %p366 = pneg %p109
      $region22: #{rac_forward.7} parent=11 // pred_check_branch
        %368 = sbr.rel (%p366) target = $region24
      $region23: #{rac_forward.7} parent=11 // pred_region
        _
      $region24: #{rac_forward.7} parent=11 // pred_fallthru
        _
      // Predicated region
      $region25: #{rac_forward.7} parent=11 // pred_check
        %p369 = pneg %p130
      $region26: #{rac_forward.7} parent=11 // pred_check_branch
        %371 = sbr.rel (%p369) target = $region28
      $region27: #{rac_forward.7} parent=11 // pred_region
        _
      $region28: #{rac_forward.7} parent=11 // pred_fallthru
        _
      // Predicated region
      $region29: #{rac_forward.7} parent=11 // pred_check
        %p372 = pneg %p151
      $region30: #{rac_forward.7} parent=11 // pred_check_branch
        %374 = sbr.rel (%p372) target = $region32
      $region31: #{rac_forward.7} parent=11 // pred_region
        _
      $region32: #{rac_forward.7} parent=11 // pred_fallthru
        _
      // Predicated region
      $region33: #{rac_forward.7} parent=11 // pred_check
        %p375 = pneg %p172
      $region34: #{rac_forward.7} parent=11 // pred_check_branch
        %377 = sbr.rel (%p375) target = $region36
      $region35: #{rac_forward.7} parent=11 // pred_region
        _
      $region36: #{rac_forward.7} parent=11 // pred_fallthru
        _
      // Predicated region
      $region37: #{rac_forward.7} parent=11 // pred_check
        %p378 = pneg %p193
      $region38: #{rac_forward.7} parent=11 // pred_check_branch
        %380 = sbr.rel (%p378) target = $region40
      $region39: #{rac_forward.7} parent=11 // pred_region
        _
      $region40: #{rac_forward.7} parent=11 // pred_fallthru
        _
      // Predicated region
      $region41: #{rac_forward.7} parent=11 // pred_check
        %p381 = pneg %p214
      $region42: #{rac_forward.7} parent=11 // pred_check_branch
        %383 = sbr.rel (%p381) target = $region44
      $region43: #{rac_forward.7} parent=11 // pred_region
        _
      $region44: #{rac_forward.7} parent=11 // pred_fallthru
        _
      // Predicated region
      $region45: #{rac_forward.7} parent=11 // pred_check
        %p384 = pneg %p235
      $region46: #{rac_forward.7} parent=11 // pred_check_branch
        %386 = sbr.rel (%p384) target = $region48
      $region47: #{rac_forward.7} parent=11 // pred_region
        _
      $region48: #{rac_forward.7} parent=11 // pred_fallthru
        _
      // Predicated region
      $region49: #{rac_forward.7} parent=11 // pred_check
        %p387 = pneg %p256
      $region50: #{rac_forward.7} parent=11 // pred_check_branch
        %389 = sbr.rel (%p387) target = $region52
      $region51: #{rac_forward.7} parent=11 // pred_region
        _
      $region52: #{rac_forward.7} parent=11 // pred_fallthru
        _
      // Predicated region
      $region53: #{rac_forward.7} parent=11 // pred_check
        %p390 = pneg %p277
      $region54: #{rac_forward.7} parent=11 // pred_check_branch
        %392 = sbr.rel (%p390) target = $region56
      $region55: #{rac_forward.7} parent=11 // pred_region
        _
      $region56: #{rac_forward.7} parent=11 // pred_fallthru
        _
      // Predicated region
      $region57: #{rac_forward.7} parent=11 // pred_check
        %p393 = pneg %p298
      $region58: #{rac_forward.7} parent=11 // pred_check_branch
        %395 = sbr.rel (%p393) target = $region60
      $region59: #{rac_forward.7} parent=11 // pred_region
        _
      $region60: #{rac_forward.7} parent=11 // pred_fallthru
        _
      // Predicated region
      $region61: #{rac_forward.7} parent=11 // pred_check
        %p396 = pneg %p319
      $region62: #{rac_forward.7} parent=11 // pred_check_branch
        %398 = sbr.rel (%p396) target = $region64
      $region63: #{rac_forward.7} parent=11 // pred_region
        _
      $region64: #{rac_forward.7} parent=11 // pred_fallthru
        _
    $region12: #{rac_forward.7} parent=5 // pred_fallthru
      _
    %p399 = scmp.lt.s32.totalorder %s20, 2
    // Predicated region
    $region65: #{rac_forward.7} parent=5 // pred_check
      %p400 = pneg %p399
    $region66: #{rac_forward.7} parent=5 // pred_check_branch
      %402 = sbr.rel (%p400) target = $region68
    $region67: #{rac_forward.7} parent=5 // pred_region
      // Predicated region
      $region69: #{rac_forward.7} parent=67 // pred_check
        %p403 = pneg %p40
      $region70: #{rac_forward.7} parent=67 // pred_check_branch
        %405 = sbr.rel (%p403) target = $region72
      $region71: #{rac_forward.7} parent=67 // pred_region
        %s406 = smul.u32 4, %s20
        %p407 = scmp.lt.s32.totalorder %s406, 7
        %s408 = scalar_select %p407, %s406, 7
        %s409 = smul.addr %s408, 2
        %s410 = smul.addr %s409, 8
        %s411 = scalar_lea.vmem %s0, %s410
        %s412 = smul.u32 4, %s20
      $region72: #{rac_forward.7} parent=67 // pred_fallthru
        _
    $region68: #{rac_forward.7} parent=5 // pred_fallthru
      _
    %p413 = scmp.le.s32.totalorder 1, %s20
    %p414 = scmp.lt.s32.totalorder %s20, 3
    %p415 = pnand %p413, %p414
    %p416 = pneg %p415
    // Predicated region
    $region73: #{rac_forward.7} parent=5 // pred_check
      _
    $region74: #{rac_forward.7} parent=5 // pred_check_branch
      %418 = sbr.rel (%p415) target = $region76
    $region75: #{rac_forward.7} parent=5 // pred_region
      %s419 = ssub.s32 %s20, 1
      %s420 = smul.u32 4, %s25
      %p421 = scmp.lt.s32.totalorder %s420, 7
      %s422 = scalar_select %p421, %s420, 7
      %s423 = smul.addr %s422, 2
      %s424 = smul.addr %s423, 8
      %s425 = scalar_lea.vmem %s0, %s424
      %p426 = pneg %p46
      %p427 = pneg %p43
      %p428 = pneg %p67
      %p429 = pneg %p64
      %p430 = pneg %p88
      %p431 = pneg %p85
      %p432 = pneg %p109
      %p433 = pneg %p106
      %p434 = pneg %p130
      %p435 = pneg %p127
      %p436 = pneg %p151
      %p437 = pneg %p148
      %p438 = pneg %p172
      %p439 = pneg %p169
      %p440 = pneg %p193
      %p441 = pneg %p190
      %p442 = pneg %p214
      %p443 = pneg %p211
      %p444 = pneg %p235
      %p445 = pneg %p232
      %p446 = pneg %p256
      %p447 = pneg %p253
      %p448 = pneg %p277
      %p449 = pneg %p274
      %p450 = pneg %p298
      %p451 = pneg %p295
      %p452 = pneg %p319
      %p453 = pneg %p316
      %p454 = pneg %p345
      %p455 = pneg %p342
      %s456 = smul.u32 4, %s25
      %p457 = scmp.lt.s32.totalorder %s456, 7
      %s458 = scalar_select %p457, %s456, 7
      %s459 = smul.addr %s458, 2
      %s460 = smul.addr %s459, 8
      %s461 = scalar_lea.vmem %s14, %s460
      %s462 = smul.u32 4, %s25
      %p463 = scmp.lt.s32.totalorder %s462, 7
      %s464 = scalar_select %p463, %s462, 7
      %s465 = smul.addr %s464, 2
      %s466 = smul.addr %s465, 8
      %s467 = scalar_lea.vmem %s0, %s466
      %s468 = smul.u32 4, %s25
      %s469 = smul.u32 4, %s25
      %p470 = scmp.lt.s32.totalorder %s469, 7
      %s471 = scalar_select %p470, %s469, 7
      %s472 = smul.addr %s471, 2
      %s473 = smul.addr %s472, 8
      %s474 = scalar_lea.vmem %s14, %s473
      %s475 = smul.u32 4, %s25
      %v477 = vld [vmem:[%s467] sm:$0xff]
      %v478 = vld [vmem:[%s467 + $0x8] sm:$0xff]
      %v479 = vld [vmem:[%s467 + $0x10] sm:$0xff]
      %v480 = vld [vmem:[%s467 + $0x18] sm:$0xff]
      %v481 = vld [vmem:[%s467 + $0x20] sm:$0xff]
      %v482 = vld [vmem:[%s467 + $0x28] sm:$0xff]
      %v483 = vld [vmem:[%s467 + $0x30] sm:$0xff]
      %v484 = vld [vmem:[%s467 + $0x38] sm:$0xff]
      %v485 = vld [vmem:[%s1] sm:$0x1]
      %v486 = vld [vmem:[%s2] sm:$0x1]
      %vm487 = vcmask 64512
      %v488 = vsel %vm487, %v477, 0.0
      %489 = vadd.xlane.f32.xlu0 %v488
      %v490 = vpop.xlane.xlu0 %489
      %v491 = vsel %vm487, %v478, 0.0
      %492 = vadd.xlane.f32.xlu0 %v491
      %v493 = vpop.xlane.xlu0 %492
      %v494 = vsel %vm487, %v479, 0.0
      %495 = vadd.xlane.f32.xlu0 %v494
      %v496 = vpop.xlane.xlu0 %495
      %v497 = vsel %vm487, %v480, 0.0
      %498 = vadd.xlane.f32.xlu0 %v497
      %v499 = vpop.xlane.xlu0 %498
      %v500 = vsel %vm487, %v481, 0.0
      %501 = vadd.xlane.f32.xlu0 %v500
      %v502 = vpop.xlane.xlu0 %501
      %v503 = vsel %vm487, %v482, 0.0
      %504 = vadd.xlane.f32.xlu0 %v503
      %v505 = vpop.xlane.xlu0 %504
      %v506 = vsel %vm487, %v483, 0.0
      %507 = vadd.xlane.f32.xlu0 %v506
      %v508 = vpop.xlane.xlu0 %507
      %v509 = vsel %vm487, %v484, 0.0
      %510 = vadd.xlane.f32.xlu0 %v509
      %v511 = vpop.xlane.xlu0 %510
      %v512 = vrcp.pop 8.0
      %v513 = vmul.f32 8.0, %v512
      %v514 = vsub.f32 1.0, %v513
      %v515 = vmul.f32 %v512, %v514
      %v516 = vadd.f32 %v512, %v515
      %vm517 = vweird.f32 %v512
      %v518 = vsel %vm517, %v512, %v516
      %v519 = vmul.f32 %v490, %v518
      %v520 = vmul.f32 %v493, %v518
      %v521 = vmul.f32 %v496, %v518
      %v522 = vmul.f32 %v499, %v518
      %v523 = vmul.f32 %v502, %v518
      %v524 = vmul.f32 %v505, %v518
      %v525 = vmul.f32 %v508, %v518
      %v526 = vmul.f32 %v511, %v518
      %v527 = vsub.f32 %v477, %v519
      %v528 = vsub.f32 %v478, %v520
      %v529 = vsub.f32 %v479, %v521
      %v530 = vsub.f32 %v480, %v522
      %v531 = vsub.f32 %v481, %v523
      %v532 = vsub.f32 %v482, %v524
      %v533 = vsub.f32 %v483, %v525
      %v534 = vsub.f32 %v484, %v526
      %v535 = vmul.f32 %v527, %v527
      %v536 = vmul.f32 %v528, %v528
      %v537 = vmul.f32 %v529, %v529
      %v538 = vmul.f32 %v530, %v530
      %v539 = vmul.f32 %v531, %v531
      %v540 = vmul.f32 %v532, %v532
      %v541 = vmul.f32 %v533, %v533
      %v542 = vmul.f32 %v534, %v534
      %v543 = vsel %vm487, %v535, 0.0
      %544 = vadd.xlane.f32.xlu0 %v543
      %v545 = vpop.xlane.xlu0 %544
      %v546 = vsel %vm487, %v536, 0.0
      %547 = vadd.xlane.f32.xlu0 %v546
      %v548 = vpop.xlane.xlu0 %547
      %v549 = vsel %vm487, %v537, 0.0
      %550 = vadd.xlane.f32.xlu0 %v549
      %v551 = vpop.xlane.xlu0 %550
      %v552 = vsel %vm487, %v538, 0.0
      %553 = vadd.xlane.f32.xlu0 %v552
      %v554 = vpop.xlane.xlu0 %553
      %v555 = vsel %vm487, %v539, 0.0
      %556 = vadd.xlane.f32.xlu0 %v555
      %v557 = vpop.xlane.xlu0 %556
      %v558 = vsel %vm487, %v540, 0.0
      %559 = vadd.xlane.f32.xlu0 %v558
      %v560 = vpop.xlane.xlu0 %559
      %v561 = vsel %vm487, %v541, 0.0
      %562 = vadd.xlane.f32.xlu0 %v561
      %v563 = vpop.xlane.xlu0 %562
      %v564 = vsel %vm487, %v542, 0.0
      %565 = vadd.xlane.f32.xlu0 %v564
      %v566 = vpop.xlane.xlu0 %565
      %v567 = vmul.f32 %v545, %v518
      %v568 = vmul.f32 %v548, %v518
      %v569 = vmul.f32 %v551, %v518
      %v570 = vmul.f32 %v554, %v518
      %v571 = vmul.f32 %v557, %v518
      %v572 = vmul.f32 %v560, %v518
      %v573 = vmul.f32 %v563, %v518
      %v574 = vmul.f32 %v566, %v518
      %v575 = vadd.f32 %v567, 1e-05
      %v576 = vadd.f32 %v568, 1e-05
      %v577 = vadd.f32 %v569, 1e-05
      %v578 = vadd.f32 %v570, 1e-05
      %v579 = vadd.f32 %v571, 1e-05
      %v580 = vadd.f32 %v572, 1e-05
      %v581 = vadd.f32 %v573, 1e-05
      %v582 = vadd.f32 %v574, 1e-05
      %v583 = vrsqrt.pop %v575
      %v584 = vmul.f32 %v583, %v575
      %v585 = vmul.f32 %v584, %v583
      %v586 = vmul.f32 0.5, %v585
      %v587 = vsub.f32 1.5, %v586
      %v588 = vmul.f32 %v583, %v587
      %vm589 = vweird.f32 %v575
      %vm590 = vweird.f32 %v583
      %vm591 = vmor %vm589, %vm590
      %v592 = vsel %vm591, %v583, %v588
      %v593 = vrsqrt.pop %v576
      %v594 = vmul.f32 %v593, %v576
      %v595 = vmul.f32 %v594, %v593
      %v596 = vmul.f32 0.5, %v595
      %v597 = vsub.f32 1.5, %v596
      %v598 = vmul.f32 %v593, %v597
      %vm599 = vweird.f32 %v576
      %vm600 = vweird.f32 %v593
      %vm601 = vmor %vm599, %vm600
      %v602 = vsel %vm601, %v593, %v598
      %v603 = vrsqrt.pop %v577
      %v604 = vmul.f32 %v603, %v577
      %v605 = vmul.f32 %v604, %v603
      %v606 = vmul.f32 0.5, %v605
      %v607 = vsub.f32 1.5, %v606
      %v608 = vmul.f32 %v603, %v607
      %vm609 = vweird.f32 %v577
      %vm610 = vweird.f32 %v603
      %vm611 = vmor %vm609, %vm610
      %v612 = vsel %vm611, %v603, %v608
      %v613 = vrsqrt.pop %v578
      %v614 = vmul.f32 %v613, %v578
      %v615 = vmul.f32 %v614, %v613
      %v616 = vmul.f32 0.5, %v615
      %v617 = vsub.f32 1.5, %v616
      %v618 = vmul.f32 %v613, %v617
      %vm619 = vweird.f32 %v578
      %vm620 = vweird.f32 %v613
      %vm621 = vmor %vm619, %vm620
      %v622 = vsel %vm621, %v613, %v618
      %v623 = vrsqrt.pop %v579
      %v624 = vmul.f32 %v623, %v579
      %v625 = vmul.f32 %v624, %v623
      %v626 = vmul.f32 0.5, %v625
      %v627 = vsub.f32 1.5, %v626
      %v628 = vmul.f32 %v623, %v627
      %vm629 = vweird.f32 %v579
      %vm630 = vweird.f32 %v623
      %vm631 = vmor %vm629, %vm630
      %v632 = vsel %vm631, %v623, %v628
      %v633 = vrsqrt.pop %v580
      %v634 = vmul.f32 %v633, %v580
      %v635 = vmul.f32 %v634, %v633
      %v636 = vmul.f32 0.5, %v635
      %v637 = vsub.f32 1.5, %v636
      %v638 = vmul.f32 %v633, %v637
      %vm639 = vweird.f32 %v580
      %vm640 = vweird.f32 %v633
      %vm641 = vmor %vm639, %vm640
      %v642 = vsel %vm641, %v633, %v638
      %v643 = vrsqrt.pop %v581
      %v644 = vmul.f32 %v643, %v581
      %v645 = vmul.f32 %v644, %v643
      %v646 = vmul.f32 0.5, %v645
      %v647 = vsub.f32 1.5, %v646
      %v648 = vmul.f32 %v643, %v647
      %vm649 = vweird.f32 %v581
      %vm650 = vweird.f32 %v643
      %vm651 = vmor %vm649, %vm650
      %v652 = vsel %vm651, %v643, %v648
      %v653 = vrsqrt.pop %v582
      %v654 = vmul.f32 %v653, %v582
      %v655 = vmul.f32 %v654, %v653
      %v656 = vmul.f32 0.5, %v655
      %v657 = vsub.f32 1.5, %v656
      %v658 = vmul.f32 %v653, %v657
      %vm659 = vweird.f32 %v582
      %vm660 = vweird.f32 %v653
      %vm661 = vmor %vm659, %vm660
      %v662 = vsel %vm661, %v653, %v658
      %v663 = vmul.f32 %v527, %v592
      %v664 = vmul.f32 %v528, %v602
      %v665 = vmul.f32 %v529, %v612
      %v666 = vmul.f32 %v530, %v622
      %v667 = vmul.f32 %v531, %v632
      %v668 = vmul.f32 %v532, %v642
      %v669 = vmul.f32 %v533, %v652
      %v670 = vmul.f32 %v534, %v662
      %v672 = vperm.slane %v485, 0
      %v674 = vmul.f32 %v663, %v672
      %v675 = vmul.f32 %v664, %v672
      %v676 = vmul.f32 %v665, %v672
      %v677 = vmul.f32 %v666, %v672
      %v678 = vmul.f32 %v667, %v672
      %v679 = vmul.f32 %v668, %v672
      %v680 = vmul.f32 %v669, %v672
      %v681 = vmul.f32 %v670, %v672
      %v683 = vperm.slane %v486, 0
      %v685 = vadd.f32 %v674, %v683
      %v686 = vadd.f32 %v675, %v683
      %v687 = vadd.f32 %v676, %v683
      %v688 = vadd.f32 %v677, %v683
      %v689 = vadd.f32 %v678, %v683
      %v690 = vadd.f32 %v679, %v683
      %v691 = vadd.f32 %v680, %v683
      %v692 = vadd.f32 %v681, %v683
      %v693 = vld [vmem:[%s3] sm:$0xff]
      %v694 = vpack.c.bf16 %v685, %v685
      %v695 = vpack.c.bf16 %v686, %v686
      %v696 = vpack.c.bf16 %v687, %v687
      %v697 = vpack.c.bf16 %v688, %v688
      %v698 = vpack.c.bf16 %v689, %v689
      %v699 = vpack.c.bf16 %v690, %v690
      %v700 = vpack.c.bf16 %v691, %v691
      %v701 = vpack.c.bf16 %v692, %v692
      %v702 = vpack.c.bf16 %v693, %v693
      %v703 = vld [vmem:[%s4] sm:$0x1]
      %v705 = vperm.slane %v703, 0
      %v715 = vunpack.c.l.b16 %v694
      %v716 = vunpack.c.l.b16 %v695
      %v717 = vunpack.c.l.b16 %v696
      %v718 = vunpack.c.l.b16 %v697
      %v719 = vunpack.c.l.b16 %v698
      %v720 = vunpack.c.l.b16 %v699
      %v721 = vunpack.c.l.b16 %v700
      %v722 = vunpack.c.l.b16 %v701
      %v723 = vpack.c.b16 %v716, %v715
      %v724 = vpack.c.b16 %v718, %v717
      %v725 = vpack.c.b16 %v720, %v719
      %v726 = vpack.c.b16 %v722, %v721
      %v728 = vsel %vm487, %v723, 0
      %v731 = vsel %vm487, %v724, 0
      %v734 = vsel %vm487, %v725, 0
      %v737 = vsel %vm487, %v726, 0
      %vm739 = vcmask 1043456
      %v741 = vsel %vm739, %v702, 0
      %743 = vmatpush.bf16.msra.mxu0 0
      %744 = vmatpush.bf16.msra.mxu0 0
      %745 = vmatpush.bf16.msra.mxu0 0
      %746 = vmatpush.bf16.msra.mxu0 0
      %747 = vmatpush.bf16.msra.mxu0 0
      %748 = vmatpush.bf16.msra.mxu0 0
      %749 = vmatpush.bf16.msra.mxu0 0
      %750 = vmatpush.bf16.msra.mxu0 %v741
      %751 = vmatmul.bf16.gmra.mxu0 %v728
      %v752 = vpop.f32.mrf.mxu0
      %v753 = vadd.f32 %v705, %v752
      %v754 = vpop.f32.mrf.mxu0
      %v755 = vadd.f32 %v705, %v754
      %756 = vmatmul.bf16.gmra.mxu0 %v731
      %v757 = vpop.f32.mrf.mxu0
      %v758 = vadd.f32 %v705, %v757
      %v759 = vpop.f32.mrf.mxu0
      %v760 = vadd.f32 %v705, %v759
      %761 = vmatmul.bf16.gmra.mxu0 %v734
      %v762 = vpop.f32.mrf.mxu0
      %v763 = vadd.f32 %v705, %v762
      %v764 = vpop.f32.mrf.mxu0
      %v765 = vadd.f32 %v705, %v764
      %766 = vmatmul.bf16.gmra.mxu0 %v737
      %v767 = vpop.f32.mrf.mxu0
      %v768 = vadd.f32 %v705, %v767
      %v769 = vpop.f32.mrf.mxu0
      %v770 = vadd.f32 %v705, %v769
      %771 = vdwg.mxu0
      %v772 = vpack.c.bf16 %v753, %v753
      %v773 = vpack.c.bf16 %v755, %v755
      %v774 = vpack.c.bf16 %v758, %v758
      %v775 = vpack.c.bf16 %v760, %v760
      %v776 = vpack.c.bf16 %v763, %v763
      %v777 = vpack.c.bf16 %v765, %v765
      %v778 = vpack.c.bf16 %v768, %v768
      %v779 = vpack.c.bf16 %v770, %v770
      %vm780 = vcmask 191488
      %781 = vst.msk [vmem:[#allocation2] sm:$0xf] %vm780, %v772
      %782 = vst.msk [vmem:[#allocation2 + $0x4] sm:$0xf] %vm780, %v773
      %783 = vst.msk [vmem:[#allocation2 + $0x8] sm:$0xf] %vm780, %v774
      %784 = vst.msk [vmem:[#allocation2 + $0xc] sm:$0xf] %vm780, %v775
      %785 = vst.msk [vmem:[#allocation2 + $0x10] sm:$0xf] %vm780, %v776
      %786 = vst.msk [vmem:[#allocation2 + $0x14] sm:$0xf] %vm780, %v777
      %787 = vst.msk [vmem:[#allocation2 + $0x18] sm:$0xf] %vm780, %v778
      %788 = vst.msk [vmem:[#allocation2 + $0x1c] sm:$0xf] %vm780, %v779
      %v789 = vld [vmem:[%s5] sm:$0xff]
      %v790 = vld [vmem:[%s5 + $0x8] sm:$0xff]
      %v791 = vld [vmem:[%s5 + $0x10] sm:$0xff]
      %v792 = vld [vmem:[%s5 + $0x18] sm:$0xff]
      %v793 = vld [vmem:[#allocation2] sm:$0xf]
      %v794 = vld [vmem:[#allocation2 + $0x4] sm:$0xf]
      %v795 = vld [vmem:[#allocation2 + $0x8] sm:$0xf]
      %v796 = vld [vmem:[#allocation2 + $0xc] sm:$0xf]
      %v797 = vld [vmem:[#allocation2 + $0x10] sm:$0xf]
      %v798 = vld [vmem:[#allocation2 + $0x14] sm:$0xf]
      %v799 = vld [vmem:[#allocation2 + $0x18] sm:$0xf]
      %v800 = vld [vmem:[#allocation2 + $0x1c] sm:$0xf]
      %v803 = vunpack.c.l.b16 %v793
      %v804 = vunpack.c.l.b16 %v794
      %v805 = vpack.c.b16 %v804, %v803
      %806 = vrot.lane.b32.xlu0 %v805, 120
      %v807 = vpop.permute.xlu0 %806
      %vm808 = vcmask 31744
      %v810 = vsel %vm808, %v805, 0
      %v813 = vsel %vm808, %v807, 0
      %815 = vmatpush.bf16.xpose.msra.mxu0 0
      %816 = vmatpush.bf16.xpose.msra.mxu0 0
      %817 = vmatpush.bf16.xpose.msra.mxu0 0
      %818 = vmatpush.bf16.xpose.msra.mxu0 0
      %819 = vmatpush.bf16.xpose.msra.mxu0 0
      %820 = vmatpush.bf16.xpose.msra.mxu0 0
      %821 = vmatpush.bf16.xpose.msra.mxu0 0
      %822 = vmatpush.bf16.xpose.msra.mxu0 %v813
      %823 = vmatmul.bf16.gmra.mxu0 %v810
      %v824 = vpop.f32.mrf.mxu0
      %v825 = vadd.f32 %v789, %v824
      %v826 = vpop.f32.mrf.mxu0
      %v827 = vadd.f32 %v790, %v826
      %828 = vdwg.mxu0
      %v831 = vunpack.c.l.b16 %v795
      %v832 = vunpack.c.l.b16 %v796
      %v833 = vpack.c.b16 %v832, %v831
      %834 = vrot.lane.b32.xlu0 %v833, 120
      %v835 = vpop.permute.xlu0 %834
      %v837 = vsel %vm808, %v833, 0
      %v840 = vsel %vm808, %v835, 0
      %842 = vmatpush.bf16.xpose.msra.mxu0 0
      %843 = vmatpush.bf16.xpose.msra.mxu0 0
      %844 = vmatpush.bf16.xpose.msra.mxu0 0
      %845 = vmatpush.bf16.xpose.msra.mxu0 0
      %846 = vmatpush.bf16.xpose.msra.mxu0 0
      %847 = vmatpush.bf16.xpose.msra.mxu0 0
      %848 = vmatpush.bf16.xpose.msra.mxu0 0
      %849 = vmatpush.bf16.xpose.msra.mxu0 %v840
      %850 = vmatmul.bf16.gmra.mxu0 %v837
      %v851 = vpop.f32.mrf.mxu0
      %v852 = vadd.f32 %v789, %v851
      %v853 = vpop.f32.mrf.mxu0
      %v854 = vadd.f32 %v790, %v853
      %855 = vdwg.mxu0
      %v858 = vunpack.c.l.b16 %v797
      %v859 = vunpack.c.l.b16 %v798
      %v860 = vpack.c.b16 %v859, %v858
      %861 = vrot.lane.b32.xlu0 %v860, 120
      %v862 = vpop.permute.xlu0 %861
      %v864 = vsel %vm808, %v860, 0
      %v867 = vsel %vm808, %v862, 0
      %869 = vmatpush.bf16.xpose.msra.mxu0 0
      %870 = vmatpush.bf16.xpose.msra.mxu0 0
      %871 = vmatpush.bf16.xpose.msra.mxu0 0
      %872 = vmatpush.bf16.xpose.msra.mxu0 0
      %873 = vmatpush.bf16.xpose.msra.mxu0 0
      %874 = vmatpush.bf16.xpose.msra.mxu0 0
      %875 = vmatpush.bf16.xpose.msra.mxu0 0
      %876 = vmatpush.bf16.xpose.msra.mxu0 %v867
      %877 = vmatmul.bf16.gmra.mxu0 %v864
      %v878 = vpop.f32.mrf.mxu0
      %v879 = vadd.f32 %v789, %v878
      %v880 = vpop.f32.mrf.mxu0
      %v881 = vadd.f32 %v790, %v880
      %882 = vdwg.mxu0
      %v885 = vunpack.c.l.b16 %v799
      %v886 = vunpack.c.l.b16 %v800
      %v887 = vpack.c.b16 %v886, %v885
      %888 = vrot.lane.b32.xlu0 %v887, 120
      %v889 = vpop.permute.xlu0 %888
      %v891 = vsel %vm808, %v887, 0
      %v894 = vsel %vm808, %v889, 0
      %896 = vmatpush.bf16.xpose.msra.mxu0 0
      %897 = vmatpush.bf16.xpose.msra.mxu0 0
      %898 = vmatpush.bf16.xpose.msra.mxu0 0
      %899 = vmatpush.bf16.xpose.msra.mxu0 0
      %900 = vmatpush.bf16.xpose.msra.mxu0 0
      %901 = vmatpush.bf16.xpose.msra.mxu0 0
      %902 = vmatpush.bf16.xpose.msra.mxu0 0
      %903 = vmatpush.bf16.xpose.msra.mxu0 %v894
      %904 = vmatmul.bf16.gmra.mxu0 %v891
      %v905 = vpop.f32.mrf.mxu0
      %v906 = vadd.f32 %v789, %v905
      %v907 = vpop.f32.mrf.mxu0
      %v908 = vadd.f32 %v790, %v907
      %909 = vdwg.mxu0
      %vm910 = vcmask 130048
      %v911 = vsel %vm910, %v825, -inf
      %912 = vmax.xlane.f32.xlu0 %v911
      %v913 = vpop.xlane.xlu0 %912
      %v914 = vsel %vm910, %v827, -inf
      %915 = vmax.xlane.f32.xlu0 %v914
      %v916 = vpop.xlane.xlu0 %915
      %v917 = vsel %vm910, %v852, -inf
      %918 = vmax.xlane.f32.xlu0 %v917
      %v919 = vpop.xlane.xlu0 %918
      %v920 = vsel %vm910, %v854, -inf
      %921 = vmax.xlane.f32.xlu0 %v920
      %v922 = vpop.xlane.xlu0 %921
      %v923 = vsel %vm910, %v879, -inf
      %924 = vmax.xlane.f32.xlu0 %v923
      %v925 = vpop.xlane.xlu0 %924
      %v926 = vsel %vm910, %v881, -inf
      %927 = vmax.xlane.f32.xlu0 %v926
      %v928 = vpop.xlane.xlu0 %927
      %v929 = vsel %vm910, %v906, -inf
      %930 = vmax.xlane.f32.xlu0 %v929
      %v931 = vpop.xlane.xlu0 %930
      %v932 = vsel %vm910, %v908, -inf
      %933 = vmax.xlane.f32.xlu0 %v932
      %v934 = vpop.xlane.xlu0 %933
      %v935 = vsub.f32 %v825, %v913
      %v936 = vsub.f32 %v827, %v916
      %v937 = vsub.f32 %v852, %v919
      %v938 = vsub.f32 %v854, %v922
      %v939 = vsub.f32 %v879, %v925
      %v940 = vsub.f32 %v881, %v928
      %v941 = vsub.f32 %v906, %v931
      %v942 = vsub.f32 %v908, %v934
      %v943 = vmul.f32 %v935, 1.442695
      %v944 = vpow.pop %v943
      %v945 = vmul.f32 %v936, 1.442695
      %v946 = vpow.pop %v945
      %v947 = vmul.f32 %v937, 1.442695
      %v948 = vpow.pop %v947
      %v949 = vmul.f32 %v938, 1.442695
      %v950 = vpow.pop %v949
      %v951 = vmul.f32 %v939, 1.442695
      %v952 = vpow.pop %v951
      %v953 = vmul.f32 %v940, 1.442695
      %v954 = vpow.pop %v953
      %v955 = vmul.f32 %v941, 1.442695
      %v956 = vpow.pop %v955
      %v957 = vmul.f32 %v942, 1.442695
      %v958 = vpow.pop %v957
      %v959 = vsel %vm910, %v944, 0.0
      %960 = vadd.xlane.f32.xlu0 %v959
      %v961 = vpop.xlane.xlu0 %960
      %v962 = vsel %vm910, %v946, 0.0
      %963 = vadd.xlane.f32.xlu0 %v962
      %v964 = vpop.xlane.xlu0 %963
      %v965 = vsel %vm910, %v948, 0.0
      %966 = vadd.xlane.f32.xlu0 %v965
      %v967 = vpop.xlane.xlu0 %966
      %v968 = vsel %vm910, %v950, 0.0
      %969 = vadd.xlane.f32.xlu0 %v968
      %v970 = vpop.xlane.xlu0 %969
      %v971 = vsel %vm910, %v952, 0.0
      %972 = vadd.xlane.f32.xlu0 %v971
      %v973 = vpop.xlane.xlu0 %972
      %v974 = vsel %vm910, %v954, 0.0
      %975 = vadd.xlane.f32.xlu0 %v974
      %v976 = vpop.xlane.xlu0 %975
      %v977 = vsel %vm910, %v956, 0.0
      %978 = vadd.xlane.f32.xlu0 %v977
      %v979 = vpop.xlane.xlu0 %978
      %v980 = vsel %vm910, %v958, 0.0
      %981 = vadd.xlane.f32.xlu0 %v980
      %v982 = vpop.xlane.xlu0 %981
      %v983 = vrcp.pop %v961
      %v984 = vrcp.pop %v964
      %v985 = vrcp.pop %v967
      %v986 = vrcp.pop %v970
      %v987 = vrcp.pop %v973
      %v988 = vrcp.pop %v976
      %v989 = vrcp.pop %v979
      %v990 = vrcp.pop %v982
      %v991 = vmul.f32 %v944, %v983
      %v992 = vmul.f32 %v946, %v984
      %v993 = vmul.f32 %v948, %v985
      %v994 = vmul.f32 %v950, %v986
      %v995 = vmul.f32 %v952, %v987
      %v996 = vmul.f32 %v954, %v988
      %v997 = vmul.f32 %v956, %v989
      %v998 = vmul.f32 %v958, %v990
      %v999 = vpack.c.bf16 %v991, %v991
      %v1000 = vpack.c.bf16 %v992, %v992
      %v1001 = vpack.c.bf16 %v993, %v993
      %v1002 = vpack.c.bf16 %v994, %v994
      %v1003 = vpack.c.bf16 %v995, %v995
      %v1004 = vpack.c.bf16 %v996, %v996
      %v1005 = vpack.c.bf16 %v997, %v997
      %v1006 = vpack.c.bf16 %v998, %v998
      %v1009 = vunpack.c.l.b16 %v999
      %v1010 = vunpack.c.l.b16 %v1000
      %v1011 = vpack.c.b16 %v1010, %v1009
      %1012 = vrot.lane.b32.xlu0 %v805, 112
      %v1013 = vpop.permute.xlu0 %1012
      %v1016 = vsel %vm910, %v1011, 0
      %1018 = vmatpush.bf16.msra.mxu0 0
      %1019 = vmatpush.bf16.msra.mxu0 0
      %1020 = vmatpush.bf16.msra.mxu0 0
      %1021 = vmatpush.bf16.msra.mxu0 0
      %1022 = vmatpush.bf16.msra.mxu0 0
      %1023 = vmatpush.bf16.msra.mxu0 0
      %1024 = vmatpush.bf16.msra.mxu0 0
      %1025 = vmatpush.bf16.msra.mxu0 %v1013
      %1026 = vmatmul.bf16.gmra.mxu0 %v1016
      %v1027 = vpop.f32.mrf.mxu0
      %v1028 = vadd.f32 0.0, %v1027
      %v1029 = vpop.f32.mrf.mxu0
      %v1030 = vadd.f32 0.0, %v1029
      %1031 = vdwg.mxu0
      %v1034 = vunpack.c.l.b16 %v1001
      %v1035 = vunpack.c.l.b16 %v1002
      %v1036 = vpack.c.b16 %v1035, %v1034
      %1037 = vrot.lane.b32.xlu0 %v833, 112
      %v1038 = vpop.permute.xlu0 %1037
      %v1041 = vsel %vm910, %v1036, 0
      %1043 = vmatpush.bf16.msra.mxu0 0
      %1044 = vmatpush.bf16.msra.mxu0 0
      %1045 = vmatpush.bf16.msra.mxu0 0
      %1046 = vmatpush.bf16.msra.mxu0 0
      %1047 = vmatpush.bf16.msra.mxu0 0
      %1048 = vmatpush.bf16.msra.mxu0 0
      %1049 = vmatpush.bf16.msra.mxu0 0
      %1050 = vmatpush.bf16.msra.mxu0 %v1038
      %1051 = vmatmul.bf16.gmra.mxu0 %v1041
      %v1052 = vpop.f32.mrf.mxu0
      %v1053 = vadd.f32 0.0, %v1052
      %v1054 = vpop.f32.mrf.mxu0
      %v1055 = vadd.f32 0.0, %v1054
      %1056 = vdwg.mxu0
      %v1059 = vunpack.c.l.b16 %v1003
      %v1060 = vunpack.c.l.b16 %v1004
      %v1061 = vpack.c.b16 %v1060, %v1059
      %1062 = vrot.lane.b32.xlu0 %v860, 112
      %v1063 = vpop.permute.xlu0 %1062
      %v1066 = vsel %vm910, %v1061, 0
      %1068 = vmatpush.bf16.msra.mxu0 0
      %1069 = vmatpush.bf16.msra.mxu0 0
      %1070 = vmatpush.bf16.msra.mxu0 0
      %1071 = vmatpush.bf16.msra.mxu0 0
      %1072 = vmatpush.bf16.msra.mxu0 0
      %1073 = vmatpush.bf16.msra.mxu0 0
      %1074 = vmatpush.bf16.msra.mxu0 0
      %1075 = vmatpush.bf16.msra.mxu0 %v1063
      %1076 = vmatmul.bf16.gmra.mxu0 %v1066
      %v1077 = vpop.f32.mrf.mxu0
      %v1078 = vadd.f32 0.0, %v1077
      %v1079 = vpop.f32.mrf.mxu0
      %v1080 = vadd.f32 0.0, %v1079
      %1081 = vdwg.mxu0
      %v1084 = vunpack.c.l.b16 %v1005
      %v1085 = vunpack.c.l.b16 %v1006
      %v1086 = vpack.c.b16 %v1085, %v1084
      %1087 = vrot.lane.b32.xlu0 %v887, 112
      %v1088 = vpop.permute.xlu0 %1087
      %v1091 = vsel %vm910, %v1086, 0
      %1093 = vmatpush.bf16.msra.mxu0 0
      %1094 = vmatpush.bf16.msra.mxu0 0
      %1095 = vmatpush.bf16.msra.mxu0 0
      %1096 = vmatpush.bf16.msra.mxu0 0
      %1097 = vmatpush.bf16.msra.mxu0 0
      %1098 = vmatpush.bf16.msra.mxu0 0
      %1099 = vmatpush.bf16.msra.mxu0 0
      %1100 = vmatpush.bf16.msra.mxu0 %v1088
      %1101 = vmatmul.bf16.gmra.mxu0 %v1091
      %v1102 = vpop.f32.mrf.mxu0
      %v1103 = vadd.f32 0.0, %v1102
      %v1104 = vpop.f32.mrf.mxu0
      %v1105 = vadd.f32 0.0, %v1104
      %1106 = vdwg.mxu0
      %1107 = vst.msk [vmem:[#allocation3] sm:$0xff] %vm808, %v1028
      %1108 = vst.msk [vmem:[#allocation3 + $0x8] sm:$0xff] %vm808, %v1030
      %1109 = vst.msk [vmem:[#allocation3 + $0x10] sm:$0xff] %vm808, %v1053
      %1110 = vst.msk [vmem:[#allocation3 + $0x18] sm:$0xff] %vm808, %v1055
      %1111 = vst.msk [vmem:[#allocation3 + $0x20] sm:$0xff] %vm808, %v1078
      %1112 = vst.msk [vmem:[#allocation3 + $0x28] sm:$0xff] %vm808, %v1080
      %1113 = vst.msk [vmem:[#allocation3 + $0x30] sm:$0xff] %vm808, %v1103
      %1114 = vst.msk [vmem:[#allocation3 + $0x38] sm:$0xff] %vm808, %v1105
      %v1115 = vld [vmem:[#allocation2] sm:$0xf]
      %v1116 = vld [vmem:[#allocation2 + $0x4] sm:$0xf]
      %v1117 = vld [vmem:[#allocation2 + $0x8] sm:$0xf]
      %v1118 = vld [vmem:[#allocation2 + $0xc] sm:$0xf]
      %v1119 = vld [vmem:[#allocation2 + $0x10] sm:$0xf]
      %v1120 = vld [vmem:[#allocation2 + $0x14] sm:$0xf]
      %v1121 = vld [vmem:[#allocation2 + $0x18] sm:$0xf]
      %v1122 = vld [vmem:[#allocation2 + $0x1c] sm:$0xf]
      %v1125 = vunpack.c.l.b16 %v1115
      %v1126 = vunpack.c.l.b16 %v1116
      %v1127 = vpack.c.b16 %v1126, %v1125
      %1128 = vrot.lane.b32.xlu0 %v1127, 124
      %v1129 = vpop.permute.xlu0 %1128
      %1130 = vrot.lane.b32.xlu0 %v1127, 116
      %v1131 = vpop.permute.xlu0 %1130
      %v1133 = vsel %vm808, %v1129, 0
      %v1136 = vsel %vm808, %v1131, 0
      %1138 = vmatpush.bf16.xpose.msra.mxu0 0
      %1139 = vmatpush.bf16.xpose.msra.mxu0 0
      %1140 = vmatpush.bf16.xpose.msra.mxu0 0
      %1141 = vmatpush.bf16.xpose.msra.mxu0 0
      %1142 = vmatpush.bf16.xpose.msra.mxu0 0
      %1143 = vmatpush.bf16.xpose.msra.mxu0 0
      %1144 = vmatpush.bf16.xpose.msra.mxu0 0
      %1145 = vmatpush.bf16.xpose.msra.mxu0 %v1136
      %1146 = vmatmul.bf16.gmra.mxu0 %v1133
      %v1147 = vpop.f32.mrf.mxu0
      %v1148 = vadd.f32 %v791, %v1147
      %v1149 = vpop.f32.mrf.mxu0
      %v1150 = vadd.f32 %v792, %v1149
      %1151 = vdwg.mxu0
      %v1154 = vunpack.c.l.b16 %v1117
      %v1155 = vunpack.c.l.b16 %v1118
      %v1156 = vpack.c.b16 %v1155, %v1154
      %1157 = vrot.lane.b32.xlu0 %v1156, 124
      %v1158 = vpop.permute.xlu0 %1157
      %1159 = vrot.lane.b32.xlu0 %v1156, 116
      %v1160 = vpop.permute.xlu0 %1159
      %v1162 = vsel %vm808, %v1158, 0
      %v1165 = vsel %vm808, %v1160, 0
      %1167 = vmatpush.bf16.xpose.msra.mxu0 0
      %1168 = vmatpush.bf16.xpose.msra.mxu0 0
      %1169 = vmatpush.bf16.xpose.msra.mxu0 0
      %1170 = vmatpush.bf16.xpose.msra.mxu0 0
      %1171 = vmatpush.bf16.xpose.msra.mxu0 0
      %1172 = vmatpush.bf16.xpose.msra.mxu0 0
      %1173 = vmatpush.bf16.xpose.msra.mxu0 0
      %1174 = vmatpush.bf16.xpose.msra.mxu0 %v1165
      %1175 = vmatmul.bf16.gmra.mxu0 %v1162
      %v1176 = vpop.f32.mrf.mxu0
      %v1177 = vadd.f32 %v791, %v1176
      %v1178 = vpop.f32.mrf.mxu0
      %v1179 = vadd.f32 %v792, %v1178
      %1180 = vdwg.mxu0
      %v1183 = vunpack.c.l.b16 %v1119
      %v1184 = vunpack.c.l.b16 %v1120
      %v1185 = vpack.c.b16 %v1184, %v1183
      %1186 = vrot.lane.b32.xlu0 %v1185, 124
      %v1187 = vpop.permute.xlu0 %1186
      %1188 = vrot.lane.b32.xlu0 %v1185, 116
      %v1189 = vpop.permute.xlu0 %1188
      %v1191 = vsel %vm808, %v1187, 0
      %v1194 = vsel %vm808, %v1189, 0
      %1196 = vmatpush.bf16.xpose.msra.mxu0 0
      %1197 = vmatpush.bf16.xpose.msra.mxu0 0
      %1198 = vmatpush.bf16.xpose.msra.mxu0 0
      %1199 = vmatpush.bf16.xpose.msra.mxu0 0
      %1200 = vmatpush.bf16.xpose.msra.mxu0 0
      %1201 = vmatpush.bf16.xpose.msra.mxu0 0
      %1202 = vmatpush.bf16.xpose.msra.mxu0 0
      %1203 = vmatpush.bf16.xpose.msra.mxu0 %v1194
      %1204 = vmatmul.bf16.gmra.mxu0 %v1191
      %v1205 = vpop.f32.mrf.mxu0
      %v1206 = vadd.f32 %v791, %v1205
      %v1207 = vpop.f32.mrf.mxu0
      %v1208 = vadd.f32 %v792, %v1207
      %1209 = vdwg.mxu0
      %v1212 = vunpack.c.l.b16 %v1121
      %v1213 = vunpack.c.l.b16 %v1122
      %v1214 = vpack.c.b16 %v1213, %v1212
      %1215 = vrot.lane.b32.xlu0 %v1214, 124
      %v1216 = vpop.permute.xlu0 %1215
      %1217 = vrot.lane.b32.xlu0 %v1214, 116
      %v1218 = vpop.permute.xlu0 %1217
      %v1220 = vsel %vm808, %v1216, 0
      %v1223 = vsel %vm808, %v1218, 0
      %1225 = vmatpush.bf16.xpose.msra.mxu0 0
      %1226 = vmatpush.bf16.xpose.msra.mxu0 0
      %1227 = vmatpush.bf16.xpose.msra.mxu0 0
      %1228 = vmatpush.bf16.xpose.msra.mxu0 0
      %1229 = vmatpush.bf16.xpose.msra.mxu0 0
      %1230 = vmatpush.bf16.xpose.msra.mxu0 0
      %1231 = vmatpush.bf16.xpose.msra.mxu0 0
      %1232 = vmatpush.bf16.xpose.msra.mxu0 %v1223
      %1233 = vmatmul.bf16.gmra.mxu0 %v1220
      %v1234 = vpop.f32.mrf.mxu0
      %v1235 = vadd.f32 %v791, %v1234
      %v1236 = vpop.f32.mrf.mxu0
      %v1237 = vadd.f32 %v792, %v1236
      %1238 = vdwg.mxu0
      %v1239 = vsel %vm910, %v1148, -inf
      %1240 = vmax.xlane.f32.xlu0 %v1239
      %v1241 = vpop.xlane.xlu0 %1240
      %v1242 = vsel %vm910, %v1150, -inf
      %1243 = vmax.xlane.f32.xlu0 %v1242
      %v1244 = vpop.xlane.xlu0 %1243
      %v1245 = vsel %vm910, %v1177, -inf
      %1246 = vmax.xlane.f32.xlu0 %v1245
      %v1247 = vpop.xlane.xlu0 %1246
      %v1248 = vsel %vm910, %v1179, -inf
      %1249 = vmax.xlane.f32.xlu0 %v1248
      %v1250 = vpop.xlane.xlu0 %1249
      %v1251 = vsel %vm910, %v1206, -inf
      %1252 = vmax.xlane.f32.xlu0 %v1251
      %v1253 = vpop.xlane.xlu0 %1252
      %v1254 = vsel %vm910, %v1208, -inf
      %1255 = vmax.xlane.f32.xlu0 %v1254
      %v1256 = vpop.xlane.xlu0 %1255
      %v1257 = vsel %vm910, %v1235, -inf
      %1258 = vmax.xlane.f32.xlu0 %v1257
      %v1259 = vpop.xlane.xlu0 %1258
      %v1260 = vsel %vm910, %v1237, -inf
      %1261 = vmax.xlane.f32.xlu0 %v1260
      %v1262 = vpop.xlane.xlu0 %1261
      %v1263 = vsub.f32 %v1148, %v1241
      %v1264 = vsub.f32 %v1150, %v1244
      %v1265 = vsub.f32 %v1177, %v1247
      %v1266 = vsub.f32 %v1179, %v1250
      %v1267 = vsub.f32 %v1206, %v1253
      %v1268 = vsub.f32 %v1208, %v1256
      %v1269 = vsub.f32 %v1235, %v1259
      %v1270 = vsub.f32 %v1237, %v1262
      %v1271 = vmul.f32 %v1263, 1.442695
      %v1272 = vpow.pop %v1271
      %v1273 = vmul.f32 %v1264, 1.442695
      %v1274 = vpow.pop %v1273
      %v1275 = vmul.f32 %v1265, 1.442695
      %v1276 = vpow.pop %v1275
      %v1277 = vmul.f32 %v1266, 1.442695
      %v1278 = vpow.pop %v1277
      %v1279 = vmul.f32 %v1267, 1.442695
      %v1280 = vpow.pop %v1279
      %v1281 = vmul.f32 %v1268, 1.442695
      %v1282 = vpow.pop %v1281
      %v1283 = vmul.f32 %v1269, 1.442695
      %v1284 = vpow.pop %v1283
      %v1285 = vmul.f32 %v1270, 1.442695
      %v1286 = vpow.pop %v1285
      %v1287 = vsel %vm910, %v1272, 0.0
      %1288 = vadd.xlane.f32.xlu0 %v1287
      %v1289 = vpop.xlane.xlu0 %1288
      %v1290 = vsel %vm910, %v1274, 0.0
      %1291 = vadd.xlane.f32.xlu0 %v1290
      %v1292 = vpop.xlane.xlu0 %1291
      %v1293 = vsel %vm910, %v1276, 0.0
      %1294 = vadd.xlane.f32.xlu0 %v1293
      %v1295 = vpop.xlane.xlu0 %1294
      %v1296 = vsel %vm910, %v1278, 0.0
      %1297 = vadd.xlane.f32.xlu0 %v1296
      %v1298 = vpop.xlane.xlu0 %1297
      %v1299 = vsel %vm910, %v1280, 0.0
      %1300 = vadd.xlane.f32.xlu0 %v1299
      %v1301 = vpop.xlane.xlu0 %1300
      %v1302 = vsel %vm910, %v1282, 0.0
      %1303 = vadd.xlane.f32.xlu0 %v1302
      %v1304 = vpop.xlane.xlu0 %1303
      %v1305 = vsel %vm910, %v1284, 0.0
      %1306 = vadd.xlane.f32.xlu0 %v1305
      %v1307 = vpop.xlane.xlu0 %1306
      %v1308 = vsel %vm910, %v1286, 0.0
      %1309 = vadd.xlane.f32.xlu0 %v1308
      %v1310 = vpop.xlane.xlu0 %1309
      %v1311 = vrcp.pop %v1289
      %v1312 = vrcp.pop %v1292
      %v1313 = vrcp.pop %v1295
      %v1314 = vrcp.pop %v1298
      %v1315 = vrcp.pop %v1301
      %v1316 = vrcp.pop %v1304
      %v1317 = vrcp.pop %v1307
      %v1318 = vrcp.pop %v1310
      %v1319 = vmul.f32 %v1272, %v1311
      %v1320 = vmul.f32 %v1274, %v1312
      %v1321 = vmul.f32 %v1276, %v1313
      %v1322 = vmul.f32 %v1278, %v1314
      %v1323 = vmul.f32 %v1280, %v1315
      %v1324 = vmul.f32 %v1282, %v1316
      %v1325 = vmul.f32 %v1284, %v1317
      %v1326 = vmul.f32 %v1286, %v1318
      %v1327 = vpack.c.bf16 %v1319, %v1319
      %v1328 = vpack.c.bf16 %v1320, %v1320
      %v1329 = vpack.c.bf16 %v1321, %v1321
      %v1330 = vpack.c.bf16 %v1322, %v1322
      %v1331 = vpack.c.bf16 %v1323, %v1323
      %v1332 = vpack.c.bf16 %v1324, %v1324
      %v1333 = vpack.c.bf16 %v1325, %v1325
      %v1334 = vpack.c.bf16 %v1326, %v1326
      %v1337 = vunpack.c.l.b16 %v1327
      %v1338 = vunpack.c.l.b16 %v1328
      %v1339 = vpack.c.b16 %v1338, %v1337
      %1340 = vrot.lane.b32.xlu0 %v1127, 108
      %v1341 = vpop.permute.xlu0 %1340
      %v1344 = vsel %vm910, %v1339, 0
      %1346 = vmatpush.bf16.msra.mxu0 0
      %1347 = vmatpush.bf16.msra.mxu0 0
      %1348 = vmatpush.bf16.msra.mxu0 0
      %1349 = vmatpush.bf16.msra.mxu0 0
      %1350 = vmatpush.bf16.msra.mxu0 0
      %1351 = vmatpush.bf16.msra.mxu0 0
      %1352 = vmatpush.bf16.msra.mxu0 0
      %1353 = vmatpush.bf16.msra.mxu0 %v1341
      %1354 = vmatmul.bf16.gmra.mxu0 %v1344
      %v1355 = vpop.f32.mrf.mxu0
      %v1356 = vadd.f32 0.0, %v1355
      %v1357 = vpop.f32.mrf.mxu0
      %v1358 = vadd.f32 0.0, %v1357
      %1359 = vdwg.mxu0
      %v1362 = vunpack.c.l.b16 %v1329
      %v1363 = vunpack.c.l.b16 %v1330
      %v1364 = vpack.c.b16 %v1363, %v1362
      %1365 = vrot.lane.b32.xlu0 %v1156, 108
      %v1366 = vpop.permute.xlu0 %1365
      %v1369 = vsel %vm910, %v1364, 0
      %1371 = vmatpush.bf16.msra.mxu0 0
      %1372 = vmatpush.bf16.msra.mxu0 0
      %1373 = vmatpush.bf16.msra.mxu0 0
      %1374 = vmatpush.bf16.msra.mxu0 0
      %1375 = vmatpush.bf16.msra.mxu0 0
      %1376 = vmatpush.bf16.msra.mxu0 0
      %1377 = vmatpush.bf16.msra.mxu0 0
      %1378 = vmatpush.bf16.msra.mxu0 %v1366
      %1379 = vmatmul.bf16.gmra.mxu0 %v1369
      %v1380 = vpop.f32.mrf.mxu0
      %v1381 = vadd.f32 0.0, %v1380
      %v1382 = vpop.f32.mrf.mxu0
      %v1383 = vadd.f32 0.0, %v1382
      %1384 = vdwg.mxu0
      %v1387 = vunpack.c.l.b16 %v1331
      %v1388 = vunpack.c.l.b16 %v1332
      %v1389 = vpack.c.b16 %v1388, %v1387
      %1390 = vrot.lane.b32.xlu0 %v1185, 108
      %v1391 = vpop.permute.xlu0 %1390
      %v1394 = vsel %vm910, %v1389, 0
      %1396 = vmatpush.bf16.msra.mxu0 0
      %1397 = vmatpush.bf16.msra.mxu0 0
      %1398 = vmatpush.bf16.msra.mxu0 0
      %1399 = vmatpush.bf16.msra.mxu0 0
      %1400 = vmatpush.bf16.msra.mxu0 0
      %1401 = vmatpush.bf16.msra.mxu0 0
      %1402 = vmatpush.bf16.msra.mxu0 0
      %1403 = vmatpush.bf16.msra.mxu0 %v1391
      %1404 = vmatmul.bf16.gmra.mxu0 %v1394
      %v1405 = vpop.f32.mrf.mxu0
      %v1406 = vadd.f32 0.0, %v1405
      %v1407 = vpop.f32.mrf.mxu0
      %v1408 = vadd.f32 0.0, %v1407
      %1409 = vdwg.mxu0
      %v1412 = vunpack.c.l.b16 %v1333
      %v1413 = vunpack.c.l.b16 %v1334
      %v1414 = vpack.c.b16 %v1413, %v1412
      %1415 = vrot.lane.b32.xlu0 %v1214, 108
      %v1416 = vpop.permute.xlu0 %1415
      %v1419 = vsel %vm910, %v1414, 0
      %1421 = vmatpush.bf16.msra.mxu0 0
      %1422 = vmatpush.bf16.msra.mxu0 0
      %1423 = vmatpush.bf16.msra.mxu0 0
      %1424 = vmatpush.bf16.msra.mxu0 0
      %1425 = vmatpush.bf16.msra.mxu0 0
      %1426 = vmatpush.bf16.msra.mxu0 0
      %1427 = vmatpush.bf16.msra.mxu0 0
      %1428 = vmatpush.bf16.msra.mxu0 %v1416
      %1429 = vmatmul.bf16.gmra.mxu0 %v1419
      %v1430 = vpop.f32.mrf.mxu0
      %v1431 = vadd.f32 0.0, %v1430
      %v1432 = vpop.f32.mrf.mxu0
      %v1433 = vadd.f32 0.0, %v1432
      %1434 = vdwg.mxu0
      %1443 = vrot.lane.b32.xlu0 %v1356, 4
      %v1444 = vpop.permute.xlu0 %1443
      %1445 = vrot.lane.b32.xlu0 %v1358, 4
      %v1446 = vpop.permute.xlu0 %1445
      %1447 = vrot.lane.b32.xlu0 %v1381, 4
      %v1448 = vpop.permute.xlu0 %1447
      %1449 = vrot.lane.b32.xlu0 %v1383, 4
      %v1450 = vpop.permute.xlu0 %1449
      %1451 = vrot.lane.b32.xlu0 %v1406, 4
      %v1452 = vpop.permute.xlu0 %1451
      %1453 = vrot.lane.b32.xlu0 %v1408, 4
      %v1454 = vpop.permute.xlu0 %1453
      %1455 = vrot.lane.b32.xlu0 %v1431, 4
      %v1456 = vpop.permute.xlu0 %1455
      %1457 = vrot.lane.b32.xlu0 %v1433, 4
      %v1458 = vpop.permute.xlu0 %1457
      %vm1467 = vcmask 64544
      %1468 = vst.msk [vmem:[#allocation3] sm:$0xff] %vm1467, %v1444
      %1469 = vst.msk [vmem:[#allocation3 + $0x8] sm:$0xff] %vm1467, %v1446
      %1470 = vst.msk [vmem:[#allocation3 + $0x10] sm:$0xff] %vm1467, %v1448
      %1471 = vst.msk [vmem:[#allocation3 + $0x18] sm:$0xff] %vm1467, %v1450
      %1472 = vst.msk [vmem:[#allocation3 + $0x20] sm:$0xff] %vm1467, %v1452
      %1473 = vst.msk [vmem:[#allocation3 + $0x28] sm:$0xff] %vm1467, %v1454
      %1474 = vst.msk [vmem:[#allocation3 + $0x30] sm:$0xff] %vm1467, %v1456
      %1475 = vst.msk [vmem:[#allocation3 + $0x38] sm:$0xff] %vm1467, %v1458
      %v1476 = vld [vmem:[#allocation3] sm:$0xff]
      %v1477 = vld [vmem:[#allocation3 + $0x8] sm:$0xff]
      %v1478 = vld [vmem:[#allocation3 + $0x10] sm:$0xff]
      %v1479 = vld [vmem:[#allocation3 + $0x18] sm:$0xff]
      %v1480 = vld [vmem:[#allocation3 + $0x20] sm:$0xff]
      %v1481 = vld [vmem:[#allocation3 + $0x28] sm:$0xff]
      %v1482 = vld [vmem:[#allocation3 + $0x30] sm:$0xff]
      %v1483 = vld [vmem:[#allocation3 + $0x38] sm:$0xff]
      %v1484 = vld [vmem:[%s6] sm:$0xff]
      %v1485 = vpack.c.bf16 %v1476, %v1476
      %v1486 = vpack.c.bf16 %v1477, %v1477
      %v1487 = vpack.c.bf16 %v1478, %v1478
      %v1488 = vpack.c.bf16 %v1479, %v1479
      %v1489 = vpack.c.bf16 %v1480, %v1480
      %v1490 = vpack.c.bf16 %v1481, %v1481
      %v1491 = vpack.c.bf16 %v1482, %v1482
      %v1492 = vpack.c.bf16 %v1483, %v1483
      %v1493 = vpack.c.bf16 %v1484, %v1484
      %v1494 = vld [vmem:[%s7] sm:$0x1]
      %v1496 = vperm.slane %v1494, 0
      %v1506 = vunpack.c.l.b16 %v1485
      %v1507 = vunpack.c.l.b16 %v1486
      %v1508 = vunpack.c.l.b16 %v1487
      %v1509 = vunpack.c.l.b16 %v1488
      %v1510 = vunpack.c.l.b16 %v1489
      %v1511 = vunpack.c.l.b16 %v1490
      %v1512 = vunpack.c.l.b16 %v1491
      %v1513 = vunpack.c.l.b16 %v1492
      %v1514 = vpack.c.b16 %v1507, %v1506
      %v1515 = vpack.c.b16 %v1509, %v1508
      %v1516 = vpack.c.b16 %v1511, %v1510
      %v1517 = vpack.c.b16 %v1513, %v1512
      %v1519 = vsel %vm487, %v1514, 0
      %v1522 = vsel %vm487, %v1515, 0
      %v1525 = vsel %vm487, %v1516, 0
      %v1528 = vsel %vm487, %v1517, 0
      %v1531 = vsel %vm739, %v1493, 0
      %1533 = vmatpush.bf16.msra.mxu0 0
      %1534 = vmatpush.bf16.msra.mxu0 0
      %1535 = vmatpush.bf16.msra.mxu0 0
      %1536 = vmatpush.bf16.msra.mxu0 0
      %1537 = vmatpush.bf16.msra.mxu0 0
      %1538 = vmatpush.bf16.msra.mxu0 0
      %1539 = vmatpush.bf16.msra.mxu0 0
      %1540 = vmatpush.bf16.msra.mxu0 %v1531
      %1541 = vmatmul.bf16.gmra.mxu0 %v1519
      %v1542 = vpop.f32.mrf.mxu0
      %v1543 = vadd.f32 %v1496, %v1542
      %v1544 = vpop.f32.mrf.mxu0
      %v1545 = vadd.f32 %v1496, %v1544
      %1546 = vmatmul.bf16.gmra.mxu0 %v1522
      %v1547 = vpop.f32.mrf.mxu0
      %v1548 = vadd.f32 %v1496, %v1547
      %v1549 = vpop.f32.mrf.mxu0
      %v1550 = vadd.f32 %v1496, %v1549
      %1551 = vmatmul.bf16.gmra.mxu0 %v1525
      %v1552 = vpop.f32.mrf.mxu0
      %v1553 = vadd.f32 %v1496, %v1552
      %v1554 = vpop.f32.mrf.mxu0
      %v1555 = vadd.f32 %v1496, %v1554
      %1556 = vmatmul.bf16.gmra.mxu0 %v1528
      %v1557 = vpop.f32.mrf.mxu0
      %v1558 = vadd.f32 %v1496, %v1557
      %v1559 = vpop.f32.mrf.mxu0
      %v1560 = vadd.f32 %v1496, %v1559
      %1561 = vdwg.mxu0
      %v1562 = vadd.f32 %v1543, %v477
      %v1563 = vadd.f32 %v1545, %v478
      %v1564 = vadd.f32 %v1548, %v479
      %v1565 = vadd.f32 %v1550, %v480
      %v1566 = vadd.f32 %v1553, %v481
      %v1567 = vadd.f32 %v1555, %v482
      %v1568 = vadd.f32 %v1558, %v483
      %v1569 = vadd.f32 %v1560, %v484
      %v1570 = vld [vmem:[%s8] sm:$0x1]
      %v1571 = vld [vmem:[%s9] sm:$0x1]
      %v1572 = vsel %vm487, %v1562, 0.0
      %1573 = vadd.xlane.f32.xlu0 %v1572
      %v1574 = vpop.xlane.xlu0 %1573
      %v1575 = vsel %vm487, %v1563, 0.0
      %1576 = vadd.xlane.f32.xlu0 %v1575
      %v1577 = vpop.xlane.xlu0 %1576
      %v1578 = vsel %vm487, %v1564, 0.0
      %1579 = vadd.xlane.f32.xlu0 %v1578
      %v1580 = vpop.xlane.xlu0 %1579
      %v1581 = vsel %vm487, %v1565, 0.0
      %1582 = vadd.xlane.f32.xlu0 %v1581
      %v1583 = vpop.xlane.xlu0 %1582
      %v1584 = vsel %vm487, %v1566, 0.0
      %1585 = vadd.xlane.f32.xlu0 %v1584
      %v1586 = vpop.xlane.xlu0 %1585
      %v1587 = vsel %vm487, %v1567, 0.0
      %1588 = vadd.xlane.f32.xlu0 %v1587
      %v1589 = vpop.xlane.xlu0 %1588
      %v1590 = vsel %vm487, %v1568, 0.0
      %1591 = vadd.xlane.f32.xlu0 %v1590
      %v1592 = vpop.xlane.xlu0 %1591
      %v1593 = vsel %vm487, %v1569, 0.0
      %1594 = vadd.xlane.f32.xlu0 %v1593
      %v1595 = vpop.xlane.xlu0 %1594
      %v1596 = vmul.f32 %v1574, %v518
      %v1597 = vmul.f32 %v1577, %v518
      %v1598 = vmul.f32 %v1580, %v518
      %v1599 = vmul.f32 %v1583, %v518
      %v1600 = vmul.f32 %v1586, %v518
      %v1601 = vmul.f32 %v1589, %v518
      %v1602 = vmul.f32 %v1592, %v518
      %v1603 = vmul.f32 %v1595, %v518
      %v1604 = vsub.f32 %v1562, %v1596
      %v1605 = vsub.f32 %v1563, %v1597
      %v1606 = vsub.f32 %v1564, %v1598
      %v1607 = vsub.f32 %v1565, %v1599
      %v1608 = vsub.f32 %v1566, %v1600
      %v1609 = vsub.f32 %v1567, %v1601
      %v1610 = vsub.f32 %v1568, %v1602
      %v1611 = vsub.f32 %v1569, %v1603
      %v1612 = vmul.f32 %v1604, %v1604
      %v1613 = vmul.f32 %v1605, %v1605
      %v1614 = vmul.f32 %v1606, %v1606
      %v1615 = vmul.f32 %v1607, %v1607
      %v1616 = vmul.f32 %v1608, %v1608
      %v1617 = vmul.f32 %v1609, %v1609
      %v1618 = vmul.f32 %v1610, %v1610
      %v1619 = vmul.f32 %v1611, %v1611
      %v1620 = vsel %vm487, %v1612, 0.0
      %1621 = vadd.xlane.f32.xlu0 %v1620
      %v1622 = vpop.xlane.xlu0 %1621
      %v1623 = vsel %vm487, %v1613, 0.0
      %1624 = vadd.xlane.f32.xlu0 %v1623
      %v1625 = vpop.xlane.xlu0 %1624
      %v1626 = vsel %vm487, %v1614, 0.0
      %1627 = vadd.xlane.f32.xlu0 %v1626
      %v1628 = vpop.xlane.xlu0 %1627
      %v1629 = vsel %vm487, %v1615, 0.0
      %1630 = vadd.xlane.f32.xlu0 %v1629
      %v1631 = vpop.xlane.xlu0 %1630
      %v1632 = vsel %vm487, %v1616, 0.0
      %1633 = vadd.xlane.f32.xlu0 %v1632
      %v1634 = vpop.xlane.xlu0 %1633
      %v1635 = vsel %vm487, %v1617, 0.0
      %1636 = vadd.xlane.f32.xlu0 %v1635
      %v1637 = vpop.xlane.xlu0 %1636
      %v1638 = vsel %vm487, %v1618, 0.0
      %1639 = vadd.xlane.f32.xlu0 %v1638
      %v1640 = vpop.xlane.xlu0 %1639
      %v1641 = vsel %vm487, %v1619, 0.0
      %1642 = vadd.xlane.f32.xlu0 %v1641
      %v1643 = vpop.xlane.xlu0 %1642
      %v1644 = vmul.f32 %v1622, %v518
      %v1645 = vmul.f32 %v1625, %v518
      %v1646 = vmul.f32 %v1628, %v518
      %v1647 = vmul.f32 %v1631, %v518
      %v1648 = vmul.f32 %v1634, %v518
      %v1649 = vmul.f32 %v1637, %v518
      %v1650 = vmul.f32 %v1640, %v518
      %v1651 = vmul.f32 %v1643, %v518
      %v1652 = vadd.f32 %v1644, 1e-05
      %v1653 = vadd.f32 %v1645, 1e-05
      %v1654 = vadd.f32 %v1646, 1e-05
      %v1655 = vadd.f32 %v1647, 1e-05
      %v1656 = vadd.f32 %v1648, 1e-05
      %v1657 = vadd.f32 %v1649, 1e-05
      %v1658 = vadd.f32 %v1650, 1e-05
      %v1659 = vadd.f32 %v1651, 1e-05
      %v1660 = vrsqrt.pop %v1652
      %v1661 = vmul.f32 %v1660, %v1652
      %v1662 = vmul.f32 %v1661, %v1660
      %v1663 = vmul.f32 0.5, %v1662
      %v1664 = vsub.f32 1.5, %v1663
      %v1665 = vmul.f32 %v1660, %v1664
      %vm1666 = vweird.f32 %v1652
      %vm1667 = vweird.f32 %v1660
      %vm1668 = vmor %vm1666, %vm1667
      %v1669 = vsel %vm1668, %v1660, %v1665
      %v1670 = vrsqrt.pop %v1653
      %v1671 = vmul.f32 %v1670, %v1653
      %v1672 = vmul.f32 %v1671, %v1670
      %v1673 = vmul.f32 0.5, %v1672
      %v1674 = vsub.f32 1.5, %v1673
      %v1675 = vmul.f32 %v1670, %v1674
      %vm1676 = vweird.f32 %v1653
      %vm1677 = vweird.f32 %v1670
      %vm1678 = vmor %vm1676, %vm1677
      %v1679 = vsel %vm1678, %v1670, %v1675
      %v1680 = vrsqrt.pop %v1654
      %v1681 = vmul.f32 %v1680, %v1654
      %v1682 = vmul.f32 %v1681, %v1680
      %v1683 = vmul.f32 0.5, %v1682
      %v1684 = vsub.f32 1.5, %v1683
      %v1685 = vmul.f32 %v1680, %v1684
      %vm1686 = vweird.f32 %v1654
      %vm1687 = vweird.f32 %v1680
      %vm1688 = vmor %vm1686, %vm1687
      %v1689 = vsel %vm1688, %v1680, %v1685
      %v1690 = vrsqrt.pop %v1655
      %v1691 = vmul.f32 %v1690, %v1655
      %v1692 = vmul.f32 %v1691, %v1690
      %v1693 = vmul.f32 0.5, %v1692
      %v1694 = vsub.f32 1.5, %v1693
      %v1695 = vmul.f32 %v1690, %v1694
      %vm1696 = vweird.f32 %v1655
      %vm1697 = vweird.f32 %v1690
      %vm1698 = vmor %vm1696, %vm1697
      %v1699 = vsel %vm1698, %v1690, %v1695
      %v1700 = vrsqrt.pop %v1656
      %v1701 = vmul.f32 %v1700, %v1656
      %v1702 = vmul.f32 %v1701, %v1700
      %v1703 = vmul.f32 0.5, %v1702
      %v1704 = vsub.f32 1.5, %v1703
      %v1705 = vmul.f32 %v1700, %v1704
      %vm1706 = vweird.f32 %v1656
      %vm1707 = vweird.f32 %v1700
      %vm1708 = vmor %vm1706, %vm1707
      %v1709 = vsel %vm1708, %v1700, %v1705
      %v1710 = vrsqrt.pop %v1657
      %v1711 = vmul.f32 %v1710, %v1657
      %v1712 = vmul.f32 %v1711, %v1710
      %v1713 = vmul.f32 0.5, %v1712
      %v1714 = vsub.f32 1.5, %v1713
      %v1715 = vmul.f32 %v1710, %v1714
      %vm1716 = vweird.f32 %v1657
      %vm1717 = vweird.f32 %v1710
      %vm1718 = vmor %vm1716, %vm1717
      %v1719 = vsel %vm1718, %v1710, %v1715
      %v1720 = vrsqrt.pop %v1658
      %v1721 = vmul.f32 %v1720, %v1658
      %v1722 = vmul.f32 %v1721, %v1720
      %v1723 = vmul.f32 0.5, %v1722
      %v1724 = vsub.f32 1.5, %v1723
      %v1725 = vmul.f32 %v1720, %v1724
      %vm1726 = vweird.f32 %v1658
      %vm1727 = vweird.f32 %v1720
      %vm1728 = vmor %vm1726, %vm1727
      %v1729 = vsel %vm1728, %v1720, %v1725
      %v1730 = vrsqrt.pop %v1659
      %v1731 = vmul.f32 %v1730, %v1659
      %v1732 = vmul.f32 %v1731, %v1730
      %v1733 = vmul.f32 0.5, %v1732
      %v1734 = vsub.f32 1.5, %v1733
      %v1735 = vmul.f32 %v1730, %v1734
      %vm1736 = vweird.f32 %v1659
      %vm1737 = vweird.f32 %v1730
      %vm1738 = vmor %vm1736, %vm1737
      %v1739 = vsel %vm1738, %v1730, %v1735
      %v1740 = vmul.f32 %v1604, %v1669
      %v1741 = vmul.f32 %v1605, %v1679
      %v1742 = vmul.f32 %v1606, %v1689
      %v1743 = vmul.f32 %v1607, %v1699
      %v1744 = vmul.f32 %v1608, %v1709
      %v1745 = vmul.f32 %v1609, %v1719
      %v1746 = vmul.f32 %v1610, %v1729
      %v1747 = vmul.f32 %v1611, %v1739
      %v1749 = vperm.slane %v1570, 0
      %v1751 = vmul.f32 %v1740, %v1749
      %v1752 = vmul.f32 %v1741, %v1749
      %v1753 = vmul.f32 %v1742, %v1749
      %v1754 = vmul.f32 %v1743, %v1749
      %v1755 = vmul.f32 %v1744, %v1749
      %v1756 = vmul.f32 %v1745, %v1749
      %v1757 = vmul.f32 %v1746, %v1749
      %v1758 = vmul.f32 %v1747, %v1749
      %v1760 = vperm.slane %v1571, 0
      %v1762 = vadd.f32 %v1751, %v1760
      %v1763 = vadd.f32 %v1752, %v1760
      %v1764 = vadd.f32 %v1753, %v1760
      %v1765 = vadd.f32 %v1754, %v1760
      %v1766 = vadd.f32 %v1755, %v1760
      %v1767 = vadd.f32 %v1756, %v1760
      %v1768 = vadd.f32 %v1757, %v1760
      %v1769 = vadd.f32 %v1758, %v1760
      %v1770 = vld [vmem:[%s10] sm:$0xff]
      %v1771 = vpack.c.bf16 %v1762, %v1762
      %v1772 = vpack.c.bf16 %v1763, %v1763
      %v1773 = vpack.c.bf16 %v1764, %v1764
      %v1774 = vpack.c.bf16 %v1765, %v1765
      %v1775 = vpack.c.bf16 %v1766, %v1766
      %v1776 = vpack.c.bf16 %v1767, %v1767
      %v1777 = vpack.c.bf16 %v1768, %v1768
      %v1778 = vpack.c.bf16 %v1769, %v1769
      %v1779 = vpack.c.bf16 %v1770, %v1770
      %v1780 = vld [vmem:[%s11] sm:$0x1]
      %v1782 = vperm.slane %v1780, 0
      %v1792 = vunpack.c.l.b16 %v1771
      %v1793 = vunpack.c.l.b16 %v1772
      %v1794 = vunpack.c.l.b16 %v1773
      %v1795 = vunpack.c.l.b16 %v1774
      %v1796 = vunpack.c.l.b16 %v1775
      %v1797 = vunpack.c.l.b16 %v1776
      %v1798 = vunpack.c.l.b16 %v1777
      %v1799 = vunpack.c.l.b16 %v1778
      %v1800 = vpack.c.b16 %v1793, %v1792
      %v1801 = vpack.c.b16 %v1795, %v1794
      %v1802 = vpack.c.b16 %v1797, %v1796
      %v1803 = vpack.c.b16 %v1799, %v1798
      %v1805 = vsel %vm487, %v1800, 0
      %v1808 = vsel %vm487, %v1801, 0
      %v1811 = vsel %vm487, %v1802, 0
      %v1814 = vsel %vm487, %v1803, 0
      %v1817 = vsel %vm739, %v1779, 0
      %1819 = vmatpush.bf16.msra.mxu0 0
      %1820 = vmatpush.bf16.msra.mxu0 0
      %1821 = vmatpush.bf16.msra.mxu0 0
      %1822 = vmatpush.bf16.msra.mxu0 0
      %1823 = vmatpush.bf16.msra.mxu0 0
      %1824 = vmatpush.bf16.msra.mxu0 0
      %1825 = vmatpush.bf16.msra.mxu0 0
      %1826 = vmatpush.bf16.msra.mxu0 %v1817
      %1827 = vmatmul.bf16.gmra.mxu0 %v1805
      %v1828 = vpop.f32.mrf.mxu0
      %v1829 = vadd.f32 %v1782, %v1828
      %v1830 = vpop.f32.mrf.mxu0
      %v1831 = vadd.f32 %v1782, %v1830
      %1832 = vmatmul.bf16.gmra.mxu0 %v1808
      %v1833 = vpop.f32.mrf.mxu0
      %v1834 = vadd.f32 %v1782, %v1833
      %v1835 = vpop.f32.mrf.mxu0
      %v1836 = vadd.f32 %v1782, %v1835
      %1837 = vmatmul.bf16.gmra.mxu0 %v1811
      %v1838 = vpop.f32.mrf.mxu0
      %v1839 = vadd.f32 %v1782, %v1838
      %v1840 = vpop.f32.mrf.mxu0
      %v1841 = vadd.f32 %v1782, %v1840
      %1842 = vmatmul.bf16.gmra.mxu0 %v1814
      %v1843 = vpop.f32.mrf.mxu0
      %v1844 = vadd.f32 %v1782, %v1843
      %v1845 = vpop.f32.mrf.mxu0
      %v1846 = vadd.f32 %v1782, %v1845
      %1847 = vdwg.mxu0
      %v1848 = vmul.f32 %v1829, 0.5
      %v1849 = vmul.f32 %v1831, 0.5
      %v1850 = vmul.f32 %v1834, 0.5
      %v1851 = vmul.f32 %v1836, 0.5
      %v1852 = vmul.f32 %v1839, 0.5
      %v1853 = vmul.f32 %v1841, 0.5
      %v1854 = vmul.f32 %v1844, 0.5
      %v1855 = vmul.f32 %v1846, 0.5
      %v1856 = vmul.f32 %v1829, 0.044715
      %v1857 = vmul.f32 %v1831, 0.044715
      %v1858 = vmul.f32 %v1834, 0.044715
      %v1859 = vmul.f32 %v1836, 0.044715
      %v1860 = vmul.f32 %v1839, 0.044715
      %v1861 = vmul.f32 %v1841, 0.044715
      %v1862 = vmul.f32 %v1844, 0.044715
      %v1863 = vmul.f32 %v1846, 0.044715
      %v1864 = vmul.f32 %v1856, %v1829
      %v1865 = vmul.f32 %v1857, %v1831
      %v1866 = vmul.f32 %v1858, %v1834
      %v1867 = vmul.f32 %v1859, %v1836
      %v1868 = vmul.f32 %v1860, %v1839
      %v1869 = vmul.f32 %v1861, %v1841
      %v1870 = vmul.f32 %v1862, %v1844
      %v1871 = vmul.f32 %v1863, %v1846
      %v1872 = vmul.f32 %v1864, %v1829
      %v1873 = vmul.f32 %v1865, %v1831
      %v1874 = vmul.f32 %v1866, %v1834
      %v1875 = vmul.f32 %v1867, %v1836
      %v1876 = vmul.f32 %v1868, %v1839
      %v1877 = vmul.f32 %v1869, %v1841
      %v1878 = vmul.f32 %v1870, %v1844
      %v1879 = vmul.f32 %v1871, %v1846
      %v1880 = vadd.f32 %v1829, %v1872
      %v1881 = vadd.f32 %v1831, %v1873
      %v1882 = vadd.f32 %v1834, %v1874
      %v1883 = vadd.f32 %v1836, %v1875
      %v1884 = vadd.f32 %v1839, %v1876
      %v1885 = vadd.f32 %v1841, %v1877
      %v1886 = vadd.f32 %v1844, %v1878
      %v1887 = vadd.f32 %v1846, %v1879
      %v1888 = vmul.f32 %v1880, 0.7978846
      %v1889 = vmul.f32 %v1881, 0.7978846
      %v1890 = vmul.f32 %v1882, 0.7978846
      %v1891 = vmul.f32 %v1883, 0.7978846
      %v1892 = vmul.f32 %v1884, 0.7978846
      %v1893 = vmul.f32 %v1885, 0.7978846
      %v1894 = vmul.f32 %v1886, 0.7978846
      %v1895 = vmul.f32 %v1887, 0.7978846
      %v1896 = vtanh.pop %v1888
      %v1897 = vtanh.pop %v1889
      %v1898 = vtanh.pop %v1890
      %v1899 = vtanh.pop %v1891
      %v1900 = vtanh.pop %v1892
      %v1901 = vtanh.pop %v1893
      %v1902 = vtanh.pop %v1894
      %v1903 = vtanh.pop %v1895
      %v1904 = vadd.f32 %v1896, 1.0
      %v1905 = vadd.f32 %v1897, 1.0
      %v1906 = vadd.f32 %v1898, 1.0
      %v1907 = vadd.f32 %v1899, 1.0
      %v1908 = vadd.f32 %v1900, 1.0
      %v1909 = vadd.f32 %v1901, 1.0
      %v1910 = vadd.f32 %v1902, 1.0
      %v1911 = vadd.f32 %v1903, 1.0
      %v1912 = vmul.f32 %v1848, %v1904
      %v1913 = vmul.f32 %v1849, %v1905
      %v1914 = vmul.f32 %v1850, %v1906
      %v1915 = vmul.f32 %v1851, %v1907
      %v1916 = vmul.f32 %v1852, %v1908
      %v1917 = vmul.f32 %v1853, %v1909
      %v1918 = vmul.f32 %v1854, %v1910
      %v1919 = vmul.f32 %v1855, %v1911
      %v1920 = vld [vmem:[%s12] sm:$0xff]
      %v1921 = vld [vmem:[%s12 + $0x8] sm:$0xff]
      %v1922 = vld [vmem:[%s12 + $0x10] sm:$0xff]
      %v1923 = vld [vmem:[%s12 + $0x18] sm:$0xff]
      %v1924 = vpack.c.bf16 %v1912, %v1912
      %v1925 = vpack.c.bf16 %v1913, %v1913
      %v1926 = vpack.c.bf16 %v1914, %v1914
      %v1927 = vpack.c.bf16 %v1915, %v1915
      %v1928 = vpack.c.bf16 %v1916, %v1916
      %v1929 = vpack.c.bf16 %v1917, %v1917
      %v1930 = vpack.c.bf16 %v1918, %v1918
      %v1931 = vpack.c.bf16 %v1919, %v1919
      %v1932 = vpack.c.bf16 %v1921, %v1920
      %v1933 = vpack.c.bf16 %v1923, %v1922
      %v1942 = vunpack.c.l.b16 %v1924
      %v1943 = vunpack.c.l.b16 %v1925
      %v1944 = vunpack.c.l.b16 %v1926
      %v1945 = vunpack.c.l.b16 %v1927
      %v1946 = vunpack.c.l.b16 %v1928
      %v1947 = vunpack.c.l.b16 %v1929
      %v1948 = vunpack.c.l.b16 %v1930
      %v1949 = vunpack.c.l.b16 %v1931
      %v1950 = vpack.c.b16 %v1943, %v1942
      %v1951 = vpack.c.b16 %v1945, %v1944
      %v1952 = vpack.c.b16 %v1947, %v1946
      %v1953 = vpack.c.b16 %v1949, %v1948
      %vm1954 = vcmask 261120
      %v1956 = vsel %vm1954, %v1950, 0
      %v1959 = vsel %vm1954, %v1951, 0
      %v1962 = vsel %vm1954, %v1952, 0
      %v1965 = vsel %vm1954, %v1953, 0
      %1967 = vmatpush.bf16.msra.mxu0 0
      %1968 = vmatpush.bf16.msra.mxu0 0
      %1969 = vmatpush.bf16.msra.mxu0 0
      %1970 = vmatpush.bf16.msra.mxu0 0
      %1971 = vmatpush.bf16.msra.mxu0 0
      %1972 = vmatpush.bf16.msra.mxu0 0
      %1973 = vmatpush.bf16.msra.mxu0 %v1933
      %1974 = vmatpush.bf16.msra.mxu0 %v1932
      %1975 = vmatmul.bf16.gmra.mxu0 %v1956
      %v1976 = vpop.f32.mrf.mxu0
      %v1977 = vadd.f32 0.0, %v1976
      %v1978 = vpop.f32.mrf.mxu0
      %v1979 = vadd.f32 0.0, %v1978
      %1980 = vmatmul.bf16.gmra.mxu0 %v1959
      %v1981 = vpop.f32.mrf.mxu0
      %v1982 = vadd.f32 0.0, %v1981
      %v1983 = vpop.f32.mrf.mxu0
      %v1984 = vadd.f32 0.0, %v1983
      %1985 = vmatmul.bf16.gmra.mxu0 %v1962
      %v1986 = vpop.f32.mrf.mxu0
      %v1987 = vadd.f32 0.0, %v1986
      %v1988 = vpop.f32.mrf.mxu0
      %v1989 = vadd.f32 0.0, %v1988
      %1990 = vmatmul.bf16.gmra.mxu0 %v1965
      %v1991 = vpop.f32.mrf.mxu0
      %v1992 = vadd.f32 0.0, %v1991
      %v1993 = vpop.f32.mrf.mxu0
      %v1994 = vadd.f32 0.0, %v1993
      %1995 = vdwg.mxu0
      %v1996 = vadd.f32 %v1562, %v1977
      %v1997 = vadd.f32 %v1563, %v1979
      %v1998 = vadd.f32 %v1564, %v1982
      %v1999 = vadd.f32 %v1565, %v1984
      %v2000 = vadd.f32 %v1566, %v1987
      %v2001 = vadd.f32 %v1567, %v1989
      %v2002 = vadd.f32 %v1568, %v1992
      %v2003 = vadd.f32 %v1569, %v1994
      %v2004 = vld [vmem:[%s13] sm:$0x1]
      %v2006 = vperm.slane %v2004, 0
      %v2008 = vadd.f32 %v1996, %v2006
      %v2009 = vadd.f32 %v1997, %v2006
      %v2010 = vadd.f32 %v1998, %v2006
      %v2011 = vadd.f32 %v1999, %v2006
      %v2012 = vadd.f32 %v2000, %v2006
      %v2013 = vadd.f32 %v2001, %v2006
      %v2014 = vadd.f32 %v2002, %v2006
      %v2015 = vadd.f32 %v2003, %v2006
      %2016 = vst.msk [vmem:[%s474] sm:$0xff] %vm487, %v2008
      %2017 = vst.msk [vmem:[%s474 + $0x8] sm:$0xff] %vm487, %v2009
      %2018 = vst.msk [vmem:[%s474 + $0x10] sm:$0xff] %vm487, %v2010
      %2019 = vst.msk [vmem:[%s474 + $0x18] sm:$0xff] %vm487, %v2011
      %2020 = vst.msk [vmem:[%s474 + $0x20] sm:$0xff] %vm487, %v2012
      %2021 = vst.msk [vmem:[%s474 + $0x28] sm:$0xff] %vm487, %v2013
      %2022 = vst.msk [vmem:[%s474 + $0x30] sm:$0xff] %vm487, %v2014
      %2023 = vst.msk [vmem:[%s474 + $0x38] sm:$0xff] %vm487, %v2015
      %s2024 = smul.u32 4, %s25
      %p2025 = scmp.lt.s32.totalorder %s2024, 7
      %s2026 = scalar_select %p2025, %s2024, 7
      %s2027 = smul.addr %s2026, 2
      %s2028 = smul.addr %s2027, 8
      %s2029 = scalar_lea.vmem %s14, %s2028
      // Predicated region
      $region77: #{rac_forward.7} parent=75 // pred_check
        %p2030 = pneg %p342
      $region78: #{rac_forward.7} parent=75 // pred_check_branch
        %2032 = sbr.rel (%p2030) target = $region80
      $region79: #{rac_forward.7} parent=75 // pred_region
        %s2033 = smul.u32 4, %s25
      $region80: #{rac_forward.7} parent=75 // pred_fallthru
        _
    $region76: #{rac_forward.7} parent=5 // pred_fallthru
      _
    %p2034 = scmp.le.s32.totalorder 2, %s20
    // Predicated region
    $region81: #{rac_forward.7} parent=5 // pred_check
      %p2035 = pneg %p2034
    $region82: #{rac_forward.7} parent=5 // pred_check_branch
      %2037 = sbr.rel (%p2035) target = $region84
    $region83: #{rac_forward.7} parent=5 // pred_region
      %s2038 = ssub.s32 %s20, 2
      // Predicated region
      $region85: #{rac_forward.7} parent=83 // pred_check
        %p2039 = pneg %p348
      $region86: #{rac_forward.7} parent=83 // pred_check_branch
        %2041 = sbr.rel (%p2039) target = $region88
      $region87: #{rac_forward.7} parent=83 // pred_region
        %s2042 = smul.u32 4, %s26
        %p2043 = scmp.lt.s32.totalorder %s2042, 7
        %s2044 = scalar_select %p2043, %s2042, 7
        %s2045 = smul.addr %s2044, 2
        %s2046 = smul.addr %s2045, 8
        %s2047 = scalar_lea.vmem %s14, %s2046
      $region88: #{rac_forward.7} parent=83 // pred_fallthru
        _
    $region84: #{rac_forward.7} parent=5 // pred_fallthru
      _
  $region6: #{rac_forward.7} parent=0 // loop_footer
    %s24 = sadd.s32 1, %s20
  $region7: #{rac_forward.7} parent=0 // loop_footer_branch
    %19 = sbr.rel target = $region3
  $region8: #{rac_forward.7} parent=0 // loop_exit
    _

// kernel: rac_forward.8
$region0: #{rac_forward.8}
  #allocation0 [shape = 'u32[]', space=smem, size = 0x4, offset = 0x4, fixed_abs, tag = 'smem constant byte address 0x4 - core index']
  #allocation1 [shape = 'u32[72,128]{1,0:T(1,128)}', space=vmem, size = 0x9000, scoped, tag = 'internal scratch']
  #allocation2 [shape = 'bf16[4,16,24]{2,1,0:T(8,128)(2,1)}', space=vmem, size = 0x4000, scoped, tag = 'scratch operand']
  #allocation3 [shape = 'f32[4,16,8]{2,1,0:T(8,128)}', space=vmem, size = 0x8000, scoped, tag = 'scratch operand']
  %s0 = inlined_call_operand.vmem [shape: f32[8,16,8], index: 0, kind: input, shape index: {}]
  %s1 = inlined_call_operand.vmem [shape: f32[1,8], index: 1, kind: input, shape index: {}]
  %s2 = inlined_call_operand.vmem [shape: f32[1,8], index: 2, kind: input, shape index: {}]
  %s3 = inlined_call_operand.vmem [shape: f32[8,24], index: 3, kind: input, shape index: {}]
  %s4 = inlined_call_operand.vmem [shape: f32[1,24], index: 4, kind: input, shape index: {}]
  %s5 = inlined_call_operand.vmem [shape: f32[2,16,16], index: 5, kind: input, shape index: {}]
  %s6 = inlined_call_operand.vmem [shape: f32[4,16,16], index: 6, kind: input, shape index: {}]
  %s7 = inlined_call_operand.vmem [shape: f32[8,8], index: 7, kind: input, shape index: {}]
  %s8 = inlined_call_operand.vmem [shape: f32[1,8], index: 8, kind: input, shape index: {}]
  %s9 = inlined_call_operand.vmem [shape: f32[1,8], index: 9, kind: input, shape index: {}]
  %s10 = inlined_call_operand.vmem [shape: f32[1,8], index: 10, kind: input, shape index: {}]
  %s11 = inlined_call_operand.vmem [shape: f32[8,32], index: 11, kind: input, shape index: {}]
  %s12 = inlined_call_operand.vmem [shape: f32[1,32], index: 12, kind: input, shape index: {}]
  %s13 = inlined_call_operand.vmem [shape: f32[32,8], index: 13, kind: input, shape index: {}]
  %s14 = inlined_call_operand.vmem [shape: f32[1,8], index: 14, kind: input, shape index: {}]
  %s15 = inlined_call_operand.vmem [shape: f32[8,16,8], index: 15, kind: output, shape index: {}]
  %s16 = sld [smem:[#allocation0]]
  $region93: #{rac_forward.8} parent=0
    _
  %s18 = ssub.s32 1, %s16
  %s19 = scalar_select 0, %s18, %s16
  loop: start=0, step=1, limit=4
  $region2: #{rac_forward.8} parent=0 // loop_pre_header
    _
  $region3: #{rac_forward.8} parent=0 // loop_header
    %s21 = sphi 0, %s25
    %p22 = scmp.ge.s32.totalorder %s21, 4
    %s31 = sphi 0, %s33
    %s34 = sphi 0, %s31
    %s35 = sphi 0, %s34
    %s51 = sphi 0, %s35
    %s55 = sphi 0, %s55
    %s57 = sphi 0, %s55
    %s58 = sphi 0, %s57
    %s72 = sphi 0, %s58
    %s76 = sphi 0, %s76
    %s78 = sphi 0, %s76
    %s79 = sphi 0, %s78
    %s93 = sphi 0, %s79
    %s97 = sphi 0, %s97
    %s99 = sphi 0, %s97
    %s100 = sphi 0, %s99
    %s114 = sphi 0, %s100
    %s118 = sphi 0, %s118
    %s120 = sphi 0, %s118
    %s121 = sphi 0, %s120
    %s135 = sphi 0, %s121
    %s139 = sphi 0, %s139
    %s141 = sphi 0, %s139
    %s142 = sphi 0, %s141
    %s156 = sphi 0, %s142
    %s160 = sphi 0, %s160
    %s162 = sphi 0, %s160
    %s163 = sphi 0, %s162
    %s177 = sphi 0, %s163
    %s181 = sphi 0, %s181
    %s183 = sphi 0, %s181
    %s184 = sphi 0, %s183
    %s198 = sphi 0, %s184
    %s202 = sphi 0, %s202
    %s204 = sphi 0, %s202
    %s205 = sphi 0, %s204
    %s219 = sphi 0, %s205
    %s223 = sphi 0, %s223
    %s225 = sphi 0, %s223
    %s226 = sphi 0, %s225
    %s240 = sphi 0, %s226
    %s244 = sphi 0, %s244
    %s246 = sphi 0, %s244
    %s247 = sphi 0, %s246
    %s261 = sphi 0, %s247
    %s265 = sphi 0, %s265
    %s267 = sphi 0, %s265
    %s268 = sphi 0, %s267
    %s282 = sphi 0, %s268
    %s286 = sphi 0, %s286
    %s288 = sphi 0, %s286
    %s289 = sphi 0, %s288
    %s303 = sphi 0, %s289
    %s307 = sphi 0, %s307
    %s309 = sphi 0, %s307
    %s310 = sphi 0, %s309
    %s324 = sphi 0, %s310
    %s328 = sphi 0, %s328
    %s330 = sphi 0, %s328
    %s331 = sphi 0, %s330
    %s345 = sphi 0, %s331
    %s351 = sphi 0, %s353
    %s354 = sphi 0, %s351
    %s355 = sphi 0, %s354
    %s371 = sphi 0, %s355
  $region4: #{rac_forward.8} parent=0 // loop_header_branch
    %24 = sbr.rel (%p22) target = $region8
  $region5: #{rac_forward.8} parent=0 // loop_body
    %s26 = ssub.s32 %s21, 1
    %s27 = ssub.s32 %s21, 2
    %s28 = sadd.s32 %s21, 1
    %s29 = ssub.s32 %s21, %s28
    %p30 = scmp.eq.s32.totalorder %s29, 0
    %s32 = sadd.s32 %s31, 1
    %s33 = scalar_select %p30, %s31, %s32
    %p36 = pneg %p30
    %p37 = scmp.eq.s32.totalorder %s21, 1
    %p38 = por %p36, %p37
    %p39 = scmp.ne.s32.totalorder %s31, %s34
    %p40 = scmp.eq.s32.totalorder %s21, 0
    %p41 = por %p39, %p40
    %p42 = scmp.ne.s32.totalorder %s31, %s34
    %p43 = scmp.eq.s32.totalorder %s26, 1
    %p44 = por %p42, %p43
    %p45 = scmp.ne.s32.totalorder %s34, %s35
    %p46 = scmp.eq.s32.totalorder %s26, 0
    %p47 = por %p45, %p46
    %p48 = scmp.ne.s32.totalorder %s34, %s35
    %p49 = scmp.eq.s32.totalorder %s27, 1
    %p50 = por %p48, %p49
    %p52 = scmp.ne.s32.totalorder %s35, %s51
    %p53 = scmp.eq.s32.totalorder %s27, 0
    %p54 = por %p52, %p53
    %s56 = sadd.s32 %s55, 1
    %p59 = scmp.eq.s32.totalorder %s21, 1
    %p60 = scmp.ne.s32.totalorder %s55, %s57
    %p61 = scmp.eq.s32.totalorder %s21, 0
    %p62 = por %p60, %p61
    %p63 = scmp.ne.s32.totalorder %s55, %s57
    %p64 = scmp.eq.s32.totalorder %s26, 1
    %p65 = por %p63, %p64
    %p66 = scmp.ne.s32.totalorder %s57, %s58
    %p67 = scmp.eq.s32.totalorder %s26, 0
    %p68 = por %p66, %p67
    %p69 = scmp.ne.s32.totalorder %s57, %s58
    %p70 = scmp.eq.s32.totalorder %s27, 1
    %p71 = por %p69, %p70
    %p73 = scmp.ne.s32.totalorder %s58, %s72
    %p74 = scmp.eq.s32.totalorder %s27, 0
    %p75 = por %p73, %p74
    %s77 = sadd.s32 %s76, 1
    %p80 = scmp.eq.s32.totalorder %s21, 1
    %p81 = scmp.ne.s32.totalorder %s76, %s78
    %p82 = scmp.eq.s32.totalorder %s21, 0
    %p83 = por %p81, %p82
    %p84 = scmp.ne.s32.totalorder %s76, %s78
    %p85 = scmp.eq.s32.totalorder %s26, 1
    %p86 = por %p84, %p85
    %p87 = scmp.ne.s32.totalorder %s78, %s79
    %p88 = scmp.eq.s32.totalorder %s26, 0
    %p89 = por %p87, %p88
    %p90 = scmp.ne.s32.totalorder %s78, %s79
    %p91 = scmp.eq.s32.totalorder %s27, 1
    %p92 = por %p90, %p91
    %p94 = scmp.ne.s32.totalorder %s79, %s93
    %p95 = scmp.eq.s32.totalorder %s27, 0
    %p96 = por %p94, %p95
    %s98 = sadd.s32 %s97, 1
    %p101 = scmp.eq.s32.totalorder %s21, 1
    %p102 = scmp.ne.s32.totalorder %s97, %s99
    %p103 = scmp.eq.s32.totalorder %s21, 0
    %p104 = por %p102, %p103
    %p105 = scmp.ne.s32.totalorder %s97, %s99
    %p106 = scmp.eq.s32.totalorder %s26, 1
    %p107 = por %p105, %p106
    %p108 = scmp.ne.s32.totalorder %s99, %s100
    %p109 = scmp.eq.s32.totalorder %s26, 0
    %p110 = por %p108, %p109
    %p111 = scmp.ne.s32.totalorder %s99, %s100
    %p112 = scmp.eq.s32.totalorder %s27, 1
    %p113 = por %p111, %p112
    %p115 = scmp.ne.s32.totalorder %s100, %s114
    %p116 = scmp.eq.s32.totalorder %s27, 0
    %p117 = por %p115, %p116
    %s119 = sadd.s32 %s118, 1
    %p122 = scmp.eq.s32.totalorder %s21, 1
    %p123 = scmp.ne.s32.totalorder %s118, %s120
    %p124 = scmp.eq.s32.totalorder %s21, 0
    %p125 = por %p123, %p124
    %p126 = scmp.ne.s32.totalorder %s118, %s120
    %p127 = scmp.eq.s32.totalorder %s26, 1
    %p128 = por %p126, %p127
    %p129 = scmp.ne.s32.totalorder %s120, %s121
    %p130 = scmp.eq.s32.totalorder %s26, 0
    %p131 = por %p129, %p130
    %p132 = scmp.ne.s32.totalorder %s120, %s121
    %p133 = scmp.eq.s32.totalorder %s27, 1
    %p134 = por %p132, %p133
    %p136 = scmp.ne.s32.totalorder %s121, %s135
    %p137 = scmp.eq.s32.totalorder %s27, 0
    %p138 = por %p136, %p137
    %s140 = sadd.s32 %s139, 1
    %p143 = scmp.eq.s32.totalorder %s21, 1
    %p144 = scmp.ne.s32.totalorder %s139, %s141
    %p145 = scmp.eq.s32.totalorder %s21, 0
    %p146 = por %p144, %p145
    %p147 = scmp.ne.s32.totalorder %s139, %s141
    %p148 = scmp.eq.s32.totalorder %s26, 1
    %p149 = por %p147, %p148
    %p150 = scmp.ne.s32.totalorder %s141, %s142
    %p151 = scmp.eq.s32.totalorder %s26, 0
    %p152 = por %p150, %p151
    %p153 = scmp.ne.s32.totalorder %s141, %s142
    %p154 = scmp.eq.s32.totalorder %s27, 1
    %p155 = por %p153, %p154
    %p157 = scmp.ne.s32.totalorder %s142, %s156
    %p158 = scmp.eq.s32.totalorder %s27, 0
    %p159 = por %p157, %p158
    %s161 = sadd.s32 %s160, 1
    %p164 = scmp.eq.s32.totalorder %s21, 1
    %p165 = scmp.ne.s32.totalorder %s160, %s162
    %p166 = scmp.eq.s32.totalorder %s21, 0
    %p167 = por %p165, %p166
    %p168 = scmp.ne.s32.totalorder %s160, %s162
    %p169 = scmp.eq.s32.totalorder %s26, 1
    %p170 = por %p168, %p169
    %p171 = scmp.ne.s32.totalorder %s162, %s163
    %p172 = scmp.eq.s32.totalorder %s26, 0
    %p173 = por %p171, %p172
    %p174 = scmp.ne.s32.totalorder %s162, %s163
    %p175 = scmp.eq.s32.totalorder %s27, 1
    %p176 = por %p174, %p175
    %p178 = scmp.ne.s32.totalorder %s163, %s177
    %p179 = scmp.eq.s32.totalorder %s27, 0
    %p180 = por %p178, %p179
    %s182 = sadd.s32 %s181, 1
    %p185 = scmp.eq.s32.totalorder %s21, 1
    %p186 = scmp.ne.s32.totalorder %s181, %s183
    %p187 = scmp.eq.s32.totalorder %s21, 0
    %p188 = por %p186, %p187
    %p189 = scmp.ne.s32.totalorder %s181, %s183
    %p190 = scmp.eq.s32.totalorder %s26, 1
    %p191 = por %p189, %p190
    %p192 = scmp.ne.s32.totalorder %s183, %s184
    %p193 = scmp.eq.s32.totalorder %s26, 0
    %p194 = por %p192, %p193
    %p195 = scmp.ne.s32.totalorder %s183, %s184
    %p196 = scmp.eq.s32.totalorder %s27, 1
    %p197 = por %p195, %p196
    %p199 = scmp.ne.s32.totalorder %s184, %s198
    %p200 = scmp.eq.s32.totalorder %s27, 0
    %p201 = por %p199, %p200
    %s203 = sadd.s32 %s202, 1
    %p206 = scmp.eq.s32.totalorder %s21, 1
    %p207 = scmp.ne.s32.totalorder %s202, %s204
    %p208 = scmp.eq.s32.totalorder %s21, 0
    %p209 = por %p207, %p208
    %p210 = scmp.ne.s32.totalorder %s202, %s204
    %p211 = scmp.eq.s32.totalorder %s26, 1
    %p212 = por %p210, %p211
    %p213 = scmp.ne.s32.totalorder %s204, %s205
    %p214 = scmp.eq.s32.totalorder %s26, 0
    %p215 = por %p213, %p214
    %p216 = scmp.ne.s32.totalorder %s204, %s205
    %p217 = scmp.eq.s32.totalorder %s27, 1
    %p218 = por %p216, %p217
    %p220 = scmp.ne.s32.totalorder %s205, %s219
    %p221 = scmp.eq.s32.totalorder %s27, 0
    %p222 = por %p220, %p221
    %s224 = sadd.s32 %s223, 1
    %p227 = scmp.eq.s32.totalorder %s21, 1
    %p228 = scmp.ne.s32.totalorder %s223, %s225
    %p229 = scmp.eq.s32.totalorder %s21, 0
    %p230 = por %p228, %p229
    %p231 = scmp.ne.s32.totalorder %s223, %s225
    %p232 = scmp.eq.s32.totalorder %s26, 1
    %p233 = por %p231, %p232
    %p234 = scmp.ne.s32.totalorder %s225, %s226
    %p235 = scmp.eq.s32.totalorder %s26, 0
    %p236 = por %p234, %p235
    %p237 = scmp.ne.s32.totalorder %s225, %s226
    %p238 = scmp.eq.s32.totalorder %s27, 1
    %p239 = por %p237, %p238
    %p241 = scmp.ne.s32.totalorder %s226, %s240
    %p242 = scmp.eq.s32.totalorder %s27, 0
    %p243 = por %p241, %p242
    %s245 = sadd.s32 %s244, 1
    %p248 = scmp.eq.s32.totalorder %s21, 1
    %p249 = scmp.ne.s32.totalorder %s244, %s246
    %p250 = scmp.eq.s32.totalorder %s21, 0
    %p251 = por %p249, %p250
    %p252 = scmp.ne.s32.totalorder %s244, %s246
    %p253 = scmp.eq.s32.totalorder %s26, 1
    %p254 = por %p252, %p253
    %p255 = scmp.ne.s32.totalorder %s246, %s247
    %p256 = scmp.eq.s32.totalorder %s26, 0
    %p257 = por %p255, %p256
    %p258 = scmp.ne.s32.totalorder %s246, %s247
    %p259 = scmp.eq.s32.totalorder %s27, 1
    %p260 = por %p258, %p259
    %p262 = scmp.ne.s32.totalorder %s247, %s261
    %p263 = scmp.eq.s32.totalorder %s27, 0
    %p264 = por %p262, %p263
    %s266 = sadd.s32 %s265, 1
    %p269 = scmp.eq.s32.totalorder %s21, 1
    %p270 = scmp.ne.s32.totalorder %s265, %s267
    %p271 = scmp.eq.s32.totalorder %s21, 0
    %p272 = por %p270, %p271
    %p273 = scmp.ne.s32.totalorder %s265, %s267
    %p274 = scmp.eq.s32.totalorder %s26, 1
    %p275 = por %p273, %p274
    %p276 = scmp.ne.s32.totalorder %s267, %s268
    %p277 = scmp.eq.s32.totalorder %s26, 0
    %p278 = por %p276, %p277
    %p279 = scmp.ne.s32.totalorder %s267, %s268
    %p280 = scmp.eq.s32.totalorder %s27, 1
    %p281 = por %p279, %p280
    %p283 = scmp.ne.s32.totalorder %s268, %s282
    %p284 = scmp.eq.s32.totalorder %s27, 0
    %p285 = por %p283, %p284
    %s287 = sadd.s32 %s286, 1
    %p290 = scmp.eq.s32.totalorder %s21, 1
    %p291 = scmp.ne.s32.totalorder %s286, %s288
    %p292 = scmp.eq.s32.totalorder %s21, 0
    %p293 = por %p291, %p292
    %p294 = scmp.ne.s32.totalorder %s286, %s288
    %p295 = scmp.eq.s32.totalorder %s26, 1
    %p296 = por %p294, %p295
    %p297 = scmp.ne.s32.totalorder %s288, %s289
    %p298 = scmp.eq.s32.totalorder %s26, 0
    %p299 = por %p297, %p298
    %p300 = scmp.ne.s32.totalorder %s288, %s289
    %p301 = scmp.eq.s32.totalorder %s27, 1
    %p302 = por %p300, %p301
    %p304 = scmp.ne.s32.totalorder %s289, %s303
    %p305 = scmp.eq.s32.totalorder %s27, 0
    %p306 = por %p304, %p305
    %s308 = sadd.s32 %s307, 1
    %p311 = scmp.eq.s32.totalorder %s21, 1
    %p312 = scmp.ne.s32.totalorder %s307, %s309
    %p313 = scmp.eq.s32.totalorder %s21, 0
    %p314 = por %p312, %p313
    %p315 = scmp.ne.s32.totalorder %s307, %s309
    %p316 = scmp.eq.s32.totalorder %s26, 1
    %p317 = por %p315, %p316
    %p318 = scmp.ne.s32.totalorder %s309, %s310
    %p319 = scmp.eq.s32.totalorder %s26, 0
    %p320 = por %p318, %p319
    %p321 = scmp.ne.s32.totalorder %s309, %s310
    %p322 = scmp.eq.s32.totalorder %s27, 1
    %p323 = por %p321, %p322
    %p325 = scmp.ne.s32.totalorder %s310, %s324
    %p326 = scmp.eq.s32.totalorder %s27, 0
    %p327 = por %p325, %p326
    %s329 = sadd.s32 %s328, 1
    %p332 = scmp.eq.s32.totalorder %s21, 1
    %p333 = scmp.ne.s32.totalorder %s328, %s330
    %p334 = scmp.eq.s32.totalorder %s21, 0
    %p335 = por %p333, %p334
    %p336 = scmp.ne.s32.totalorder %s328, %s330
    %p337 = scmp.eq.s32.totalorder %s26, 1
    %p338 = por %p336, %p337
    %p339 = scmp.ne.s32.totalorder %s330, %s331
    %p340 = scmp.eq.s32.totalorder %s26, 0
    %p341 = por %p339, %p340
    %p342 = scmp.ne.s32.totalorder %s330, %s331
    %p343 = scmp.eq.s32.totalorder %s27, 1
    %p344 = por %p342, %p343
    %p346 = scmp.ne.s32.totalorder %s331, %s345
    %p347 = scmp.eq.s32.totalorder %s27, 0
    %p348 = por %p346, %p347
    %s349 = ssub.s32 %s21, %s28
    %p350 = scmp.eq.s32.totalorder %s349, 0
    %s352 = sadd.s32 %s351, 1
    %s353 = scalar_select %p350, %s351, %s352
    %p356 = pneg %p350
    %p357 = scmp.eq.s32.totalorder %s21, 1
    %p358 = por %p356, %p357
    %p359 = scmp.ne.s32.totalorder %s351, %s354
    %p360 = scmp.eq.s32.totalorder %s21, 0
    %p361 = por %p359, %p360
    %p362 = scmp.ne.s32.totalorder %s351, %s354
    %p363 = scmp.eq.s32.totalorder %s26, 1
    %p364 = por %p362, %p363
    %p365 = scmp.ne.s32.totalorder %s354, %s355
    %p366 = scmp.eq.s32.totalorder %s26, 0
    %p367 = por %p365, %p366
    %p368 = scmp.ne.s32.totalorder %s354, %s355
    %p369 = scmp.eq.s32.totalorder %s27, 1
    %p370 = por %p368, %p369
    %p372 = scmp.ne.s32.totalorder %s355, %s371
    %p373 = scmp.eq.s32.totalorder %s27, 0
    %p374 = por %p372, %p373
    %p375 = scmp.le.s32.totalorder 1, %s21
    %p376 = scmp.lt.s32.totalorder %s21, 3
    %p377 = pnand %p375, %p376
    %p378 = pneg %p377
    // Predicated region
    $region9: #{rac_forward.8} parent=5 // pred_check
      _
    $region10: #{rac_forward.8} parent=5 // pred_check_branch
      %380 = sbr.rel (%p377) target = $region12
    $region11: #{rac_forward.8} parent=5 // pred_region
      %s381 = ssub.s32 %s21, 1
      // Predicated region
      $region13: #{rac_forward.8} parent=11 // pred_check
        %p382 = pneg %p68
      $region14: #{rac_forward.8} parent=11 // pred_check_branch
        %384 = sbr.rel (%p382) target = $region16
      $region15: #{rac_forward.8} parent=11 // pred_region
        _
      $region16: #{rac_forward.8} parent=11 // pred_fallthru
        _
      // Predicated region
      $region17: #{rac_forward.8} parent=11 // pred_check
        %p385 = pneg %p89
      $region18: #{rac_forward.8} parent=11 // pred_check_branch
        %387 = sbr.rel (%p385) target = $region20
      $region19: #{rac_forward.8} parent=11 // pred_region
        _
      $region20: #{rac_forward.8} parent=11 // pred_fallthru
        _
      // Predicated region
      $region21: #{rac_forward.8} parent=11 // pred_check
        %p388 = pneg %p110
      $region22: #{rac_forward.8} parent=11 // pred_check_branch
        %390 = sbr.rel (%p388) target = $region24
      $region23: #{rac_forward.8} parent=11 // pred_region
        _
      $region24: #{rac_forward.8} parent=11 // pred_fallthru
        _
      // Predicated region
      $region25: #{rac_forward.8} parent=11 // pred_check
        %p391 = pneg %p131
      $region26: #{rac_forward.8} parent=11 // pred_check_branch
        %393 = sbr.rel (%p391) target = $region28
      $region27: #{rac_forward.8} parent=11 // pred_region
        _
      $region28: #{rac_forward.8} parent=11 // pred_fallthru
        _
      // Predicated region
      $region29: #{rac_forward.8} parent=11 // pred_check
        %p394 = pneg %p152
      $region30: #{rac_forward.8} parent=11 // pred_check_branch
        %396 = sbr.rel (%p394) target = $region32
      $region31: #{rac_forward.8} parent=11 // pred_region
        _
      $region32: #{rac_forward.8} parent=11 // pred_fallthru
        _
      // Predicated region
      $region33: #{rac_forward.8} parent=11 // pred_check
        %p397 = pneg %p173
      $region34: #{rac_forward.8} parent=11 // pred_check_branch
        %399 = sbr.rel (%p397) target = $region36
      $region35: #{rac_forward.8} parent=11 // pred_region
        _
      $region36: #{rac_forward.8} parent=11 // pred_fallthru
        _
      // Predicated region
      $region37: #{rac_forward.8} parent=11 // pred_check
        %p400 = pneg %p194
      $region38: #{rac_forward.8} parent=11 // pred_check_branch
        %402 = sbr.rel (%p400) target = $region40
      $region39: #{rac_forward.8} parent=11 // pred_region
        _
      $region40: #{rac_forward.8} parent=11 // pred_fallthru
        _
      // Predicated region
      $region41: #{rac_forward.8} parent=11 // pred_check
        %p403 = pneg %p215
      $region42: #{rac_forward.8} parent=11 // pred_check_branch
        %405 = sbr.rel (%p403) target = $region44
      $region43: #{rac_forward.8} parent=11 // pred_region
        _
      $region44: #{rac_forward.8} parent=11 // pred_fallthru
        _
      // Predicated region
      $region45: #{rac_forward.8} parent=11 // pred_check
        %p406 = pneg %p236
      $region46: #{rac_forward.8} parent=11 // pred_check_branch
        %408 = sbr.rel (%p406) target = $region48
      $region47: #{rac_forward.8} parent=11 // pred_region
        _
      $region48: #{rac_forward.8} parent=11 // pred_fallthru
        _
      // Predicated region
      $region49: #{rac_forward.8} parent=11 // pred_check
        %p409 = pneg %p257
      $region50: #{rac_forward.8} parent=11 // pred_check_branch
        %411 = sbr.rel (%p409) target = $region52
      $region51: #{rac_forward.8} parent=11 // pred_region
        _
      $region52: #{rac_forward.8} parent=11 // pred_fallthru
        _
      // Predicated region
      $region53: #{rac_forward.8} parent=11 // pred_check
        %p412 = pneg %p278
      $region54: #{rac_forward.8} parent=11 // pred_check_branch
        %414 = sbr.rel (%p412) target = $region56
      $region55: #{rac_forward.8} parent=11 // pred_region
        _
      $region56: #{rac_forward.8} parent=11 // pred_fallthru
        _
      // Predicated region
      $region57: #{rac_forward.8} parent=11 // pred_check
        %p415 = pneg %p299
      $region58: #{rac_forward.8} parent=11 // pred_check_branch
        %417 = sbr.rel (%p415) target = $region60
      $region59: #{rac_forward.8} parent=11 // pred_region
        _
      $region60: #{rac_forward.8} parent=11 // pred_fallthru
        _
      // Predicated region
      $region61: #{rac_forward.8} parent=11 // pred_check
        %p418 = pneg %p320
      $region62: #{rac_forward.8} parent=11 // pred_check_branch
        %420 = sbr.rel (%p418) target = $region64
      $region63: #{rac_forward.8} parent=11 // pred_region
        _
      $region64: #{rac_forward.8} parent=11 // pred_fallthru
        _
      // Predicated region
      $region65: #{rac_forward.8} parent=11 // pred_check
        %p421 = pneg %p341
      $region66: #{rac_forward.8} parent=11 // pred_check_branch
        %423 = sbr.rel (%p421) target = $region68
      $region67: #{rac_forward.8} parent=11 // pred_region
        _
      $region68: #{rac_forward.8} parent=11 // pred_fallthru
        _
    $region12: #{rac_forward.8} parent=5 // pred_fallthru
      _
    %p424 = scmp.lt.s32.totalorder %s21, 2
    // Predicated region
    $region69: #{rac_forward.8} parent=5 // pred_check
      %p425 = pneg %p424
    $region70: #{rac_forward.8} parent=5 // pred_check_branch
      %427 = sbr.rel (%p425) target = $region72
    $region71: #{rac_forward.8} parent=5 // pred_region
      // Predicated region
      $region73: #{rac_forward.8} parent=71 // pred_check
        %p428 = pneg %p41
      $region74: #{rac_forward.8} parent=71 // pred_check_branch
        %430 = sbr.rel (%p428) target = $region76
      $region75: #{rac_forward.8} parent=71 // pred_region
        %s431 = smul.u32 4, %s21
        %p432 = scmp.lt.s32.totalorder %s431, 7
        %s433 = scalar_select %p432, %s431, 7
        %s434 = smul.addr %s433, 2
        %s435 = smul.addr %s434, 8
        %s436 = scalar_lea.vmem %s0, %s435
        %s437 = smul.u32 4, %s21
      $region76: #{rac_forward.8} parent=71 // pred_fallthru
        _
    $region72: #{rac_forward.8} parent=5 // pred_fallthru
      _
    %p438 = scmp.le.s32.totalorder 1, %s21
    %p439 = scmp.lt.s32.totalorder %s21, 3
    %p440 = pnand %p438, %p439
    %p441 = pneg %p440
    // Predicated region
    $region77: #{rac_forward.8} parent=5 // pred_check
      _
    $region78: #{rac_forward.8} parent=5 // pred_check_branch
      %443 = sbr.rel (%p440) target = $region80
    $region79: #{rac_forward.8} parent=5 // pred_region
      %s444 = ssub.s32 %s21, 1
      %s445 = smul.u32 4, %s26
      %p446 = scmp.lt.s32.totalorder %s445, 7
      %s447 = scalar_select %p446, %s445, 7
      %s448 = smul.addr %s447, 2
      %s449 = smul.addr %s448, 8
      %s450 = scalar_lea.vmem %s0, %s449
      %p451 = pneg %p47
      %p452 = pneg %p44
      %p453 = pneg %p68
      %p454 = pneg %p65
      %p455 = pneg %p89
      %p456 = pneg %p86
      %p457 = pneg %p110
      %p458 = pneg %p107
      %p459 = pneg %p131
      %p460 = pneg %p128
      %p461 = pneg %p152
      %p462 = pneg %p149
      %p463 = pneg %p173
      %p464 = pneg %p170
      %p465 = pneg %p194
      %p466 = pneg %p191
      %p467 = pneg %p215
      %p468 = pneg %p212
      %p469 = pneg %p236
      %p470 = pneg %p233
      %p471 = pneg %p257
      %p472 = pneg %p254
      %p473 = pneg %p278
      %p474 = pneg %p275
      %p475 = pneg %p299
      %p476 = pneg %p296
      %p477 = pneg %p320
      %p478 = pneg %p317
      %p479 = pneg %p341
      %p480 = pneg %p338
      %p481 = pneg %p367
      %p482 = pneg %p364
      %s483 = smul.u32 4, %s26
      %p484 = scmp.lt.s32.totalorder %s483, 7
      %s485 = scalar_select %p484, %s483, 7
      %s486 = smul.addr %s485, 2
      %s487 = smul.addr %s486, 8
      %s488 = scalar_lea.vmem %s15, %s487
      %s489 = smul.u32 4, %s26
      %p490 = scmp.lt.s32.totalorder %s489, 7
      %s491 = scalar_select %p490, %s489, 7
      %s492 = smul.addr %s491, 2
      %s493 = smul.addr %s492, 8
      %s494 = scalar_lea.vmem %s0, %s493
      %s495 = smul.u32 4, %s26
      %s496 = smul.u32 4, %s26
      %p497 = scmp.lt.s32.totalorder %s496, 7
      %s498 = scalar_select %p497, %s496, 7
      %s499 = smul.addr %s498, 2
      %s500 = smul.addr %s499, 8
      %s501 = scalar_lea.vmem %s15, %s500
      %s502 = smul.u32 4, %s26
      %v504 = vld [vmem:[%s494] sm:$0xff]
      %v505 = vld [vmem:[%s494 + $0x8] sm:$0xff]
      %v506 = vld [vmem:[%s494 + $0x10] sm:$0xff]
      %v507 = vld [vmem:[%s494 + $0x18] sm:$0xff]
      %v508 = vld [vmem:[%s494 + $0x20] sm:$0xff]
      %v509 = vld [vmem:[%s494 + $0x28] sm:$0xff]
      %v510 = vld [vmem:[%s494 + $0x30] sm:$0xff]
      %v511 = vld [vmem:[%s494 + $0x38] sm:$0xff]
      %v512 = vld [vmem:[%s1] sm:$0x1]
      %v513 = vld [vmem:[%s2] sm:$0x1]
      %vm514 = vcmask 64512
      %v515 = vsel %vm514, %v504, 0.0
      %516 = vadd.xlane.f32.xlu0 %v515
      %v517 = vpop.xlane.xlu0 %516
      %v518 = vsel %vm514, %v505, 0.0
      %519 = vadd.xlane.f32.xlu0 %v518
      %v520 = vpop.xlane.xlu0 %519
      %v521 = vsel %vm514, %v506, 0.0
      %522 = vadd.xlane.f32.xlu0 %v521
      %v523 = vpop.xlane.xlu0 %522
      %v524 = vsel %vm514, %v507, 0.0
      %525 = vadd.xlane.f32.xlu0 %v524
      %v526 = vpop.xlane.xlu0 %525
      %v527 = vsel %vm514, %v508, 0.0
      %528 = vadd.xlane.f32.xlu0 %v527
      %v529 = vpop.xlane.xlu0 %528
      %v530 = vsel %vm514, %v509, 0.0
      %531 = vadd.xlane.f32.xlu0 %v530
      %v532 = vpop.xlane.xlu0 %531
      %v533 = vsel %vm514, %v510, 0.0
      %534 = vadd.xlane.f32.xlu0 %v533
      %v535 = vpop.xlane.xlu0 %534
      %v536 = vsel %vm514, %v511, 0.0
      %537 = vadd.xlane.f32.xlu0 %v536
      %v538 = vpop.xlane.xlu0 %537
      %v539 = vrcp.pop 8.0
      %v540 = vmul.f32 8.0, %v539
      %v541 = vsub.f32 1.0, %v540
      %v542 = vmul.f32 %v539, %v541
      %v543 = vadd.f32 %v539, %v542
      %vm544 = vweird.f32 %v539
      %v545 = vsel %vm544, %v539, %v543
      %v546 = vmul.f32 %v517, %v545
      %v547 = vmul.f32 %v520, %v545
      %v548 = vmul.f32 %v523, %v545
      %v549 = vmul.f32 %v526, %v545
      %v550 = vmul.f32 %v529, %v545
      %v551 = vmul.f32 %v532, %v545
      %v552 = vmul.f32 %v535, %v545
      %v553 = vmul.f32 %v538, %v545
      %v554 = vsub.f32 %v504, %v546
      %v555 = vsub.f32 %v505, %v547
      %v556 = vsub.f32 %v506, %v548
      %v557 = vsub.f32 %v507, %v549
      %v558 = vsub.f32 %v508, %v550
      %v559 = vsub.f32 %v509, %v551
      %v560 = vsub.f32 %v510, %v552
      %v561 = vsub.f32 %v511, %v553
      %v562 = vmul.f32 %v554, %v554
      %v563 = vmul.f32 %v555, %v555
      %v564 = vmul.f32 %v556, %v556
      %v565 = vmul.f32 %v557, %v557
      %v566 = vmul.f32 %v558, %v558
      %v567 = vmul.f32 %v559, %v559
      %v568 = vmul.f32 %v560, %v560
      %v569 = vmul.f32 %v561, %v561
      %v570 = vsel %vm514, %v562, 0.0
      %571 = vadd.xlane.f32.xlu0 %v570
      %v572 = vpop.xlane.xlu0 %571
      %v573 = vsel %vm514, %v563, 0.0
      %574 = vadd.xlane.f32.xlu0 %v573
      %v575 = vpop.xlane.xlu0 %574
      %v576 = vsel %vm514, %v564, 0.0
      %577 = vadd.xlane.f32.xlu0 %v576
      %v578 = vpop.xlane.xlu0 %577
      %v579 = vsel %vm514, %v565, 0.0
      %580 = vadd.xlane.f32.xlu0 %v579
      %v581 = vpop.xlane.xlu0 %580
      %v582 = vsel %vm514, %v566, 0.0
      %583 = vadd.xlane.f32.xlu0 %v582
      %v584 = vpop.xlane.xlu0 %583
      %v585 = vsel %vm514, %v567, 0.0
      %586 = vadd.xlane.f32.xlu0 %v585
      %v587 = vpop.xlane.xlu0 %586
      %v588 = vsel %vm514, %v568, 0.0
      %589 = vadd.xlane.f32.xlu0 %v588
      %v590 = vpop.xlane.xlu0 %589
      %v591 = vsel %vm514, %v569, 0.0
      %592 = vadd.xlane.f32.xlu0 %v591
      %v593 = vpop.xlane.xlu0 %592
      %v594 = vmul.f32 %v572, %v545
      %v595 = vmul.f32 %v575, %v545
      %v596 = vmul.f32 %v578, %v545
      %v597 = vmul.f32 %v581, %v545
      %v598 = vmul.f32 %v584, %v545
      %v599 = vmul.f32 %v587, %v545
      %v600 = vmul.f32 %v590, %v545
      %v601 = vmul.f32 %v593, %v545
      %v602 = vadd.f32 %v594, 1e-05
      %v603 = vadd.f32 %v595, 1e-05
      %v604 = vadd.f32 %v596, 1e-05
      %v605 = vadd.f32 %v597, 1e-05
      %v606 = vadd.f32 %v598, 1e-05
      %v607 = vadd.f32 %v599, 1e-05
      %v608 = vadd.f32 %v600, 1e-05
      %v609 = vadd.f32 %v601, 1e-05
      %v610 = vrsqrt.pop %v602
      %v611 = vmul.f32 %v610, %v602
      %v612 = vmul.f32 %v611, %v610
      %v613 = vmul.f32 0.5, %v612
      %v614 = vsub.f32 1.5, %v613
      %v615 = vmul.f32 %v610, %v614
      %vm616 = vweird.f32 %v602
      %vm617 = vweird.f32 %v610
      %vm618 = vmor %vm616, %vm617
      %v619 = vsel %vm618, %v610, %v615
      %v620 = vrsqrt.pop %v603
      %v621 = vmul.f32 %v620, %v603
      %v622 = vmul.f32 %v621, %v620
      %v623 = vmul.f32 0.5, %v622
      %v624 = vsub.f32 1.5, %v623
      %v625 = vmul.f32 %v620, %v624
      %vm626 = vweird.f32 %v603
      %vm627 = vweird.f32 %v620
      %vm628 = vmor %vm626, %vm627
      %v629 = vsel %vm628, %v620, %v625
      %v630 = vrsqrt.pop %v604
      %v631 = vmul.f32 %v630, %v604
      %v632 = vmul.f32 %v631, %v630
      %v633 = vmul.f32 0.5, %v632
      %v634 = vsub.f32 1.5, %v633
      %v635 = vmul.f32 %v630, %v634
      %vm636 = vweird.f32 %v604
      %vm637 = vweird.f32 %v630
      %vm638 = vmor %vm636, %vm637
      %v639 = vsel %vm638, %v630, %v635
      %v640 = vrsqrt.pop %v605
      %v641 = vmul.f32 %v640, %v605
      %v642 = vmul.f32 %v641, %v640
      %v643 = vmul.f32 0.5, %v642
      %v644 = vsub.f32 1.5, %v643
      %v645 = vmul.f32 %v640, %v644
      %vm646 = vweird.f32 %v605
      %vm647 = vweird.f32 %v640
      %vm648 = vmor %vm646, %vm647
      %v649 = vsel %vm648, %v640, %v645
      %v650 = vrsqrt.pop %v606
      %v651 = vmul.f32 %v650, %v606
      %v652 = vmul.f32 %v651, %v650
      %v653 = vmul.f32 0.5, %v652
      %v654 = vsub.f32 1.5, %v653
      %v655 = vmul.f32 %v650, %v654
      %vm656 = vweird.f32 %v606
      %vm657 = vweird.f32 %v650
      %vm658 = vmor %vm656, %vm657
      %v659 = vsel %vm658, %v650, %v655
      %v660 = vrsqrt.pop %v607
      %v661 = vmul.f32 %v660, %v607
      %v662 = vmul.f32 %v661, %v660
      %v663 = vmul.f32 0.5, %v662
      %v664 = vsub.f32 1.5, %v663
      %v665 = vmul.f32 %v660, %v664
      %vm666 = vweird.f32 %v607
      %vm667 = vweird.f32 %v660
      %vm668 = vmor %vm666, %vm667
      %v669 = vsel %vm668, %v660, %v665
      %v670 = vrsqrt.pop %v608
      %v671 = vmul.f32 %v670, %v608
      %v672 = vmul.f32 %v671, %v670
      %v673 = vmul.f32 0.5, %v672
      %v674 = vsub.f32 1.5, %v673
      %v675 = vmul.f32 %v670, %v674
      %vm676 = vweird.f32 %v608
      %vm677 = vweird.f32 %v670
      %vm678 = vmor %vm676, %vm677
      %v679 = vsel %vm678, %v670, %v675
      %v680 = vrsqrt.pop %v609
      %v681 = vmul.f32 %v680, %v609
      %v682 = vmul.f32 %v681, %v680
      %v683 = vmul.f32 0.5, %v682
      %v684 = vsub.f32 1.5, %v683
      %v685 = vmul.f32 %v680, %v684
      %vm686 = vweird.f32 %v609
      %vm687 = vweird.f32 %v680
      %vm688 = vmor %vm686, %vm687
      %v689 = vsel %vm688, %v680, %v685
      %v690 = vmul.f32 %v554, %v619
      %v691 = vmul.f32 %v555, %v629
      %v692 = vmul.f32 %v556, %v639
      %v693 = vmul.f32 %v557, %v649
      %v694 = vmul.f32 %v558, %v659
      %v695 = vmul.f32 %v559, %v669
      %v696 = vmul.f32 %v560, %v679
      %v697 = vmul.f32 %v561, %v689
      %v699 = vperm.slane %v512, 0
      %v701 = vmul.f32 %v690, %v699
      %v702 = vmul.f32 %v691, %v699
      %v703 = vmul.f32 %v692, %v699
      %v704 = vmul.f32 %v693, %v699
      %v705 = vmul.f32 %v694, %v699
      %v706 = vmul.f32 %v695, %v699
      %v707 = vmul.f32 %v696, %v699
      %v708 = vmul.f32 %v697, %v699
      %v710 = vperm.slane %v513, 0
      %v712 = vadd.f32 %v701, %v710
      %v713 = vadd.f32 %v702, %v710
      %v714 = vadd.f32 %v703, %v710
      %v715 = vadd.f32 %v704, %v710
      %v716 = vadd.f32 %v705, %v710
      %v717 = vadd.f32 %v706, %v710
      %v718 = vadd.f32 %v707, %v710
      %v719 = vadd.f32 %v708, %v710
      %v720 = vld [vmem:[%s3] sm:$0xff]
      %v721 = vpack.c.bf16 %v712, %v712
      %v722 = vpack.c.bf16 %v713, %v713
      %v723 = vpack.c.bf16 %v714, %v714
      %v724 = vpack.c.bf16 %v715, %v715
      %v725 = vpack.c.bf16 %v716, %v716
      %v726 = vpack.c.bf16 %v717, %v717
      %v727 = vpack.c.bf16 %v718, %v718
      %v728 = vpack.c.bf16 %v719, %v719
      %v729 = vpack.c.bf16 %v720, %v720
      %v730 = vld [vmem:[%s4] sm:$0x1]
      %v732 = vperm.slane %v730, 0
      %v742 = vunpack.c.l.b16 %v721
      %v743 = vunpack.c.l.b16 %v722
      %v744 = vunpack.c.l.b16 %v723
      %v745 = vunpack.c.l.b16 %v724
      %v746 = vunpack.c.l.b16 %v725
      %v747 = vunpack.c.l.b16 %v726
      %v748 = vunpack.c.l.b16 %v727
      %v749 = vunpack.c.l.b16 %v728
      %v750 = vpack.c.b16 %v743, %v742
      %v751 = vpack.c.b16 %v745, %v744
      %v752 = vpack.c.b16 %v747, %v746
      %v753 = vpack.c.b16 %v749, %v748
      %v755 = vsel %vm514, %v750, 0
      %v758 = vsel %vm514, %v751, 0
      %v761 = vsel %vm514, %v752, 0
      %v764 = vsel %vm514, %v753, 0
      %vm766 = vcmask 1043456
      %v768 = vsel %vm766, %v729, 0
      %770 = vmatpush.bf16.msra.mxu0 0
      %771 = vmatpush.bf16.msra.mxu0 0
      %772 = vmatpush.bf16.msra.mxu0 0
      %773 = vmatpush.bf16.msra.mxu0 0
      %774 = vmatpush.bf16.msra.mxu0 0
      %775 = vmatpush.bf16.msra.mxu0 0
      %776 = vmatpush.bf16.msra.mxu0 0
      %777 = vmatpush.bf16.msra.mxu0 %v768
      %778 = vmatmul.bf16.gmra.mxu0 %v755
      %v779 = vpop.f32.mrf.mxu0
      %v780 = vadd.f32 %v732, %v779
      %v781 = vpop.f32.mrf.mxu0
      %v782 = vadd.f32 %v732, %v781
      %783 = vmatmul.bf16.gmra.mxu0 %v758
      %v784 = vpop.f32.mrf.mxu0
      %v785 = vadd.f32 %v732, %v784
      %v786 = vpop.f32.mrf.mxu0
      %v787 = vadd.f32 %v732, %v786
      %788 = vmatmul.bf16.gmra.mxu0 %v761
      %v789 = vpop.f32.mrf.mxu0
      %v790 = vadd.f32 %v732, %v789
      %v791 = vpop.f32.mrf.mxu0
      %v792 = vadd.f32 %v732, %v791
      %793 = vmatmul.bf16.gmra.mxu0 %v764
      %v794 = vpop.f32.mrf.mxu0
      %v795 = vadd.f32 %v732, %v794
      %v796 = vpop.f32.mrf.mxu0
      %v797 = vadd.f32 %v732, %v796
      %798 = vdwg.mxu0
      %v799 = vpack.c.bf16 %v780, %v780
      %v800 = vpack.c.bf16 %v782, %v782
      %v801 = vpack.c.bf16 %v785, %v785
      %v802 = vpack.c.bf16 %v787, %v787
      %v803 = vpack.c.bf16 %v790, %v790
      %v804 = vpack.c.bf16 %v792, %v792
      %v805 = vpack.c.bf16 %v795, %v795
      %v806 = vpack.c.bf16 %v797, %v797
      %vm807 = vcmask 191488
      %808 = vst.msk [vmem:[#allocation2] sm:$0xf] %vm807, %v799
      %809 = vst.msk [vmem:[#allocation2 + $0x4] sm:$0xf] %vm807, %v800
      %810 = vst.msk [vmem:[#allocation2 + $0x8] sm:$0xf] %vm807, %v801
      %811 = vst.msk [vmem:[#allocation2 + $0xc] sm:$0xf] %vm807, %v802
      %812 = vst.msk [vmem:[#allocation2 + $0x10] sm:$0xf] %vm807, %v803
      %813 = vst.msk [vmem:[#allocation2 + $0x14] sm:$0xf] %vm807, %v804
      %814 = vst.msk [vmem:[#allocation2 + $0x18] sm:$0xf] %vm807, %v805
      %815 = vst.msk [vmem:[#allocation2 + $0x1c] sm:$0xf] %vm807, %v806
      %v816 = vld [vmem:[%s5] sm:$0xff]
      %v817 = vld [vmem:[%s5 + $0x8] sm:$0xff]
      %v818 = vld [vmem:[%s5 + $0x10] sm:$0xff]
      %v819 = vld [vmem:[%s5 + $0x18] sm:$0xff]
      %v820 = vld [vmem:[%s6] sm:$0xff]
      %v821 = vld [vmem:[%s6 + $0x8] sm:$0xff]
      %v822 = vld [vmem:[%s6 + $0x10] sm:$0xff]
      %v823 = vld [vmem:[%s6 + $0x18] sm:$0xff]
      %v824 = vld [vmem:[%s6 + $0x20] sm:$0xff]
      %v825 = vld [vmem:[%s6 + $0x28] sm:$0xff]
      %v826 = vld [vmem:[%s6 + $0x30] sm:$0xff]
      %v827 = vld [vmem:[%s6 + $0x38] sm:$0xff]
      %v828 = vld [vmem:[#allocation2] sm:$0xf]
      %v829 = vld [vmem:[#allocation2 + $0x4] sm:$0xf]
      %v830 = vld [vmem:[#allocation2 + $0x8] sm:$0xf]
      %v831 = vld [vmem:[#allocation2 + $0xc] sm:$0xf]
      %v832 = vld [vmem:[#allocation2 + $0x10] sm:$0xf]
      %v833 = vld [vmem:[#allocation2 + $0x14] sm:$0xf]
      %v834 = vld [vmem:[#allocation2 + $0x18] sm:$0xf]
      %v835 = vld [vmem:[#allocation2 + $0x1c] sm:$0xf]
      %v838 = vunpack.c.l.b16 %v828
      %v839 = vunpack.c.l.b16 %v829
      %v840 = vpack.c.b16 %v839, %v838
      %841 = vrot.lane.b32.xlu0 %v840, 120
      %v842 = vpop.permute.xlu0 %841
      %vm843 = vcmask 31744
      %v845 = vsel %vm843, %v840, 0
      %v848 = vsel %vm843, %v842, 0
      %850 = vmatpush.bf16.xpose.msra.mxu0 0
      %851 = vmatpush.bf16.xpose.msra.mxu0 0
      %852 = vmatpush.bf16.xpose.msra.mxu0 0
      %853 = vmatpush.bf16.xpose.msra.mxu0 0
      %854 = vmatpush.bf16.xpose.msra.mxu0 0
      %855 = vmatpush.bf16.xpose.msra.mxu0 0
      %856 = vmatpush.bf16.xpose.msra.mxu0 0
      %857 = vmatpush.bf16.xpose.msra.mxu0 %v848
      %858 = vmatmul.bf16.gmra.mxu0 %v845
      %v859 = vpop.f32.mrf.mxu0
      %v860 = vadd.f32 %v816, %v859
      %v861 = vpop.f32.mrf.mxu0
      %v862 = vadd.f32 %v817, %v861
      %863 = vdwg.mxu0
      %v866 = vunpack.c.l.b16 %v830
      %v867 = vunpack.c.l.b16 %v831
      %v868 = vpack.c.b16 %v867, %v866
      %869 = vrot.lane.b32.xlu0 %v868, 120
      %v870 = vpop.permute.xlu0 %869
      %v872 = vsel %vm843, %v868, 0
      %v875 = vsel %vm843, %v870, 0
      %877 = vmatpush.bf16.xpose.msra.mxu0 0
      %878 = vmatpush.bf16.xpose.msra.mxu0 0
      %879 = vmatpush.bf16.xpose.msra.mxu0 0
      %880 = vmatpush.bf16.xpose.msra.mxu0 0
      %881 = vmatpush.bf16.xpose.msra.mxu0 0
      %882 = vmatpush.bf16.xpose.msra.mxu0 0
      %883 = vmatpush.bf16.xpose.msra.mxu0 0
      %884 = vmatpush.bf16.xpose.msra.mxu0 %v875
      %885 = vmatmul.bf16.gmra.mxu0 %v872
      %v886 = vpop.f32.mrf.mxu0
      %v887 = vadd.f32 %v816, %v886
      %v888 = vpop.f32.mrf.mxu0
      %v889 = vadd.f32 %v817, %v888
      %890 = vdwg.mxu0
      %v893 = vunpack.c.l.b16 %v832
      %v894 = vunpack.c.l.b16 %v833
      %v895 = vpack.c.b16 %v894, %v893
      %896 = vrot.lane.b32.xlu0 %v895, 120
      %v897 = vpop.permute.xlu0 %896
      %v899 = vsel %vm843, %v895, 0
      %v902 = vsel %vm843, %v897, 0
      %904 = vmatpush.bf16.xpose.msra.mxu0 0
      %905 = vmatpush.bf16.xpose.msra.mxu0 0
      %906 = vmatpush.bf16.xpose.msra.mxu0 0
      %907 = vmatpush.bf16.xpose.msra.mxu0 0
      %908 = vmatpush.bf16.xpose.msra.mxu0 0
      %909 = vmatpush.bf16.xpose.msra.mxu0 0
      %910 = vmatpush.bf16.xpose.msra.mxu0 0
      %911 = vmatpush.bf16.xpose.msra.mxu0 %v902
      %912 = vmatmul.bf16.gmra.mxu0 %v899
      %v913 = vpop.f32.mrf.mxu0
      %v914 = vadd.f32 %v816, %v913
      %v915 = vpop.f32.mrf.mxu0
      %v916 = vadd.f32 %v817, %v915
      %917 = vdwg.mxu0
      %v920 = vunpack.c.l.b16 %v834
      %v921 = vunpack.c.l.b16 %v835
      %v922 = vpack.c.b16 %v921, %v920
      %923 = vrot.lane.b32.xlu0 %v922, 120
      %v924 = vpop.permute.xlu0 %923
      %v926 = vsel %vm843, %v922, 0
      %v929 = vsel %vm843, %v924, 0
      %931 = vmatpush.bf16.xpose.msra.mxu0 0
      %932 = vmatpush.bf16.xpose.msra.mxu0 0
      %933 = vmatpush.bf16.xpose.msra.mxu0 0
      %934 = vmatpush.bf16.xpose.msra.mxu0 0
      %935 = vmatpush.bf16.xpose.msra.mxu0 0
      %936 = vmatpush.bf16.xpose.msra.mxu0 0
      %937 = vmatpush.bf16.xpose.msra.mxu0 0
      %938 = vmatpush.bf16.xpose.msra.mxu0 %v929
      %939 = vmatmul.bf16.gmra.mxu0 %v926
      %v940 = vpop.f32.mrf.mxu0
      %v941 = vadd.f32 %v816, %v940
      %v942 = vpop.f32.mrf.mxu0
      %v943 = vadd.f32 %v817, %v942
      %944 = vdwg.mxu0
      %v945 = vadd.f32 %v860, %v820
      %v946 = vadd.f32 %v862, %v821
      %v947 = vadd.f32 %v887, %v822
      %v948 = vadd.f32 %v889, %v823
      %v949 = vadd.f32 %v914, %v824
      %v950 = vadd.f32 %v916, %v825
      %v951 = vadd.f32 %v941, %v826
      %v952 = vadd.f32 %v943, %v827
      %vm953 = vcmask 130048
      %v954 = vsel %vm953, %v945, -inf
      %955 = vmax.xlane.f32.xlu0 %v954
      %v956 = vpop.xlane.xlu0 %955
      %v957 = vsel %vm953, %v946, -inf
      %958 = vmax.xlane.f32.xlu0 %v957
      %v959 = vpop.xlane.xlu0 %958
      %v960 = vsel %vm953, %v947, -inf
      %961 = vmax.xlane.f32.xlu0 %v960
      %v962 = vpop.xlane.xlu0 %961
      %v963 = vsel %vm953, %v948, -inf
      %964 = vmax.xlane.f32.xlu0 %v963
      %v965 = vpop.xlane.xlu0 %964
      %v966 = vsel %vm953, %v949, -inf
      %967 = vmax.xlane.f32.xlu0 %v966
      %v968 = vpop.xlane.xlu0 %967
      %v969 = vsel %vm953, %v950, -inf
      %970 = vmax.xlane.f32.xlu0 %v969
      %v971 = vpop.xlane.xlu0 %970
      %v972 = vsel %vm953, %v951, -inf
      %973 = vmax.xlane.f32.xlu0 %v972
      %v974 = vpop.xlane.xlu0 %973
      %v975 = vsel %vm953, %v952, -inf
      %976 = vmax.xlane.f32.xlu0 %v975
      %v977 = vpop.xlane.xlu0 %976
      %v978 = vsub.f32 %v945, %v956
      %v979 = vsub.f32 %v946, %v959
      %v980 = vsub.f32 %v947, %v962
      %v981 = vsub.f32 %v948, %v965
      %v982 = vsub.f32 %v949, %v968
      %v983 = vsub.f32 %v950, %v971
      %v984 = vsub.f32 %v951, %v974
      %v985 = vsub.f32 %v952, %v977
      %v986 = vmul.f32 %v978, 1.442695
      %v987 = vpow.pop %v986
      %v988 = vmul.f32 %v979, 1.442695
      %v989 = vpow.pop %v988
      %v990 = vmul.f32 %v980, 1.442695
      %v991 = vpow.pop %v990
      %v992 = vmul.f32 %v981, 1.442695
      %v993 = vpow.pop %v992
      %v994 = vmul.f32 %v982, 1.442695
      %v995 = vpow.pop %v994
      %v996 = vmul.f32 %v983, 1.442695
      %v997 = vpow.pop %v996
      %v998 = vmul.f32 %v984, 1.442695
      %v999 = vpow.pop %v998
      %v1000 = vmul.f32 %v985, 1.442695
      %v1001 = vpow.pop %v1000
      %v1002 = vsel %vm953, %v987, 0.0
      %1003 = vadd.xlane.f32.xlu0 %v1002
      %v1004 = vpop.xlane.xlu0 %1003
      %v1005 = vsel %vm953, %v989, 0.0
      %1006 = vadd.xlane.f32.xlu0 %v1005
      %v1007 = vpop.xlane.xlu0 %1006
      %v1008 = vsel %vm953, %v991, 0.0
      %1009 = vadd.xlane.f32.xlu0 %v1008
      %v1010 = vpop.xlane.xlu0 %1009
      %v1011 = vsel %vm953, %v993, 0.0
      %1012 = vadd.xlane.f32.xlu0 %v1011
      %v1013 = vpop.xlane.xlu0 %1012
      %v1014 = vsel %vm953, %v995, 0.0
      %1015 = vadd.xlane.f32.xlu0 %v1014
      %v1016 = vpop.xlane.xlu0 %1015
      %v1017 = vsel %vm953, %v997, 0.0
      %1018 = vadd.xlane.f32.xlu0 %v1017
      %v1019 = vpop.xlane.xlu0 %1018
      %v1020 = vsel %vm953, %v999, 0.0
      %1021 = vadd.xlane.f32.xlu0 %v1020
      %v1022 = vpop.xlane.xlu0 %1021
      %v1023 = vsel %vm953, %v1001, 0.0
      %1024 = vadd.xlane.f32.xlu0 %v1023
      %v1025 = vpop.xlane.xlu0 %1024
      %v1026 = vrcp.pop %v1004
      %v1027 = vrcp.pop %v1007
      %v1028 = vrcp.pop %v1010
      %v1029 = vrcp.pop %v1013
      %v1030 = vrcp.pop %v1016
      %v1031 = vrcp.pop %v1019
      %v1032 = vrcp.pop %v1022
      %v1033 = vrcp.pop %v1025
      %v1034 = vmul.f32 %v987, %v1026
      %v1035 = vmul.f32 %v989, %v1027
      %v1036 = vmul.f32 %v991, %v1028
      %v1037 = vmul.f32 %v993, %v1029
      %v1038 = vmul.f32 %v995, %v1030
      %v1039 = vmul.f32 %v997, %v1031
      %v1040 = vmul.f32 %v999, %v1032
      %v1041 = vmul.f32 %v1001, %v1033
      %v1042 = vpack.c.bf16 %v1034, %v1034
      %v1043 = vpack.c.bf16 %v1035, %v1035
      %v1044 = vpack.c.bf16 %v1036, %v1036
      %v1045 = vpack.c.bf16 %v1037, %v1037
      %v1046 = vpack.c.bf16 %v1038, %v1038
      %v1047 = vpack.c.bf16 %v1039, %v1039
      %v1048 = vpack.c.bf16 %v1040, %v1040
      %v1049 = vpack.c.bf16 %v1041, %v1041
      %v1052 = vunpack.c.l.b16 %v1042
      %v1053 = vunpack.c.l.b16 %v1043
      %v1054 = vpack.c.b16 %v1053, %v1052
      %1055 = vrot.lane.b32.xlu0 %v840, 112
      %v1056 = vpop.permute.xlu0 %1055
      %v1059 = vsel %vm953, %v1054, 0
      %1061 = vmatpush.bf16.msra.mxu0 0
      %1062 = vmatpush.bf16.msra.mxu0 0
      %1063 = vmatpush.bf16.msra.mxu0 0
      %1064 = vmatpush.bf16.msra.mxu0 0
      %1065 = vmatpush.bf16.msra.mxu0 0
      %1066 = vmatpush.bf16.msra.mxu0 0
      %1067 = vmatpush.bf16.msra.mxu0 0
      %1068 = vmatpush.bf16.msra.mxu0 %v1056
      %1069 = vmatmul.bf16.gmra.mxu0 %v1059
      %v1070 = vpop.f32.mrf.mxu0
      %v1071 = vadd.f32 0.0, %v1070
      %v1072 = vpop.f32.mrf.mxu0
      %v1073 = vadd.f32 0.0, %v1072
      %1074 = vdwg.mxu0
      %v1077 = vunpack.c.l.b16 %v1044
      %v1078 = vunpack.c.l.b16 %v1045
      %v1079 = vpack.c.b16 %v1078, %v1077
      %1080 = vrot.lane.b32.xlu0 %v868, 112
      %v1081 = vpop.permute.xlu0 %1080
      %v1084 = vsel %vm953, %v1079, 0
      %1086 = vmatpush.bf16.msra.mxu0 0
      %1087 = vmatpush.bf16.msra.mxu0 0
      %1088 = vmatpush.bf16.msra.mxu0 0
      %1089 = vmatpush.bf16.msra.mxu0 0
      %1090 = vmatpush.bf16.msra.mxu0 0
      %1091 = vmatpush.bf16.msra.mxu0 0
      %1092 = vmatpush.bf16.msra.mxu0 0
      %1093 = vmatpush.bf16.msra.mxu0 %v1081
      %1094 = vmatmul.bf16.gmra.mxu0 %v1084
      %v1095 = vpop.f32.mrf.mxu0
      %v1096 = vadd.f32 0.0, %v1095
      %v1097 = vpop.f32.mrf.mxu0
      %v1098 = vadd.f32 0.0, %v1097
      %1099 = vdwg.mxu0
      %v1102 = vunpack.c.l.b16 %v1046
      %v1103 = vunpack.c.l.b16 %v1047
      %v1104 = vpack.c.b16 %v1103, %v1102
      %1105 = vrot.lane.b32.xlu0 %v895, 112
      %v1106 = vpop.permute.xlu0 %1105
      %v1109 = vsel %vm953, %v1104, 0
      %1111 = vmatpush.bf16.msra.mxu0 0
      %1112 = vmatpush.bf16.msra.mxu0 0
      %1113 = vmatpush.bf16.msra.mxu0 0
      %1114 = vmatpush.bf16.msra.mxu0 0
      %1115 = vmatpush.bf16.msra.mxu0 0
      %1116 = vmatpush.bf16.msra.mxu0 0
      %1117 = vmatpush.bf16.msra.mxu0 0
      %1118 = vmatpush.bf16.msra.mxu0 %v1106
      %1119 = vmatmul.bf16.gmra.mxu0 %v1109
      %v1120 = vpop.f32.mrf.mxu0
      %v1121 = vadd.f32 0.0, %v1120
      %v1122 = vpop.f32.mrf.mxu0
      %v1123 = vadd.f32 0.0, %v1122
      %1124 = vdwg.mxu0
      %v1127 = vunpack.c.l.b16 %v1048
      %v1128 = vunpack.c.l.b16 %v1049
      %v1129 = vpack.c.b16 %v1128, %v1127
      %1130 = vrot.lane.b32.xlu0 %v922, 112
      %v1131 = vpop.permute.xlu0 %1130
      %v1134 = vsel %vm953, %v1129, 0
      %1136 = vmatpush.bf16.msra.mxu0 0
      %1137 = vmatpush.bf16.msra.mxu0 0
      %1138 = vmatpush.bf16.msra.mxu0 0
      %1139 = vmatpush.bf16.msra.mxu0 0
      %1140 = vmatpush.bf16.msra.mxu0 0
      %1141 = vmatpush.bf16.msra.mxu0 0
      %1142 = vmatpush.bf16.msra.mxu0 0
      %1143 = vmatpush.bf16.msra.mxu0 %v1131
      %1144 = vmatmul.bf16.gmra.mxu0 %v1134
      %v1145 = vpop.f32.mrf.mxu0
      %v1146 = vadd.f32 0.0, %v1145
      %v1147 = vpop.f32.mrf.mxu0
      %v1148 = vadd.f32 0.0, %v1147
      %1149 = vdwg.mxu0
      %1150 = vst.msk [vmem:[#allocation3] sm:$0xff] %vm843, %v1071
      %1151 = vst.msk [vmem:[#allocation3 + $0x8] sm:$0xff] %vm843, %v1073
      %1152 = vst.msk [vmem:[#allocation3 + $0x10] sm:$0xff] %vm843, %v1096
      %1153 = vst.msk [vmem:[#allocation3 + $0x18] sm:$0xff] %vm843, %v1098
      %1154 = vst.msk [vmem:[#allocation3 + $0x20] sm:$0xff] %vm843, %v1121
      %1155 = vst.msk [vmem:[#allocation3 + $0x28] sm:$0xff] %vm843, %v1123
      %1156 = vst.msk [vmem:[#allocation3 + $0x30] sm:$0xff] %vm843, %v1146
      %1157 = vst.msk [vmem:[#allocation3 + $0x38] sm:$0xff] %vm843, %v1148
      %v1158 = vld [vmem:[#allocation2] sm:$0xf]
      %v1159 = vld [vmem:[#allocation2 + $0x4] sm:$0xf]
      %v1160 = vld [vmem:[#allocation2 + $0x8] sm:$0xf]
      %v1161 = vld [vmem:[#allocation2 + $0xc] sm:$0xf]
      %v1162 = vld [vmem:[#allocation2 + $0x10] sm:$0xf]
      %v1163 = vld [vmem:[#allocation2 + $0x14] sm:$0xf]
      %v1164 = vld [vmem:[#allocation2 + $0x18] sm:$0xf]
      %v1165 = vld [vmem:[#allocation2 + $0x1c] sm:$0xf]
      %v1168 = vunpack.c.l.b16 %v1158
      %v1169 = vunpack.c.l.b16 %v1159
      %v1170 = vpack.c.b16 %v1169, %v1168
      %1171 = vrot.lane.b32.xlu0 %v1170, 124
      %v1172 = vpop.permute.xlu0 %1171
      %1173 = vrot.lane.b32.xlu0 %v1170, 116
      %v1174 = vpop.permute.xlu0 %1173
      %v1176 = vsel %vm843, %v1172, 0
      %v1179 = vsel %vm843, %v1174, 0
      %1181 = vmatpush.bf16.xpose.msra.mxu0 0
      %1182 = vmatpush.bf16.xpose.msra.mxu0 0
      %1183 = vmatpush.bf16.xpose.msra.mxu0 0
      %1184 = vmatpush.bf16.xpose.msra.mxu0 0
      %1185 = vmatpush.bf16.xpose.msra.mxu0 0
      %1186 = vmatpush.bf16.xpose.msra.mxu0 0
      %1187 = vmatpush.bf16.xpose.msra.mxu0 0
      %1188 = vmatpush.bf16.xpose.msra.mxu0 %v1179
      %1189 = vmatmul.bf16.gmra.mxu0 %v1176
      %v1190 = vpop.f32.mrf.mxu0
      %v1191 = vadd.f32 %v818, %v1190
      %v1192 = vpop.f32.mrf.mxu0
      %v1193 = vadd.f32 %v819, %v1192
      %1194 = vdwg.mxu0
      %v1197 = vunpack.c.l.b16 %v1160
      %v1198 = vunpack.c.l.b16 %v1161
      %v1199 = vpack.c.b16 %v1198, %v1197
      %1200 = vrot.lane.b32.xlu0 %v1199, 124
      %v1201 = vpop.permute.xlu0 %1200
      %1202 = vrot.lane.b32.xlu0 %v1199, 116
      %v1203 = vpop.permute.xlu0 %1202
      %v1205 = vsel %vm843, %v1201, 0
      %v1208 = vsel %vm843, %v1203, 0
      %1210 = vmatpush.bf16.xpose.msra.mxu0 0
      %1211 = vmatpush.bf16.xpose.msra.mxu0 0
      %1212 = vmatpush.bf16.xpose.msra.mxu0 0
      %1213 = vmatpush.bf16.xpose.msra.mxu0 0
      %1214 = vmatpush.bf16.xpose.msra.mxu0 0
      %1215 = vmatpush.bf16.xpose.msra.mxu0 0
      %1216 = vmatpush.bf16.xpose.msra.mxu0 0
      %1217 = vmatpush.bf16.xpose.msra.mxu0 %v1208
      %1218 = vmatmul.bf16.gmra.mxu0 %v1205
      %v1219 = vpop.f32.mrf.mxu0
      %v1220 = vadd.f32 %v818, %v1219
      %v1221 = vpop.f32.mrf.mxu0
      %v1222 = vadd.f32 %v819, %v1221
      %1223 = vdwg.mxu0
      %v1226 = vunpack.c.l.b16 %v1162
      %v1227 = vunpack.c.l.b16 %v1163
      %v1228 = vpack.c.b16 %v1227, %v1226
      %1229 = vrot.lane.b32.xlu0 %v1228, 124
      %v1230 = vpop.permute.xlu0 %1229
      %1231 = vrot.lane.b32.xlu0 %v1228, 116
      %v1232 = vpop.permute.xlu0 %1231
      %v1234 = vsel %vm843, %v1230, 0
      %v1237 = vsel %vm843, %v1232, 0
      %1239 = vmatpush.bf16.xpose.msra.mxu0 0
      %1240 = vmatpush.bf16.xpose.msra.mxu0 0
      %1241 = vmatpush.bf16.xpose.msra.mxu0 0
      %1242 = vmatpush.bf16.xpose.msra.mxu0 0
      %1243 = vmatpush.bf16.xpose.msra.mxu0 0
      %1244 = vmatpush.bf16.xpose.msra.mxu0 0
      %1245 = vmatpush.bf16.xpose.msra.mxu0 0
      %1246 = vmatpush.bf16.xpose.msra.mxu0 %v1237
      %1247 = vmatmul.bf16.gmra.mxu0 %v1234
      %v1248 = vpop.f32.mrf.mxu0
      %v1249 = vadd.f32 %v818, %v1248
      %v1250 = vpop.f32.mrf.mxu0
      %v1251 = vadd.f32 %v819, %v1250
      %1252 = vdwg.mxu0
      %v1255 = vunpack.c.l.b16 %v1164
      %v1256 = vunpack.c.l.b16 %v1165
      %v1257 = vpack.c.b16 %v1256, %v1255
      %1258 = vrot.lane.b32.xlu0 %v1257, 124
      %v1259 = vpop.permute.xlu0 %1258
      %1260 = vrot.lane.b32.xlu0 %v1257, 116
      %v1261 = vpop.permute.xlu0 %1260
      %v1263 = vsel %vm843, %v1259, 0
      %v1266 = vsel %vm843, %v1261, 0
      %1268 = vmatpush.bf16.xpose.msra.mxu0 0
      %1269 = vmatpush.bf16.xpose.msra.mxu0 0
      %1270 = vmatpush.bf16.xpose.msra.mxu0 0
      %1271 = vmatpush.bf16.xpose.msra.mxu0 0
      %1272 = vmatpush.bf16.xpose.msra.mxu0 0
      %1273 = vmatpush.bf16.xpose.msra.mxu0 0
      %1274 = vmatpush.bf16.xpose.msra.mxu0 0
      %1275 = vmatpush.bf16.xpose.msra.mxu0 %v1266
      %1276 = vmatmul.bf16.gmra.mxu0 %v1263
      %v1277 = vpop.f32.mrf.mxu0
      %v1278 = vadd.f32 %v818, %v1277
      %v1279 = vpop.f32.mrf.mxu0
      %v1280 = vadd.f32 %v819, %v1279
      %1281 = vdwg.mxu0
      %v1282 = vadd.f32 %v1191, %v820
      %v1283 = vadd.f32 %v1193, %v821
      %v1284 = vadd.f32 %v1220, %v822
      %v1285 = vadd.f32 %v1222, %v823
      %v1286 = vadd.f32 %v1249, %v824
      %v1287 = vadd.f32 %v1251, %v825
      %v1288 = vadd.f32 %v1278, %v826
      %v1289 = vadd.f32 %v1280, %v827
      %v1290 = vsel %vm953, %v1282, -inf
      %1291 = vmax.xlane.f32.xlu0 %v1290
      %v1292 = vpop.xlane.xlu0 %1291
      %v1293 = vsel %vm953, %v1283, -inf
      %1294 = vmax.xlane.f32.xlu0 %v1293
      %v1295 = vpop.xlane.xlu0 %1294
      %v1296 = vsel %vm953, %v1284, -inf
      %1297 = vmax.xlane.f32.xlu0 %v1296
      %v1298 = vpop.xlane.xlu0 %1297
      %v1299 = vsel %vm953, %v1285, -inf
      %1300 = vmax.xlane.f32.xlu0 %v1299
      %v1301 = vpop.xlane.xlu0 %1300
      %v1302 = vsel %vm953, %v1286, -inf
      %1303 = vmax.xlane.f32.xlu0 %v1302
      %v1304 = vpop.xlane.xlu0 %1303
      %v1305 = vsel %vm953, %v1287, -inf
      %1306 = vmax.xlane.f32.xlu0 %v1305
      %v1307 = vpop.xlane.xlu0 %1306
      %v1308 = vsel %vm953, %v1288, -inf
      %1309 = vmax.xlane.f32.xlu0 %v1308
      %v1310 = vpop.xlane.xlu0 %1309
      %v1311 = vsel %vm953, %v1289, -inf
      %1312 = vmax.xlane.f32.xlu0 %v1311
      %v1313 = vpop.xlane.xlu0 %1312
      %v1314 = vsub.f32 %v1282, %v1292
      %v1315 = vsub.f32 %v1283, %v1295
      %v1316 = vsub.f32 %v1284, %v1298
      %v1317 = vsub.f32 %v1285, %v1301
      %v1318 = vsub.f32 %v1286, %v1304
      %v1319 = vsub.f32 %v1287, %v1307
      %v1320 = vsub.f32 %v1288, %v1310
      %v1321 = vsub.f32 %v1289, %v1313
      %v1322 = vmul.f32 %v1314, 1.442695
      %v1323 = vpow.pop %v1322
      %v1324 = vmul.f32 %v1315, 1.442695
      %v1325 = vpow.pop %v1324
      %v1326 = vmul.f32 %v1316, 1.442695
      %v1327 = vpow.pop %v1326
      %v1328 = vmul.f32 %v1317, 1.442695
      %v1329 = vpow.pop %v1328
      %v1330 = vmul.f32 %v1318, 1.442695
      %v1331 = vpow.pop %v1330
      %v1332 = vmul.f32 %v1319, 1.442695
      %v1333 = vpow.pop %v1332
      %v1334 = vmul.f32 %v1320, 1.442695
      %v1335 = vpow.pop %v1334
      %v1336 = vmul.f32 %v1321, 1.442695
      %v1337 = vpow.pop %v1336
      %v1338 = vsel %vm953, %v1323, 0.0
      %1339 = vadd.xlane.f32.xlu0 %v1338
      %v1340 = vpop.xlane.xlu0 %1339
      %v1341 = vsel %vm953, %v1325, 0.0
      %1342 = vadd.xlane.f32.xlu0 %v1341
      %v1343 = vpop.xlane.xlu0 %1342
      %v1344 = vsel %vm953, %v1327, 0.0
      %1345 = vadd.xlane.f32.xlu0 %v1344
      %v1346 = vpop.xlane.xlu0 %1345
      %v1347 = vsel %vm953, %v1329, 0.0
      %1348 = vadd.xlane.f32.xlu0 %v1347
      %v1349 = vpop.xlane.xlu0 %1348
      %v1350 = vsel %vm953, %v1331, 0.0
      %1351 = vadd.xlane.f32.xlu0 %v1350
      %v1352 = vpop.xlane.xlu0 %1351
      %v1353 = vsel %vm953, %v1333, 0.0
      %1354 = vadd.xlane.f32.xlu0 %v1353
      %v1355 = vpop.xlane.xlu0 %1354
      %v1356 = vsel %vm953, %v1335, 0.0
      %1357 = vadd.xlane.f32.xlu0 %v1356
      %v1358 = vpop.xlane.xlu0 %1357
      %v1359 = vsel %vm953, %v1337, 0.0
      %1360 = vadd.xlane.f32.xlu0 %v1359
      %v1361 = vpop.xlane.xlu0 %1360
      %v1362 = vrcp.pop %v1340
      %v1363 = vrcp.pop %v1343
      %v1364 = vrcp.pop %v1346
      %v1365 = vrcp.pop %v1349
      %v1366 = vrcp.pop %v1352
      %v1367 = vrcp.pop %v1355
      %v1368 = vrcp.pop %v1358
      %v1369 = vrcp.pop %v1361
      %v1370 = vmul.f32 %v1323, %v1362
      %v1371 = vmul.f32 %v1325, %v1363
      %v1372 = vmul.f32 %v1327, %v1364
      %v1373 = vmul.f32 %v1329, %v1365
      %v1374 = vmul.f32 %v1331, %v1366
      %v1375 = vmul.f32 %v1333, %v1367
      %v1376 = vmul.f32 %v1335, %v1368
      %v1377 = vmul.f32 %v1337, %v1369
      %v1378 = vpack.c.bf16 %v1370, %v1370
      %v1379 = vpack.c.bf16 %v1371, %v1371
      %v1380 = vpack.c.bf16 %v1372, %v1372
      %v1381 = vpack.c.bf16 %v1373, %v1373
      %v1382 = vpack.c.bf16 %v1374, %v1374
      %v1383 = vpack.c.bf16 %v1375, %v1375
      %v1384 = vpack.c.bf16 %v1376, %v1376
      %v1385 = vpack.c.bf16 %v1377, %v1377
      %v1388 = vunpack.c.l.b16 %v1378
      %v1389 = vunpack.c.l.b16 %v1379
      %v1390 = vpack.c.b16 %v1389, %v1388
      %1391 = vrot.lane.b32.xlu0 %v1170, 108
      %v1392 = vpop.permute.xlu0 %1391
      %v1395 = vsel %vm953, %v1390, 0
      %1397 = vmatpush.bf16.msra.mxu0 0
      %1398 = vmatpush.bf16.msra.mxu0 0
      %1399 = vmatpush.bf16.msra.mxu0 0
      %1400 = vmatpush.bf16.msra.mxu0 0
      %1401 = vmatpush.bf16.msra.mxu0 0
      %1402 = vmatpush.bf16.msra.mxu0 0
      %1403 = vmatpush.bf16.msra.mxu0 0
      %1404 = vmatpush.bf16.msra.mxu0 %v1392
      %1405 = vmatmul.bf16.gmra.mxu0 %v1395
      %v1406 = vpop.f32.mrf.mxu0
      %v1407 = vadd.f32 0.0, %v1406
      %v1408 = vpop.f32.mrf.mxu0
      %v1409 = vadd.f32 0.0, %v1408
      %1410 = vdwg.mxu0
      %v1413 = vunpack.c.l.b16 %v1380
      %v1414 = vunpack.c.l.b16 %v1381
      %v1415 = vpack.c.b16 %v1414, %v1413
      %1416 = vrot.lane.b32.xlu0 %v1199, 108
      %v1417 = vpop.permute.xlu0 %1416
      %v1420 = vsel %vm953, %v1415, 0
      %1422 = vmatpush.bf16.msra.mxu0 0
      %1423 = vmatpush.bf16.msra.mxu0 0
      %1424 = vmatpush.bf16.msra.mxu0 0
      %1425 = vmatpush.bf16.msra.mxu0 0
      %1426 = vmatpush.bf16.msra.mxu0 0
      %1427 = vmatpush.bf16.msra.mxu0 0
      %1428 = vmatpush.bf16.msra.mxu0 0
      %1429 = vmatpush.bf16.msra.mxu0 %v1417
      %1430 = vmatmul.bf16.gmra.mxu0 %v1420
      %v1431 = vpop.f32.mrf.mxu0
      %v1432 = vadd.f32 0.0, %v1431
      %v1433 = vpop.f32.mrf.mxu0
      %v1434 = vadd.f32 0.0, %v1433
      %1435 = vdwg.mxu0
      %v1438 = vunpack.c.l.b16 %v1382
      %v1439 = vunpack.c.l.b16 %v1383
      %v1440 = vpack.c.b16 %v1439, %v1438
      %1441 = vrot.lane.b32.xlu0 %v1228, 108
      %v1442 = vpop.permute.xlu0 %1441
      %v1445 = vsel %vm953, %v1440, 0
      %1447 = vmatpush.bf16.msra.mxu0 0
      %1448 = vmatpush.bf16.msra.mxu0 0
      %1449 = vmatpush.bf16.msra.mxu0 0
      %1450 = vmatpush.bf16.msra.mxu0 0
      %1451 = vmatpush.bf16.msra.mxu0 0
      %1452 = vmatpush.bf16.msra.mxu0 0
      %1453 = vmatpush.bf16.msra.mxu0 0
      %1454 = vmatpush.bf16.msra.mxu0 %v1442
      %1455 = vmatmul.bf16.gmra.mxu0 %v1445
      %v1456 = vpop.f32.mrf.mxu0
      %v1457 = vadd.f32 0.0, %v1456
      %v1458 = vpop.f32.mrf.mxu0
      %v1459 = vadd.f32 0.0, %v1458
      %1460 = vdwg.mxu0
      %v1463 = vunpack.c.l.b16 %v1384
      %v1464 = vunpack.c.l.b16 %v1385
      %v1465 = vpack.c.b16 %v1464, %v1463
      %1466 = vrot.lane.b32.xlu0 %v1257, 108
      %v1467 = vpop.permute.xlu0 %1466
      %v1470 = vsel %vm953, %v1465, 0
      %1472 = vmatpush.bf16.msra.mxu0 0
      %1473 = vmatpush.bf16.msra.mxu0 0
      %1474 = vmatpush.bf16.msra.mxu0 0
      %1475 = vmatpush.bf16.msra.mxu0 0
      %1476 = vmatpush.bf16.msra.mxu0 0
      %1477 = vmatpush.bf16.msra.mxu0 0
      %1478 = vmatpush.bf16.msra.mxu0 0
      %1479 = vmatpush.bf16.msra.mxu0 %v1467
      %1480 = vmatmul.bf16.gmra.mxu0 %v1470
      %v1481 = vpop.f32.mrf.mxu0
      %v1482 = vadd.f32 0.0, %v1481
      %v1483 = vpop.f32.mrf.mxu0
      %v1484 = vadd.f32 0.0, %v1483
      %1485 = vdwg.mxu0
      %1494 = vrot.lane.b32.xlu0 %v1407, 4
      %v1495 = vpop.permute.xlu0 %1494
      %1496 = vrot.lane.b32.xlu0 %v1409, 4
      %v1497 = vpop.permute.xlu0 %1496
      %1498 = vrot.lane.b32.xlu0 %v1432, 4
      %v1499 = vpop.permute.xlu0 %1498
      %1500 = vrot.lane.b32.xlu0 %v1434, 4
      %v1501 = vpop.permute.xlu0 %1500
      %1502 = vrot.lane.b32.xlu0 %v1457, 4
      %v1503 = vpop.permute.xlu0 %1502
      %1504 = vrot.lane.b32.xlu0 %v1459, 4
      %v1505 = vpop.permute.xlu0 %1504
      %1506 = vrot.lane.b32.xlu0 %v1482, 4
      %v1507 = vpop.permute.xlu0 %1506
      %1508 = vrot.lane.b32.xlu0 %v1484, 4
      %v1509 = vpop.permute.xlu0 %1508
      %vm1518 = vcmask 64544
      %1519 = vst.msk [vmem:[#allocation3] sm:$0xff] %vm1518, %v1495
      %1520 = vst.msk [vmem:[#allocation3 + $0x8] sm:$0xff] %vm1518, %v1497
      %1521 = vst.msk [vmem:[#allocation3 + $0x10] sm:$0xff] %vm1518, %v1499
      %1522 = vst.msk [vmem:[#allocation3 + $0x18] sm:$0xff] %vm1518, %v1501
      %1523 = vst.msk [vmem:[#allocation3 + $0x20] sm:$0xff] %vm1518, %v1503
      %1524 = vst.msk [vmem:[#allocation3 + $0x28] sm:$0xff] %vm1518, %v1505
      %1525 = vst.msk [vmem:[#allocation3 + $0x30] sm:$0xff] %vm1518, %v1507
      %1526 = vst.msk [vmem:[#allocation3 + $0x38] sm:$0xff] %vm1518, %v1509
      %v1527 = vld [vmem:[#allocation3] sm:$0xff]
      %v1528 = vld [vmem:[#allocation3 + $0x8] sm:$0xff]
      %v1529 = vld [vmem:[#allocation3 + $0x10] sm:$0xff]
      %v1530 = vld [vmem:[#allocation3 + $0x18] sm:$0xff]
      %v1531 = vld [vmem:[#allocation3 + $0x20] sm:$0xff]
      %v1532 = vld [vmem:[#allocation3 + $0x28] sm:$0xff]
      %v1533 = vld [vmem:[#allocation3 + $0x30] sm:$0xff]
      %v1534 = vld [vmem:[#allocation3 + $0x38] sm:$0xff]
      %v1535 = vld [vmem:[%s7] sm:$0xff]
      %v1536 = vpack.c.bf16 %v1527, %v1527
      %v1537 = vpack.c.bf16 %v1528, %v1528
      %v1538 = vpack.c.bf16 %v1529, %v1529
      %v1539 = vpack.c.bf16 %v1530, %v1530
      %v1540 = vpack.c.bf16 %v1531, %v1531
      %v1541 = vpack.c.bf16 %v1532, %v1532
      %v1542 = vpack.c.bf16 %v1533, %v1533
      %v1543 = vpack.c.bf16 %v1534, %v1534
      %v1544 = vpack.c.bf16 %v1535, %v1535
      %v1545 = vld [vmem:[%s8] sm:$0x1]
      %v1547 = vperm.slane %v1545, 0
      %v1557 = vunpack.c.l.b16 %v1536
      %v1558 = vunpack.c.l.b16 %v1537
      %v1559 = vunpack.c.l.b16 %v1538
      %v1560 = vunpack.c.l.b16 %v1539
      %v1561 = vunpack.c.l.b16 %v1540
      %v1562 = vunpack.c.l.b16 %v1541
      %v1563 = vunpack.c.l.b16 %v1542
      %v1564 = vunpack.c.l.b16 %v1543
      %v1565 = vpack.c.b16 %v1558, %v1557
      %v1566 = vpack.c.b16 %v1560, %v1559
      %v1567 = vpack.c.b16 %v1562, %v1561
      %v1568 = vpack.c.b16 %v1564, %v1563
      %v1570 = vsel %vm514, %v1565, 0
      %v1573 = vsel %vm514, %v1566, 0
      %v1576 = vsel %vm514, %v1567, 0
      %v1579 = vsel %vm514, %v1568, 0
      %v1582 = vsel %vm766, %v1544, 0
      %1584 = vmatpush.bf16.msra.mxu0 0
      %1585 = vmatpush.bf16.msra.mxu0 0
      %1586 = vmatpush.bf16.msra.mxu0 0
      %1587 = vmatpush.bf16.msra.mxu0 0
      %1588 = vmatpush.bf16.msra.mxu0 0
      %1589 = vmatpush.bf16.msra.mxu0 0
      %1590 = vmatpush.bf16.msra.mxu0 0
      %1591 = vmatpush.bf16.msra.mxu0 %v1582
      %1592 = vmatmul.bf16.gmra.mxu0 %v1570
      %v1593 = vpop.f32.mrf.mxu0
      %v1594 = vadd.f32 %v1547, %v1593
      %v1595 = vpop.f32.mrf.mxu0
      %v1596 = vadd.f32 %v1547, %v1595
      %1597 = vmatmul.bf16.gmra.mxu0 %v1573
      %v1598 = vpop.f32.mrf.mxu0
      %v1599 = vadd.f32 %v1547, %v1598
      %v1600 = vpop.f32.mrf.mxu0
      %v1601 = vadd.f32 %v1547, %v1600
      %1602 = vmatmul.bf16.gmra.mxu0 %v1576
      %v1603 = vpop.f32.mrf.mxu0
      %v1604 = vadd.f32 %v1547, %v1603
      %v1605 = vpop.f32.mrf.mxu0
      %v1606 = vadd.f32 %v1547, %v1605
      %1607 = vmatmul.bf16.gmra.mxu0 %v1579
      %v1608 = vpop.f32.mrf.mxu0
      %v1609 = vadd.f32 %v1547, %v1608
      %v1610 = vpop.f32.mrf.mxu0
      %v1611 = vadd.f32 %v1547, %v1610
      %1612 = vdwg.mxu0
      %v1613 = vadd.f32 %v1594, %v504
      %v1614 = vadd.f32 %v1596, %v505
      %v1615 = vadd.f32 %v1599, %v506
      %v1616 = vadd.f32 %v1601, %v507
      %v1617 = vadd.f32 %v1604, %v508
      %v1618 = vadd.f32 %v1606, %v509
      %v1619 = vadd.f32 %v1609, %v510
      %v1620 = vadd.f32 %v1611, %v511
      %v1621 = vld [vmem:[%s9] sm:$0x1]
      %v1622 = vld [vmem:[%s10] sm:$0x1]
      %v1623 = vsel %vm514, %v1613, 0.0
      %1624 = vadd.xlane.f32.xlu0 %v1623
      %v1625 = vpop.xlane.xlu0 %1624
      %v1626 = vsel %vm514, %v1614, 0.0
      %1627 = vadd.xlane.f32.xlu0 %v1626
      %v1628 = vpop.xlane.xlu0 %1627
      %v1629 = vsel %vm514, %v1615, 0.0
      %1630 = vadd.xlane.f32.xlu0 %v1629
      %v1631 = vpop.xlane.xlu0 %1630
      %v1632 = vsel %vm514, %v1616, 0.0
      %1633 = vadd.xlane.f32.xlu0 %v1632
      %v1634 = vpop.xlane.xlu0 %1633
      %v1635 = vsel %vm514, %v1617, 0.0
      %1636 = vadd.xlane.f32.xlu0 %v1635
      %v1637 = vpop.xlane.xlu0 %1636
      %v1638 = vsel %vm514, %v1618, 0.0
      %1639 = vadd.xlane.f32.xlu0 %v1638
      %v1640 = vpop.xlane.xlu0 %1639
      %v1641 = vsel %vm514, %v1619, 0.0
      %1642 = vadd.xlane.f32.xlu0 %v1641
      %v1643 = vpop.xlane.xlu0 %1642
      %v1644 = vsel %vm514, %v1620, 0.0
      %1645 = vadd.xlane.f32.xlu0 %v1644
      %v1646 = vpop.xlane.xlu0 %1645
      %v1647 = vmul.f32 %v1625, %v545
      %v1648 = vmul.f32 %v1628, %v545
      %v1649 = vmul.f32 %v1631, %v545
      %v1650 = vmul.f32 %v1634, %v545
      %v1651 = vmul.f32 %v1637, %v545
      %v1652 = vmul.f32 %v1640, %v545
      %v1653 = vmul.f32 %v1643, %v545
      %v1654 = vmul.f32 %v1646, %v545
      %v1655 = vsub.f32 %v1613, %v1647
      %v1656 = vsub.f32 %v1614, %v1648
      %v1657 = vsub.f32 %v1615, %v1649
      %v1658 = vsub.f32 %v1616, %v1650
      %v1659 = vsub.f32 %v1617, %v1651
      %v1660 = vsub.f32 %v1618, %v1652
      %v1661 = vsub.f32 %v1619, %v1653
      %v1662 = vsub.f32 %v1620, %v1654
      %v1663 = vmul.f32 %v1655, %v1655
      %v1664 = vmul.f32 %v1656, %v1656
      %v1665 = vmul.f32 %v1657, %v1657
      %v1666 = vmul.f32 %v1658, %v1658
      %v1667 = vmul.f32 %v1659, %v1659
      %v1668 = vmul.f32 %v1660, %v1660
      %v1669 = vmul.f32 %v1661, %v1661
      %v1670 = vmul.f32 %v1662, %v1662
      %v1671 = vsel %vm514, %v1663, 0.0
      %1672 = vadd.xlane.f32.xlu0 %v1671
      %v1673 = vpop.xlane.xlu0 %1672
      %v1674 = vsel %vm514, %v1664, 0.0
      %1675 = vadd.xlane.f32.xlu0 %v1674
      %v1676 = vpop.xlane.xlu0 %1675
      %v1677 = vsel %vm514, %v1665, 0.0
      %1678 = vadd.xlane.f32.xlu0 %v1677
      %v1679 = vpop.xlane.xlu0 %1678
      %v1680 = vsel %vm514, %v1666, 0.0
      %1681 = vadd.xlane.f32.xlu0 %v1680
      %v1682 = vpop.xlane.xlu0 %1681
      %v1683 = vsel %vm514, %v1667, 0.0
      %1684 = vadd.xlane.f32.xlu0 %v1683
      %v1685 = vpop.xlane.xlu0 %1684
      %v1686 = vsel %vm514, %v1668, 0.0
      %1687 = vadd.xlane.f32.xlu0 %v1686
      %v1688 = vpop.xlane.xlu0 %1687
      %v1689 = vsel %vm514, %v1669, 0.0
      %1690 = vadd.xlane.f32.xlu0 %v1689
      %v1691 = vpop.xlane.xlu0 %1690
      %v1692 = vsel %vm514, %v1670, 0.0
      %1693 = vadd.xlane.f32.xlu0 %v1692
      %v1694 = vpop.xlane.xlu0 %1693
      %v1695 = vmul.f32 %v1673, %v545
      %v1696 = vmul.f32 %v1676, %v545
      %v1697 = vmul.f32 %v1679, %v545
      %v1698 = vmul.f32 %v1682, %v545
      %v1699 = vmul.f32 %v1685, %v545
      %v1700 = vmul.f32 %v1688, %v545
      %v1701 = vmul.f32 %v1691, %v545
      %v1702 = vmul.f32 %v1694, %v545
      %v1703 = vadd.f32 %v1695, 1e-05
      %v1704 = vadd.f32 %v1696, 1e-05
      %v1705 = vadd.f32 %v1697, 1e-05
      %v1706 = vadd.f32 %v1698, 1e-05
      %v1707 = vadd.f32 %v1699, 1e-05
      %v1708 = vadd.f32 %v1700, 1e-05
      %v1709 = vadd.f32 %v1701, 1e-05
      %v1710 = vadd.f32 %v1702, 1e-05
      %v1711 = vrsqrt.pop %v1703
      %v1712 = vmul.f32 %v1711, %v1703
      %v1713 = vmul.f32 %v1712, %v1711
      %v1714 = vmul.f32 0.5, %v1713
      %v1715 = vsub.f32 1.5, %v1714
      %v1716 = vmul.f32 %v1711, %v1715
      %vm1717 = vweird.f32 %v1703
      %vm1718 = vweird.f32 %v1711
      %vm1719 = vmor %vm1717, %vm1718
      %v1720 = vsel %vm1719, %v1711, %v1716
      %v1721 = vrsqrt.pop %v1704
      %v1722 = vmul.f32 %v1721, %v1704
      %v1723 = vmul.f32 %v1722, %v1721
      %v1724 = vmul.f32 0.5, %v1723
      %v1725 = vsub.f32 1.5, %v1724
      %v1726 = vmul.f32 %v1721, %v1725
      %vm1727 = vweird.f32 %v1704
      %vm1728 = vweird.f32 %v1721
      %vm1729 = vmor %vm1727, %vm1728
      %v1730 = vsel %vm1729, %v1721, %v1726
      %v1731 = vrsqrt.pop %v1705
      %v1732 = vmul.f32 %v1731, %v1705
      %v1733 = vmul.f32 %v1732, %v1731
      %v1734 = vmul.f32 0.5, %v1733
      %v1735 = vsub.f32 1.5, %v1734
      %v1736 = vmul.f32 %v1731, %v1735
      %vm1737 = vweird.f32 %v1705
      %vm1738 = vweird.f32 %v1731
      %vm1739 = vmor %vm1737, %vm1738
      %v1740 = vsel %vm1739, %v1731, %v1736
      %v1741 = vrsqrt.pop %v1706
      %v1742 = vmul.f32 %v1741, %v1706
      %v1743 = vmul.f32 %v1742, %v1741
      %v1744 = vmul.f32 0.5, %v1743
      %v1745 = vsub.f32 1.5, %v1744
      %v1746 = vmul.f32 %v1741, %v1745
      %vm1747 = vweird.f32 %v1706
      %vm1748 = vweird.f32 %v1741
      %vm1749 = vmor %vm1747, %vm1748
      %v1750 = vsel %vm1749, %v1741, %v1746
      %v1751 = vrsqrt.pop %v1707
      %v1752 = vmul.f32 %v1751, %v1707
      %v1753 = vmul.f32 %v1752, %v1751
      %v1754 = vmul.f32 0.5, %v1753
      %v1755 = vsub.f32 1.5, %v1754
      %v1756 = vmul.f32 %v1751, %v1755
      %vm1757 = vweird.f32 %v1707
      %vm1758 = vweird.f32 %v1751
      %vm1759 = vmor %vm1757, %vm1758
      %v1760 = vsel %vm1759, %v1751, %v1756
      %v1761 = vrsqrt.pop %v1708
      %v1762 = vmul.f32 %v1761, %v1708
      %v1763 = vmul.f32 %v1762, %v1761
      %v1764 = vmul.f32 0.5, %v1763
      %v1765 = vsub.f32 1.5, %v1764
      %v1766 = vmul.f32 %v1761, %v1765
      %vm1767 = vweird.f32 %v1708
      %vm1768 = vweird.f32 %v1761
      %vm1769 = vmor %vm1767, %vm1768
      %v1770 = vsel %vm1769, %v1761, %v1766
      %v1771 = vrsqrt.pop %v1709
      %v1772 = vmul.f32 %v1771, %v1709
      %v1773 = vmul.f32 %v1772, %v1771
      %v1774 = vmul.f32 0.5, %v1773
      %v1775 = vsub.f32 1.5, %v1774
      %v1776 = vmul.f32 %v1771, %v1775
      %vm1777 = vweird.f32 %v1709
      %vm1778 = vweird.f32 %v1771
      %vm1779 = vmor %vm1777, %vm1778
      %v1780 = vsel %vm1779, %v1771, %v1776
      %v1781 = vrsqrt.pop %v1710
      %v1782 = vmul.f32 %v1781, %v1710
      %v1783 = vmul.f32 %v1782, %v1781
      %v1784 = vmul.f32 0.5, %v1783
      %v1785 = vsub.f32 1.5, %v1784
      %v1786 = vmul.f32 %v1781, %v1785
      %vm1787 = vweird.f32 %v1710
      %vm1788 = vweird.f32 %v1781
      %vm1789 = vmor %vm1787, %vm1788
      %v1790 = vsel %vm1789, %v1781, %v1786
      %v1791 = vmul.f32 %v1655, %v1720
      %v1792 = vmul.f32 %v1656, %v1730
      %v1793 = vmul.f32 %v1657, %v1740
      %v1794 = vmul.f32 %v1658, %v1750
      %v1795 = vmul.f32 %v1659, %v1760
      %v1796 = vmul.f32 %v1660, %v1770
      %v1797 = vmul.f32 %v1661, %v1780
      %v1798 = vmul.f32 %v1662, %v1790
      %v1800 = vperm.slane %v1621, 0
      %v1802 = vmul.f32 %v1791, %v1800
      %v1803 = vmul.f32 %v1792, %v1800
      %v1804 = vmul.f32 %v1793, %v1800
      %v1805 = vmul.f32 %v1794, %v1800
      %v1806 = vmul.f32 %v1795, %v1800
      %v1807 = vmul.f32 %v1796, %v1800
      %v1808 = vmul.f32 %v1797, %v1800
      %v1809 = vmul.f32 %v1798, %v1800
      %v1811 = vperm.slane %v1622, 0
      %v1813 = vadd.f32 %v1802, %v1811
      %v1814 = vadd.f32 %v1803, %v1811
      %v1815 = vadd.f32 %v1804, %v1811
      %v1816 = vadd.f32 %v1805, %v1811
      %v1817 = vadd.f32 %v1806, %v1811
      %v1818 = vadd.f32 %v1807, %v1811
      %v1819 = vadd.f32 %v1808, %v1811
      %v1820 = vadd.f32 %v1809, %v1811
      %v1821 = vld [vmem:[%s11] sm:$0xff]
      %v1822 = vpack.c.bf16 %v1813, %v1813
      %v1823 = vpack.c.bf16 %v1814, %v1814
      %v1824 = vpack.c.bf16 %v1815, %v1815
      %v1825 = vpack.c.bf16 %v1816, %v1816
      %v1826 = vpack.c.bf16 %v1817, %v1817
      %v1827 = vpack.c.bf16 %v1818, %v1818
      %v1828 = vpack.c.bf16 %v1819, %v1819
      %v1829 = vpack.c.bf16 %v1820, %v1820
      %v1830 = vpack.c.bf16 %v1821, %v1821
      %v1831 = vld [vmem:[%s12] sm:$0x1]
      %v1833 = vperm.slane %v1831, 0
      %v1843 = vunpack.c.l.b16 %v1822
      %v1844 = vunpack.c.l.b16 %v1823
      %v1845 = vunpack.c.l.b16 %v1824
      %v1846 = vunpack.c.l.b16 %v1825
      %v1847 = vunpack.c.l.b16 %v1826
      %v1848 = vunpack.c.l.b16 %v1827
      %v1849 = vunpack.c.l.b16 %v1828
      %v1850 = vunpack.c.l.b16 %v1829
      %v1851 = vpack.c.b16 %v1844, %v1843
      %v1852 = vpack.c.b16 %v1846, %v1845
      %v1853 = vpack.c.b16 %v1848, %v1847
      %v1854 = vpack.c.b16 %v1850, %v1849
      %v1856 = vsel %vm514, %v1851, 0
      %v1859 = vsel %vm514, %v1852, 0
      %v1862 = vsel %vm514, %v1853, 0
      %v1865 = vsel %vm514, %v1854, 0
      %v1868 = vsel %vm766, %v1830, 0
      %1870 = vmatpush.bf16.msra.mxu0 0
      %1871 = vmatpush.bf16.msra.mxu0 0
      %1872 = vmatpush.bf16.msra.mxu0 0
      %1873 = vmatpush.bf16.msra.mxu0 0
      %1874 = vmatpush.bf16.msra.mxu0 0
      %1875 = vmatpush.bf16.msra.mxu0 0
      %1876 = vmatpush.bf16.msra.mxu0 0
      %1877 = vmatpush.bf16.msra.mxu0 %v1868
      %1878 = vmatmul.bf16.gmra.mxu0 %v1856
      %v1879 = vpop.f32.mrf.mxu0
      %v1880 = vadd.f32 %v1833, %v1879
      %v1881 = vpop.f32.mrf.mxu0
      %v1882 = vadd.f32 %v1833, %v1881
      %1883 = vmatmul.bf16.gmra.mxu0 %v1859
      %v1884 = vpop.f32.mrf.mxu0
      %v1885 = vadd.f32 %v1833, %v1884
      %v1886 = vpop.f32.mrf.mxu0
      %v1887 = vadd.f32 %v1833, %v1886
      %1888 = vmatmul.bf16.gmra.mxu0 %v1862
      %v1889 = vpop.f32.mrf.mxu0
      %v1890 = vadd.f32 %v1833, %v1889
      %v1891 = vpop.f32.mrf.mxu0
      %v1892 = vadd.f32 %v1833, %v1891
      %1893 = vmatmul.bf16.gmra.mxu0 %v1865
      %v1894 = vpop.f32.mrf.mxu0
      %v1895 = vadd.f32 %v1833, %v1894
      %v1896 = vpop.f32.mrf.mxu0
      %v1897 = vadd.f32 %v1833, %v1896
      %1898 = vdwg.mxu0
      %v1899 = vmul.f32 %v1880, 0.5
      %v1900 = vmul.f32 %v1882, 0.5
      %v1901 = vmul.f32 %v1885, 0.5
      %v1902 = vmul.f32 %v1887, 0.5
      %v1903 = vmul.f32 %v1890, 0.5
      %v1904 = vmul.f32 %v1892, 0.5
      %v1905 = vmul.f32 %v1895, 0.5
      %v1906 = vmul.f32 %v1897, 0.5
      %v1907 = vmul.f32 %v1880, 0.044715
      %v1908 = vmul.f32 %v1882, 0.044715
      %v1909 = vmul.f32 %v1885, 0.044715
      %v1910 = vmul.f32 %v1887, 0.044715
      %v1911 = vmul.f32 %v1890, 0.044715
      %v1912 = vmul.f32 %v1892, 0.044715
      %v1913 = vmul.f32 %v1895, 0.044715
      %v1914 = vmul.f32 %v1897, 0.044715
      %v1915 = vmul.f32 %v1907, %v1880
      %v1916 = vmul.f32 %v1908, %v1882
      %v1917 = vmul.f32 %v1909, %v1885
      %v1918 = vmul.f32 %v1910, %v1887
      %v1919 = vmul.f32 %v1911, %v1890
      %v1920 = vmul.f32 %v1912, %v1892
      %v1921 = vmul.f32 %v1913, %v1895
      %v1922 = vmul.f32 %v1914, %v1897
      %v1923 = vmul.f32 %v1915, %v1880
      %v1924 = vmul.f32 %v1916, %v1882
      %v1925 = vmul.f32 %v1917, %v1885
      %v1926 = vmul.f32 %v1918, %v1887
      %v1927 = vmul.f32 %v1919, %v1890
      %v1928 = vmul.f32 %v1920, %v1892
      %v1929 = vmul.f32 %v1921, %v1895
      %v1930 = vmul.f32 %v1922, %v1897
      %v1931 = vadd.f32 %v1880, %v1923
      %v1932 = vadd.f32 %v1882, %v1924
      %v1933 = vadd.f32 %v1885, %v1925
      %v1934 = vadd.f32 %v1887, %v1926
      %v1935 = vadd.f32 %v1890, %v1927
      %v1936 = vadd.f32 %v1892, %v1928
      %v1937 = vadd.f32 %v1895, %v1929
      %v1938 = vadd.f32 %v1897, %v1930
      %v1939 = vmul.f32 %v1931, 0.7978846
      %v1940 = vmul.f32 %v1932, 0.7978846
      %v1941 = vmul.f32 %v1933, 0.7978846
      %v1942 = vmul.f32 %v1934, 0.7978846
      %v1943 = vmul.f32 %v1935, 0.7978846
      %v1944 = vmul.f32 %v1936, 0.7978846
      %v1945 = vmul.f32 %v1937, 0.7978846
      %v1946 = vmul.f32 %v1938, 0.7978846
      %v1947 = vtanh.pop %v1939
      %v1948 = vtanh.pop %v1940
      %v1949 = vtanh.pop %v1941
      %v1950 = vtanh.pop %v1942
      %v1951 = vtanh.pop %v1943
      %v1952 = vtanh.pop %v1944
      %v1953 = vtanh.pop %v1945
      %v1954 = vtanh.pop %v1946
      %v1955 = vadd.f32 %v1947, 1.0
      %v1956 = vadd.f32 %v1948, 1.0
      %v1957 = vadd.f32 %v1949, 1.0
      %v1958 = vadd.f32 %v1950, 1.0
      %v1959 = vadd.f32 %v1951, 1.0
      %v1960 = vadd.f32 %v1952, 1.0
      %v1961 = vadd.f32 %v1953, 1.0
      %v1962 = vadd.f32 %v1954, 1.0
      %v1963 = vmul.f32 %v1899, %v1955
      %v1964 = vmul.f32 %v1900, %v1956
      %v1965 = vmul.f32 %v1901, %v1957
      %v1966 = vmul.f32 %v1902, %v1958
      %v1967 = vmul.f32 %v1903, %v1959
      %v1968 = vmul.f32 %v1904, %v1960
      %v1969 = vmul.f32 %v1905, %v1961
      %v1970 = vmul.f32 %v1906, %v1962
      %v1971 = vld [vmem:[%s13] sm:$0xff]
      %v1972 = vld [vmem:[%s13 + $0x8] sm:$0xff]
      %v1973 = vld [vmem:[%s13 + $0x10] sm:$0xff]
      %v1974 = vld [vmem:[%s13 + $0x18] sm:$0xff]
      %v1975 = vpack.c.bf16 %v1963, %v1963
      %v1976 = vpack.c.bf16 %v1964, %v1964
      %v1977 = vpack.c.bf16 %v1965, %v1965
      %v1978 = vpack.c.bf16 %v1966, %v1966
      %v1979 = vpack.c.bf16 %v1967, %v1967
      %v1980 = vpack.c.bf16 %v1968, %v1968
      %v1981 = vpack.c.bf16 %v1969, %v1969
      %v1982 = vpack.c.bf16 %v1970, %v1970
      %v1983 = vpack.c.bf16 %v1972, %v1971
      %v1984 = vpack.c.bf16 %v1974, %v1973
      %v1993 = vunpack.c.l.b16 %v1975
      %v1994 = vunpack.c.l.b16 %v1976
      %v1995 = vunpack.c.l.b16 %v1977
      %v1996 = vunpack.c.l.b16 %v1978
      %v1997 = vunpack.c.l.b16 %v1979
      %v1998 = vunpack.c.l.b16 %v1980
      %v1999 = vunpack.c.l.b16 %v1981
      %v2000 = vunpack.c.l.b16 %v1982
      %v2001 = vpack.c.b16 %v1994, %v1993
      %v2002 = vpack.c.b16 %v1996, %v1995
      %v2003 = vpack.c.b16 %v1998, %v1997
      %v2004 = vpack.c.b16 %v2000, %v1999
      %vm2005 = vcmask 261120
      %v2007 = vsel %vm2005, %v2001, 0
      %v2010 = vsel %vm2005, %v2002, 0
      %v2013 = vsel %vm2005, %v2003, 0
      %v2016 = vsel %vm2005, %v2004, 0
      %2018 = vmatpush.bf16.msra.mxu0 0
      %2019 = vmatpush.bf16.msra.mxu0 0
      %2020 = vmatpush.bf16.msra.mxu0 0
      %2021 = vmatpush.bf16.msra.mxu0 0
      %2022 = vmatpush.bf16.msra.mxu0 0
      %2023 = vmatpush.bf16.msra.mxu0 0
      %2024 = vmatpush.bf16.msra.mxu0 %v1984
      %2025 = vmatpush.bf16.msra.mxu0 %v1983
      %2026 = vmatmul.bf16.gmra.mxu0 %v2007
      %v2027 = vpop.f32.mrf.mxu0
      %v2028 = vadd.f32 0.0, %v2027
      %v2029 = vpop.f32.mrf.mxu0
      %v2030 = vadd.f32 0.0, %v2029
      %2031 = vmatmul.bf16.gmra.mxu0 %v2010
      %v2032 = vpop.f32.mrf.mxu0
      %v2033 = vadd.f32 0.0, %v2032
      %v2034 = vpop.f32.mrf.mxu0
      %v2035 = vadd.f32 0.0, %v2034
      %2036 = vmatmul.bf16.gmra.mxu0 %v2013
      %v2037 = vpop.f32.mrf.mxu0
      %v2038 = vadd.f32 0.0, %v2037
      %v2039 = vpop.f32.mrf.mxu0
      %v2040 = vadd.f32 0.0, %v2039
      %2041 = vmatmul.bf16.gmra.mxu0 %v2016
      %v2042 = vpop.f32.mrf.mxu0
      %v2043 = vadd.f32 0.0, %v2042
      %v2044 = vpop.f32.mrf.mxu0
      %v2045 = vadd.f32 0.0, %v2044
      %2046 = vdwg.mxu0
      %v2047 = vadd.f32 %v1613, %v2028
      %v2048 = vadd.f32 %v1614, %v2030
      %v2049 = vadd.f32 %v1615, %v2033
      %v2050 = vadd.f32 %v1616, %v2035
      %v2051 = vadd.f32 %v1617, %v2038
      %v2052 = vadd.f32 %v1618, %v2040
      %v2053 = vadd.f32 %v1619, %v2043
      %v2054 = vadd.f32 %v1620, %v2045
      %v2055 = vld [vmem:[%s14] sm:$0x1]
      %v2057 = vperm.slane %v2055, 0
      %v2059 = vadd.f32 %v2047, %v2057
      %v2060 = vadd.f32 %v2048, %v2057
      %v2061 = vadd.f32 %v2049, %v2057
      %v2062 = vadd.f32 %v2050, %v2057
      %v2063 = vadd.f32 %v2051, %v2057
      %v2064 = vadd.f32 %v2052, %v2057
      %v2065 = vadd.f32 %v2053, %v2057
      %v2066 = vadd.f32 %v2054, %v2057
      %2067 = vst.msk [vmem:[%s501] sm:$0xff] %vm514, %v2059
      %2068 = vst.msk [vmem:[%s501 + $0x8] sm:$0xff] %vm514, %v2060
      %2069 = vst.msk [vmem:[%s501 + $0x10] sm:$0xff] %vm514, %v2061
      %2070 = vst.msk [vmem:[%s501 + $0x18] sm:$0xff] %vm514, %v2062
      %2071 = vst.msk [vmem:[%s501 + $0x20] sm:$0xff] %vm514, %v2063
      %2072 = vst.msk [vmem:[%s501 + $0x28] sm:$0xff] %vm514, %v2064
      %2073 = vst.msk [vmem:[%s501 + $0x30] sm:$0xff] %vm514, %v2065
      %2074 = vst.msk [vmem:[%s501 + $0x38] sm:$0xff] %vm514, %v2066
      %s2075 = smul.u32 4, %s26
      %p2076 = scmp.lt.s32.totalorder %s2075, 7
      %s2077 = scalar_select %p2076, %s2075, 7
      %s2078 = smul.addr %s2077, 2
      %s2079 = smul.addr %s2078, 8
      %s2080 = scalar_lea.vmem %s15, %s2079
      // Predicated region
      $region81: #{rac_forward.8} parent=79 // pred_check
        %p2081 = pneg %p364
      $region82: #{rac_forward.8} parent=79 // pred_check_branch
        %2083 = sbr.rel (%p2081) target = $region84
      $region83: #{rac_forward.8} parent=79 // pred_region
        %s2084 = smul.u32 4, %s26
      $region84: #{rac_forward.8} parent=79 // pred_fallthru
        _
    $region80: #{rac_forward.8} parent=5 // pred_fallthru
      _
    %p2085 = scmp.le.s32.totalorder 2, %s21
    // Predicated region
    $region85: #{rac_forward.8} parent=5 // pred_check
      %p2086 = pneg %p2085
    $region86: #{rac_forward.8} parent=5 // pred_check_branch
      %2088 = sbr.rel (%p2086) target = $region88
    $region87: #{rac_forward.8} parent=5 // pred_region
      %s2089 = ssub.s32 %s21, 2
      // Predicated region
      $region89: #{rac_forward.8} parent=87 // pred_check
        %p2090 = pneg %p370
      $region90: #{rac_forward.8} parent=87 // pred_check_branch
        %2092 = sbr.rel (%p2090) target = $region92
      $region91: #{rac_forward.8} parent=87 // pred_region
        %s2093 = smul.u32 4, %s27
        %p2094 = scmp.lt.s32.totalorder %s2093, 7
        %s2095 = scalar_select %p2094, %s2093, 7
        %s2096 = smul.addr %s2095, 2
        %s2097 = smul.addr %s2096, 8
        %s2098 = scalar_lea.vmem %s15, %s2097
      $region92: #{rac_forward.8} parent=87 // pred_fallthru
        _
    $region88: #{rac_forward.8} parent=5 // pred_fallthru
      _
  $region6: #{rac_forward.8} parent=0 // loop_footer
    %s25 = sadd.s32 1, %s21
  $region7: #{rac_forward.8} parent=0 // loop_footer_branch
    %20 = sbr.rel target = $region3
  $region8: #{rac_forward.8} parent=0 // loop_exit
    _

// kernel: rac_forward.13
$region0: #{rac_forward.13}
  #allocation0 [shape = 'u32[]', space=smem, size = 0x4, offset = 0x4, fixed_abs, tag = 'smem constant byte address 0x4 - core index']
  #allocation1 [shape = 'u32[72,128]{1,0:T(1,128)}', space=vmem, size = 0x9000, scoped, tag = 'internal scratch']
  %s0 = inlined_call_operand.vmem [shape: f32[128,8], index: 0, kind: input, shape index: {}]
  %s1 = inlined_call_operand.vmem [shape: f32[128,4], index: 1, kind: input, shape index: {}]
  %s2 = inlined_call_operand.vmem [shape: f32[128,4], index: 2, kind: input, shape index: {}]
  %s3 = inlined_call_operand.vmem [shape: f32[2,8], index: 3, kind: input, shape index: {}]
  %s4 = inlined_call_operand.vmem [shape: f32[1,2], index: 4, kind: input, shape index: {}]
  %s5 = inlined_call_operand.vmem [shape: f32[128,4], index: 5, kind: output, shape index: {}]
  %s6 = sld [smem:[#allocation0]]
  $region30: #{rac_forward.13} parent=0
    _
  %s8 = ssub.s32 1, %s6
  %s9 = scalar_select 0, %s8, %s6
  // Predicated region
  $region2: #{rac_forward.13} parent=0 // pred_check
    _
  $region3: #{rac_forward.13} parent=0 // pred_check_branch
    %11 = sbr.rel (0) target = $region5
  $region4: #{rac_forward.13} parent=0 // pred_region
    _
  $region5: #{rac_forward.13} parent=0 // pred_fallthru
    _
  // Predicated region
  $region6: #{rac_forward.13} parent=0 // pred_check
    _
  $region7: #{rac_forward.13} parent=0 // pred_check_branch
    %13 = sbr.rel (0) target = $region9
  $region8: #{rac_forward.13} parent=0 // pred_region
    _
  $region9: #{rac_forward.13} parent=0 // pred_fallthru
    _
  // Predicated region
  $region10: #{rac_forward.13} parent=0 // pred_check
    _
  $region11: #{rac_forward.13} parent=0 // pred_check_branch
    %15 = sbr.rel (0) target = $region13
  $region12: #{rac_forward.13} parent=0 // pred_region
    _
  $region13: #{rac_forward.13} parent=0 // pred_fallthru
    _
  // Predicated region
  $region14: #{rac_forward.13} parent=0 // pred_check
    _
  $region15: #{rac_forward.13} parent=0 // pred_check_branch
    %17 = sbr.rel (0) target = $region17
  $region16: #{rac_forward.13} parent=0 // pred_region
    _
  $region17: #{rac_forward.13} parent=0 // pred_fallthru
    _
  // Predicated region
  $region18: #{rac_forward.13} parent=0 // pred_check
    _
  $region19: #{rac_forward.13} parent=0 // pred_check_branch
    %19 = sbr.rel (0) target = $region21
  $region20: #{rac_forward.13} parent=0 // pred_region
    _
  $region21: #{rac_forward.13} parent=0 // pred_fallthru
    _
  %v20 = vld [vmem:[%s0] sm:$0xff]
  %v21 = vld [vmem:[%s0 + $0x8] sm:$0xff]
  %v22 = vld [vmem:[%s0 + $0x10] sm:$0xff]
  %v23 = vld [vmem:[%s0 + $0x18] sm:$0xff]
  %v24 = vld [vmem:[%s0 + $0x20] sm:$0xff]
  %v25 = vld [vmem:[%s0 + $0x28] sm:$0xff]
  %v26 = vld [vmem:[%s0 + $0x30] sm:$0xff]
  %v27 = vld [vmem:[%s0 + $0x38] sm:$0xff]
  %v28 = vld [vmem:[%s0 + $0x40] sm:$0xff]
  %v29 = vld [vmem:[%s0 + $0x48] sm:$0xff]
  %v30 = vld [vmem:[%s0 + $0x50] sm:$0xff]
  %v31 = vld [vmem:[%s0 + $0x58] sm:$0xff]
  %v32 = vld [vmem:[%s0 + $0x60] sm:$0xff]
  %v33 = vld [vmem:[%s0 + $0x68] sm:$0xff]
  %v34 = vld [vmem:[%s0 + $0x70] sm:$0xff]
  %v35 = vld [vmem:[%s0 + $0x78] sm:$0xff]
  %v36 = vld [vmem:[%s3] sm:$0x3]
  %v37 = vld [vmem:[%s4] sm:$0x1]
  %v38 = vperm.slane %v36, 0
  %v39 = vmul.f32 %v20, %v38
  %v40 = vmul.f32 %v21, %v38
  %v41 = vmul.f32 %v22, %v38
  %v42 = vmul.f32 %v23, %v38
  %v43 = vmul.f32 %v24, %v38
  %v44 = vmul.f32 %v25, %v38
  %v45 = vmul.f32 %v26, %v38
  %v46 = vmul.f32 %v27, %v38
  %v47 = vmul.f32 %v28, %v38
  %v48 = vmul.f32 %v29, %v38
  %v49 = vmul.f32 %v30, %v38
  %v50 = vmul.f32 %v31, %v38
  %v51 = vmul.f32 %v32, %v38
  %v52 = vmul.f32 %v33, %v38
  %v53 = vmul.f32 %v34, %v38
  %v54 = vmul.f32 %v35, %v38
  %vm55 = vcmask 64512
  %v56 = vsel %vm55, %v39, 0.0
  %57 = vadd.xlane.f32.xlu0 %v56
  %v58 = vpop.xlane.xlu0 %57
  %v59 = vsel %vm55, %v40, 0.0
  %60 = vadd.xlane.f32.xlu0 %v59
  %v61 = vpop.xlane.xlu0 %60
  %v62 = vsel %vm55, %v41, 0.0
  %63 = vadd.xlane.f32.xlu0 %v62
  %v64 = vpop.xlane.xlu0 %63
  %v65 = vsel %vm55, %v42, 0.0
  %66 = vadd.xlane.f32.xlu0 %v65
  %v67 = vpop.xlane.xlu0 %66
  %v68 = vsel %vm55, %v43, 0.0
  %69 = vadd.xlane.f32.xlu0 %v68
  %v70 = vpop.xlane.xlu0 %69
  %v71 = vsel %vm55, %v44, 0.0
  %72 = vadd.xlane.f32.xlu0 %v71
  %v73 = vpop.xlane.xlu0 %72
  %v74 = vsel %vm55, %v45, 0.0
  %75 = vadd.xlane.f32.xlu0 %v74
  %v76 = vpop.xlane.xlu0 %75
  %v77 = vsel %vm55, %v46, 0.0
  %78 = vadd.xlane.f32.xlu0 %v77
  %v79 = vpop.xlane.xlu0 %78
  %v80 = vsel %vm55, %v47, 0.0
  %81 = vadd.xlane.f32.xlu0 %v80
  %v82 = vpop.xlane.xlu0 %81
  %v83 = vsel %vm55, %v48, 0.0
  %84 = vadd.xlane.f32.xlu0 %v83
  %v85 = vpop.xlane.xlu0 %84
  %v86 = vsel %vm55, %v49, 0.0
  %87 = vadd.xlane.f32.xlu0 %v86
  %v88 = vpop.xlane.xlu0 %87
  %v89 = vsel %vm55, %v50, 0.0
  %90 = vadd.xlane.f32.xlu0 %v89
  %v91 = vpop.xlane.xlu0 %90
  %v92 = vsel %vm55, %v51, 0.0
  %93 = vadd.xlane.f32.xlu0 %v92
  %v94 = vpop.xlane.xlu0 %93
  %v95 = vsel %vm55, %v52, 0.0
  %96 = vadd.xlane.f32.xlu0 %v95
  %v97 = vpop.xlane.xlu0 %96
  %v98 = vsel %vm55, %v53, 0.0
  %99 = vadd.xlane.f32.xlu0 %v98
  %v100 = vpop.xlane.xlu0 %99
  %v101 = vsel %vm55, %v54, 0.0
  %102 = vadd.xlane.f32.xlu0 %v101
  %v103 = vpop.xlane.xlu0 %102
  %v105 = vperm.slane %v37, 0
  %v107 = vadd.f32 %v58, %v105
  %v108 = vadd.f32 %v61, %v105
  %v109 = vadd.f32 %v64, %v105
  %v110 = vadd.f32 %v67, %v105
  %v111 = vadd.f32 %v70, %v105
  %v112 = vadd.f32 %v73, %v105
  %v113 = vadd.f32 %v76, %v105
  %v114 = vadd.f32 %v79, %v105
  %v115 = vadd.f32 %v82, %v105
  %v116 = vadd.f32 %v85, %v105
  %v117 = vadd.f32 %v88, %v105
  %v118 = vadd.f32 %v91, %v105
  %v119 = vadd.f32 %v94, %v105
  %v120 = vadd.f32 %v97, %v105
  %v121 = vadd.f32 %v100, %v105
  %v122 = vadd.f32 %v103, %v105
  %v123 = vperm.slane %v36, 1
  %v124 = vmul.f32 %v20, %v123
  %v125 = vmul.f32 %v21, %v123
  %v126 = vmul.f32 %v22, %v123
  %v127 = vmul.f32 %v23, %v123
  %v128 = vmul.f32 %v24, %v123
  %v129 = vmul.f32 %v25, %v123
  %v130 = vmul.f32 %v26, %v123
  %v131 = vmul.f32 %v27, %v123
  %v132 = vmul.f32 %v28, %v123
  %v133 = vmul.f32 %v29, %v123
  %v134 = vmul.f32 %v30, %v123
  %v135 = vmul.f32 %v31, %v123
  %v136 = vmul.f32 %v32, %v123
  %v137 = vmul.f32 %v33, %v123
  %v138 = vmul.f32 %v34, %v123
  %v139 = vmul.f32 %v35, %v123
  %v140 = vsel %vm55, %v124, 0.0
  %141 = vadd.xlane.f32.xlu0 %v140
  %v142 = vpop.xlane.xlu0 %141
  %v143 = vsel %vm55, %v125, 0.0
  %144 = vadd.xlane.f32.xlu0 %v143
  %v145 = vpop.xlane.xlu0 %144
  %v146 = vsel %vm55, %v126, 0.0
  %147 = vadd.xlane.f32.xlu0 %v146
  %v148 = vpop.xlane.xlu0 %147
  %v149 = vsel %vm55, %v127, 0.0
  %150 = vadd.xlane.f32.xlu0 %v149
  %v151 = vpop.xlane.xlu0 %150
  %v152 = vsel %vm55, %v128, 0.0
  %153 = vadd.xlane.f32.xlu0 %v152
  %v154 = vpop.xlane.xlu0 %153
  %v155 = vsel %vm55, %v129, 0.0
  %156 = vadd.xlane.f32.xlu0 %v155
  %v157 = vpop.xlane.xlu0 %156
  %v158 = vsel %vm55, %v130, 0.0
  %159 = vadd.xlane.f32.xlu0 %v158
  %v160 = vpop.xlane.xlu0 %159
  %v161 = vsel %vm55, %v131, 0.0
  %162 = vadd.xlane.f32.xlu0 %v161
  %v163 = vpop.xlane.xlu0 %162
  %v164 = vsel %vm55, %v132, 0.0
  %165 = vadd.xlane.f32.xlu0 %v164
  %v166 = vpop.xlane.xlu0 %165
  %v167 = vsel %vm55, %v133, 0.0
  %168 = vadd.xlane.f32.xlu0 %v167
  %v169 = vpop.xlane.xlu0 %168
  %v170 = vsel %vm55, %v134, 0.0
  %171 = vadd.xlane.f32.xlu0 %v170
  %v172 = vpop.xlane.xlu0 %171
  %v173 = vsel %vm55, %v135, 0.0
  %174 = vadd.xlane.f32.xlu0 %v173
  %v175 = vpop.xlane.xlu0 %174
  %v176 = vsel %vm55, %v136, 0.0
  %177 = vadd.xlane.f32.xlu0 %v176
  %v178 = vpop.xlane.xlu0 %177
  %v179 = vsel %vm55, %v137, 0.0
  %180 = vadd.xlane.f32.xlu0 %v179
  %v181 = vpop.xlane.xlu0 %180
  %v182 = vsel %vm55, %v138, 0.0
  %183 = vadd.xlane.f32.xlu0 %v182
  %v184 = vpop.xlane.xlu0 %183
  %v185 = vsel %vm55, %v139, 0.0
  %186 = vadd.xlane.f32.xlu0 %v185
  %v187 = vpop.xlane.xlu0 %186
  %v188 = vadd.f32 %v142, %v105
  %v189 = vadd.f32 %v145, %v105
  %v190 = vadd.f32 %v148, %v105
  %v191 = vadd.f32 %v151, %v105
  %v192 = vadd.f32 %v154, %v105
  %v193 = vadd.f32 %v157, %v105
  %v194 = vadd.f32 %v160, %v105
  %v195 = vadd.f32 %v163, %v105
  %v196 = vadd.f32 %v166, %v105
  %v197 = vadd.f32 %v169, %v105
  %v198 = vadd.f32 %v172, %v105
  %v199 = vadd.f32 %v175, %v105
  %v200 = vadd.f32 %v178, %v105
  %v201 = vadd.f32 %v181, %v105
  %v202 = vadd.f32 %v184, %v105
  %v203 = vadd.f32 %v187, %v105
  %220 = vrot.lane.b32.xlu0 %v188, 127
  %v221 = vpop.permute.xlu0 %220
  %222 = vrot.lane.b32.xlu0 %v189, 127
  %v223 = vpop.permute.xlu0 %222
  %224 = vrot.lane.b32.xlu0 %v190, 127
  %v225 = vpop.permute.xlu0 %224
  %226 = vrot.lane.b32.xlu0 %v191, 127
  %v227 = vpop.permute.xlu0 %226
  %228 = vrot.lane.b32.xlu0 %v192, 127
  %v229 = vpop.permute.xlu0 %228
  %230 = vrot.lane.b32.xlu0 %v193, 127
  %v231 = vpop.permute.xlu0 %230
  %232 = vrot.lane.b32.xlu0 %v194, 127
  %v233 = vpop.permute.xlu0 %232
  %234 = vrot.lane.b32.xlu0 %v195, 127
  %v235 = vpop.permute.xlu0 %234
  %236 = vrot.lane.b32.xlu0 %v196, 127
  %v237 = vpop.permute.xlu0 %236
  %238 = vrot.lane.b32.xlu0 %v197, 127
  %v239 = vpop.permute.xlu0 %238
  %240 = vrot.lane.b32.xlu0 %v198, 127
  %v241 = vpop.permute.xlu0 %240
  %242 = vrot.lane.b32.xlu0 %v199, 127
  %v243 = vpop.permute.xlu0 %242
  %244 = vrot.lane.b32.xlu0 %v200, 127
  %v245 = vpop.permute.xlu0 %244
  %246 = vrot.lane.b32.xlu0 %v201, 127
  %v247 = vpop.permute.xlu0 %246
  %248 = vrot.lane.b32.xlu0 %v202, 127
  %v249 = vpop.permute.xlu0 %248
  %250 = vrot.lane.b32.xlu0 %v203, 127
  %v251 = vpop.permute.xlu0 %250
  %v268 = vmax.f32 %v107, %v221
  %v269 = vmax.f32 %v108, %v223
  %v270 = vmax.f32 %v109, %v225
  %v271 = vmax.f32 %v110, %v227
  %v272 = vmax.f32 %v111, %v229
  %v273 = vmax.f32 %v112, %v231
  %v274 = vmax.f32 %v113, %v233
  %v275 = vmax.f32 %v114, %v235
  %v276 = vmax.f32 %v115, %v237
  %v277 = vmax.f32 %v116, %v239
  %v278 = vmax.f32 %v117, %v241
  %v279 = vmax.f32 %v118, %v243
  %v280 = vmax.f32 %v119, %v245
  %v281 = vmax.f32 %v120, %v247
  %v282 = vmax.f32 %v121, %v249
  %v283 = vmax.f32 %v122, %v251
  %v284 = vsub.f32 %v107, %v268
  %v285 = vsub.f32 %v108, %v269
  %v286 = vsub.f32 %v109, %v270
  %v287 = vsub.f32 %v110, %v271
  %v288 = vsub.f32 %v111, %v272
  %v289 = vsub.f32 %v112, %v273
  %v290 = vsub.f32 %v113, %v274
  %v291 = vsub.f32 %v114, %v275
  %v292 = vsub.f32 %v115, %v276
  %v293 = vsub.f32 %v116, %v277
  %v294 = vsub.f32 %v117, %v278
  %v295 = vsub.f32 %v118, %v279
  %v296 = vsub.f32 %v119, %v280
  %v297 = vsub.f32 %v120, %v281
  %v298 = vsub.f32 %v121, %v282
  %v299 = vsub.f32 %v122, %v283
  %v300 = vmul.f32 %v284, 1.442695
  %v301 = vpow.pop %v300
  %v302 = vmul.f32 %v285, 1.442695
  %v303 = vpow.pop %v302
  %v304 = vmul.f32 %v286, 1.442695
  %v305 = vpow.pop %v304
  %v306 = vmul.f32 %v287, 1.442695
  %v307 = vpow.pop %v306
  %v308 = vmul.f32 %v288, 1.442695
  %v309 = vpow.pop %v308
  %v310 = vmul.f32 %v289, 1.442695
  %v311 = vpow.pop %v310
  %v312 = vmul.f32 %v290, 1.442695
  %v313 = vpow.pop %v312
  %v314 = vmul.f32 %v291, 1.442695
  %v315 = vpow.pop %v314
  %v316 = vmul.f32 %v292, 1.442695
  %v317 = vpow.pop %v316
  %v318 = vmul.f32 %v293, 1.442695
  %v319 = vpow.pop %v318
  %v320 = vmul.f32 %v294, 1.442695
  %v321 = vpow.pop %v320
  %v322 = vmul.f32 %v295, 1.442695
  %v323 = vpow.pop %v322
  %v324 = vmul.f32 %v296, 1.442695
  %v325 = vpow.pop %v324
  %v326 = vmul.f32 %v297, 1.442695
  %v327 = vpow.pop %v326
  %v328 = vmul.f32 %v298, 1.442695
  %v329 = vpow.pop %v328
  %v330 = vmul.f32 %v299, 1.442695
  %v331 = vpow.pop %v330
  %348 = vrot.lane.b32.xlu0 %v268, 1
  %v349 = vpop.permute.xlu0 %348
  %350 = vrot.lane.b32.xlu0 %v269, 1
  %v351 = vpop.permute.xlu0 %350
  %352 = vrot.lane.b32.xlu0 %v270, 1
  %v353 = vpop.permute.xlu0 %352
  %354 = vrot.lane.b32.xlu0 %v271, 1
  %v355 = vpop.permute.xlu0 %354
  %356 = vrot.lane.b32.xlu0 %v272, 1
  %v357 = vpop.permute.xlu0 %356
  %358 = vrot.lane.b32.xlu0 %v273, 1
  %v359 = vpop.permute.xlu0 %358
  %360 = vrot.lane.b32.xlu0 %v274, 1
  %v361 = vpop.permute.xlu0 %360
  %362 = vrot.lane.b32.xlu0 %v275, 1
  %v363 = vpop.permute.xlu0 %362
  %364 = vrot.lane.b32.xlu0 %v276, 1
  %v365 = vpop.permute.xlu0 %364
  %366 = vrot.lane.b32.xlu0 %v277, 1
  %v367 = vpop.permute.xlu0 %366
  %368 = vrot.lane.b32.xlu0 %v278, 1
  %v369 = vpop.permute.xlu0 %368
  %370 = vrot.lane.b32.xlu0 %v279, 1
  %v371 = vpop.permute.xlu0 %370
  %372 = vrot.lane.b32.xlu0 %v280, 1
  %v373 = vpop.permute.xlu0 %372
  %374 = vrot.lane.b32.xlu0 %v281, 1
  %v375 = vpop.permute.xlu0 %374
  %376 = vrot.lane.b32.xlu0 %v282, 1
  %v377 = vpop.permute.xlu0 %376
  %378 = vrot.lane.b32.xlu0 %v283, 1
  %v379 = vpop.permute.xlu0 %378
  %v396 = vsub.f32 %v188, %v349
  %v397 = vsub.f32 %v189, %v351
  %v398 = vsub.f32 %v190, %v353
  %v399 = vsub.f32 %v191, %v355
  %v400 = vsub.f32 %v192, %v357
  %v401 = vsub.f32 %v193, %v359
  %v402 = vsub.f32 %v194, %v361
  %v403 = vsub.f32 %v195, %v363
  %v404 = vsub.f32 %v196, %v365
  %v405 = vsub.f32 %v197, %v367
  %v406 = vsub.f32 %v198, %v369
  %v407 = vsub.f32 %v199, %v371
  %v408 = vsub.f32 %v200, %v373
  %v409 = vsub.f32 %v201, %v375
  %v410 = vsub.f32 %v202, %v377
  %v411 = vsub.f32 %v203, %v379
  %v412 = vmul.f32 %v396, 1.442695
  %v413 = vpow.pop %v412
  %v414 = vmul.f32 %v397, 1.442695
  %v415 = vpow.pop %v414
  %v416 = vmul.f32 %v398, 1.442695
  %v417 = vpow.pop %v416
  %v418 = vmul.f32 %v399, 1.442695
  %v419 = vpow.pop %v418
  %v420 = vmul.f32 %v400, 1.442695
  %v421 = vpow.pop %v420
  %v422 = vmul.f32 %v401, 1.442695
  %v423 = vpow.pop %v422
  %v424 = vmul.f32 %v402, 1.442695
  %v425 = vpow.pop %v424
  %v426 = vmul.f32 %v403, 1.442695
  %v427 = vpow.pop %v426
  %v428 = vmul.f32 %v404, 1.442695
  %v429 = vpow.pop %v428
  %v430 = vmul.f32 %v405, 1.442695
  %v431 = vpow.pop %v430
  %v432 = vmul.f32 %v406, 1.442695
  %v433 = vpow.pop %v432
  %v434 = vmul.f32 %v407, 1.442695
  %v435 = vpow.pop %v434
  %v436 = vmul.f32 %v408, 1.442695
  %v437 = vpow.pop %v436
  %v438 = vmul.f32 %v409, 1.442695
  %v439 = vpow.pop %v438
  %v440 = vmul.f32 %v410, 1.442695
  %v441 = vpow.pop %v440
  %v442 = vmul.f32 %v411, 1.442695
  %v443 = vpow.pop %v442
  %460 = vrot.lane.b32.xlu0 %v413, 127
  %v461 = vpop.permute.xlu0 %460
  %462 = vrot.lane.b32.xlu0 %v415, 127
  %v463 = vpop.permute.xlu0 %462
  %464 = vrot.lane.b32.xlu0 %v417, 127
  %v465 = vpop.permute.xlu0 %464
  %466 = vrot.lane.b32.xlu0 %v419, 127
  %v467 = vpop.permute.xlu0 %466
  %468 = vrot.lane.b32.xlu0 %v421, 127
  %v469 = vpop.permute.xlu0 %468
  %470 = vrot.lane.b32.xlu0 %v423, 127
  %v471 = vpop.permute.xlu0 %470
  %472 = vrot.lane.b32.xlu0 %v425, 127
  %v473 = vpop.permute.xlu0 %472
  %474 = vrot.lane.b32.xlu0 %v427, 127
  %v475 = vpop.permute.xlu0 %474
  %476 = vrot.lane.b32.xlu0 %v429, 127
  %v477 = vpop.permute.xlu0 %476
  %478 = vrot.lane.b32.xlu0 %v431, 127
  %v479 = vpop.permute.xlu0 %478
  %480 = vrot.lane.b32.xlu0 %v433, 127
  %v481 = vpop.permute.xlu0 %480
  %482 = vrot.lane.b32.xlu0 %v435, 127
  %v483 = vpop.permute.xlu0 %482
  %484 = vrot.lane.b32.xlu0 %v437, 127
  %v485 = vpop.permute.xlu0 %484
  %486 = vrot.lane.b32.xlu0 %v439, 127
  %v487 = vpop.permute.xlu0 %486
  %488 = vrot.lane.b32.xlu0 %v441, 127
  %v489 = vpop.permute.xlu0 %488
  %490 = vrot.lane.b32.xlu0 %v443, 127
  %v491 = vpop.permute.xlu0 %490
  %v508 = vadd.f32 %v301, %v461
  %v509 = vadd.f32 %v303, %v463
  %v510 = vadd.f32 %v305, %v465
  %v511 = vadd.f32 %v307, %v467
  %v512 = vadd.f32 %v309, %v469
  %v513 = vadd.f32 %v311, %v471
  %v514 = vadd.f32 %v313, %v473
  %v515 = vadd.f32 %v315, %v475
  %v516 = vadd.f32 %v317, %v477
  %v517 = vadd.f32 %v319, %v479
  %v518 = vadd.f32 %v321, %v481
  %v519 = vadd.f32 %v323, %v483
  %v520 = vadd.f32 %v325, %v485
  %v521 = vadd.f32 %v327, %v487
  %v522 = vadd.f32 %v329, %v489
  %v523 = vadd.f32 %v331, %v491
  %v524 = vrcp.pop %v508
  %v525 = vrcp.pop %v509
  %v526 = vrcp.pop %v510
  %v527 = vrcp.pop %v511
  %v528 = vrcp.pop %v512
  %v529 = vrcp.pop %v513
  %v530 = vrcp.pop %v514
  %v531 = vrcp.pop %v515
  %v532 = vrcp.pop %v516
  %v533 = vrcp.pop %v517
  %v534 = vrcp.pop %v518
  %v535 = vrcp.pop %v519
  %v536 = vrcp.pop %v520
  %v537 = vrcp.pop %v521
  %v538 = vrcp.pop %v522
  %v539 = vrcp.pop %v523
  %v540 = vmul.f32 %v301, %v524
  %v541 = vmul.f32 %v303, %v525
  %v542 = vmul.f32 %v305, %v526
  %v543 = vmul.f32 %v307, %v527
  %v544 = vmul.f32 %v309, %v528
  %v545 = vmul.f32 %v311, %v529
  %v546 = vmul.f32 %v313, %v530
  %v547 = vmul.f32 %v315, %v531
  %v548 = vmul.f32 %v317, %v532
  %v549 = vmul.f32 %v319, %v533
  %v550 = vmul.f32 %v321, %v534
  %v551 = vmul.f32 %v323, %v535
  %v552 = vmul.f32 %v325, %v536
  %v553 = vmul.f32 %v327, %v537
  %v554 = vmul.f32 %v329, %v538
  %v555 = vmul.f32 %v331, %v539
  %v556 = vld [vmem:[%s1] sm:$0xff]
  %v557 = vld [vmem:[%s1 + $0x8] sm:$0xff]
  %v558 = vld [vmem:[%s1 + $0x10] sm:$0xff]
  %v559 = vld [vmem:[%s1 + $0x18] sm:$0xff]
  %v560 = vld [vmem:[%s1 + $0x20] sm:$0xff]
  %v561 = vld [vmem:[%s1 + $0x28] sm:$0xff]
  %v562 = vld [vmem:[%s1 + $0x30] sm:$0xff]
  %v563 = vld [vmem:[%s1 + $0x38] sm:$0xff]
  %v564 = vld [vmem:[%s1 + $0x40] sm:$0xff]
  %v565 = vld [vmem:[%s1 + $0x48] sm:$0xff]
  %v566 = vld [vmem:[%s1 + $0x50] sm:$0xff]
  %v567 = vld [vmem:[%s1 + $0x58] sm:$0xff]
  %v568 = vld [vmem:[%s1 + $0x60] sm:$0xff]
  %v569 = vld [vmem:[%s1 + $0x68] sm:$0xff]
  %v570 = vld [vmem:[%s1 + $0x70] sm:$0xff]
  %v571 = vld [vmem:[%s1 + $0x78] sm:$0xff]
  %573 = vset.pattern.permute.xlu0 0
  %574 = vperm.xlu0 %573, %v540
  %v575 = vpop.permute.xlu0 %574
  %578 = vset.pattern.permute.xlu0 0
  %579 = vperm.xlu0 %578, %v541
  %v580 = vpop.permute.xlu0 %579
  %583 = vset.pattern.permute.xlu0 0
  %584 = vperm.xlu0 %583, %v542
  %v585 = vpop.permute.xlu0 %584
  %588 = vset.pattern.permute.xlu0 0
  %589 = vperm.xlu0 %588, %v543
  %v590 = vpop.permute.xlu0 %589
  %593 = vset.pattern.permute.xlu0 0
  %594 = vperm.xlu0 %593, %v544
  %v595 = vpop.permute.xlu0 %594
  %598 = vset.pattern.permute.xlu0 0
  %599 = vperm.xlu0 %598, %v545
  %v600 = vpop.permute.xlu0 %599
  %603 = vset.pattern.permute.xlu0 0
  %604 = vperm.xlu0 %603, %v546
  %v605 = vpop.permute.xlu0 %604
  %608 = vset.pattern.permute.xlu0 0
  %609 = vperm.xlu0 %608, %v547
  %v610 = vpop.permute.xlu0 %609
  %613 = vset.pattern.permute.xlu0 0
  %614 = vperm.xlu0 %613, %v548
  %v615 = vpop.permute.xlu0 %614
  %618 = vset.pattern.permute.xlu0 0
  %619 = vperm.xlu0 %618, %v549
  %v620 = vpop.permute.xlu0 %619
  %623 = vset.pattern.permute.xlu0 0
  %624 = vperm.xlu0 %623, %v550
  %v625 = vpop.permute.xlu0 %624
  %628 = vset.pattern.permute.xlu0 0
  %629 = vperm.xlu0 %628, %v551
  %v630 = vpop.permute.xlu0 %629
  %633 = vset.pattern.permute.xlu0 0
  %634 = vperm.xlu0 %633, %v552
  %v635 = vpop.permute.xlu0 %634
  %638 = vset.pattern.permute.xlu0 0
  %639 = vperm.xlu0 %638, %v553
  %v640 = vpop.permute.xlu0 %639
  %643 = vset.pattern.permute.xlu0 0
  %644 = vperm.xlu0 %643, %v554
  %v645 = vpop.permute.xlu0 %644
  %648 = vset.pattern.permute.xlu0 0
  %649 = vperm.xlu0 %648, %v555
  %v650 = vpop.permute.xlu0 %649
  %v652 = vmul.f32 %v575, %v556
  %v653 = vmul.f32 %v580, %v557
  %v654 = vmul.f32 %v585, %v558
  %v655 = vmul.f32 %v590, %v559
  %v656 = vmul.f32 %v595, %v560
  %v657 = vmul.f32 %v600, %v561
  %v658 = vmul.f32 %v605, %v562
  %v659 = vmul.f32 %v610, %v563
  %v660 = vmul.f32 %v615, %v564
  %v661 = vmul.f32 %v620, %v565
  %v662 = vmul.f32 %v625, %v566
  %v663 = vmul.f32 %v630, %v567
  %v664 = vmul.f32 %v635, %v568
  %v665 = vmul.f32 %v640, %v569
  %v666 = vmul.f32 %v645, %v570
  %v667 = vmul.f32 %v650, %v571
  %684 = vrot.lane.b32.xlu0 %v524, 1
  %v685 = vpop.permute.xlu0 %684
  %686 = vrot.lane.b32.xlu0 %v525, 1
  %v687 = vpop.permute.xlu0 %686
  %688 = vrot.lane.b32.xlu0 %v526, 1
  %v689 = vpop.permute.xlu0 %688
  %690 = vrot.lane.b32.xlu0 %v527, 1
  %v691 = vpop.permute.xlu0 %690
  %692 = vrot.lane.b32.xlu0 %v528, 1
  %v693 = vpop.permute.xlu0 %692
  %694 = vrot.lane.b32.xlu0 %v529, 1
  %v695 = vpop.permute.xlu0 %694
  %696 = vrot.lane.b32.xlu0 %v530, 1
  %v697 = vpop.permute.xlu0 %696
  %698 = vrot.lane.b32.xlu0 %v531, 1
  %v699 = vpop.permute.xlu0 %698
  %700 = vrot.lane.b32.xlu0 %v532, 1
  %v701 = vpop.permute.xlu0 %700
  %702 = vrot.lane.b32.xlu0 %v533, 1
  %v703 = vpop.permute.xlu0 %702
  %704 = vrot.lane.b32.xlu0 %v534, 1
  %v705 = vpop.permute.xlu0 %704
  %706 = vrot.lane.b32.xlu0 %v535, 1
  %v707 = vpop.permute.xlu0 %706
  %708 = vrot.lane.b32.xlu0 %v536, 1
  %v709 = vpop.permute.xlu0 %708
  %710 = vrot.lane.b32.xlu0 %v537, 1
  %v711 = vpop.permute.xlu0 %710
  %712 = vrot.lane.b32.xlu0 %v538, 1
  %v713 = vpop.permute.xlu0 %712
  %714 = vrot.lane.b32.xlu0 %v539, 1
  %v715 = vpop.permute.xlu0 %714
  %v732 = vmul.f32 %v413, %v685
  %v733 = vmul.f32 %v415, %v687
  %v734 = vmul.f32 %v417, %v689
  %v735 = vmul.f32 %v419, %v691
  %v736 = vmul.f32 %v421, %v693
  %v737 = vmul.f32 %v423, %v695
  %v738 = vmul.f32 %v425, %v697
  %v739 = vmul.f32 %v427, %v699
  %v740 = vmul.f32 %v429, %v701
  %v741 = vmul.f32 %v431, %v703
  %v742 = vmul.f32 %v433, %v705
  %v743 = vmul.f32 %v435, %v707
  %v744 = vmul.f32 %v437, %v709
  %v745 = vmul.f32 %v439, %v711
  %v746 = vmul.f32 %v441, %v713
  %v747 = vmul.f32 %v443, %v715
  %v748 = vld [vmem:[%s2] sm:$0xff]
  %v749 = vld [vmem:[%s2 + $0x8] sm:$0xff]
  %v750 = vld [vmem:[%s2 + $0x10] sm:$0xff]
  %v751 = vld [vmem:[%s2 + $0x18] sm:$0xff]
  %v752 = vld [vmem:[%s2 + $0x20] sm:$0xff]
  %v753 = vld [vmem:[%s2 + $0x28] sm:$0xff]
  %v754 = vld [vmem:[%s2 + $0x30] sm:$0xff]
  %v755 = vld [vmem:[%s2 + $0x38] sm:$0xff]
  %v756 = vld [vmem:[%s2 + $0x40] sm:$0xff]
  %v757 = vld [vmem:[%s2 + $0x48] sm:$0xff]
  %v758 = vld [vmem:[%s2 + $0x50] sm:$0xff]
  %v759 = vld [vmem:[%s2 + $0x58] sm:$0xff]
  %v760 = vld [vmem:[%s2 + $0x60] sm:$0xff]
  %v761 = vld [vmem:[%s2 + $0x68] sm:$0xff]
  %v762 = vld [vmem:[%s2 + $0x70] sm:$0xff]
  %v763 = vld [vmem:[%s2 + $0x78] sm:$0xff]
  %765 = vset.pattern.permute.xlu0 1
  %766 = vperm.xlu0 %765, %v732
  %v767 = vpop.permute.xlu0 %766
  %770 = vset.pattern.permute.xlu0 1
  %771 = vperm.xlu0 %770, %v733
  %v772 = vpop.permute.xlu0 %771
  %775 = vset.pattern.permute.xlu0 1
  %776 = vperm.xlu0 %775, %v734
  %v777 = vpop.permute.xlu0 %776
  %780 = vset.pattern.permute.xlu0 1
  %781 = vperm.xlu0 %780, %v735
  %v782 = vpop.permute.xlu0 %781
  %785 = vset.pattern.permute.xlu0 1
  %786 = vperm.xlu0 %785, %v736
  %v787 = vpop.permute.xlu0 %786
  %790 = vset.pattern.permute.xlu0 1
  %791 = vperm.xlu0 %790, %v737
  %v792 = vpop.permute.xlu0 %791
  %795 = vset.pattern.permute.xlu0 1
  %796 = vperm.xlu0 %795, %v738
  %v797 = vpop.permute.xlu0 %796
  %800 = vset.pattern.permute.xlu0 1
  %801 = vperm.xlu0 %800, %v739
  %v802 = vpop.permute.xlu0 %801
  %805 = vset.pattern.permute.xlu0 1
  %806 = vperm.xlu0 %805, %v740
  %v807 = vpop.permute.xlu0 %806
  %810 = vset.pattern.permute.xlu0 1
  %811 = vperm.xlu0 %810, %v741
  %v812 = vpop.permute.xlu0 %811
  %815 = vset.pattern.permute.xlu0 1
  %816 = vperm.xlu0 %815, %v742
  %v817 = vpop.permute.xlu0 %816
  %820 = vset.pattern.permute.xlu0 1
  %821 = vperm.xlu0 %820, %v743
  %v822 = vpop.permute.xlu0 %821
  %825 = vset.pattern.permute.xlu0 1
  %826 = vperm.xlu0 %825, %v744
  %v827 = vpop.permute.xlu0 %826
  %830 = vset.pattern.permute.xlu0 1
  %831 = vperm.xlu0 %830, %v745
  %v832 = vpop.permute.xlu0 %831
  %835 = vset.pattern.permute.xlu0 1
  %836 = vperm.xlu0 %835, %v746
  %v837 = vpop.permute.xlu0 %836
  %840 = vset.pattern.permute.xlu0 1
  %841 = vperm.xlu0 %840, %v747
  %v842 = vpop.permute.xlu0 %841
  %v844 = vmul.f32 %v767, %v748
  %v845 = vmul.f32 %v772, %v749
  %v846 = vmul.f32 %v777, %v750
  %v847 = vmul.f32 %v782, %v751
  %v848 = vmul.f32 %v787, %v752
  %v849 = vmul.f32 %v792, %v753
  %v850 = vmul.f32 %v797, %v754
  %v851 = vmul.f32 %v802, %v755
  %v852 = vmul.f32 %v807, %v756
  %v853 = vmul.f32 %v812, %v757
  %v854 = vmul.f32 %v817, %v758
  %v855 = vmul.f32 %v822, %v759
  %v856 = vmul.f32 %v827, %v760
  %v857 = vmul.f32 %v832, %v761
  %v858 = vmul.f32 %v837, %v762
  %v859 = vmul.f32 %v842, %v763
  %v860 = vadd.f32 %v652, %v844
  %v861 = vadd.f32 %v653, %v845
  %v862 = vadd.f32 %v654, %v846
  %v863 = vadd.f32 %v655, %v847
  %v864 = vadd.f32 %v656, %v848
  %v865 = vadd.f32 %v657, %v849
  %v866 = vadd.f32 %v658, %v850
  %v867 = vadd.f32 %v659, %v851
  %v868 = vadd.f32 %v660, %v852
  %v869 = vadd.f32 %v661, %v853
  %v870 = vadd.f32 %v662, %v854
  %v871 = vadd.f32 %v663, %v855
  %v872 = vadd.f32 %v664, %v856
  %v873 = vadd.f32 %v665, %v857
  %v874 = vadd.f32 %v666, %v858
  %v875 = vadd.f32 %v667, %v859
  %vm876 = vcmask 31744
  %877 = vst.msk [vmem:[%s5] sm:$0xff] %vm876, %v860
  %878 = vst.msk [vmem:[%s5 + $0x8] sm:$0xff] %vm876, %v861
  %879 = vst.msk [vmem:[%s5 + $0x10] sm:$0xff] %vm876, %v862
  %880 = vst.msk [vmem:[%s5 + $0x18] sm:$0xff] %vm876, %v863
  %881 = vst.msk [vmem:[%s5 + $0x20] sm:$0xff] %vm876, %v864
  %882 = vst.msk [vmem:[%s5 + $0x28] sm:$0xff] %vm876, %v865
  %883 = vst.msk [vmem:[%s5 + $0x30] sm:$0xff] %vm876, %v866
  %884 = vst.msk [vmem:[%s5 + $0x38] sm:$0xff] %vm876, %v867
  %885 = vst.msk [vmem:[%s5 + $0x40] sm:$0xff] %vm876, %v868
  %886 = vst.msk [vmem:[%s5 + $0x48] sm:$0xff] %vm876, %v869
  %887 = vst.msk [vmem:[%s5 + $0x50] sm:$0xff] %vm876, %v870
  %888 = vst.msk [vmem:[%s5 + $0x58] sm:$0xff] %vm876, %v871
  %889 = vst.msk [vmem:[%s5 + $0x60] sm:$0xff] %vm876, %v872
  %890 = vst.msk [vmem:[%s5 + $0x68] sm:$0xff] %vm876, %v873
  %891 = vst.msk [vmem:[%s5 + $0x70] sm:$0xff] %vm876, %v874
  %892 = vst.msk [vmem:[%s5 + $0x78] sm:$0xff] %vm876, %v875
  // Predicated region
  $region22: #{rac_forward.13} parent=0 // pred_check
    _
  $region23: #{rac_forward.13} parent=0 // pred_check_branch
    %894 = sbr.rel (0) target = $region25
  $region24: #{rac_forward.13} parent=0 // pred_region
    _
  $region25: #{rac_forward.13} parent=0 // pred_fallthru
    _
  // Predicated region
  $region26: #{rac_forward.13} parent=0 // pred_check
    _
  $region27: #{rac_forward.13} parent=0 // pred_check_branch
    %896 = sbr.rel (0) target = $region29
  $region28: #{rac_forward.13} parent=0 // pred_region
    _
  $region29: #{rac_forward.13} parent=0 // pred_fallthru
    _

</llo_original>
